<compile_context>
chip_gen: v5e
topology: v5e:2x2
jax: 0.10.0
libtpu: 0.0.40
codegen_flags: <defaults>
</compile_context>

<pallas_src>
import numpy as np
import jax
import jax.numpy as jnp
from jax.experimental import pallas as pl
from jax.experimental.pallas import tpu as pltpu

_VMEM_LIMIT = 32 * 1024 * 1024   # <= physical VMEM on v5e/v6e (128 MiB) and v7x (64 MiB)


# ----------------------------------------------------------------------------
# conv3x3(pad=1) + bias + ReLU + maxpool(2,2), im2col done in-kernel.
# Used for conv1..conv3 (W is a multiple of 8 there, so every in-kernel reshape
# is layout-preserving and the vertical-pool slice is sublane-aligned).
# ----------------------------------------------------------------------------
def make_conv_pool_kernel(NB, H, W, Cin, Cout):
    Hp, Wp = H // 2, W // 2
    M = NB * H * W

    def kernel(x_ref, w_ref, b_ref, o_ref, vmax_ref):
        # x_ref    : (NB, H+2, W+2, Cin) bf16   padded NHWC activations
        # w_ref    : (9, Cin, Cout)      bf16   tap-major filter (k = dy*3+dx)
        # b_ref    : (1, Cout)           f32
        # o_ref    : (NB, Hp, Wp, Cout)  bf16   pooled output
        # vmax_ref : (NB*Hp, W, Cout)    f32    scratch: vertical 2-max
        x = x_ref[...]
        acc = jnp.zeros((M, Cout), jnp.float32)
        for dx in range(3):
            xs = x[:, :, dx:dx + W, :]                     # one sublane shift per dx
            for dy in range(3):
                patch = xs[:, dy:dy + H, :, :].reshape(M, Cin)
                acc = acc + jnp.dot(patch, w_ref[dy * 3 + dx],
                                    preferred_element_type=jnp.float32)
        conv = jnp.maximum(acc + b_ref[...], 0.0)          # (M, Cout) f32

        # 2x2 max-pool: 2*W is a multiple of 8, so the reshape only regroups
        # sublane rows and the vertical slice at offset W is sublane-aligned.
        conv = conv.reshape(NB * Hp, 2 * W, Cout)
        vmax_ref[...] = jnp.maximum(conv[:, :W, :], conv[:, W:, :])
        hmax = jnp.maximum(vmax_ref[:, pl.ds(0, Wp, stride=2), :],
                           vmax_ref[:, pl.ds(1, Wp, stride=2), :])
        o_ref[...] = hmax.reshape(NB, Hp, Wp, Cout).astype(o_ref.dtype)

    return kernel


def _pick_nb(n, rows_per_image, m_target):
    """Images per grid step: aim for ~m_target matmul rows, but keep >=2 grid
    steps when possible so the 'parallel' axis can shard across 2 TensorCores
    (v7x), and never exceed the batch."""
    nb = max(1, m_target // rows_per_image)
    if n >= 2:
        nb = min(nb, (n + 1) // 2)
    return max(1, min(nb, n))


def conv_relu_pool(x, w9, b_row, m_target=4096):
    """x: (N, H, W, Cin) bf16; w9: (9, Cin, Cout) bf16; b_row: (1, Cout) f32.
    Returns (N, H/2, W/2, Cout) bf16."""
    N, H, W, Cin = x.shape
    Cout = w9.shape[-1]
    assert H % 2 == 0 and W % 2 == 0 and W % 8 == 0
    Hp, Wp = H // 2, W // 2

    nb = _pick_nb(N, H * W, m_target)
    n_pad = -(-N // nb) * nb
    if n_pad != N:                       # pad batch with zero images (discarded below)
        x = jnp.pad(x, ((0, n_pad - N), (0, 0), (0, 0), (0, 0)))
    xp = jnp.pad(x, ((0, 0), (1, 1), (1, 1), (0, 0)))      # conv padding=1 (bf16)

    out = pl.pallas_call(
        make_conv_pool_kernel(nb, H, W, Cin, Cout),
        out_shape=jax.ShapeDtypeStruct((n_pad, Hp, Wp, Cout), jnp.bfloat16),
        grid=(n_pad // nb,),
        in_specs=[
            pl.BlockSpec((nb, H + 2, W + 2, Cin), lambda g: (g, 0, 0, 0)),
            pl.BlockSpec((9, Cin, Cout), lambda g: (0, 0, 0)),
            pl.BlockSpec((1, Cout), lambda g: (0, 0)),
        ],
        out_specs=pl.BlockSpec((nb, Hp, Wp, Cout), lambda g: (g, 0, 0, 0)),
        scratch_shapes=[pltpu.VMEM((nb * Hp, W, Cout), jnp.float32)],
        compiler_params=pltpu.CompilerParams(
            dimension_semantics=("parallel",),
            vmem_limit_bytes=_VMEM_LIMIT),
    )(xp, w9, b_row)
    return out[:N]


# ----------------------------------------------------------------------------
# conv4 (4x4 spatial): host-side im2col (tiny) + fused matmul/bias/ReLU/pool.
# ----------------------------------------------------------------------------
def make_conv4_pool_kernel(NB, H, W, Cout):
    Hp, Wp = H // 2, W // 2

    def kernel(p_ref, w_ref, b_ref, o_ref, vmax_ref):
        # p_ref : (NB*H*W, 9*Cin) bf16 im2col patches; w_ref : (9*Cin, Cout) bf16
        acc = jnp.dot(p_ref[...], w_ref[...], preferred_element_type=jnp.float32)
        conv = jnp.maximum(acc + b_ref[...], 0.0)          # (NB*H*W, Cout)
        conv = conv.reshape(NB * Hp, 2 * W, Cout)          # 2*W == 8 sublanes here
        # NOTE: offset-W slice is sub-8-sublane for W=4 -> tiny relayout; the
        # layer is launch/DMA-overhead bound so this is negligible.
        vmax_ref[...] = jnp.maximum(conv[:, :W, :], conv[:, W:, :])
        o_ref[...] = jnp.maximum(vmax_ref[:, pl.ds(0, Wp, stride=2), :],
                                 vmax_ref[:, pl.ds(1, Wp, stride=2), :]
                                 ).astype(o_ref.dtype)

    return kernel


def conv4_relu_pool(x, w_mat, b_row, m_target=2048):
    N, H, W, Cin = x.shape
    Cout = w_mat.shape[1]
    Hp, Wp = H // 2, W // 2

    nb = _pick_nb(N, H * W, m_target)
    n_pad = -(-N // nb) * nb
    if n_pad != N:
        x = jnp.pad(x, ((0, n_pad - N), (0, 0), (0, 0), (0, 0)))
    xp = jnp.pad(x, ((0, 0), (1, 1), (1, 1), (0, 0)))
    patches = jnp.concatenate(
        [xp[:, dy:dy + H, dx:dx + W, :] for dy in range(3) for dx in range(3)],
        axis=-1).reshape(n_pad * H * W, 9 * Cin).astype(jnp.bfloat16)

    out = pl.pallas_call(
        make_conv4_pool_kernel(nb, H, W, Cout),
        out_shape=jax.ShapeDtypeStruct((n_pad * Hp, Wp, Cout), jnp.bfloat16),
        grid=(n_pad // nb,),
        in_specs=[
            pl.BlockSpec((nb * H * W, 9 * Cin), lambda g: (g, 0)),
            pl.BlockSpec((9 * Cin, Cout), lambda g: (0, 0)),
            pl.BlockSpec((1, Cout), lambda g: (0, 0)),
        ],
        out_specs=pl.BlockSpec((nb * Hp, Wp, Cout), lambda g: (g, 0, 0)),
        scratch_shapes=[pltpu.VMEM((nb * Hp, W, Cout), jnp.float32)],
        compiler_params=pltpu.CompilerParams(
            dimension_semantics=("parallel",),
            vmem_limit_bytes=_VMEM_LIMIT),
    )(patches, w_mat, b_row)
    return out.reshape(n_pad, Hp, Wp, Cout)[:N]


# ----------------------------------------------------------------------------
# FC stack: relu(x @ W1 + b1) @ W23 + b23   (fc2 and fc3 folded into W23/b23)
# ----------------------------------------------------------------------------
def mlp_kernel(x_ref, w1_ref, b1_ref, w23_ref, b23_ref, o_ref):
    h = jnp.dot(x_ref[...], w1_ref[...], preferred_element_type=jnp.float32) + b1_ref[...]
    h = jnp.maximum(h, 0.0).astype(jnp.bfloat16)
    o_ref[...] = jnp.dot(h, w23_ref[...], preferred_element_type=jnp.float32) + b23_ref[...]


def mlp_forward(x_bf16, w1, b1, w23, b23):
    N = x_bf16.shape[0]
    n_classes = w23.shape[1]
    vmem = pl.BlockSpec(memory_space=pltpu.MemorySpace.VMEM)
    return pl.pallas_call(
        mlp_kernel,
        out_shape=jax.ShapeDtypeStruct((N, n_classes), jnp.float32),
        in_specs=[vmem] * 5,
        out_specs=vmem,
        compiler_params=pltpu.CompilerParams(vmem_limit_bytes=_VMEM_LIMIT),
    )(x_bf16, w1, b1, w23, b23)


# ----------------------------------------------------------------------------
# One-time parameter preparation (all transposes / permutations hoisted here)
# ----------------------------------------------------------------------------
def prepare_params(params, H):
    prep = {}
    for i in range(1, 4):                                    # conv1..conv3: (9, Cin, Cout)
        w = params[f"conv{i}_w"]                             # (Cout, Cin, 3, 3) OIHW
        cout, cin = w.shape[0], w.shape[1]
        w_hwio = jnp.transpose(w, (2, 3, 1, 0))              # (3, 3, Cin, Cout)
        prep[f"conv{i}_w"] = w_hwio.reshape(9, cin, cout).astype(jnp.bfloat16)
        prep[f"conv{i}_b"] = params[f"conv{i}_b"].reshape(1, cout).astype(jnp.float32)

    w = params["conv4_w"]                                    # conv4: (9*Cin, Cout) patch matmul
    cout, cin = w.shape[0], w.shape[1]
    w_hwio = jnp.transpose(w, (2, 3, 1, 0))
    prep["conv4_w"] = w_hwio.reshape(9 * cin, cout).astype(jnp.bfloat16)
    prep["conv4_b"] = params["conv4_b"].reshape(1, cout).astype(jnp.float32)

    # fc1: fold PyTorch's NCHW flatten (c, i, j) ordering into the weight so the
    # activation can stay in its natural HWC-flattened layout (no transpose).
    c4 = 128
    hp4 = H // 16
    w1 = params["fc1_w"]                                     # (hidden, c4*hp4*hp4)
    hidden = w1.shape[0]
    w1p = (w1.reshape(hidden, c4, hp4, hp4)
             .transpose(2, 3, 1, 0)
             .reshape(hp4 * hp4 * c4, hidden))
    prep["fc1_w"] = w1p.astype(jnp.bfloat16)
    prep["fc1_b"] = params["fc1_b"].reshape(1, -1).astype(jnp.float32)

    # fc2/fc3 fold (no nonlinearity between):  y = h @ (W3 @ W2)^T + (b2 @ W3^T + b3)
    w2, b2 = params["fc2_w"], params["fc2_b"]
    w3, b3 = params["fc3_w"], params["fc3_b"]
    prep["fc23_w"] = (w3 @ w2).T.astype(jnp.bfloat16)        # (hidden, n_classes)
    prep["fc23_b"] = (b2 @ w3.T + b3).reshape(1, -1).astype(jnp.float32)
    return prep


# ----------------------------------------------------------------------------
# Full forward pass (matches CNN.forward; dropout in eval mode = identity)
# ----------------------------------------------------------------------------
def cnn_forward(images_nchw, prep):
    x = jnp.transpose(images_nchw, (0, 2, 3, 1)).astype(jnp.bfloat16)   # NCHW -> NHWC bf16
    x = conv_relu_pool(x, prep["conv1_w"], prep["conv1_b"])
    x = conv_relu_pool(x, prep["conv2_w"], prep["conv2_b"])
    x = conv_relu_pool(x, prep["conv3_w"], prep["conv3_b"])
    x = conv4_relu_pool(x, prep["conv4_w"], prep["conv4_b"])
    x = x.reshape(x.shape[0], -1)                                        # (N, 512), (i, j, c) order
    # TODO(synk): nn.Dropout(p=0.25) is identity in eval mode; training-mode RNG dropout not modeled.
    return mlp_forward(x, prep["fc1_w"], prep["fc1_b"], prep["fc23_w"], prep["fc23_b"])


cnn_forward_jit = jax.jit(cnn_forward)


# ----------------------------------------------------------------------------
# Deterministic parameter init (PyTorch default-style uniform(-1/sqrt(fan_in), +))
# ----------------------------------------------------------------------------
def init_params(key, H, hidden_dim, hidden_dim2, n_classes):
    params = {}

    def uinit(k, shape, fan_in):
        bound = 1.0 / np.sqrt(fan_in)
        return jax.random.uniform(k, shape, jnp.float32, -bound, bound)

    conv_dims = [(3, 16), (16, 32), (32, 64), (64, 128)]
    keys = jax.random.split(key, 2 * 4 + 2 * 3)
    ki = 0
    for i, (cin, cout) in enumerate(conv_dims, start=1):
        fan = cin * 3 * 3
        params[f"conv{i}_w"] = uinit(keys[ki], (cout, cin, 3, 3), fan); ki += 1
        params[f"conv{i}_b"] = uinit(keys[ki], (cout,), fan); ki += 1

    hout = H // (2 ** 4)
    fc_dims = [(hout * hout * 128, hidden_dim), (hidden_dim, hidden_dim2),
               (hidden_dim2, n_classes)]
    for i, (fin, fout) in enumerate(fc_dims, start=1):
        params[f"fc{i}_w"] = uinit(keys[ki], (fout, fin), fin); ki += 1
        params[f"fc{i}_b"] = uinit(keys[ki], (fout,), fin); ki += 1
    return params


# ----------------------------------------------------------------------------
# Pure-JAX (f32) reference for validation
# ----------------------------------------------------------------------------
def reference_forward(images_nchw, params):
    x = jnp.transpose(images_nchw, (0, 2, 3, 1))
    for i in range(1, 5):
        w = jnp.transpose(params[f"conv{i}_w"], (2, 3, 1, 0))
        y = jax.lax.conv_general_dilated(x, w, (1, 1), "SAME",
                                         dimension_numbers=("NHWC", "HWIO", "NHWC"))
        y = jax.nn.relu(y + params[f"conv{i}_b"])
        x = jax.lax.reduce_window(y, -jnp.inf, jax.lax.max,
                                  (1, 2, 2, 1), (1, 2, 2, 1), "VALID")
    x = jnp.transpose(x, (0, 3, 1, 2)).reshape(x.shape[0], -1)
    h = jax.nn.relu(x @ params["fc1_w"].T + params["fc1_b"])
    h = h @ params["fc2_w"].T + params["fc2_b"]
    return h @ params["fc3_w"].T + params["fc3_b"]


if __name__ == "__main__":
    # im_size=(3, 32, 32), hidden_dim=32, hidden_dim2=16, n_classes=10, batch=2
    N, C, H, W = 2, 3, 32, 32
    hidden_dim, hidden_dim2, n_classes = 32, 16, 10

    key = jax.random.PRNGKey(0)
    kp, kx = jax.random.split(key)
    params = init_params(kp, H, hidden_dim, hidden_dim2, n_classes)
    images = jax.random.normal(kx, (N, C, H, W), jnp.float32)

    prep = prepare_params(params, H)     # one-time weight repacking (hoisted out of the forward)

    scores = jax.block_until_ready(cnn_forward_jit(images, prep))
    assert scores.shape == (N, n_classes), scores.shape

    ref = jax.block_until_ready(reference_forward(images, params))
    np.testing.assert_allclose(np.asarray(scores), np.asarray(ref), rtol=7.5e-2, atol=7.5e-2)

    print("KERNEL_OK")
</pallas_src>

<mosaic_0001>
module attributes {stable_mosaic.version = 11 : i64} {
  func.func @kernel(%arg0: i32, %arg1: memref<1x34x34x3xbf16, #tpu.memory_space<vmem>>, %arg2: memref<9x3x16xbf16, #tpu.memory_space<vmem>>, %arg3: memref<1x16xf32, #tpu.memory_space<vmem>>, %arg4: memref<1x16x16x16xbf16, #tpu.memory_space<vmem>>, %arg5: memref<16x32x16xf32, #tpu.memory_space<vmem>>) attributes {dimension_semantics = [#tpu.dimension_semantics<parallel>], iteration_bounds = array<i64: 2>, scalar_prefetch = 0 : i64, scratch_operands = 1 : i64, tpu.core_type = #tpu.core_type<tc>, window_params = [{transform_indices = @transform_0, window_bounds = array<i64: 1, 34, 34, 3>}, {pipeline_mode = #tpu.pipeline_mode<synchronous>, transform_indices = @transform_1, window_bounds = array<i64: 9, 3, 16>}, {pipeline_mode = #tpu.pipeline_mode<synchronous>, transform_indices = @transform_2, window_bounds = array<i64: 1, 16>}, {transform_indices = @transform_3, window_bounds = array<i64: 1, 16, 16, 16>}]} {
    %c0 = arith.constant 0 : index
    %c0_0 = arith.constant 0 : index
    %c0_1 = arith.constant 0 : index
    %c0_2 = arith.constant 0 : index
    %0 = vector.load %arg1[%c0, %c0_0, %c0_1, %c0_2] : memref<1x34x34x3xbf16, #tpu.memory_space<vmem>>, vector<1x34x34x3xbf16>
    %cst = arith.constant 0.000000e+00 : f32
    %1 = vector.broadcast %cst : f32 to vector<1024x16xf32>
    %2 = vector.extract_strided_slice %0 {offsets = [0, 0, 0, 0], sizes = [1, 34, 32, 3], strides = [1, 1, 1, 1]} : vector<1x34x34x3xbf16> to vector<1x34x32x3xbf16>
    %3 = vector.extract_strided_slice %2 {offsets = [0, 0, 0, 0], sizes = [1, 32, 32, 3], strides = [1, 1, 1, 1]} : vector<1x34x32x3xbf16> to vector<1x32x32x3xbf16>
    %4 = vector.shape_cast %3 : vector<1x32x32x3xbf16> to vector<1024x3xbf16>
    %c0_3 = arith.constant 0 : index
    %c0_4 = arith.constant 0 : index
    %c0_5 = arith.constant 0 : index
    %5 = vector.load %arg2[%c0_3, %c0_4, %c0_5] : memref<9x3x16xbf16, #tpu.memory_space<vmem>>, vector<1x3x16xbf16>
    %6 = vector.shape_cast %5 : vector<1x3x16xbf16> to vector<3x16xbf16>
    %cst_6 = arith.constant dense<0.000000e+00> : vector<1024x16xf32>
    %7 = tpu.matmul %4, %6, %cst_6 {dimension_numbers = #tpu.dot_dimension_numbers<[1], [0], [0], [1], [0, 0, 1, 1], [], []>} : vector<1024x3xbf16>, vector<3x16xbf16>, vector<1024x16xf32> -> vector<1024x16xf32>
    %8 = arith.addf %1, %7 : vector<1024x16xf32>
    %9 = vector.extract_strided_slice %2 {offsets = [0, 1, 0, 0], sizes = [1, 32, 32, 3], strides = [1, 1, 1, 1]} : vector<1x34x32x3xbf16> to vector<1x32x32x3xbf16>
    %10 = vector.shape_cast %9 : vector<1x32x32x3xbf16> to vector<1024x3xbf16>
    %c3 = arith.constant 3 : index
    %c0_7 = arith.constant 0 : index
    %c0_8 = arith.constant 0 : index
    %11 = vector.load %arg2[%c3, %c0_7, %c0_8] : memref<9x3x16xbf16, #tpu.memory_space<vmem>>, vector<1x3x16xbf16>
    %12 = vector.shape_cast %11 : vector<1x3x16xbf16> to vector<3x16xbf16>
    %cst_9 = arith.constant dense<0.000000e+00> : vector<1024x16xf32>
    %13 = tpu.matmul %10, %12, %cst_9 {dimension_numbers = #tpu.dot_dimension_numbers<[1], [0], [0], [1], [0, 0, 1, 1], [], []>} : vector<1024x3xbf16>, vector<3x16xbf16>, vector<1024x16xf32> -> vector<1024x16xf32>
    %14 = arith.addf %8, %13 : vector<1024x16xf32>
    %15 = vector.extract_strided_slice %2 {offsets = [0, 2, 0, 0], sizes = [1, 32, 32, 3], strides = [1, 1, 1, 1]} : vector<1x34x32x3xbf16> to vector<1x32x32x3xbf16>
    %16 = vector.shape_cast %15 : vector<1x32x32x3xbf16> to vector<1024x3xbf16>
    %c6 = arith.constant 6 : index
    %c0_10 = arith.constant 0 : index
    %c0_11 = arith.constant 0 : index
    %17 = vector.load %arg2[%c6, %c0_10, %c0_11] : memref<9x3x16xbf16, #tpu.memory_space<vmem>>, vector<1x3x16xbf16>
    %18 = vector.shape_cast %17 : vector<1x3x16xbf16> to vector<3x16xbf16>
    %cst_12 = arith.constant dense<0.000000e+00> : vector<1024x16xf32>
    %19 = tpu.matmul %16, %18, %cst_12 {dimension_numbers = #tpu.dot_dimension_numbers<[1], [0], [0], [1], [0, 0, 1, 1], [], []>} : vector<1024x3xbf16>, vector<3x16xbf16>, vector<1024x16xf32> -> vector<1024x16xf32>
    %20 = arith.addf %14, %19 : vector<1024x16xf32>
    %21 = vector.extract_strided_slice %0 {offsets = [0, 0, 1, 0], sizes = [1, 34, 32, 3], strides = [1, 1, 1, 1]} : vector<1x34x34x3xbf16> to vector<1x34x32x3xbf16>
    %22 = vector.extract_strided_slice %21 {offsets = [0, 0, 0, 0], sizes = [1, 32, 32, 3], strides = [1, 1, 1, 1]} : vector<1x34x32x3xbf16> to vector<1x32x32x3xbf16>
    %23 = vector.shape_cast %22 : vector<1x32x32x3xbf16> to vector<1024x3xbf16>
    %c1 = arith.constant 1 : index
    %c0_13 = arith.constant 0 : index
    %c0_14 = arith.constant 0 : index
    %24 = vector.load %arg2[%c1, %c0_13, %c0_14] : memref<9x3x16xbf16, #tpu.memory_space<vmem>>, vector<1x3x16xbf16>
    %25 = vector.shape_cast %24 : vector<1x3x16xbf16> to vector<3x16xbf16>
    %cst_15 = arith.constant dense<0.000000e+00> : vector<1024x16xf32>
    %26 = tpu.matmul %23, %25, %cst_15 {dimension_numbers = #tpu.dot_dimension_numbers<[1], [0], [0], [1], [0, 0, 1, 1], [], []>} : vector<1024x3xbf16>, vector<3x16xbf16>, vector<1024x16xf32> -> vector<1024x16xf32>
    %27 = arith.addf %20, %26 : vector<1024x16xf32>
    %28 = vector.extract_strided_slice %21 {offsets = [0, 1, 0, 0], sizes = [1, 32, 32, 3], strides = [1, 1, 1, 1]} : vector<1x34x32x3xbf16> to vector<1x32x32x3xbf16>
    %29 = vector.shape_cast %28 : vector<1x32x32x3xbf16> to vector<1024x3xbf16>
    %c4 = arith.constant 4 : index
    %c0_16 = arith.constant 0 : index
    %c0_17 = arith.constant 0 : index
    %30 = vector.load %arg2[%c4, %c0_16, %c0_17] : memref<9x3x16xbf16, #tpu.memory_space<vmem>>, vector<1x3x16xbf16>
    %31 = vector.shape_cast %30 : vector<1x3x16xbf16> to vector<3x16xbf16>
    %cst_18 = arith.constant dense<0.000000e+00> : vector<1024x16xf32>
    %32 = tpu.matmul %29, %31, %cst_18 {dimension_numbers = #tpu.dot_dimension_numbers<[1], [0], [0], [1], [0, 0, 1, 1], [], []>} : vector<1024x3xbf16>, vector<3x16xbf16>, vector<1024x16xf32> -> vector<1024x16xf32>
    %33 = arith.addf %27, %32 : vector<1024x16xf32>
    %34 = vector.extract_strided_slice %21 {offsets = [0, 2, 0, 0], sizes = [1, 32, 32, 3], strides = [1, 1, 1, 1]} : vector<1x34x32x3xbf16> to vector<1x32x32x3xbf16>
    %35 = vector.shape_cast %34 : vector<1x32x32x3xbf16> to vector<1024x3xbf16>
    %c7 = arith.constant 7 : index
    %c0_19 = arith.constant 0 : index
    %c0_20 = arith.constant 0 : index
    %36 = vector.load %arg2[%c7, %c0_19, %c0_20] : memref<9x3x16xbf16, #tpu.memory_space<vmem>>, vector<1x3x16xbf16>
    %37 = vector.shape_cast %36 : vector<1x3x16xbf16> to vector<3x16xbf16>
    %cst_21 = arith.constant dense<0.000000e+00> : vector<1024x16xf32>
    %38 = tpu.matmul %35, %37, %cst_21 {dimension_numbers = #tpu.dot_dimension_numbers<[1], [0], [0], [1], [0, 0, 1, 1], [], []>} : vector<1024x3xbf16>, vector<3x16xbf16>, vector<1024x16xf32> -> vector<1024x16xf32>
    %39 = arith.addf %33, %38 : vector<1024x16xf32>
    %40 = vector.extract_strided_slice %0 {offsets = [0, 0, 2, 0], sizes = [1, 34, 32, 3], strides = [1, 1, 1, 1]} : vector<1x34x34x3xbf16> to vector<1x34x32x3xbf16>
    %41 = vector.extract_strided_slice %40 {offsets = [0, 0, 0, 0], sizes = [1, 32, 32, 3], strides = [1, 1, 1, 1]} : vector<1x34x32x3xbf16> to vector<1x32x32x3xbf16>
    %42 = vector.shape_cast %41 : vector<1x32x32x3xbf16> to vector<1024x3xbf16>
    %c2 = arith.constant 2 : index
    %c0_22 = arith.constant 0 : index
    %c0_23 = arith.constant 0 : index
    %43 = vector.load %arg2[%c2, %c0_22, %c0_23] : memref<9x3x16xbf16, #tpu.memory_space<vmem>>, vector<1x3x16xbf16>
    %44 = vector.shape_cast %43 : vector<1x3x16xbf16> to vector<3x16xbf16>
    %cst_24 = arith.constant dense<0.000000e+00> : vector<1024x16xf32>
    %45 = tpu.matmul %42, %44, %cst_24 {dimension_numbers = #tpu.dot_dimension_numbers<[1], [0], [0], [1], [0, 0, 1, 1], [], []>} : vector<1024x3xbf16>, vector<3x16xbf16>, vector<1024x16xf32> -> vector<1024x16xf32>
    %46 = arith.addf %39, %45 : vector<1024x16xf32>
    %47 = vector.extract_strided_slice %40 {offsets = [0, 1, 0, 0], sizes = [1, 32, 32, 3], strides = [1, 1, 1, 1]} : vector<1x34x32x3xbf16> to vector<1x32x32x3xbf16>
    %48 = vector.shape_cast %47 : vector<1x32x32x3xbf16> to vector<1024x3xbf16>
    %c5 = arith.constant 5 : index
    %c0_25 = arith.constant 0 : index
    %c0_26 = arith.constant 0 : index
    %49 = vector.load %arg2[%c5, %c0_25, %c0_26] : memref<9x3x16xbf16, #tpu.memory_space<vmem>>, vector<1x3x16xbf16>
    %50 = vector.shape_cast %49 : vector<1x3x16xbf16> to vector<3x16xbf16>
    %cst_27 = arith.constant dense<0.000000e+00> : vector<1024x16xf32>
    %51 = tpu.matmul %48, %50, %cst_27 {dimension_numbers = #tpu.dot_dimension_numbers<[1], [0], [0], [1], [0, 0, 1, 1], [], []>} : vector<1024x3xbf16>, vector<3x16xbf16>, vector<1024x16xf32> -> vector<1024x16xf32>
    %52 = arith.addf %46, %51 : vector<1024x16xf32>
    %53 = vector.extract_strided_slice %40 {offsets = [0, 2, 0, 0], sizes = [1, 32, 32, 3], strides = [1, 1, 1, 1]} : vector<1x34x32x3xbf16> to vector<1x32x32x3xbf16>
    %54 = vector.shape_cast %53 : vector<1x32x32x3xbf16> to vector<1024x3xbf16>
    %c8 = arith.constant 8 : index
    %c0_28 = arith.constant 0 : index
    %c0_29 = arith.constant 0 : index
    %55 = vector.load %arg2[%c8, %c0_28, %c0_29] : memref<9x3x16xbf16, #tpu.memory_space<vmem>>, vector<1x3x16xbf16>
    %56 = vector.shape_cast %55 : vector<1x3x16xbf16> to vector<3x16xbf16>
    %cst_30 = arith.constant dense<0.000000e+00> : vector<1024x16xf32>
    %57 = tpu.matmul %54, %56, %cst_30 {dimension_numbers = #tpu.dot_dimension_numbers<[1], [0], [0], [1], [0, 0, 1, 1], [], []>} : vector<1024x3xbf16>, vector<3x16xbf16>, vector<1024x16xf32> -> vector<1024x16xf32>
    %58 = arith.addf %52, %57 : vector<1024x16xf32>
    %c0_31 = arith.constant 0 : index
    %c0_32 = arith.constant 0 : index
    %59 = vector.load %arg3[%c0_31, %c0_32] : memref<1x16xf32, #tpu.memory_space<vmem>>, vector<1x16xf32>
    %60 = vector.broadcast %59 : vector<1x16xf32> to vector<1024x16xf32>
    %61 = arith.addf %58, %60 : vector<1024x16xf32>
    %cst_33 = arith.constant 0.000000e+00 : f32
    %62 = vector.broadcast %cst_33 : f32 to vector<1024x16xf32>
    %63 = arith.maximumf %61, %62 : vector<1024x16xf32>
    %64 = vector.shape_cast %63 : vector<1024x16xf32> to vector<16x64x16xf32>
    %65 = vector.extract_strided_slice %64 {offsets = [0, 0, 0], sizes = [16, 32, 16], strides = [1, 1, 1]} : vector<16x64x16xf32> to vector<16x32x16xf32>
    %66 = vector.extract_strided_slice %64 {offsets = [0, 32, 0], sizes = [16, 32, 16], strides = [1, 1, 1]} : vector<16x64x16xf32> to vector<16x32x16xf32>
    %67 = arith.maximumf %65, %66 : vector<16x32x16xf32>
    %c0_34 = arith.constant 0 : index
    %c0_35 = arith.constant 0 : index
    %c0_36 = arith.constant 0 : index
    %68 = vector.load %arg5[%c0_34, %c0_35, %c0_36] : memref<16x32x16xf32, #tpu.memory_space<vmem>>, vector<16x32x16xf32>
    tpu.vector_store %arg5[%c0_34, %c0_35, %c0_36], %67 {strides = array<i32>} : memref<16x32x16xf32, #tpu.memory_space<vmem>>, vector<16x32x16xf32>,
    %c0_37 = arith.constant 0 : index
    %c0_38 = arith.constant 0 : index
    %c0_39 = arith.constant 0 : index
    %69 = tpu.strided_load %arg5[%c0_37, %c0_38, %c0_39] {strides = array<i32: 1, 2, 1>} : memref<16x32x16xf32, #tpu.memory_space<vmem>>, vector<16x16x16xf32>
    %c0_40 = arith.constant 0 : index
    %c1_41 = arith.constant 1 : index
    %c0_42 = arith.constant 0 : index
    %70 = tpu.strided_load %arg5[%c0_40, %c1_41, %c0_42] {strides = array<i32: 1, 2, 1>} : memref<16x32x16xf32, #tpu.memory_space<vmem>>, vector<16x16x16xf32>
    %71 = arith.maximumf %69, %70 : vector<16x16x16xf32>
    %72 = vector.shape_cast %71 : vector<16x16x16xf32> to vector<1x16x16x16xf32>
    %73 = arith.truncf %72 : vector<1x16x16x16xf32> to vector<1x16x16x16xbf16>
    %c0_43 = arith.constant 0 : index
    %c0_44 = arith.constant 0 : index
    %c0_45 = arith.constant 0 : index
    %c0_46 = arith.constant 0 : index
    %74 = vector.load %arg4[%c0_43, %c0_44, %c0_45, %c0_46] : memref<1x16x16x16xbf16, #tpu.memory_space<vmem>>, vector<1x16x16x16xbf16>
    tpu.vector_store %arg4[%c0_43, %c0_44, %c0_45, %c0_46], %73 {strides = array<i32>} : memref<1x16x16x16xbf16, #tpu.memory_space<vmem>>, vector<1x16x16x16xbf16>,
    return
  }
  func.func @transform_0(%arg0: i32) -> (i32, i32, i32, i32) {
    %c0_i32 = arith.constant 0 : i32
    %c0_i32_0 = arith.constant 0 : i32
    %c0_i32_1 = arith.constant 0 : i32
    %c0_i32_2 = arith.constant 0 : i32
    return %arg0, %c0_i32, %c0_i32_0, %c0_i32_1 : i32, i32, i32, i32
  }
  func.func @transform_1(%arg0: i32) -> (i32, i32, i32) {
    %c0_i32 = arith.constant 0 : i32
    %c0_i32_0 = arith.constant 0 : i32
    %c0_i32_1 = arith.constant 0 : i32
    %c0_i32_2 = arith.constant 0 : i32
    return %c0_i32, %c0_i32_0, %c0_i32_1 : i32, i32, i32
  }
  func.func @transform_2(%arg0: i32) -> (i32, i32) {
    %c0_i32 = arith.constant 0 : i32
    %c0_i32_0 = arith.constant 0 : i32
    %c0_i32_1 = arith.constant 0 : i32
    return %c0_i32, %c0_i32_0 : i32, i32
  }
  func.func @transform_3(%arg0: i32) -> (i32, i32, i32, i32) {
    %c0_i32 = arith.constant 0 : i32
    %c0_i32_0 = arith.constant 0 : i32
    %c0_i32_1 = arith.constant 0 : i32
    %c0_i32_2 = arith.constant 0 : i32
    return %arg0, %c0_i32, %c0_i32_0, %c0_i32_1 : i32, i32, i32, i32
  }
}

module attributes {stable_mosaic.version = 11 : i64} {
  func.func @kernel(%arg0: i32, %arg1: memref<1x18x18x16xbf16, #tpu.memory_space<vmem>>, %arg2: memref<9x16x32xbf16, #tpu.memory_space<vmem>>, %arg3: memref<1x32xf32, #tpu.memory_space<vmem>>, %arg4: memref<1x8x8x32xbf16, #tpu.memory_space<vmem>>, %arg5: memref<8x16x32xf32, #tpu.memory_space<vmem>>) attributes {dimension_semantics = [#tpu.dimension_semantics<parallel>], iteration_bounds = array<i64: 2>, scalar_prefetch = 0 : i64, scratch_operands = 1 : i64, tpu.core_type = #tpu.core_type<tc>, window_params = [{transform_indices = @transform_0, window_bounds = array<i64: 1, 18, 18, 16>}, {pipeline_mode = #tpu.pipeline_mode<synchronous>, transform_indices = @transform_1, window_bounds = array<i64: 9, 16, 32>}, {pipeline_mode = #tpu.pipeline_mode<synchronous>, transform_indices = @transform_2, window_bounds = array<i64: 1, 32>}, {transform_indices = @transform_3, window_bounds = array<i64: 1, 8, 8, 32>}]} {
    %c0 = arith.constant 0 : index
    %c0_0 = arith.constant 0 : index
    %c0_1 = arith.constant 0 : index
    %c0_2 = arith.constant 0 : index
    %0 = vector.load %arg1[%c0, %c0_0, %c0_1, %c0_2] : memref<1x18x18x16xbf16, #tpu.memory_space<vmem>>, vector<1x18x18x16xbf16>
    %cst = arith.constant 0.000000e+00 : f32
    %1 = vector.broadcast %cst : f32 to vector<256x32xf32>
    %2 = vector.extract_strided_slice %0 {offsets = [0, 0, 0, 0], sizes = [1, 18, 16, 16], strides = [1, 1, 1, 1]} : vector<1x18x18x16xbf16> to vector<1x18x16x16xbf16>
    %3 = vector.extract_strided_slice %2 {offsets = [0, 0, 0, 0], sizes = [1, 16, 16, 16], strides = [1, 1, 1, 1]} : vector<1x18x16x16xbf16> to vector<1x16x16x16xbf16>
    %4 = vector.shape_cast %3 : vector<1x16x16x16xbf16> to vector<256x16xbf16>
    %c0_3 = arith.constant 0 : index
    %c0_4 = arith.constant 0 : index
    %c0_5 = arith.constant 0 : index
    %5 = vector.load %arg2[%c0_3, %c0_4, %c0_5] : memref<9x16x32xbf16, #tpu.memory_space<vmem>>, vector<1x16x32xbf16>
    %6 = vector.shape_cast %5 : vector<1x16x32xbf16> to vector<16x32xbf16>
    %cst_6 = arith.constant dense<0.000000e+00> : vector<256x32xf32>
    %7 = tpu.matmul %4, %6, %cst_6 {dimension_numbers = #tpu.dot_dimension_numbers<[1], [0], [0], [1], [0, 0, 1, 1], [], []>} : vector<256x16xbf16>, vector<16x32xbf16>, vector<256x32xf32> -> vector<256x32xf32>
    %8 = arith.addf %1, %7 : vector<256x32xf32>
    %9 = vector.extract_strided_slice %2 {offsets = [0, 1, 0, 0], sizes = [1, 16, 16, 16], strides = [1, 1, 1, 1]} : vector<1x18x16x16xbf16> to vector<1x16x16x16xbf16>
    %10 = vector.shape_cast %9 : vector<1x16x16x16xbf16> to vector<256x16xbf16>
    %c3 = arith.constant 3 : index
    %c0_7 = arith.constant 0 : index
    %c0_8 = arith.constant 0 : index
    %11 = vector.load %arg2[%c3, %c0_7, %c0_8] : memref<9x16x32xbf16, #tpu.memory_space<vmem>>, vector<1x16x32xbf16>
    %12 = vector.shape_cast %11 : vector<1x16x32xbf16> to vector<16x32xbf16>
    %cst_9 = arith.constant dense<0.000000e+00> : vector<256x32xf32>
    %13 = tpu.matmul %10, %12, %cst_9 {dimension_numbers = #tpu.dot_dimension_numbers<[1], [0], [0], [1], [0, 0, 1, 1], [], []>} : vector<256x16xbf16>, vector<16x32xbf16>, vector<256x32xf32> -> vector<256x32xf32>
    %14 = arith.addf %8, %13 : vector<256x32xf32>
    %15 = vector.extract_strided_slice %2 {offsets = [0, 2, 0, 0], sizes = [1, 16, 16, 16], strides = [1, 1, 1, 1]} : vector<1x18x16x16xbf16> to vector<1x16x16x16xbf16>
    %16 = vector.shape_cast %15 : vector<1x16x16x16xbf16> to vector<256x16xbf16>
    %c6 = arith.constant 6 : index
    %c0_10 = arith.constant 0 : index
    %c0_11 = arith.constant 0 : index
    %17 = vector.load %arg2[%c6, %c0_10, %c0_11] : memref<9x16x32xbf16, #tpu.memory_space<vmem>>, vector<1x16x32xbf16>
    %18 = vector.shape_cast %17 : vector<1x16x32xbf16> to vector<16x32xbf16>
    %cst_12 = arith.constant dense<0.000000e+00> : vector<256x32xf32>
    %19 = tpu.matmul %16, %18, %cst_12 {dimension_numbers = #tpu.dot_dimension_numbers<[1], [0], [0], [1], [0, 0, 1, 1], [], []>} : vector<256x16xbf16>, vector<16x32xbf16>, vector<256x32xf32> -> vector<256x32xf32>
    %20 = arith.addf %14, %19 : vector<256x32xf32>
    %21 = vector.extract_strided_slice %0 {offsets = [0, 0, 1, 0], sizes = [1, 18, 16, 16], strides = [1, 1, 1, 1]} : vector<1x18x18x16xbf16> to vector<1x18x16x16xbf16>
    %22 = vector.extract_strided_slice %21 {offsets = [0, 0, 0, 0], sizes = [1, 16, 16, 16], strides = [1, 1, 1, 1]} : vector<1x18x16x16xbf16> to vector<1x16x16x16xbf16>
    %23 = vector.shape_cast %22 : vector<1x16x16x16xbf16> to vector<256x16xbf16>
    %c1 = arith.constant 1 : index
    %c0_13 = arith.constant 0 : index
    %c0_14 = arith.constant 0 : index
    %24 = vector.load %arg2[%c1, %c0_13, %c0_14] : memref<9x16x32xbf16, #tpu.memory_space<vmem>>, vector<1x16x32xbf16>
    %25 = vector.shape_cast %24 : vector<1x16x32xbf16> to vector<16x32xbf16>
    %cst_15 = arith.constant dense<0.000000e+00> : vector<256x32xf32>
    %26 = tpu.matmul %23, %25, %cst_15 {dimension_numbers = #tpu.dot_dimension_numbers<[1], [0], [0], [1], [0, 0, 1, 1], [], []>} : vector<256x16xbf16>, vector<16x32xbf16>, vector<256x32xf32> -> vector<256x32xf32>
    %27 = arith.addf %20, %26 : vector<256x32xf32>
    %28 = vector.extract_strided_slice %21 {offsets = [0, 1, 0, 0], sizes = [1, 16, 16, 16], strides = [1, 1, 1, 1]} : vector<1x18x16x16xbf16> to vector<1x16x16x16xbf16>
    %29 = vector.shape_cast %28 : vector<1x16x16x16xbf16> to vector<256x16xbf16>
    %c4 = arith.constant 4 : index
    %c0_16 = arith.constant 0 : index
    %c0_17 = arith.constant 0 : index
    %30 = vector.load %arg2[%c4, %c0_16, %c0_17] : memref<9x16x32xbf16, #tpu.memory_space<vmem>>, vector<1x16x32xbf16>
    %31 = vector.shape_cast %30 : vector<1x16x32xbf16> to vector<16x32xbf16>
    %cst_18 = arith.constant dense<0.000000e+00> : vector<256x32xf32>
    %32 = tpu.matmul %29, %31, %cst_18 {dimension_numbers = #tpu.dot_dimension_numbers<[1], [0], [0], [1], [0, 0, 1, 1], [], []>} : vector<256x16xbf16>, vector<16x32xbf16>, vector<256x32xf32> -> vector<256x32xf32>
    %33 = arith.addf %27, %32 : vector<256x32xf32>
    %34 = vector.extract_strided_slice %21 {offsets = [0, 2, 0, 0], sizes = [1, 16, 16, 16], strides = [1, 1, 1, 1]} : vector<1x18x16x16xbf16> to vector<1x16x16x16xbf16>
    %35 = vector.shape_cast %34 : vector<1x16x16x16xbf16> to vector<256x16xbf16>
    %c7 = arith.constant 7 : index
    %c0_19 = arith.constant 0 : index
    %c0_20 = arith.constant 0 : index
    %36 = vector.load %arg2[%c7, %c0_19, %c0_20] : memref<9x16x32xbf16, #tpu.memory_space<vmem>>, vector<1x16x32xbf16>
    %37 = vector.shape_cast %36 : vector<1x16x32xbf16> to vector<16x32xbf16>
    %cst_21 = arith.constant dense<0.000000e+00> : vector<256x32xf32>
    %38 = tpu.matmul %35, %37, %cst_21 {dimension_numbers = #tpu.dot_dimension_numbers<[1], [0], [0], [1], [0, 0, 1, 1], [], []>} : vector<256x16xbf16>, vector<16x32xbf16>, vector<256x32xf32> -> vector<256x32xf32>
    %39 = arith.addf %33, %38 : vector<256x32xf32>
    %40 = vector.extract_strided_slice %0 {offsets = [0, 0, 2, 0], sizes = [1, 18, 16, 16], strides = [1, 1, 1, 1]} : vector<1x18x18x16xbf16> to vector<1x18x16x16xbf16>
    %41 = vector.extract_strided_slice %40 {offsets = [0, 0, 0, 0], sizes = [1, 16, 16, 16], strides = [1, 1, 1, 1]} : vector<1x18x16x16xbf16> to vector<1x16x16x16xbf16>
    %42 = vector.shape_cast %41 : vector<1x16x16x16xbf16> to vector<256x16xbf16>
    %c2 = arith.constant 2 : index
    %c0_22 = arith.constant 0 : index
    %c0_23 = arith.constant 0 : index
    %43 = vector.load %arg2[%c2, %c0_22, %c0_23] : memref<9x16x32xbf16, #tpu.memory_space<vmem>>, vector<1x16x32xbf16>
    %44 = vector.shape_cast %43 : vector<1x16x32xbf16> to vector<16x32xbf16>
    %cst_24 = arith.constant dense<0.000000e+00> : vector<256x32xf32>
    %45 = tpu.matmul %42, %44, %cst_24 {dimension_numbers = #tpu.dot_dimension_numbers<[1], [0], [0], [1], [0, 0, 1, 1], [], []>} : vector<256x16xbf16>, vector<16x32xbf16>, vector<256x32xf32> -> vector<256x32xf32>
    %46 = arith.addf %39, %45 : vector<256x32xf32>
    %47 = vector.extract_strided_slice %40 {offsets = [0, 1, 0, 0], sizes = [1, 16, 16, 16], strides = [1, 1, 1, 1]} : vector<1x18x16x16xbf16> to vector<1x16x16x16xbf16>
    %48 = vector.shape_cast %47 : vector<1x16x16x16xbf16> to vector<256x16xbf16>
    %c5 = arith.constant 5 : index
    %c0_25 = arith.constant 0 : index
    %c0_26 = arith.constant 0 : index
    %49 = vector.load %arg2[%c5, %c0_25, %c0_26] : memref<9x16x32xbf16, #tpu.memory_space<vmem>>, vector<1x16x32xbf16>
    %50 = vector.shape_cast %49 : vector<1x16x32xbf16> to vector<16x32xbf16>
    %cst_27 = arith.constant dense<0.000000e+00> : vector<256x32xf32>
    %51 = tpu.matmul %48, %50, %cst_27 {dimension_numbers = #tpu.dot_dimension_numbers<[1], [0], [0], [1], [0, 0, 1, 1], [], []>} : vector<256x16xbf16>, vector<16x32xbf16>, vector<256x32xf32> -> vector<256x32xf32>
    %52 = arith.addf %46, %51 : vector<256x32xf32>
    %53 = vector.extract_strided_slice %40 {offsets = [0, 2, 0, 0], sizes = [1, 16, 16, 16], strides = [1, 1, 1, 1]} : vector<1x18x16x16xbf16> to vector<1x16x16x16xbf16>
    %54 = vector.shape_cast %53 : vector<1x16x16x16xbf16> to vector<256x16xbf16>
    %c8 = arith.constant 8 : index
    %c0_28 = arith.constant 0 : index
    %c0_29 = arith.constant 0 : index
    %55 = vector.load %arg2[%c8, %c0_28, %c0_29] : memref<9x16x32xbf16, #tpu.memory_space<vmem>>, vector<1x16x32xbf16>
    %56 = vector.shape_cast %55 : vector<1x16x32xbf16> to vector<16x32xbf16>
    %cst_30 = arith.constant dense<0.000000e+00> : vector<256x32xf32>
    %57 = tpu.matmul %54, %56, %cst_30 {dimension_numbers = #tpu.dot_dimension_numbers<[1], [0], [0], [1], [0, 0, 1, 1], [], []>} : vector<256x16xbf16>, vector<16x32xbf16>, vector<256x32xf32> -> vector<256x32xf32>
    %58 = arith.addf %52, %57 : vector<256x32xf32>
    %c0_31 = arith.constant 0 : index
    %c0_32 = arith.constant 0 : index
    %59 = vector.load %arg3[%c0_31, %c0_32] : memref<1x32xf32, #tpu.memory_space<vmem>>, vector<1x32xf32>
    %60 = vector.broadcast %59 : vector<1x32xf32> to vector<256x32xf32>
    %61 = arith.addf %58, %60 : vector<256x32xf32>
    %cst_33 = arith.constant 0.000000e+00 : f32
    %62 = vector.broadcast %cst_33 : f32 to vector<256x32xf32>
    %63 = arith.maximumf %61, %62 : vector<256x32xf32>
    %64 = vector.shape_cast %63 : vector<256x32xf32> to vector<8x32x32xf32>
    %65 = vector.extract_strided_slice %64 {offsets = [0, 0, 0], sizes = [8, 16, 32], strides = [1, 1, 1]} : vector<8x32x32xf32> to vector<8x16x32xf32>
    %66 = vector.extract_strided_slice %64 {offsets = [0, 16, 0], sizes = [8, 16, 32], strides = [1, 1, 1]} : vector<8x32x32xf32> to vector<8x16x32xf32>
    %67 = arith.maximumf %65, %66 : vector<8x16x32xf32>
    %c0_34 = arith.constant 0 : index
    %c0_35 = arith.constant 0 : index
    %c0_36 = arith.constant 0 : index
    %68 = vector.load %arg5[%c0_34, %c0_35, %c0_36] : memref<8x16x32xf32, #tpu.memory_space<vmem>>, vector<8x16x32xf32>
    tpu.vector_store %arg5[%c0_34, %c0_35, %c0_36], %67 {strides = array<i32>} : memref<8x16x32xf32, #tpu.memory_space<vmem>>, vector<8x16x32xf32>,
    %c0_37 = arith.constant 0 : index
    %c0_38 = arith.constant 0 : index
    %c0_39 = arith.constant 0 : index
    %69 = tpu.strided_load %arg5[%c0_37, %c0_38, %c0_39] {strides = array<i32: 1, 2, 1>} : memref<8x16x32xf32, #tpu.memory_space<vmem>>, vector<8x8x32xf32>
    %c0_40 = arith.constant 0 : index
    %c1_41 = arith.constant 1 : index
    %c0_42 = arith.constant 0 : index
    %70 = tpu.strided_load %arg5[%c0_40, %c1_41, %c0_42] {strides = array<i32: 1, 2, 1>} : memref<8x16x32xf32, #tpu.memory_space<vmem>>, vector<8x8x32xf32>
    %71 = arith.maximumf %69, %70 : vector<8x8x32xf32>
    %72 = vector.shape_cast %71 : vector<8x8x32xf32> to vector<1x8x8x32xf32>
    %73 = arith.truncf %72 : vector<1x8x8x32xf32> to vector<1x8x8x32xbf16>
    %c0_43 = arith.constant 0 : index
    %c0_44 = arith.constant 0 : index
    %c0_45 = arith.constant 0 : index
    %c0_46 = arith.constant 0 : index
    %74 = vector.load %arg4[%c0_43, %c0_44, %c0_45, %c0_46] : memref<1x8x8x32xbf16, #tpu.memory_space<vmem>>, vector<1x8x8x32xbf16>
    tpu.vector_store %arg4[%c0_43, %c0_44, %c0_45, %c0_46], %73 {strides = array<i32>} : memref<1x8x8x32xbf16, #tpu.memory_space<vmem>>, vector<1x8x8x32xbf16>,
    return
  }
  func.func @transform_0(%arg0: i32) -> (i32, i32, i32, i32) {
    %c0_i32 = arith.constant 0 : i32
    %c0_i32_0 = arith.constant 0 : i32
    %c0_i32_1 = arith.constant 0 : i32
    %c0_i32_2 = arith.constant 0 : i32
    return %arg0, %c0_i32, %c0_i32_0, %c0_i32_1 : i32, i32, i32, i32
  }
  func.func @transform_1(%arg0: i32) -> (i32, i32, i32) {
    %c0_i32 = arith.constant 0 : i32
    %c0_i32_0 = arith.constant 0 : i32
    %c0_i32_1 = arith.constant 0 : i32
    %c0_i32_2 = arith.constant 0 : i32
    return %c0_i32, %c0_i32_0, %c0_i32_1 : i32, i32, i32
  }
  func.func @transform_2(%arg0: i32) -> (i32, i32) {
    %c0_i32 = arith.constant 0 : i32
    %c0_i32_0 = arith.constant 0 : i32
    %c0_i32_1 = arith.constant 0 : i32
    return %c0_i32, %c0_i32_0 : i32, i32
  }
  func.func @transform_3(%arg0: i32) -> (i32, i32, i32, i32) {
    %c0_i32 = arith.constant 0 : i32
    %c0_i32_0 = arith.constant 0 : i32
    %c0_i32_1 = arith.constant 0 : i32
    %c0_i32_2 = arith.constant 0 : i32
    return %arg0, %c0_i32, %c0_i32_0, %c0_i32_1 : i32, i32, i32, i32
  }
}

module attributes {stable_mosaic.version = 11 : i64} {
  func.func @kernel(%arg0: i32, %arg1: memref<1x10x10x32xbf16, #tpu.memory_space<vmem>>, %arg2: memref<9x32x64xbf16, #tpu.memory_space<vmem>>, %arg3: memref<1x64xf32, #tpu.memory_space<vmem>>, %arg4: memref<1x4x4x64xbf16, #tpu.memory_space<vmem>>, %arg5: memref<4x8x64xf32, #tpu.memory_space<vmem>>) attributes {dimension_semantics = [#tpu.dimension_semantics<parallel>], iteration_bounds = array<i64: 2>, scalar_prefetch = 0 : i64, scratch_operands = 1 : i64, tpu.core_type = #tpu.core_type<tc>, window_params = [{transform_indices = @transform_0, window_bounds = array<i64: 1, 10, 10, 32>}, {pipeline_mode = #tpu.pipeline_mode<synchronous>, transform_indices = @transform_1, window_bounds = array<i64: 9, 32, 64>}, {pipeline_mode = #tpu.pipeline_mode<synchronous>, transform_indices = @transform_2, window_bounds = array<i64: 1, 64>}, {transform_indices = @transform_3, window_bounds = array<i64: 1, 4, 4, 64>}]} {
    %c0 = arith.constant 0 : index
    %c0_0 = arith.constant 0 : index
    %c0_1 = arith.constant 0 : index
    %c0_2 = arith.constant 0 : index
    %0 = vector.load %arg1[%c0, %c0_0, %c0_1, %c0_2] : memref<1x10x10x32xbf16, #tpu.memory_space<vmem>>, vector<1x10x10x32xbf16>
    %cst = arith.constant 0.000000e+00 : f32
    %1 = vector.broadcast %cst : f32 to vector<64x64xf32>
    %2 = vector.extract_strided_slice %0 {offsets = [0, 0, 0, 0], sizes = [1, 10, 8, 32], strides = [1, 1, 1, 1]} : vector<1x10x10x32xbf16> to vector<1x10x8x32xbf16>
    %3 = vector.extract_strided_slice %2 {offsets = [0, 0, 0, 0], sizes = [1, 8, 8, 32], strides = [1, 1, 1, 1]} : vector<1x10x8x32xbf16> to vector<1x8x8x32xbf16>
    %4 = vector.shape_cast %3 : vector<1x8x8x32xbf16> to vector<64x32xbf16>
    %c0_3 = arith.constant 0 : index
    %c0_4 = arith.constant 0 : index
    %c0_5 = arith.constant 0 : index
    %5 = vector.load %arg2[%c0_3, %c0_4, %c0_5] : memref<9x32x64xbf16, #tpu.memory_space<vmem>>, vector<1x32x64xbf16>
    %6 = vector.shape_cast %5 : vector<1x32x64xbf16> to vector<32x64xbf16>
    %cst_6 = arith.constant dense<0.000000e+00> : vector<64x64xf32>
    %7 = tpu.matmul %4, %6, %cst_6 {dimension_numbers = #tpu.dot_dimension_numbers<[1], [0], [0], [1], [0, 0, 1, 1], [], []>} : vector<64x32xbf16>, vector<32x64xbf16>, vector<64x64xf32> -> vector<64x64xf32>
    %8 = arith.addf %1, %7 : vector<64x64xf32>
    %9 = vector.extract_strided_slice %2 {offsets = [0, 1, 0, 0], sizes = [1, 8, 8, 32], strides = [1, 1, 1, 1]} : vector<1x10x8x32xbf16> to vector<1x8x8x32xbf16>
    %10 = vector.shape_cast %9 : vector<1x8x8x32xbf16> to vector<64x32xbf16>
    %c3 = arith.constant 3 : index
    %c0_7 = arith.constant 0 : index
    %c0_8 = arith.constant 0 : index
    %11 = vector.load %arg2[%c3, %c0_7, %c0_8] : memref<9x32x64xbf16, #tpu.memory_space<vmem>>, vector<1x32x64xbf16>
    %12 = vector.shape_cast %11 : vector<1x32x64xbf16> to vector<32x64xbf16>
    %cst_9 = arith.constant dense<0.000000e+00> : vector<64x64xf32>
    %13 = tpu.matmul %10, %12, %cst_9 {dimension_numbers = #tpu.dot_dimension_numbers<[1], [0], [0], [1], [0, 0, 1, 1], [], []>} : vector<64x32xbf16>, vector<32x64xbf16>, vector<64x64xf32> -> vector<64x64xf32>
    %14 = arith.addf %8, %13 : vector<64x64xf32>
    %15 = vector.extract_strided_slice %2 {offsets = [0, 2, 0, 0], sizes = [1, 8, 8, 32], strides = [1, 1, 1, 1]} : vector<1x10x8x32xbf16> to vector<1x8x8x32xbf16>
    %16 = vector.shape_cast %15 : vector<1x8x8x32xbf16> to vector<64x32xbf16>
    %c6 = arith.constant 6 : index
    %c0_10 = arith.constant 0 : index
    %c0_11 = arith.constant 0 : index
    %17 = vector.load %arg2[%c6, %c0_10, %c0_11] : memref<9x32x64xbf16, #tpu.memory_space<vmem>>, vector<1x32x64xbf16>
    %18 = vector.shape_cast %17 : vector<1x32x64xbf16> to vector<32x64xbf16>
    %cst_12 = arith.constant dense<0.000000e+00> : vector<64x64xf32>
    %19 = tpu.matmul %16, %18, %cst_12 {dimension_numbers = #tpu.dot_dimension_numbers<[1], [0], [0], [1], [0, 0, 1, 1], [], []>} : vector<64x32xbf16>, vector<32x64xbf16>, vector<64x64xf32> -> vector<64x64xf32>
    %20 = arith.addf %14, %19 : vector<64x64xf32>
    %21 = vector.extract_strided_slice %0 {offsets = [0, 0, 1, 0], sizes = [1, 10, 8, 32], strides = [1, 1, 1, 1]} : vector<1x10x10x32xbf16> to vector<1x10x8x32xbf16>
    %22 = vector.extract_strided_slice %21 {offsets = [0, 0, 0, 0], sizes = [1, 8, 8, 32], strides = [1, 1, 1, 1]} : vector<1x10x8x32xbf16> to vector<1x8x8x32xbf16>
    %23 = vector.shape_cast %22 : vector<1x8x8x32xbf16> to vector<64x32xbf16>
    %c1 = arith.constant 1 : index
    %c0_13 = arith.constant 0 : index
    %c0_14 = arith.constant 0 : index
    %24 = vector.load %arg2[%c1, %c0_13, %c0_14] : memref<9x32x64xbf16, #tpu.memory_space<vmem>>, vector<1x32x64xbf16>
    %25 = vector.shape_cast %24 : vector<1x32x64xbf16> to vector<32x64xbf16>
    %cst_15 = arith.constant dense<0.000000e+00> : vector<64x64xf32>
    %26 = tpu.matmul %23, %25, %cst_15 {dimension_numbers = #tpu.dot_dimension_numbers<[1], [0], [0], [1], [0, 0, 1, 1], [], []>} : vector<64x32xbf16>, vector<32x64xbf16>, vector<64x64xf32> -> vector<64x64xf32>
    %27 = arith.addf %20, %26 : vector<64x64xf32>
    %28 = vector.extract_strided_slice %21 {offsets = [0, 1, 0, 0], sizes = [1, 8, 8, 32], strides = [1, 1, 1, 1]} : vector<1x10x8x32xbf16> to vector<1x8x8x32xbf16>
    %29 = vector.shape_cast %28 : vector<1x8x8x32xbf16> to vector<64x32xbf16>
    %c4 = arith.constant 4 : index
    %c0_16 = arith.constant 0 : index
    %c0_17 = arith.constant 0 : index
    %30 = vector.load %arg2[%c4, %c0_16, %c0_17] : memref<9x32x64xbf16, #tpu.memory_space<vmem>>, vector<1x32x64xbf16>
    %31 = vector.shape_cast %30 : vector<1x32x64xbf16> to vector<32x64xbf16>
    %cst_18 = arith.constant dense<0.000000e+00> : vector<64x64xf32>
    %32 = tpu.matmul %29, %31, %cst_18 {dimension_numbers = #tpu.dot_dimension_numbers<[1], [0], [0], [1], [0, 0, 1, 1], [], []>} : vector<64x32xbf16>, vector<32x64xbf16>, vector<64x64xf32> -> vector<64x64xf32>
    %33 = arith.addf %27, %32 : vector<64x64xf32>
    %34 = vector.extract_strided_slice %21 {offsets = [0, 2, 0, 0], sizes = [1, 8, 8, 32], strides = [1, 1, 1, 1]} : vector<1x10x8x32xbf16> to vector<1x8x8x32xbf16>
    %35 = vector.shape_cast %34 : vector<1x8x8x32xbf16> to vector<64x32xbf16>
    %c7 = arith.constant 7 : index
    %c0_19 = arith.constant 0 : index
    %c0_20 = arith.constant 0 : index
    %36 = vector.load %arg2[%c7, %c0_19, %c0_20] : memref<9x32x64xbf16, #tpu.memory_space<vmem>>, vector<1x32x64xbf16>
    %37 = vector.shape_cast %36 : vector<1x32x64xbf16> to vector<32x64xbf16>
    %cst_21 = arith.constant dense<0.000000e+00> : vector<64x64xf32>
    %38 = tpu.matmul %35, %37, %cst_21 {dimension_numbers = #tpu.dot_dimension_numbers<[1], [0], [0], [1], [0, 0, 1, 1], [], []>} : vector<64x32xbf16>, vector<32x64xbf16>, vector<64x64xf32> -> vector<64x64xf32>
    %39 = arith.addf %33, %38 : vector<64x64xf32>
    %40 = vector.extract_strided_slice %0 {offsets = [0, 0, 2, 0], sizes = [1, 10, 8, 32], strides = [1, 1, 1, 1]} : vector<1x10x10x32xbf16> to vector<1x10x8x32xbf16>
    %41 = vector.extract_strided_slice %40 {offsets = [0, 0, 0, 0], sizes = [1, 8, 8, 32], strides = [1, 1, 1, 1]} : vector<1x10x8x32xbf16> to vector<1x8x8x32xbf16>
    %42 = vector.shape_cast %41 : vector<1x8x8x32xbf16> to vector<64x32xbf16>
    %c2 = arith.constant 2 : index
    %c0_22 = arith.constant 0 : index
    %c0_23 = arith.constant 0 : index
    %43 = vector.load %arg2[%c2, %c0_22, %c0_23] : memref<9x32x64xbf16, #tpu.memory_space<vmem>>, vector<1x32x64xbf16>
    %44 = vector.shape_cast %43 : vector<1x32x64xbf16> to vector<32x64xbf16>
    %cst_24 = arith.constant dense<0.000000e+00> : vector<64x64xf32>
    %45 = tpu.matmul %42, %44, %cst_24 {dimension_numbers = #tpu.dot_dimension_numbers<[1], [0], [0], [1], [0, 0, 1, 1], [], []>} : vector<64x32xbf16>, vector<32x64xbf16>, vector<64x64xf32> -> vector<64x64xf32>
    %46 = arith.addf %39, %45 : vector<64x64xf32>
    %47 = vector.extract_strided_slice %40 {offsets = [0, 1, 0, 0], sizes = [1, 8, 8, 32], strides = [1, 1, 1, 1]} : vector<1x10x8x32xbf16> to vector<1x8x8x32xbf16>
    %48 = vector.shape_cast %47 : vector<1x8x8x32xbf16> to vector<64x32xbf16>
    %c5 = arith.constant 5 : index
    %c0_25 = arith.constant 0 : index
    %c0_26 = arith.constant 0 : index
    %49 = vector.load %arg2[%c5, %c0_25, %c0_26] : memref<9x32x64xbf16, #tpu.memory_space<vmem>>, vector<1x32x64xbf16>
    %50 = vector.shape_cast %49 : vector<1x32x64xbf16> to vector<32x64xbf16>
    %cst_27 = arith.constant dense<0.000000e+00> : vector<64x64xf32>
    %51 = tpu.matmul %48, %50, %cst_27 {dimension_numbers = #tpu.dot_dimension_numbers<[1], [0], [0], [1], [0, 0, 1, 1], [], []>} : vector<64x32xbf16>, vector<32x64xbf16>, vector<64x64xf32> -> vector<64x64xf32>
    %52 = arith.addf %46, %51 : vector<64x64xf32>
    %53 = vector.extract_strided_slice %40 {offsets = [0, 2, 0, 0], sizes = [1, 8, 8, 32], strides = [1, 1, 1, 1]} : vector<1x10x8x32xbf16> to vector<1x8x8x32xbf16>
    %54 = vector.shape_cast %53 : vector<1x8x8x32xbf16> to vector<64x32xbf16>
    %c8 = arith.constant 8 : index
    %c0_28 = arith.constant 0 : index
    %c0_29 = arith.constant 0 : index
    %55 = vector.load %arg2[%c8, %c0_28, %c0_29] : memref<9x32x64xbf16, #tpu.memory_space<vmem>>, vector<1x32x64xbf16>
    %56 = vector.shape_cast %55 : vector<1x32x64xbf16> to vector<32x64xbf16>
    %cst_30 = arith.constant dense<0.000000e+00> : vector<64x64xf32>
    %57 = tpu.matmul %54, %56, %cst_30 {dimension_numbers = #tpu.dot_dimension_numbers<[1], [0], [0], [1], [0, 0, 1, 1], [], []>} : vector<64x32xbf16>, vector<32x64xbf16>, vector<64x64xf32> -> vector<64x64xf32>
    %58 = arith.addf %52, %57 : vector<64x64xf32>
    %c0_31 = arith.constant 0 : index
    %c0_32 = arith.constant 0 : index
    %59 = vector.load %arg3[%c0_31, %c0_32] : memref<1x64xf32, #tpu.memory_space<vmem>>, vector<1x64xf32>
    %60 = vector.broadcast %59 : vector<1x64xf32> to vector<64x64xf32>
    %61 = arith.addf %58, %60 : vector<64x64xf32>
    %cst_33 = arith.constant 0.000000e+00 : f32
    %62 = vector.broadcast %cst_33 : f32 to vector<64x64xf32>
    %63 = arith.maximumf %61, %62 : vector<64x64xf32>
    %64 = vector.shape_cast %63 : vector<64x64xf32> to vector<4x16x64xf32>
    %65 = vector.extract_strided_slice %64 {offsets = [0, 0, 0], sizes = [4, 8, 64], strides = [1, 1, 1]} : vector<4x16x64xf32> to vector<4x8x64xf32>
    %66 = vector.extract_strided_slice %64 {offsets = [0, 8, 0], sizes = [4, 8, 64], strides = [1, 1, 1]} : vector<4x16x64xf32> to vector<4x8x64xf32>
    %67 = arith.maximumf %65, %66 : vector<4x8x64xf32>
    %c0_34 = arith.constant 0 : index
    %c0_35 = arith.constant 0 : index
    %c0_36 = arith.constant 0 : index
    %68 = vector.load %arg5[%c0_34, %c0_35, %c0_36] : memref<4x8x64xf32, #tpu.memory_space<vmem>>, vector<4x8x64xf32>
    tpu.vector_store %arg5[%c0_34, %c0_35, %c0_36], %67 {strides = array<i32>} : memref<4x8x64xf32, #tpu.memory_space<vmem>>, vector<4x8x64xf32>,
    %c0_37 = arith.constant 0 : index
    %c0_38 = arith.constant 0 : index
    %c0_39 = arith.constant 0 : index
    %69 = tpu.strided_load %arg5[%c0_37, %c0_38, %c0_39] {strides = array<i32: 1, 2, 1>} : memref<4x8x64xf32, #tpu.memory_space<vmem>>, vector<4x4x64xf32>
    %c0_40 = arith.constant 0 : index
    %c1_41 = arith.constant 1 : index
    %c0_42 = arith.constant 0 : index
    %70 = tpu.strided_load %arg5[%c0_40, %c1_41, %c0_42] {strides = array<i32: 1, 2, 1>} : memref<4x8x64xf32, #tpu.memory_space<vmem>>, vector<4x4x64xf32>
    %71 = arith.maximumf %69, %70 : vector<4x4x64xf32>
    %72 = vector.shape_cast %71 : vector<4x4x64xf32> to vector<1x4x4x64xf32>
    %73 = arith.truncf %72 : vector<1x4x4x64xf32> to vector<1x4x4x64xbf16>
    %c0_43 = arith.constant 0 : index
    %c0_44 = arith.constant 0 : index
    %c0_45 = arith.constant 0 : index
    %c0_46 = arith.constant 0 : index
    %74 = vector.load %arg4[%c0_43, %c0_44, %c0_45, %c0_46] : memref<1x4x4x64xbf16, #tpu.memory_space<vmem>>, vector<1x4x4x64xbf16>
    tpu.vector_store %arg4[%c0_43, %c0_44, %c0_45, %c0_46], %73 {strides = array<i32>} : memref<1x4x4x64xbf16, #tpu.memory_space<vmem>>, vector<1x4x4x64xbf16>,
    return
  }
  func.func @transform_0(%arg0: i32) -> (i32, i32, i32, i32) {
    %c0_i32 = arith.constant 0 : i32
    %c0_i32_0 = arith.constant 0 : i32
    %c0_i32_1 = arith.constant 0 : i32
    %c0_i32_2 = arith.constant 0 : i32
    return %arg0, %c0_i32, %c0_i32_0, %c0_i32_1 : i32, i32, i32, i32
  }
  func.func @transform_1(%arg0: i32) -> (i32, i32, i32) {
    %c0_i32 = arith.constant 0 : i32
    %c0_i32_0 = arith.constant 0 : i32
    %c0_i32_1 = arith.constant 0 : i32
    %c0_i32_2 = arith.constant 0 : i32
    return %c0_i32, %c0_i32_0, %c0_i32_1 : i32, i32, i32
  }
  func.func @transform_2(%arg0: i32) -> (i32, i32) {
    %c0_i32 = arith.constant 0 : i32
    %c0_i32_0 = arith.constant 0 : i32
    %c0_i32_1 = arith.constant 0 : i32
    return %c0_i32, %c0_i32_0 : i32, i32
  }
  func.func @transform_3(%arg0: i32) -> (i32, i32, i32, i32) {
    %c0_i32 = arith.constant 0 : i32
    %c0_i32_0 = arith.constant 0 : i32
    %c0_i32_1 = arith.constant 0 : i32
    %c0_i32_2 = arith.constant 0 : i32
    return %arg0, %c0_i32, %c0_i32_0, %c0_i32_1 : i32, i32, i32, i32
  }
}

module attributes {stable_mosaic.version = 11 : i64} {
  func.func @kernel(%arg0: i32, %arg1: memref<16x576xbf16, #tpu.memory_space<vmem>>, %arg2: memref<576x128xbf16, #tpu.memory_space<vmem>>, %arg3: memref<1x128xf32, #tpu.memory_space<vmem>>, %arg4: memref<2x2x128xbf16, #tpu.memory_space<vmem>>, %arg5: memref<2x4x128xf32, #tpu.memory_space<vmem>>) attributes {dimension_semantics = [#tpu.dimension_semantics<parallel>], iteration_bounds = array<i64: 2>, scalar_prefetch = 0 : i64, scratch_operands = 1 : i64, tpu.core_type = #tpu.core_type<tc>, window_params = [{transform_indices = @transform_0, window_bounds = array<i64: 16, 576>}, {pipeline_mode = #tpu.pipeline_mode<synchronous>, transform_indices = @transform_1, window_bounds = array<i64: 576, 128>}, {pipeline_mode = #tpu.pipeline_mode<synchronous>, transform_indices = @transform_2, window_bounds = array<i64: 1, 128>}, {transform_indices = @transform_3, window_bounds = array<i64: 2, 2, 128>}]} {
    %c0 = arith.constant 0 : index
    %c0_0 = arith.constant 0 : index
    %0 = vector.load %arg1[%c0, %c0_0] : memref<16x576xbf16, #tpu.memory_space<vmem>>, vector<16x576xbf16>
    %c0_1 = arith.constant 0 : index
    %c0_2 = arith.constant 0 : index
    %1 = vector.load %arg2[%c0_1, %c0_2] : memref<576x128xbf16, #tpu.memory_space<vmem>>, vector<576x128xbf16>
    %cst = arith.constant dense<0.000000e+00> : vector<16x128xf32>
    %2 = tpu.matmul %0, %1, %cst {dimension_numbers = #tpu.dot_dimension_numbers<[1], [0], [0], [1], [0, 0, 1, 1], [], []>} : vector<16x576xbf16>, vector<576x128xbf16>, vector<16x128xf32> -> vector<16x128xf32>
    %c0_3 = arith.constant 0 : index
    %c0_4 = arith.constant 0 : index
    %3 = vector.load %arg3[%c0_3, %c0_4] : memref<1x128xf32, #tpu.memory_space<vmem>>, vector<1x128xf32>
    %4 = vector.broadcast %3 : vector<1x128xf32> to vector<16x128xf32>
    %5 = arith.addf %2, %4 : vector<16x128xf32>
    %cst_5 = arith.constant 0.000000e+00 : f32
    %6 = vector.broadcast %cst_5 : f32 to vector<16x128xf32>
    %7 = arith.maximumf %5, %6 : vector<16x128xf32>
    %8 = vector.shape_cast %7 : vector<16x128xf32> to vector<2x8x128xf32>
    %9 = vector.extract_strided_slice %8 {offsets = [0, 0, 0], sizes = [2, 4, 128], strides = [1, 1, 1]} : vector<2x8x128xf32> to vector<2x4x128xf32>
    %10 = vector.extract_strided_slice %8 {offsets = [0, 4, 0], sizes = [2, 4, 128], strides = [1, 1, 1]} : vector<2x8x128xf32> to vector<2x4x128xf32>
    %11 = arith.maximumf %9, %10 : vector<2x4x128xf32>
    %c0_6 = arith.constant 0 : index
    %c0_7 = arith.constant 0 : index
    %c0_8 = arith.constant 0 : index
    %12 = vector.load %arg5[%c0_6, %c0_7, %c0_8] : memref<2x4x128xf32, #tpu.memory_space<vmem>>, vector<2x4x128xf32>
    tpu.vector_store %arg5[%c0_6, %c0_7, %c0_8], %11 {strides = array<i32>} : memref<2x4x128xf32, #tpu.memory_space<vmem>>, vector<2x4x128xf32>,
    %c0_9 = arith.constant 0 : index
    %c0_10 = arith.constant 0 : index
    %c0_11 = arith.constant 0 : index
    %13 = tpu.strided_load %arg5[%c0_9, %c0_10, %c0_11] {strides = array<i32: 1, 2, 1>} : memref<2x4x128xf32, #tpu.memory_space<vmem>>, vector<2x2x128xf32>
    %c0_12 = arith.constant 0 : index
    %c1 = arith.constant 1 : index
    %c0_13 = arith.constant 0 : index
    %14 = tpu.strided_load %arg5[%c0_12, %c1, %c0_13] {strides = array<i32: 1, 2, 1>} : memref<2x4x128xf32, #tpu.memory_space<vmem>>, vector<2x2x128xf32>
    %15 = arith.maximumf %13, %14 : vector<2x2x128xf32>
    %16 = arith.truncf %15 : vector<2x2x128xf32> to vector<2x2x128xbf16>
    %c0_14 = arith.constant 0 : index
    %c0_15 = arith.constant 0 : index
    %c0_16 = arith.constant 0 : index
    %17 = vector.load %arg4[%c0_14, %c0_15, %c0_16] : memref<2x2x128xbf16, #tpu.memory_space<vmem>>, vector<2x2x128xbf16>
    tpu.vector_store %arg4[%c0_14, %c0_15, %c0_16], %16 {strides = array<i32>} : memref<2x2x128xbf16, #tpu.memory_space<vmem>>, vector<2x2x128xbf16>,
    return
  }
  func.func @transform_0(%arg0: i32) -> (i32, i32) {
    %c0_i32 = arith.constant 0 : i32
    %c0_i32_0 = arith.constant 0 : i32
    return %arg0, %c0_i32 : i32, i32
  }
  func.func @transform_1(%arg0: i32) -> (i32, i32) {
    %c0_i32 = arith.constant 0 : i32
    %c0_i32_0 = arith.constant 0 : i32
    %c0_i32_1 = arith.constant 0 : i32
    return %c0_i32, %c0_i32_0 : i32, i32
  }
  func.func @transform_2(%arg0: i32) -> (i32, i32) {
    %c0_i32 = arith.constant 0 : i32
    %c0_i32_0 = arith.constant 0 : i32
    %c0_i32_1 = arith.constant 0 : i32
    return %c0_i32, %c0_i32_0 : i32, i32
  }
  func.func @transform_3(%arg0: i32) -> (i32, i32, i32) {
    %c0_i32 = arith.constant 0 : i32
    %c0_i32_0 = arith.constant 0 : i32
    %c0_i32_1 = arith.constant 0 : i32
    return %arg0, %c0_i32, %c0_i32_0 : i32, i32, i32
  }
}

module attributes {stable_mosaic.version = 11 : i64} {
  func.func @mlp_kernel(%arg0: memref<2x512xbf16, #tpu.memory_space<vmem>>, %arg1: memref<512x32xbf16, #tpu.memory_space<vmem>>, %arg2: memref<1x32xf32, #tpu.memory_space<vmem>>, %arg3: memref<32x10xbf16, #tpu.memory_space<vmem>>, %arg4: memref<1x10xf32, #tpu.memory_space<vmem>>, %arg5: memref<2x10xf32, #tpu.memory_space<vmem>>) attributes {dimension_semantics = [], scalar_prefetch = 0 : i64, scratch_operands = 0 : i64, tpu.core_type = #tpu.core_type<tc>} {
    %c0 = arith.constant 0 : index
    %c0_0 = arith.constant 0 : index
    %0 = vector.load %arg0[%c0, %c0_0] : memref<2x512xbf16, #tpu.memory_space<vmem>>, vector<2x512xbf16>
    %c0_1 = arith.constant 0 : index
    %c0_2 = arith.constant 0 : index
    %1 = vector.load %arg1[%c0_1, %c0_2] : memref<512x32xbf16, #tpu.memory_space<vmem>>, vector<512x32xbf16>
    %cst = arith.constant dense<0.000000e+00> : vector<2x32xf32>
    %2 = tpu.matmul %0, %1, %cst {dimension_numbers = #tpu.dot_dimension_numbers<[1], [0], [0], [1], [0, 0, 1, 1], [], []>} : vector<2x512xbf16>, vector<512x32xbf16>, vector<2x32xf32> -> vector<2x32xf32>
    %c0_3 = arith.constant 0 : index
    %c0_4 = arith.constant 0 : index
    %3 = vector.load %arg2[%c0_3, %c0_4] : memref<1x32xf32, #tpu.memory_space<vmem>>, vector<1x32xf32>
    %4 = vector.broadcast %3 : vector<1x32xf32> to vector<2x32xf32>
    %5 = arith.addf %2, %4 : vector<2x32xf32>
    %cst_5 = arith.constant 0.000000e+00 : f32
    %6 = vector.broadcast %cst_5 : f32 to vector<2x32xf32>
    %7 = arith.maximumf %5, %6 : vector<2x32xf32>
    %8 = arith.truncf %7 : vector<2x32xf32> to vector<2x32xbf16>
    %c0_6 = arith.constant 0 : index
    %c0_7 = arith.constant 0 : index
    %9 = vector.load %arg3[%c0_6, %c0_7] : memref<32x10xbf16, #tpu.memory_space<vmem>>, vector<32x10xbf16>
    %cst_8 = arith.constant dense<0.000000e+00> : vector<2x10xf32>
    %10 = tpu.matmul %8, %9, %cst_8 {dimension_numbers = #tpu.dot_dimension_numbers<[1], [0], [0], [1], [0, 0, 1, 1], [], []>} : vector<2x32xbf16>, vector<32x10xbf16>, vector<2x10xf32> -> vector<2x10xf32>
    %c0_9 = arith.constant 0 : index
    %c0_10 = arith.constant 0 : index
    %11 = vector.load %arg4[%c0_9, %c0_10] : memref<1x10xf32, #tpu.memory_space<vmem>>, vector<1x10xf32>
    %12 = vector.broadcast %11 : vector<1x10xf32> to vector<2x10xf32>
    %13 = arith.addf %10, %12 : vector<2x10xf32>
    %c0_11 = arith.constant 0 : index
    %c0_12 = arith.constant 0 : index
    %14 = vector.load %arg5[%c0_11, %c0_12] : memref<2x10xf32, #tpu.memory_space<vmem>>, vector<2x10xf32>
    tpu.vector_store %arg5[%c0_11, %c0_12], %13 {strides = array<i32>} : memref<2x10xf32, #tpu.memory_space<vmem>>, vector<2x10xf32>,
    return
  }
}

</mosaic_0001>

<llo_original>
// kernel: cnn_forward.7
$region0: #{cnn_forward.7}
  #allocation0 [shape = 'u32[]', space=smem, size = 0x4, offset = 0x4, fixed_abs, tag = 'smem constant byte address 0x4 - core index']
  #allocation1 [shape = 'u32[72,128]{1,0:T(1,128)}', space=vmem, size = 0x9000, scoped, tag = 'internal scratch']
  #allocation2 [shape = 'f32[4,8,64]{2,1,0:T(8,128)}', space=vmem, size = 0x4000, scoped, tag = 'scratch operand']
  %s0 = inlined_call_operand.vmem [shape: bf16[2,10,10,32], index: 0, kind: input, shape index: {}]
  %s1 = inlined_call_operand.vmem [shape: bf16[9,32,64], index: 1, kind: input, shape index: {}]
  %s2 = inlined_call_operand.vmem [shape: f32[1,64], index: 2, kind: input, shape index: {}]
  %s3 = inlined_call_operand.vmem [shape: bf16[2,4,4,64], index: 3, kind: output, shape index: {}]
  %s4 = sld [smem:[#allocation0]]
  $region45: #{cnn_forward.7} parent=0
    _
  %s6 = ssub.s32 1, %s4
  %s7 = scalar_select 0, %s6, %s4
  loop: start=0, step=1, limit=4
  $region2: #{cnn_forward.7} parent=0 // loop_pre_header
    _
  $region3: #{cnn_forward.7} parent=0 // loop_header
    %s9 = sphi 0, %s13
    %p10 = scmp.ge.s32.totalorder %s9, 4
    %s19 = sphi 0, %s21
    %s22 = sphi 0, %s19
    %s23 = sphi 0, %s22
    %s39 = sphi 0, %s23
    %s43 = sphi 0, %s43
    %s45 = sphi 0, %s43
    %s46 = sphi 0, %s45
    %s60 = sphi 0, %s46
    %s64 = sphi 0, %s64
    %s66 = sphi 0, %s64
    %s67 = sphi 0, %s66
    %s81 = sphi 0, %s67
    %s87 = sphi 0, %s89
    %s90 = sphi 0, %s87
    %s91 = sphi 0, %s90
    %s107 = sphi 0, %s91
  $region4: #{cnn_forward.7} parent=0 // loop_header_branch
    %12 = sbr.rel (%p10) target = $region8
  $region5: #{cnn_forward.7} parent=0 // loop_body
    %s14 = ssub.s32 %s9, 1
    %s15 = ssub.s32 %s9, 2
    %s16 = sadd.s32 %s9, 1
    %s17 = ssub.s32 %s9, %s16
    %p18 = scmp.eq.s32.totalorder %s17, 0
    %s20 = sadd.s32 %s19, 1
    %s21 = scalar_select %p18, %s19, %s20
    %p24 = pneg %p18
    %p25 = scmp.eq.s32.totalorder %s9, 1
    %p26 = por %p24, %p25
    %p27 = scmp.ne.s32.totalorder %s19, %s22
    %p28 = scmp.eq.s32.totalorder %s9, 0
    %p29 = por %p27, %p28
    %p30 = scmp.ne.s32.totalorder %s19, %s22
    %p31 = scmp.eq.s32.totalorder %s14, 1
    %p32 = por %p30, %p31
    %p33 = scmp.ne.s32.totalorder %s22, %s23
    %p34 = scmp.eq.s32.totalorder %s14, 0
    %p35 = por %p33, %p34
    %p36 = scmp.ne.s32.totalorder %s22, %s23
    %p37 = scmp.eq.s32.totalorder %s15, 1
    %p38 = por %p36, %p37
    %p40 = scmp.ne.s32.totalorder %s23, %s39
    %p41 = scmp.eq.s32.totalorder %s15, 0
    %p42 = por %p40, %p41
    %s44 = sadd.s32 %s43, 1
    %p47 = scmp.eq.s32.totalorder %s9, 1
    %p48 = scmp.ne.s32.totalorder %s43, %s45
    %p49 = scmp.eq.s32.totalorder %s9, 0
    %p50 = por %p48, %p49
    %p51 = scmp.ne.s32.totalorder %s43, %s45
    %p52 = scmp.eq.s32.totalorder %s14, 1
    %p53 = por %p51, %p52
    %p54 = scmp.ne.s32.totalorder %s45, %s46
    %p55 = scmp.eq.s32.totalorder %s14, 0
    %p56 = por %p54, %p55
    %p57 = scmp.ne.s32.totalorder %s45, %s46
    %p58 = scmp.eq.s32.totalorder %s15, 1
    %p59 = por %p57, %p58
    %p61 = scmp.ne.s32.totalorder %s46, %s60
    %p62 = scmp.eq.s32.totalorder %s15, 0
    %p63 = por %p61, %p62
    %s65 = sadd.s32 %s64, 1
    %p68 = scmp.eq.s32.totalorder %s9, 1
    %p69 = scmp.ne.s32.totalorder %s64, %s66
    %p70 = scmp.eq.s32.totalorder %s9, 0
    %p71 = por %p69, %p70
    %p72 = scmp.ne.s32.totalorder %s64, %s66
    %p73 = scmp.eq.s32.totalorder %s14, 1
    %p74 = por %p72, %p73
    %p75 = scmp.ne.s32.totalorder %s66, %s67
    %p76 = scmp.eq.s32.totalorder %s14, 0
    %p77 = por %p75, %p76
    %p78 = scmp.ne.s32.totalorder %s66, %s67
    %p79 = scmp.eq.s32.totalorder %s15, 1
    %p80 = por %p78, %p79
    %p82 = scmp.ne.s32.totalorder %s67, %s81
    %p83 = scmp.eq.s32.totalorder %s15, 0
    %p84 = por %p82, %p83
    %s85 = ssub.s32 %s9, %s16
    %p86 = scmp.eq.s32.totalorder %s85, 0
    %s88 = sadd.s32 %s87, 1
    %s89 = scalar_select %p86, %s87, %s88
    %p92 = pneg %p86
    %p93 = scmp.eq.s32.totalorder %s9, 1
    %p94 = por %p92, %p93
    %p95 = scmp.ne.s32.totalorder %s87, %s90
    %p96 = scmp.eq.s32.totalorder %s9, 0
    %p97 = por %p95, %p96
    %p98 = scmp.ne.s32.totalorder %s87, %s90
    %p99 = scmp.eq.s32.totalorder %s14, 1
    %p100 = por %p98, %p99
    %p101 = scmp.ne.s32.totalorder %s90, %s91
    %p102 = scmp.eq.s32.totalorder %s14, 0
    %p103 = por %p101, %p102
    %p104 = scmp.ne.s32.totalorder %s90, %s91
    %p105 = scmp.eq.s32.totalorder %s15, 1
    %p106 = por %p104, %p105
    %p108 = scmp.ne.s32.totalorder %s91, %s107
    %p109 = scmp.eq.s32.totalorder %s15, 0
    %p110 = por %p108, %p109
    %p111 = scmp.le.s32.totalorder 1, %s9
    %p112 = scmp.lt.s32.totalorder %s9, 3
    %p113 = pnand %p111, %p112
    %p114 = pneg %p113
    // Predicated region
    $region9: #{cnn_forward.7} parent=5 // pred_check
      _
    $region10: #{cnn_forward.7} parent=5 // pred_check_branch
      %116 = sbr.rel (%p113) target = $region12
    $region11: #{cnn_forward.7} parent=5 // pred_region
      %s117 = ssub.s32 %s9, 1
      // Predicated region
      $region13: #{cnn_forward.7} parent=11 // pred_check
        %p118 = pneg %p56
      $region14: #{cnn_forward.7} parent=11 // pred_check_branch
        %120 = sbr.rel (%p118) target = $region16
      $region15: #{cnn_forward.7} parent=11 // pred_region
        _
      $region16: #{cnn_forward.7} parent=11 // pred_fallthru
        _
      // Predicated region
      $region17: #{cnn_forward.7} parent=11 // pred_check
        %p121 = pneg %p77
      $region18: #{cnn_forward.7} parent=11 // pred_check_branch
        %123 = sbr.rel (%p121) target = $region20
      $region19: #{cnn_forward.7} parent=11 // pred_region
        _
      $region20: #{cnn_forward.7} parent=11 // pred_fallthru
        _
    $region12: #{cnn_forward.7} parent=5 // pred_fallthru
      _
    %p124 = scmp.lt.s32.totalorder %s9, 2
    // Predicated region
    $region21: #{cnn_forward.7} parent=5 // pred_check
      %p125 = pneg %p124
    $region22: #{cnn_forward.7} parent=5 // pred_check_branch
      %127 = sbr.rel (%p125) target = $region24
    $region23: #{cnn_forward.7} parent=5 // pred_region
      // Predicated region
      $region25: #{cnn_forward.7} parent=23 // pred_check
        %p128 = pneg %p29
      $region26: #{cnn_forward.7} parent=23 // pred_check_branch
        %130 = sbr.rel (%p128) target = $region28
      $region27: #{cnn_forward.7} parent=23 // pred_region
        %p131 = scmp.lt.s32.totalorder %s9, 1
        %s132 = scalar_select %p131, %s9, 1
        %s133 = smul.addr %s132, 20
        %s134 = smul.addr %s133, 4
        %s135 = scalar_lea.vmem %s0, %s134
      $region28: #{cnn_forward.7} parent=23 // pred_fallthru
        _
    $region24: #{cnn_forward.7} parent=5 // pred_fallthru
      _
    %p136 = scmp.le.s32.totalorder 1, %s9
    %p137 = scmp.lt.s32.totalorder %s9, 3
    %p138 = pnand %p136, %p137
    %p139 = pneg %p138
    // Predicated region
    $region29: #{cnn_forward.7} parent=5 // pred_check
      _
    $region30: #{cnn_forward.7} parent=5 // pred_check_branch
      %141 = sbr.rel (%p138) target = $region32
    $region31: #{cnn_forward.7} parent=5 // pred_region
      %s142 = ssub.s32 %s9, 1
      %p143 = scmp.lt.s32.totalorder %s14, 1
      %s144 = scalar_select %p143, %s14, 1
      %s145 = smul.addr %s144, 20
      %s146 = smul.addr %s145, 4
      %s147 = scalar_lea.vmem %s0, %s146
      %p148 = pneg %p35
      %p149 = pneg %p32
      %p150 = pneg %p56
      %p151 = pneg %p53
      %p152 = pneg %p77
      %p153 = pneg %p74
      %p154 = pneg %p103
      %p155 = pneg %p100
      %p156 = scmp.lt.s32.totalorder %s14, 1
      %s157 = scalar_select %p156, %s14, 1
      %s158 = smul.addr %s157, 4
      %s159 = smul.addr %s158, 2
      %s160 = scalar_lea.vmem %s3, %s159
      %p161 = scmp.lt.s32.totalorder %s14, 1
      %s162 = scalar_select %p161, %s14, 1
      %s163 = smul.addr %s162, 20
      %s164 = smul.addr %s163, 4
      %s165 = scalar_lea.vmem %s0, %s164
      %p166 = scmp.lt.s32.totalorder %s14, 1
      %s167 = scalar_select %p166, %s14, 1
      %s168 = smul.addr %s167, 4
      %s169 = smul.addr %s168, 2
      %s170 = scalar_lea.vmem %s3, %s169
      %v172 = vld [vmem:[%s165] sm:$0xf]
      %v173 = vld [vmem:[%s165 + $0x4] sm:$0x1]
      %v174 = vld [vmem:[%s165 + $0x8] sm:$0xf]
      %v175 = vld [vmem:[%s165 + $0xc] sm:$0x1]
      %v176 = vld [vmem:[%s165 + $0x10] sm:$0xf]
      %v177 = vld [vmem:[%s165 + $0x14] sm:$0x1]
      %v178 = vld [vmem:[%s165 + $0x18] sm:$0xf]
      %v179 = vld [vmem:[%s165 + $0x1c] sm:$0x1]
      %v180 = vld [vmem:[%s165 + $0x20] sm:$0xf]
      %v181 = vld [vmem:[%s165 + $0x24] sm:$0x1]
      %v182 = vld [vmem:[%s165 + $0x28] sm:$0xf]
      %v183 = vld [vmem:[%s165 + $0x2c] sm:$0x1]
      %v184 = vld [vmem:[%s165 + $0x30] sm:$0xf]
      %v185 = vld [vmem:[%s165 + $0x34] sm:$0x1]
      %v186 = vld [vmem:[%s165 + $0x38] sm:$0xf]
      %v187 = vld [vmem:[%s165 + $0x3c] sm:$0x1]
      %v188 = vld [vmem:[%s165 + $0x40] sm:$0xf]
      %v189 = vld [vmem:[%s165 + $0x44] sm:$0x1]
      %v190 = vld [vmem:[%s165 + $0x48] sm:$0xf]
      %v191 = vld [vmem:[%s165 + $0x4c] sm:$0x1]
      %v192 = vld [vmem:[%s1] sm:$0xf]
      %v193 = vld [vmem:[%s1 + $0x4] sm:$0xf]
      %v194 = vld [vmem:[%s1 + $0x8] sm:$0xf]
      %v195 = vld [vmem:[%s1 + $0xc] sm:$0xf]
      %s196 = scalar_lea.vmem %s1, 48
      %v197 = vld [vmem:[%s196] sm:$0xf]
      %v198 = vld [vmem:[%s196 + $0x4] sm:$0xf]
      %v199 = vld [vmem:[%s196 + $0x8] sm:$0xf]
      %v200 = vld [vmem:[%s196 + $0xc] sm:$0xf]
      %v209 = vunpack.c.l.b16 %v174
      %v210 = vunpack.c.l.b16 %v176
      %v211 = vunpack.c.l.b16 %v178
      %v212 = vunpack.c.l.b16 %v180
      %v213 = vunpack.c.l.b16 %v182
      %v214 = vunpack.c.l.b16 %v184
      %v215 = vunpack.c.l.b16 %v186
      %v216 = vunpack.c.l.b16 %v188
      %v217 = vpack.c.b16 %v210, %v209
      %v218 = vpack.c.b16 %v212, %v211
      %v219 = vpack.c.b16 %v214, %v213
      %v220 = vpack.c.b16 %v216, %v215
      %v225 = vunpack.c.l.b16 %v197
      %v226 = vunpack.c.l.b16 %v198
      %v227 = vunpack.c.l.b16 %v199
      %v228 = vunpack.c.l.b16 %v200
      %v229 = vpack.c.b16 %v226, %v225
      %v230 = vpack.c.b16 %v228, %v227
      %vm233 = vcmask 261120
      %v235 = vsel %vm233, %v217, 0
      %v238 = vsel %vm233, %v218, 0
      %v241 = vsel %vm233, %v219, 0
      %v244 = vsel %vm233, %v220, 0
      %246 = vmatpush.bf16.msra.mxu0 0
      %247 = vmatpush.bf16.msra.mxu0 0
      %248 = vmatpush.bf16.msra.mxu0 0
      %249 = vmatpush.bf16.msra.mxu0 0
      %250 = vmatpush.bf16.msra.mxu0 0
      %251 = vmatpush.bf16.msra.mxu0 0
      %252 = vmatpush.bf16.msra.mxu0 %v230
      %253 = vmatpush.bf16.msra.mxu0 %v229
      %254 = vmatmul.bf16.gmra.mxu0 %v235
      %v255 = vpop.f32.mrf.mxu0
      %v256 = vadd.f32 0.0, %v255
      %v257 = vpop.f32.mrf.mxu0
      %v258 = vadd.f32 0.0, %v257
      %259 = vmatmul.bf16.gmra.mxu0 %v238
      %v260 = vpop.f32.mrf.mxu0
      %v261 = vadd.f32 0.0, %v260
      %v262 = vpop.f32.mrf.mxu0
      %v263 = vadd.f32 0.0, %v262
      %264 = vmatmul.bf16.gmra.mxu0 %v241
      %v265 = vpop.f32.mrf.mxu0
      %v266 = vadd.f32 0.0, %v265
      %v267 = vpop.f32.mrf.mxu0
      %v268 = vadd.f32 0.0, %v267
      %269 = vmatmul.bf16.gmra.mxu0 %v244
      %v270 = vpop.f32.mrf.mxu0
      %v271 = vadd.f32 0.0, %v270
      %v272 = vpop.f32.mrf.mxu0
      %v273 = vadd.f32 0.0, %v272
      %274 = vdwg.mxu0
      %v276 = vunpack.c.l.b16 %v172
      %v277 = vpack.c.b16 %v209, %v276
      %v278 = vpack.c.b16 %v211, %v210
      %v279 = vpack.c.b16 %v213, %v212
      %v280 = vpack.c.b16 %v215, %v214
      %v285 = vunpack.c.l.b16 %v192
      %v286 = vunpack.c.l.b16 %v193
      %v287 = vunpack.c.l.b16 %v194
      %v288 = vunpack.c.l.b16 %v195
      %v289 = vpack.c.b16 %v286, %v285
      %v290 = vpack.c.b16 %v288, %v287
      %v294 = vsel %vm233, %v277, 0
      %v297 = vsel %vm233, %v278, 0
      %v300 = vsel %vm233, %v279, 0
      %v303 = vsel %vm233, %v280, 0
      %305 = vmatpush.bf16.msra.mxu0 0
      %306 = vmatpush.bf16.msra.mxu0 0
      %307 = vmatpush.bf16.msra.mxu0 0
      %308 = vmatpush.bf16.msra.mxu0 0
      %309 = vmatpush.bf16.msra.mxu0 0
      %310 = vmatpush.bf16.msra.mxu0 0
      %311 = vmatpush.bf16.msra.mxu0 %v290
      %312 = vmatpush.bf16.msra.mxu0 %v289
      %313 = vmatmul.bf16.gmra.mxu0 %v294
      %v314 = vpop.f32.mrf.mxu0
      %v315 = vadd.f32 %v256, %v314
      %v316 = vpop.f32.mrf.mxu0
      %v317 = vadd.f32 %v258, %v316
      %318 = vmatmul.bf16.gmra.mxu0 %v297
      %v319 = vpop.f32.mrf.mxu0
      %v320 = vadd.f32 %v261, %v319
      %v321 = vpop.f32.mrf.mxu0
      %v322 = vadd.f32 %v263, %v321
      %323 = vmatmul.bf16.gmra.mxu0 %v300
      %v324 = vpop.f32.mrf.mxu0
      %v325 = vadd.f32 %v266, %v324
      %v326 = vpop.f32.mrf.mxu0
      %v327 = vadd.f32 %v268, %v326
      %328 = vmatmul.bf16.gmra.mxu0 %v303
      %v329 = vpop.f32.mrf.mxu0
      %v330 = vadd.f32 %v271, %v329
      %v331 = vpop.f32.mrf.mxu0
      %v332 = vadd.f32 %v273, %v331
      %333 = vdwg.mxu0
      %s334 = scalar_lea.vmem %s1, 96
      %v335 = vld [vmem:[%s334] sm:$0xf]
      %v336 = vld [vmem:[%s334 + $0x4] sm:$0xf]
      %v337 = vld [vmem:[%s334 + $0x8] sm:$0xf]
      %v338 = vld [vmem:[%s334 + $0xc] sm:$0xf]
      %v340 = vunpack.c.l.b16 %v190
      %v341 = vpack.c.b16 %v340, %v216
      %v346 = vunpack.c.l.b16 %v335
      %v347 = vunpack.c.l.b16 %v336
      %v348 = vunpack.c.l.b16 %v337
      %v349 = vunpack.c.l.b16 %v338
      %v350 = vpack.c.b16 %v347, %v346
      %v351 = vpack.c.b16 %v349, %v348
      %v355 = vsel %vm233, %v341, 0
      %357 = vmatpush.bf16.msra.mxu0 0
      %358 = vmatpush.bf16.msra.mxu0 0
      %359 = vmatpush.bf16.msra.mxu0 0
      %360 = vmatpush.bf16.msra.mxu0 0
      %361 = vmatpush.bf16.msra.mxu0 0
      %362 = vmatpush.bf16.msra.mxu0 0
      %363 = vmatpush.bf16.msra.mxu0 %v351
      %364 = vmatpush.bf16.msra.mxu0 %v350
      %365 = vmatmul.bf16.gmra.mxu0 %v297
      %v366 = vpop.f32.mrf.mxu0
      %v367 = vadd.f32 0.0, %v366
      %v368 = vpop.f32.mrf.mxu0
      %v369 = vadd.f32 0.0, %v368
      %370 = vmatmul.bf16.gmra.mxu0 %v300
      %v371 = vpop.f32.mrf.mxu0
      %v372 = vadd.f32 0.0, %v371
      %v373 = vpop.f32.mrf.mxu0
      %v374 = vadd.f32 0.0, %v373
      %375 = vmatmul.bf16.gmra.mxu0 %v303
      %v376 = vpop.f32.mrf.mxu0
      %v377 = vadd.f32 0.0, %v376
      %v378 = vpop.f32.mrf.mxu0
      %v379 = vadd.f32 0.0, %v378
      %380 = vmatmul.bf16.gmra.mxu0 %v355
      %v381 = vpop.f32.mrf.mxu0
      %v382 = vadd.f32 0.0, %v381
      %v383 = vpop.f32.mrf.mxu0
      %v384 = vadd.f32 0.0, %v383
      %385 = vdwg.mxu0
      %v386 = vadd.f32 %v315, %v367
      %v387 = vadd.f32 %v317, %v369
      %v388 = vadd.f32 %v320, %v372
      %v389 = vadd.f32 %v322, %v374
      %v390 = vadd.f32 %v325, %v377
      %v391 = vadd.f32 %v327, %v379
      %v392 = vadd.f32 %v330, %v382
      %v393 = vadd.f32 %v332, %v384
      %vm394 = vsmask.f32 3328
      %vm395 = vsmask.f32 7440
      %vm396 = vmor %vm394, %vm395
      %v398 = vshrl.u32 %v172, 16
      %v400 = vrot.slane %v398, 4
      %v401 = vshll.u32 %v172, 16
      %v403 = vrot.slane %v401, 5
      %v404 = vor.u32 %v400, %v403
      %v405 = vrot.slane %v404, 4
      %v407 = vshll.u32 %v173, 16
      %v409 = vrot.slane %v407, 5
      %v410 = vsel %vm396, %v405, %v409
      %v412 = vshrl.u32 %v174, 16
      %v414 = vrot.slane %v412, 4
      %v415 = vshll.u32 %v174, 16
      %v417 = vrot.slane %v415, 5
      %v418 = vor.u32 %v414, %v417
      %v419 = vrot.slane %v418, 4
      %v421 = vshll.u32 %v175, 16
      %v423 = vrot.slane %v421, 5
      %v424 = vsel %vm396, %v419, %v423
      %v426 = vshrl.u32 %v176, 16
      %v428 = vrot.slane %v426, 4
      %v429 = vshll.u32 %v176, 16
      %v431 = vrot.slane %v429, 5
      %v432 = vor.u32 %v428, %v431
      %v433 = vrot.slane %v432, 4
      %v435 = vshll.u32 %v177, 16
      %v437 = vrot.slane %v435, 5
      %v438 = vsel %vm396, %v433, %v437
      %v440 = vshrl.u32 %v178, 16
      %v442 = vrot.slane %v440, 4
      %v443 = vshll.u32 %v178, 16
      %v445 = vrot.slane %v443, 5
      %v446 = vor.u32 %v442, %v445
      %v447 = vrot.slane %v446, 4
      %v449 = vshll.u32 %v179, 16
      %v451 = vrot.slane %v449, 5
      %v452 = vsel %vm396, %v447, %v451
      %v454 = vshrl.u32 %v180, 16
      %v456 = vrot.slane %v454, 4
      %v457 = vshll.u32 %v180, 16
      %v459 = vrot.slane %v457, 5
      %v460 = vor.u32 %v456, %v459
      %v461 = vrot.slane %v460, 4
      %v463 = vshll.u32 %v181, 16
      %v465 = vrot.slane %v463, 5
      %v466 = vsel %vm396, %v461, %v465
      %v468 = vshrl.u32 %v182, 16
      %v470 = vrot.slane %v468, 4
      %v471 = vshll.u32 %v182, 16
      %v473 = vrot.slane %v471, 5
      %v474 = vor.u32 %v470, %v473
      %v475 = vrot.slane %v474, 4
      %v477 = vshll.u32 %v183, 16
      %v479 = vrot.slane %v477, 5
      %v480 = vsel %vm396, %v475, %v479
      %v482 = vshrl.u32 %v184, 16
      %v484 = vrot.slane %v482, 4
      %v485 = vshll.u32 %v184, 16
      %v487 = vrot.slane %v485, 5
      %v488 = vor.u32 %v484, %v487
      %v489 = vrot.slane %v488, 4
      %v491 = vshll.u32 %v185, 16
      %v493 = vrot.slane %v491, 5
      %v494 = vsel %vm396, %v489, %v493
      %v496 = vshrl.u32 %v186, 16
      %v498 = vrot.slane %v496, 4
      %v499 = vshll.u32 %v186, 16
      %v501 = vrot.slane %v499, 5
      %v502 = vor.u32 %v498, %v501
      %v503 = vrot.slane %v502, 4
      %v505 = vshll.u32 %v187, 16
      %v507 = vrot.slane %v505, 5
      %v508 = vsel %vm396, %v503, %v507
      %s509 = scalar_lea.vmem %s1, 16
      %v510 = vld [vmem:[%s509] sm:$0xf]
      %v511 = vld [vmem:[%s509 + $0x4] sm:$0xf]
      %v512 = vld [vmem:[%s509 + $0x8] sm:$0xf]
      %v513 = vld [vmem:[%s509 + $0xc] sm:$0xf]
      %v514 = vunpack.c.l.b16 %v410
      %v515 = vunpack.c.l.b16 %v424
      %v516 = vunpack.c.l.b16 %v438
      %v517 = vunpack.c.l.b16 %v452
      %v518 = vunpack.c.l.b16 %v466
      %v519 = vunpack.c.l.b16 %v480
      %v520 = vunpack.c.l.b16 %v494
      %v521 = vunpack.c.l.b16 %v508
      %v522 = vpack.c.b16 %v515, %v514
      %v523 = vpack.c.b16 %v517, %v516
      %v524 = vpack.c.b16 %v519, %v518
      %v525 = vpack.c.b16 %v521, %v520
      %v530 = vunpack.c.l.b16 %v510
      %v531 = vunpack.c.l.b16 %v511
      %v532 = vunpack.c.l.b16 %v512
      %v533 = vunpack.c.l.b16 %v513
      %v534 = vpack.c.b16 %v531, %v530
      %v535 = vpack.c.b16 %v533, %v532
      %v539 = vsel %vm233, %v522, 0
      %v542 = vsel %vm233, %v523, 0
      %v545 = vsel %vm233, %v524, 0
      %v548 = vsel %vm233, %v525, 0
      %550 = vmatpush.bf16.msra.mxu0 0
      %551 = vmatpush.bf16.msra.mxu0 0
      %552 = vmatpush.bf16.msra.mxu0 0
      %553 = vmatpush.bf16.msra.mxu0 0
      %554 = vmatpush.bf16.msra.mxu0 0
      %555 = vmatpush.bf16.msra.mxu0 0
      %556 = vmatpush.bf16.msra.mxu0 %v535
      %557 = vmatpush.bf16.msra.mxu0 %v534
      %558 = vmatmul.bf16.gmra.mxu0 %v539
      %v559 = vpop.f32.mrf.mxu0
      %v560 = vadd.f32 0.0, %v559
      %v561 = vpop.f32.mrf.mxu0
      %v562 = vadd.f32 0.0, %v561
      %563 = vmatmul.bf16.gmra.mxu0 %v542
      %v564 = vpop.f32.mrf.mxu0
      %v565 = vadd.f32 0.0, %v564
      %v566 = vpop.f32.mrf.mxu0
      %v567 = vadd.f32 0.0, %v566
      %568 = vmatmul.bf16.gmra.mxu0 %v545
      %v569 = vpop.f32.mrf.mxu0
      %v570 = vadd.f32 0.0, %v569
      %v571 = vpop.f32.mrf.mxu0
      %v572 = vadd.f32 0.0, %v571
      %573 = vmatmul.bf16.gmra.mxu0 %v548
      %v574 = vpop.f32.mrf.mxu0
      %v575 = vadd.f32 0.0, %v574
      %v576 = vpop.f32.mrf.mxu0
      %v577 = vadd.f32 0.0, %v576
      %578 = vdwg.mxu0
      %v579 = vadd.f32 %v386, %v560
      %v580 = vadd.f32 %v387, %v562
      %v581 = vadd.f32 %v388, %v565
      %v582 = vadd.f32 %v389, %v567
      %v583 = vadd.f32 %v390, %v570
      %v584 = vadd.f32 %v391, %v572
      %v585 = vadd.f32 %v392, %v575
      %v586 = vadd.f32 %v393, %v577
      %v588 = vshrl.u32 %v188, 16
      %v590 = vrot.slane %v588, 4
      %v591 = vshll.u32 %v188, 16
      %v593 = vrot.slane %v591, 5
      %v594 = vor.u32 %v590, %v593
      %v595 = vrot.slane %v594, 4
      %v597 = vshll.u32 %v189, 16
      %v599 = vrot.slane %v597, 5
      %v600 = vsel %vm396, %v595, %v599
      %s601 = scalar_lea.vmem %s1, 64
      %v602 = vld [vmem:[%s601] sm:$0xf]
      %v603 = vld [vmem:[%s601 + $0x4] sm:$0xf]
      %v604 = vld [vmem:[%s601 + $0x8] sm:$0xf]
      %v605 = vld [vmem:[%s601 + $0xc] sm:$0xf]
      %v606 = vunpack.c.l.b16 %v600
      %v607 = vpack.c.b16 %v516, %v515
      %v608 = vpack.c.b16 %v518, %v517
      %v609 = vpack.c.b16 %v520, %v519
      %v610 = vpack.c.b16 %v606, %v521
      %v615 = vunpack.c.l.b16 %v602
      %v616 = vunpack.c.l.b16 %v603
      %v617 = vunpack.c.l.b16 %v604
      %v618 = vunpack.c.l.b16 %v605
      %v619 = vpack.c.b16 %v616, %v615
      %v620 = vpack.c.b16 %v618, %v617
      %v624 = vsel %vm233, %v607, 0
      %v627 = vsel %vm233, %v608, 0
      %v630 = vsel %vm233, %v609, 0
      %v633 = vsel %vm233, %v610, 0
      %635 = vmatpush.bf16.msra.mxu0 0
      %636 = vmatpush.bf16.msra.mxu0 0
      %637 = vmatpush.bf16.msra.mxu0 0
      %638 = vmatpush.bf16.msra.mxu0 0
      %639 = vmatpush.bf16.msra.mxu0 0
      %640 = vmatpush.bf16.msra.mxu0 0
      %641 = vmatpush.bf16.msra.mxu0 %v620
      %642 = vmatpush.bf16.msra.mxu0 %v619
      %643 = vmatmul.bf16.gmra.mxu0 %v624
      %v644 = vpop.f32.mrf.mxu0
      %v645 = vadd.f32 0.0, %v644
      %v646 = vpop.f32.mrf.mxu0
      %v647 = vadd.f32 0.0, %v646
      %648 = vmatmul.bf16.gmra.mxu0 %v627
      %v649 = vpop.f32.mrf.mxu0
      %v650 = vadd.f32 0.0, %v649
      %v651 = vpop.f32.mrf.mxu0
      %v652 = vadd.f32 0.0, %v651
      %653 = vmatmul.bf16.gmra.mxu0 %v630
      %v654 = vpop.f32.mrf.mxu0
      %v655 = vadd.f32 0.0, %v654
      %v656 = vpop.f32.mrf.mxu0
      %v657 = vadd.f32 0.0, %v656
      %658 = vmatmul.bf16.gmra.mxu0 %v633
      %v659 = vpop.f32.mrf.mxu0
      %v660 = vadd.f32 0.0, %v659
      %v661 = vpop.f32.mrf.mxu0
      %v662 = vadd.f32 0.0, %v661
      %663 = vdwg.mxu0
      %v664 = vadd.f32 %v579, %v645
      %v665 = vadd.f32 %v580, %v647
      %v666 = vadd.f32 %v581, %v650
      %v667 = vadd.f32 %v582, %v652
      %v668 = vadd.f32 %v583, %v655
      %v669 = vadd.f32 %v584, %v657
      %v670 = vadd.f32 %v585, %v660
      %v671 = vadd.f32 %v586, %v662
      %v673 = vshrl.u32 %v190, 16
      %v675 = vrot.slane %v673, 4
      %v676 = vshll.u32 %v190, 16
      %v678 = vrot.slane %v676, 5
      %v679 = vor.u32 %v675, %v678
      %v680 = vrot.slane %v679, 4
      %v682 = vshll.u32 %v191, 16
      %v684 = vrot.slane %v682, 5
      %v685 = vsel %vm396, %v680, %v684
      %s686 = scalar_lea.vmem %s1, 112
      %v687 = vld [vmem:[%s686] sm:$0xf]
      %v688 = vld [vmem:[%s686 + $0x4] sm:$0xf]
      %v689 = vld [vmem:[%s686 + $0x8] sm:$0xf]
      %v690 = vld [vmem:[%s686 + $0xc] sm:$0xf]
      %v691 = vunpack.c.l.b16 %v685
      %v692 = vpack.c.b16 %v691, %v606
      %v697 = vunpack.c.l.b16 %v687
      %v698 = vunpack.c.l.b16 %v688
      %v699 = vunpack.c.l.b16 %v689
      %v700 = vunpack.c.l.b16 %v690
      %v701 = vpack.c.b16 %v698, %v697
      %v702 = vpack.c.b16 %v700, %v699
      %v706 = vsel %vm233, %v692, 0
      %708 = vmatpush.bf16.msra.mxu0 0
      %709 = vmatpush.bf16.msra.mxu0 0
      %710 = vmatpush.bf16.msra.mxu0 0
      %711 = vmatpush.bf16.msra.mxu0 0
      %712 = vmatpush.bf16.msra.mxu0 0
      %713 = vmatpush.bf16.msra.mxu0 0
      %714 = vmatpush.bf16.msra.mxu0 %v702
      %715 = vmatpush.bf16.msra.mxu0 %v701
      %716 = vmatmul.bf16.gmra.mxu0 %v542
      %v717 = vpop.f32.mrf.mxu0
      %v718 = vadd.f32 0.0, %v717
      %v719 = vpop.f32.mrf.mxu0
      %v720 = vadd.f32 0.0, %v719
      %721 = vmatmul.bf16.gmra.mxu0 %v545
      %v722 = vpop.f32.mrf.mxu0
      %v723 = vadd.f32 0.0, %v722
      %v724 = vpop.f32.mrf.mxu0
      %v725 = vadd.f32 0.0, %v724
      %726 = vmatmul.bf16.gmra.mxu0 %v548
      %v727 = vpop.f32.mrf.mxu0
      %v728 = vadd.f32 0.0, %v727
      %v729 = vpop.f32.mrf.mxu0
      %v730 = vadd.f32 0.0, %v729
      %731 = vmatmul.bf16.gmra.mxu0 %v706
      %v732 = vpop.f32.mrf.mxu0
      %v733 = vadd.f32 0.0, %v732
      %v734 = vpop.f32.mrf.mxu0
      %v735 = vadd.f32 0.0, %v734
      %736 = vdwg.mxu0
      %v737 = vadd.f32 %v664, %v718
      %v738 = vadd.f32 %v665, %v720
      %v739 = vadd.f32 %v666, %v723
      %v740 = vadd.f32 %v667, %v725
      %v741 = vadd.f32 %v668, %v728
      %v742 = vadd.f32 %v669, %v730
      %v743 = vadd.f32 %v670, %v733
      %v744 = vadd.f32 %v671, %v735
      %vm753 = vcmask 1042432
      %vm754 = vcmask 1046532
      %vm755 = vmor %vm753, %vm754
      %v756 = vrot.slane %v172, 5
      %v757 = vrot.slane %v756, 4
      %v758 = vrot.slane %v173, 5
      %v759 = vsel %vm755, %v757, %v758
      %v760 = vrot.slane %v174, 5
      %v761 = vrot.slane %v760, 4
      %v762 = vrot.slane %v175, 5
      %v763 = vsel %vm755, %v761, %v762
      %v764 = vrot.slane %v176, 5
      %v765 = vrot.slane %v764, 4
      %v766 = vrot.slane %v177, 5
      %v767 = vsel %vm755, %v765, %v766
      %v768 = vrot.slane %v178, 5
      %v769 = vrot.slane %v768, 4
      %v770 = vrot.slane %v179, 5
      %v771 = vsel %vm755, %v769, %v770
      %v772 = vrot.slane %v180, 5
      %v773 = vrot.slane %v772, 4
      %v774 = vrot.slane %v181, 5
      %v775 = vsel %vm755, %v773, %v774
      %v776 = vrot.slane %v182, 5
      %v777 = vrot.slane %v776, 4
      %v778 = vrot.slane %v183, 5
      %v779 = vsel %vm755, %v777, %v778
      %v780 = vrot.slane %v184, 5
      %v781 = vrot.slane %v780, 4
      %v782 = vrot.slane %v185, 5
      %v783 = vsel %vm755, %v781, %v782
      %v784 = vrot.slane %v186, 5
      %v785 = vrot.slane %v784, 4
      %v786 = vrot.slane %v187, 5
      %v787 = vsel %vm755, %v785, %v786
      %s788 = scalar_lea.vmem %s1, 32
      %v789 = vld [vmem:[%s788] sm:$0xf]
      %v790 = vld [vmem:[%s788 + $0x4] sm:$0xf]
      %v791 = vld [vmem:[%s788 + $0x8] sm:$0xf]
      %v792 = vld [vmem:[%s788 + $0xc] sm:$0xf]
      %v793 = vunpack.c.l.b16 %v759
      %v794 = vunpack.c.l.b16 %v763
      %v795 = vunpack.c.l.b16 %v767
      %v796 = vunpack.c.l.b16 %v771
      %v797 = vunpack.c.l.b16 %v775
      %v798 = vunpack.c.l.b16 %v779
      %v799 = vunpack.c.l.b16 %v783
      %v800 = vunpack.c.l.b16 %v787
      %v801 = vpack.c.b16 %v794, %v793
      %v802 = vpack.c.b16 %v796, %v795
      %v803 = vpack.c.b16 %v798, %v797
      %v804 = vpack.c.b16 %v800, %v799
      %v809 = vunpack.c.l.b16 %v789
      %v810 = vunpack.c.l.b16 %v790
      %v811 = vunpack.c.l.b16 %v791
      %v812 = vunpack.c.l.b16 %v792
      %v813 = vpack.c.b16 %v810, %v809
      %v814 = vpack.c.b16 %v812, %v811
      %v818 = vsel %vm233, %v801, 0
      %v821 = vsel %vm233, %v802, 0
      %v824 = vsel %vm233, %v803, 0
      %v827 = vsel %vm233, %v804, 0
      %829 = vmatpush.bf16.msra.mxu0 0
      %830 = vmatpush.bf16.msra.mxu0 0
      %831 = vmatpush.bf16.msra.mxu0 0
      %832 = vmatpush.bf16.msra.mxu0 0
      %833 = vmatpush.bf16.msra.mxu0 0
      %834 = vmatpush.bf16.msra.mxu0 0
      %835 = vmatpush.bf16.msra.mxu0 %v814
      %836 = vmatpush.bf16.msra.mxu0 %v813
      %837 = vmatmul.bf16.gmra.mxu0 %v818
      %v838 = vpop.f32.mrf.mxu0
      %v839 = vadd.f32 0.0, %v838
      %v840 = vpop.f32.mrf.mxu0
      %v841 = vadd.f32 0.0, %v840
      %842 = vmatmul.bf16.gmra.mxu0 %v821
      %v843 = vpop.f32.mrf.mxu0
      %v844 = vadd.f32 0.0, %v843
      %v845 = vpop.f32.mrf.mxu0
      %v846 = vadd.f32 0.0, %v845
      %847 = vmatmul.bf16.gmra.mxu0 %v824
      %v848 = vpop.f32.mrf.mxu0
      %v849 = vadd.f32 0.0, %v848
      %v850 = vpop.f32.mrf.mxu0
      %v851 = vadd.f32 0.0, %v850
      %852 = vmatmul.bf16.gmra.mxu0 %v827
      %v853 = vpop.f32.mrf.mxu0
      %v854 = vadd.f32 0.0, %v853
      %v855 = vpop.f32.mrf.mxu0
      %v856 = vadd.f32 0.0, %v855
      %857 = vdwg.mxu0
      %v858 = vadd.f32 %v737, %v839
      %v859 = vadd.f32 %v738, %v841
      %v860 = vadd.f32 %v739, %v844
      %v861 = vadd.f32 %v740, %v846
      %v862 = vadd.f32 %v741, %v849
      %v863 = vadd.f32 %v742, %v851
      %v864 = vadd.f32 %v743, %v854
      %v865 = vadd.f32 %v744, %v856
      %v867 = vrot.slane %v188, 5
      %v868 = vrot.slane %v867, 4
      %v869 = vrot.slane %v189, 5
      %v870 = vsel %vm755, %v868, %v869
      %s871 = scalar_lea.vmem %s1, 80
      %v872 = vld [vmem:[%s871] sm:$0xf]
      %v873 = vld [vmem:[%s871 + $0x4] sm:$0xf]
      %v874 = vld [vmem:[%s871 + $0x8] sm:$0xf]
      %v875 = vld [vmem:[%s871 + $0xc] sm:$0xf]
      %v876 = vunpack.c.l.b16 %v870
      %v877 = vpack.c.b16 %v795, %v794
      %v878 = vpack.c.b16 %v797, %v796
      %v879 = vpack.c.b16 %v799, %v798
      %v880 = vpack.c.b16 %v876, %v800
      %v885 = vunpack.c.l.b16 %v872
      %v886 = vunpack.c.l.b16 %v873
      %v887 = vunpack.c.l.b16 %v874
      %v888 = vunpack.c.l.b16 %v875
      %v889 = vpack.c.b16 %v886, %v885
      %v890 = vpack.c.b16 %v888, %v887
      %v894 = vsel %vm233, %v877, 0
      %v897 = vsel %vm233, %v878, 0
      %v900 = vsel %vm233, %v879, 0
      %v903 = vsel %vm233, %v880, 0
      %905 = vmatpush.bf16.msra.mxu0 0
      %906 = vmatpush.bf16.msra.mxu0 0
      %907 = vmatpush.bf16.msra.mxu0 0
      %908 = vmatpush.bf16.msra.mxu0 0
      %909 = vmatpush.bf16.msra.mxu0 0
      %910 = vmatpush.bf16.msra.mxu0 0
      %911 = vmatpush.bf16.msra.mxu0 %v890
      %912 = vmatpush.bf16.msra.mxu0 %v889
      %913 = vmatmul.bf16.gmra.mxu0 %v894
      %v914 = vpop.f32.mrf.mxu0
      %v915 = vadd.f32 0.0, %v914
      %v916 = vpop.f32.mrf.mxu0
      %v917 = vadd.f32 0.0, %v916
      %918 = vmatmul.bf16.gmra.mxu0 %v897
      %v919 = vpop.f32.mrf.mxu0
      %v920 = vadd.f32 0.0, %v919
      %v921 = vpop.f32.mrf.mxu0
      %v922 = vadd.f32 0.0, %v921
      %923 = vmatmul.bf16.gmra.mxu0 %v900
      %v924 = vpop.f32.mrf.mxu0
      %v925 = vadd.f32 0.0, %v924
      %v926 = vpop.f32.mrf.mxu0
      %v927 = vadd.f32 0.0, %v926
      %928 = vmatmul.bf16.gmra.mxu0 %v903
      %v929 = vpop.f32.mrf.mxu0
      %v930 = vadd.f32 0.0, %v929
      %v931 = vpop.f32.mrf.mxu0
      %v932 = vadd.f32 0.0, %v931
      %933 = vdwg.mxu0
      %v934 = vadd.f32 %v858, %v915
      %v935 = vadd.f32 %v859, %v917
      %v936 = vadd.f32 %v860, %v920
      %v937 = vadd.f32 %v861, %v922
      %v938 = vadd.f32 %v862, %v925
      %v939 = vadd.f32 %v863, %v927
      %v940 = vadd.f32 %v864, %v930
      %v941 = vadd.f32 %v865, %v932
      %v943 = vrot.slane %v190, 5
      %v944 = vrot.slane %v943, 4
      %v945 = vrot.slane %v191, 5
      %v946 = vsel %vm755, %v944, %v945
      %s947 = scalar_lea.vmem %s1, 128
      %v948 = vld [vmem:[%s947] sm:$0xf]
      %v949 = vld [vmem:[%s947 + $0x4] sm:$0xf]
      %v950 = vld [vmem:[%s947 + $0x8] sm:$0xf]
      %v951 = vld [vmem:[%s947 + $0xc] sm:$0xf]
      %v952 = vunpack.c.l.b16 %v946
      %v953 = vpack.c.b16 %v952, %v876
      %v958 = vunpack.c.l.b16 %v948
      %v959 = vunpack.c.l.b16 %v949
      %v960 = vunpack.c.l.b16 %v950
      %v961 = vunpack.c.l.b16 %v951
      %v962 = vpack.c.b16 %v959, %v958
      %v963 = vpack.c.b16 %v961, %v960
      %v967 = vsel %vm233, %v953, 0
      %969 = vmatpush.bf16.msra.mxu0 0
      %970 = vmatpush.bf16.msra.mxu0 0
      %971 = vmatpush.bf16.msra.mxu0 0
      %972 = vmatpush.bf16.msra.mxu0 0
      %973 = vmatpush.bf16.msra.mxu0 0
      %974 = vmatpush.bf16.msra.mxu0 0
      %975 = vmatpush.bf16.msra.mxu0 %v963
      %976 = vmatpush.bf16.msra.mxu0 %v962
      %977 = vmatmul.bf16.gmra.mxu0 %v821
      %v978 = vpop.f32.mrf.mxu0
      %v979 = vadd.f32 0.0, %v978
      %v980 = vpop.f32.mrf.mxu0
      %v981 = vadd.f32 0.0, %v980
      %982 = vmatmul.bf16.gmra.mxu0 %v824
      %v983 = vpop.f32.mrf.mxu0
      %v984 = vadd.f32 0.0, %v983
      %v985 = vpop.f32.mrf.mxu0
      %v986 = vadd.f32 0.0, %v985
      %987 = vmatmul.bf16.gmra.mxu0 %v827
      %v988 = vpop.f32.mrf.mxu0
      %v989 = vadd.f32 0.0, %v988
      %v990 = vpop.f32.mrf.mxu0
      %v991 = vadd.f32 0.0, %v990
      %992 = vmatmul.bf16.gmra.mxu0 %v967
      %v993 = vpop.f32.mrf.mxu0
      %v994 = vadd.f32 0.0, %v993
      %v995 = vpop.f32.mrf.mxu0
      %v996 = vadd.f32 0.0, %v995
      %997 = vdwg.mxu0
      %v998 = vadd.f32 %v934, %v979
      %v999 = vadd.f32 %v935, %v981
      %v1000 = vadd.f32 %v936, %v984
      %v1001 = vadd.f32 %v937, %v986
      %v1002 = vadd.f32 %v938, %v989
      %v1003 = vadd.f32 %v939, %v991
      %v1004 = vadd.f32 %v940, %v994
      %v1005 = vadd.f32 %v941, %v996
      %v1006 = vld [vmem:[%s2] sm:$0x1]
      %v1008 = vperm.slane %v1006, 0
      %v1010 = vadd.f32 %v998, %v1008
      %v1011 = vadd.f32 %v999, %v1008
      %v1012 = vadd.f32 %v1000, %v1008
      %v1013 = vadd.f32 %v1001, %v1008
      %v1014 = vadd.f32 %v1002, %v1008
      %v1015 = vadd.f32 %v1003, %v1008
      %v1016 = vadd.f32 %v1004, %v1008
      %v1017 = vadd.f32 %v1005, %v1008
      %v1018 = vmax.f32 %v1010, 0.0
      %v1019 = vmax.f32 %v1011, 0.0
      %v1020 = vmax.f32 %v1012, 0.0
      %v1021 = vmax.f32 %v1013, 0.0
      %v1022 = vmax.f32 %v1014, 0.0
      %v1023 = vmax.f32 %v1015, 0.0
      %v1024 = vmax.f32 %v1016, 0.0
      %v1025 = vmax.f32 %v1017, 0.0
      %v1026 = vmax.f32 %v1018, %v1019
      %v1027 = vmax.f32 %v1020, %v1021
      %v1028 = vmax.f32 %v1022, %v1023
      %v1029 = vmax.f32 %v1024, %v1025
      %vm1030 = vcmask 523264
      %1031 = vst.msk [vmem:[#allocation2] sm:$0xff] %vm1030, %v1026
      %1032 = vst.msk [vmem:[#allocation2 + $0x8] sm:$0xff] %vm1030, %v1027
      %1033 = vst.msk [vmem:[#allocation2 + $0x10] sm:$0xff] %vm1030, %v1028
      %1034 = vst.msk [vmem:[#allocation2 + $0x18] sm:$0xff] %vm1030, %v1029
      %v1035 = vld [vmem:[#allocation2] ss:$2 sm:$0xf]
      %s1036 = scalar_lea.vmem [#allocation2], 8
      %v1037 = vld [vmem:[%s1036] ss:$2 sm:$0xf]
      %s1038 = scalar_lea.vmem [#allocation2], 16
      %v1039 = vld [vmem:[%s1038] ss:$2 sm:$0xf]
      %s1040 = scalar_lea.vmem [#allocation2], 24
      %v1041 = vld [vmem:[%s1040] ss:$2 sm:$0xf]
      %s1042 = scalar_lea.vmem [#allocation2], 1
      %v1043 = vld [vmem:[%s1042] ss:$2 sm:$0xf]
      %s1044 = scalar_lea.vmem [#allocation2], 9
      %v1045 = vld [vmem:[%s1044] ss:$2 sm:$0xf]
      %s1046 = scalar_lea.vmem [#allocation2], 17
      %v1047 = vld [vmem:[%s1046] ss:$2 sm:$0xf]
      %s1048 = scalar_lea.vmem [#allocation2], 25
      %v1049 = vld [vmem:[%s1048] ss:$2 sm:$0xf]
      %v1050 = vmax.f32 %v1035, %v1043
      %v1051 = vmax.f32 %v1037, %v1045
      %v1052 = vmax.f32 %v1039, %v1047
      %v1053 = vmax.f32 %v1041, %v1049
      %v1054 = vpack.c.bf16 %v1050, %v1050
      %v1055 = vpack.c.bf16 %v1051, %v1051
      %v1056 = vpack.c.bf16 %v1052, %v1052
      %v1057 = vpack.c.bf16 %v1053, %v1053
      %vm1058 = vcmask 517120
      %1059 = vst.msk [vmem:[%s170] sm:$0x3] %vm1058, %v1054
      %1060 = vst.msk [vmem:[%s170 + $0x2] sm:$0x3] %vm1058, %v1055
      %1061 = vst.msk [vmem:[%s170 + $0x4] sm:$0x3] %vm1058, %v1056
      %1062 = vst.msk [vmem:[%s170 + $0x6] sm:$0x3] %vm1058, %v1057
      %p1063 = scmp.lt.s32.totalorder %s14, 1
      %s1064 = scalar_select %p1063, %s14, 1
      %s1065 = smul.addr %s1064, 4
      %s1066 = smul.addr %s1065, 2
      %s1067 = scalar_lea.vmem %s3, %s1066
      // Predicated region
      $region33: #{cnn_forward.7} parent=31 // pred_check
        %p1068 = pneg %p100
      $region34: #{cnn_forward.7} parent=31 // pred_check_branch
        %1070 = sbr.rel (%p1068) target = $region36
      $region35: #{cnn_forward.7} parent=31 // pred_region
        _
      $region36: #{cnn_forward.7} parent=31 // pred_fallthru
        _
    $region32: #{cnn_forward.7} parent=5 // pred_fallthru
      _
    %p1071 = scmp.le.s32.totalorder 2, %s9
    // Predicated region
    $region37: #{cnn_forward.7} parent=5 // pred_check
      %p1072 = pneg %p1071
    $region38: #{cnn_forward.7} parent=5 // pred_check_branch
      %1074 = sbr.rel (%p1072) target = $region40
    $region39: #{cnn_forward.7} parent=5 // pred_region
      %s1075 = ssub.s32 %s9, 2
      // Predicated region
      $region41: #{cnn_forward.7} parent=39 // pred_check
        %p1076 = pneg %p106
      $region42: #{cnn_forward.7} parent=39 // pred_check_branch
        %1078 = sbr.rel (%p1076) target = $region44
      $region43: #{cnn_forward.7} parent=39 // pred_region
        %p1079 = scmp.lt.s32.totalorder %s15, 1
        %s1080 = scalar_select %p1079, %s15, 1
        %s1081 = smul.addr %s1080, 4
        %s1082 = smul.addr %s1081, 2
        %s1083 = scalar_lea.vmem %s3, %s1082
      $region44: #{cnn_forward.7} parent=39 // pred_fallthru
        _
    $region40: #{cnn_forward.7} parent=5 // pred_fallthru
      _
  $region6: #{cnn_forward.7} parent=0 // loop_footer
    %s13 = sadd.s32 1, %s9
  $region7: #{cnn_forward.7} parent=0 // loop_footer_branch
    %8 = sbr.rel target = $region3
  $region8: #{cnn_forward.7} parent=0 // loop_exit
    _

// kernel: cnn_forward.6
$region0: #{cnn_forward.6}
  #allocation0 [shape = 'u32[]', space=smem, size = 0x4, offset = 0x4, fixed_abs, tag = 'smem constant byte address 0x4 - core index']
  #allocation1 [shape = 'u32[72,128]{1,0:T(1,128)}', space=vmem, size = 0x9000, scoped, tag = 'internal scratch']
  #allocation2 [shape = 'f32[8,16,32]{2,1,0:T(8,128)}', space=vmem, size = 0x10000, scoped, tag = 'scratch operand']
  %s0 = inlined_call_operand.vmem [shape: bf16[2,18,18,16], index: 0, kind: input, shape index: {}]
  %s1 = inlined_call_operand.vmem [shape: bf16[9,16,32], index: 1, kind: input, shape index: {}]
  %s2 = inlined_call_operand.vmem [shape: f32[1,32], index: 2, kind: input, shape index: {}]
  %s3 = inlined_call_operand.vmem [shape: bf16[2,8,8,32], index: 3, kind: output, shape index: {}]
  %s4 = sld [smem:[#allocation0]]
  $region45: #{cnn_forward.6} parent=0
    _
  %s6 = ssub.s32 1, %s4
  %s7 = scalar_select 0, %s6, %s4
  loop: start=0, step=1, limit=4
  $region2: #{cnn_forward.6} parent=0 // loop_pre_header
    _
  $region3: #{cnn_forward.6} parent=0 // loop_header
    %s9 = sphi 0, %s13
    %p10 = scmp.ge.s32.totalorder %s9, 4
    %s19 = sphi 0, %s21
    %s22 = sphi 0, %s19
    %s23 = sphi 0, %s22
    %s39 = sphi 0, %s23
    %s43 = sphi 0, %s43
    %s45 = sphi 0, %s43
    %s46 = sphi 0, %s45
    %s60 = sphi 0, %s46
    %s64 = sphi 0, %s64
    %s66 = sphi 0, %s64
    %s67 = sphi 0, %s66
    %s81 = sphi 0, %s67
    %s87 = sphi 0, %s89
    %s90 = sphi 0, %s87
    %s91 = sphi 0, %s90
    %s107 = sphi 0, %s91
  $region4: #{cnn_forward.6} parent=0 // loop_header_branch
    %12 = sbr.rel (%p10) target = $region8
  $region5: #{cnn_forward.6} parent=0 // loop_body
    %s14 = ssub.s32 %s9, 1
    %s15 = ssub.s32 %s9, 2
    %s16 = sadd.s32 %s9, 1
    %s17 = ssub.s32 %s9, %s16
    %p18 = scmp.eq.s32.totalorder %s17, 0
    %s20 = sadd.s32 %s19, 1
    %s21 = scalar_select %p18, %s19, %s20
    %p24 = pneg %p18
    %p25 = scmp.eq.s32.totalorder %s9, 1
    %p26 = por %p24, %p25
    %p27 = scmp.ne.s32.totalorder %s19, %s22
    %p28 = scmp.eq.s32.totalorder %s9, 0
    %p29 = por %p27, %p28
    %p30 = scmp.ne.s32.totalorder %s19, %s22
    %p31 = scmp.eq.s32.totalorder %s14, 1
    %p32 = por %p30, %p31
    %p33 = scmp.ne.s32.totalorder %s22, %s23
    %p34 = scmp.eq.s32.totalorder %s14, 0
    %p35 = por %p33, %p34
    %p36 = scmp.ne.s32.totalorder %s22, %s23
    %p37 = scmp.eq.s32.totalorder %s15, 1
    %p38 = por %p36, %p37
    %p40 = scmp.ne.s32.totalorder %s23, %s39
    %p41 = scmp.eq.s32.totalorder %s15, 0
    %p42 = por %p40, %p41
    %s44 = sadd.s32 %s43, 1
    %p47 = scmp.eq.s32.totalorder %s9, 1
    %p48 = scmp.ne.s32.totalorder %s43, %s45
    %p49 = scmp.eq.s32.totalorder %s9, 0
    %p50 = por %p48, %p49
    %p51 = scmp.ne.s32.totalorder %s43, %s45
    %p52 = scmp.eq.s32.totalorder %s14, 1
    %p53 = por %p51, %p52
    %p54 = scmp.ne.s32.totalorder %s45, %s46
    %p55 = scmp.eq.s32.totalorder %s14, 0
    %p56 = por %p54, %p55
    %p57 = scmp.ne.s32.totalorder %s45, %s46
    %p58 = scmp.eq.s32.totalorder %s15, 1
    %p59 = por %p57, %p58
    %p61 = scmp.ne.s32.totalorder %s46, %s60
    %p62 = scmp.eq.s32.totalorder %s15, 0
    %p63 = por %p61, %p62
    %s65 = sadd.s32 %s64, 1
    %p68 = scmp.eq.s32.totalorder %s9, 1
    %p69 = scmp.ne.s32.totalorder %s64, %s66
    %p70 = scmp.eq.s32.totalorder %s9, 0
    %p71 = por %p69, %p70
    %p72 = scmp.ne.s32.totalorder %s64, %s66
    %p73 = scmp.eq.s32.totalorder %s14, 1
    %p74 = por %p72, %p73
    %p75 = scmp.ne.s32.totalorder %s66, %s67
    %p76 = scmp.eq.s32.totalorder %s14, 0
    %p77 = por %p75, %p76
    %p78 = scmp.ne.s32.totalorder %s66, %s67
    %p79 = scmp.eq.s32.totalorder %s15, 1
    %p80 = por %p78, %p79
    %p82 = scmp.ne.s32.totalorder %s67, %s81
    %p83 = scmp.eq.s32.totalorder %s15, 0
    %p84 = por %p82, %p83
    %s85 = ssub.s32 %s9, %s16
    %p86 = scmp.eq.s32.totalorder %s85, 0
    %s88 = sadd.s32 %s87, 1
    %s89 = scalar_select %p86, %s87, %s88
    %p92 = pneg %p86
    %p93 = scmp.eq.s32.totalorder %s9, 1
    %p94 = por %p92, %p93
    %p95 = scmp.ne.s32.totalorder %s87, %s90
    %p96 = scmp.eq.s32.totalorder %s9, 0
    %p97 = por %p95, %p96
    %p98 = scmp.ne.s32.totalorder %s87, %s90
    %p99 = scmp.eq.s32.totalorder %s14, 1
    %p100 = por %p98, %p99
    %p101 = scmp.ne.s32.totalorder %s90, %s91
    %p102 = scmp.eq.s32.totalorder %s14, 0
    %p103 = por %p101, %p102
    %p104 = scmp.ne.s32.totalorder %s90, %s91
    %p105 = scmp.eq.s32.totalorder %s15, 1
    %p106 = por %p104, %p105
    %p108 = scmp.ne.s32.totalorder %s91, %s107
    %p109 = scmp.eq.s32.totalorder %s15, 0
    %p110 = por %p108, %p109
    %p111 = scmp.le.s32.totalorder 1, %s9
    %p112 = scmp.lt.s32.totalorder %s9, 3
    %p113 = pnand %p111, %p112
    %p114 = pneg %p113
    // Predicated region
    $region9: #{cnn_forward.6} parent=5 // pred_check
      _
    $region10: #{cnn_forward.6} parent=5 // pred_check_branch
      %116 = sbr.rel (%p113) target = $region12
    $region11: #{cnn_forward.6} parent=5 // pred_region
      %s117 = ssub.s32 %s9, 1
      // Predicated region
      $region13: #{cnn_forward.6} parent=11 // pred_check
        %p118 = pneg %p56
      $region14: #{cnn_forward.6} parent=11 // pred_check_branch
        %120 = sbr.rel (%p118) target = $region16
      $region15: #{cnn_forward.6} parent=11 // pred_region
        _
      $region16: #{cnn_forward.6} parent=11 // pred_fallthru
        _
      // Predicated region
      $region17: #{cnn_forward.6} parent=11 // pred_check
        %p121 = pneg %p77
      $region18: #{cnn_forward.6} parent=11 // pred_check_branch
        %123 = sbr.rel (%p121) target = $region20
      $region19: #{cnn_forward.6} parent=11 // pred_region
        _
      $region20: #{cnn_forward.6} parent=11 // pred_fallthru
        _
    $region12: #{cnn_forward.6} parent=5 // pred_fallthru
      _
    %p124 = scmp.lt.s32.totalorder %s9, 2
    // Predicated region
    $region21: #{cnn_forward.6} parent=5 // pred_check
      %p125 = pneg %p124
    $region22: #{cnn_forward.6} parent=5 // pred_check_branch
      %127 = sbr.rel (%p125) target = $region24
    $region23: #{cnn_forward.6} parent=5 // pred_region
      // Predicated region
      $region25: #{cnn_forward.6} parent=23 // pred_check
        %p128 = pneg %p29
      $region26: #{cnn_forward.6} parent=23 // pred_check_branch
        %130 = sbr.rel (%p128) target = $region28
      $region27: #{cnn_forward.6} parent=23 // pred_region
        %p131 = scmp.lt.s32.totalorder %s9, 1
        %s132 = scalar_select %p131, %s9, 1
        %s133 = smul.addr %s132, 54
        %s134 = smul.addr %s133, 4
        %s135 = scalar_lea.vmem %s0, %s134
      $region28: #{cnn_forward.6} parent=23 // pred_fallthru
        _
    $region24: #{cnn_forward.6} parent=5 // pred_fallthru
      _
    %p136 = scmp.le.s32.totalorder 1, %s9
    %p137 = scmp.lt.s32.totalorder %s9, 3
    %p138 = pnand %p136, %p137
    %p139 = pneg %p138
    // Predicated region
    $region29: #{cnn_forward.6} parent=5 // pred_check
      _
    $region30: #{cnn_forward.6} parent=5 // pred_check_branch
      %141 = sbr.rel (%p138) target = $region32
    $region31: #{cnn_forward.6} parent=5 // pred_region
      %s142 = ssub.s32 %s9, 1
      %p143 = scmp.lt.s32.totalorder %s14, 1
      %s144 = scalar_select %p143, %s14, 1
      %s145 = smul.addr %s144, 54
      %s146 = smul.addr %s145, 4
      %s147 = scalar_lea.vmem %s0, %s146
      %p148 = pneg %p35
      %p149 = pneg %p32
      %p150 = pneg %p56
      %p151 = pneg %p53
      %p152 = pneg %p77
      %p153 = pneg %p74
      %p154 = pneg %p103
      %p155 = pneg %p100
      %p156 = scmp.lt.s32.totalorder %s14, 1
      %s157 = scalar_select %p156, %s14, 1
      %s158 = smul.addr %s157, 8
      %s159 = smul.addr %s158, 4
      %s160 = scalar_lea.vmem %s3, %s159
      %p161 = scmp.lt.s32.totalorder %s14, 1
      %s162 = scalar_select %p161, %s14, 1
      %s163 = smul.addr %s162, 54
      %s164 = smul.addr %s163, 4
      %s165 = scalar_lea.vmem %s0, %s164
      %p166 = scmp.lt.s32.totalorder %s14, 1
      %s167 = scalar_select %p166, %s14, 1
      %s168 = smul.addr %s167, 8
      %s169 = smul.addr %s168, 4
      %s170 = scalar_lea.vmem %s3, %s169
      %v172 = vld [vmem:[%s165] sm:$0xf]
      %v173 = vld [vmem:[%s165 + $0x4] sm:$0xf]
      %v174 = vld [vmem:[%s165 + $0x8] sm:$0x1]
      %v175 = vld [vmem:[%s165 + $0xc] sm:$0xf]
      %v176 = vld [vmem:[%s165 + $0x10] sm:$0xf]
      %v177 = vld [vmem:[%s165 + $0x14] sm:$0x1]
      %v178 = vld [vmem:[%s165 + $0x18] sm:$0xf]
      %v179 = vld [vmem:[%s165 + $0x1c] sm:$0xf]
      %v180 = vld [vmem:[%s165 + $0x20] sm:$0x1]
      %v181 = vld [vmem:[%s165 + $0x24] sm:$0xf]
      %v182 = vld [vmem:[%s165 + $0x28] sm:$0xf]
      %v183 = vld [vmem:[%s165 + $0x2c] sm:$0x1]
      %v184 = vld [vmem:[%s165 + $0x30] sm:$0xf]
      %v185 = vld [vmem:[%s165 + $0x34] sm:$0xf]
      %v186 = vld [vmem:[%s165 + $0x38] sm:$0x1]
      %v187 = vld [vmem:[%s165 + $0x3c] sm:$0xf]
      %v188 = vld [vmem:[%s165 + $0x40] sm:$0xf]
      %v189 = vld [vmem:[%s165 + $0x44] sm:$0x1]
      %v190 = vld [vmem:[%s165 + $0x48] sm:$0xf]
      %v191 = vld [vmem:[%s165 + $0x4c] sm:$0xf]
      %v192 = vld [vmem:[%s165 + $0x50] sm:$0x1]
      %v193 = vld [vmem:[%s165 + $0x54] sm:$0xf]
      %v194 = vld [vmem:[%s165 + $0x58] sm:$0xf]
      %v195 = vld [vmem:[%s165 + $0x5c] sm:$0x1]
      %v196 = vld [vmem:[%s165 + $0x60] sm:$0xf]
      %v197 = vld [vmem:[%s165 + $0x64] sm:$0xf]
      %v198 = vld [vmem:[%s165 + $0x68] sm:$0x1]
      %v199 = vld [vmem:[%s165 + $0x6c] sm:$0xf]
      %v200 = vld [vmem:[%s165 + $0x70] sm:$0xf]
      %v201 = vld [vmem:[%s165 + $0x74] sm:$0x1]
      %v202 = vld [vmem:[%s165 + $0x78] sm:$0xf]
      %v203 = vld [vmem:[%s165 + $0x7c] sm:$0xf]
      %v204 = vld [vmem:[%s165 + $0x80] sm:$0x1]
      %v205 = vld [vmem:[%s165 + $0x84] sm:$0xf]
      %v206 = vld [vmem:[%s165 + $0x88] sm:$0xf]
      %v207 = vld [vmem:[%s165 + $0x8c] sm:$0x1]
      %v208 = vld [vmem:[%s165 + $0x90] sm:$0xf]
      %v209 = vld [vmem:[%s165 + $0x94] sm:$0xf]
      %v210 = vld [vmem:[%s165 + $0x98] sm:$0x1]
      %v211 = vld [vmem:[%s165 + $0x9c] sm:$0xf]
      %v212 = vld [vmem:[%s165 + $0xa0] sm:$0xf]
      %v213 = vld [vmem:[%s165 + $0xa4] sm:$0x1]
      %v214 = vld [vmem:[%s165 + $0xa8] sm:$0xf]
      %v215 = vld [vmem:[%s165 + $0xac] sm:$0xf]
      %v216 = vld [vmem:[%s165 + $0xb0] sm:$0x1]
      %v217 = vld [vmem:[%s165 + $0xb4] sm:$0xf]
      %v218 = vld [vmem:[%s165 + $0xb8] sm:$0xf]
      %v219 = vld [vmem:[%s165 + $0xbc] sm:$0x1]
      %v220 = vld [vmem:[%s165 + $0xc0] sm:$0xf]
      %v221 = vld [vmem:[%s165 + $0xc4] sm:$0xf]
      %v222 = vld [vmem:[%s165 + $0xc8] sm:$0x1]
      %v223 = vld [vmem:[%s165 + $0xcc] sm:$0xf]
      %v224 = vld [vmem:[%s165 + $0xd0] sm:$0xf]
      %v225 = vld [vmem:[%s165 + $0xd4] sm:$0x1]
      %v226 = vld [vmem:[%s1] sm:$0xf]
      %v227 = vld [vmem:[%s1 + $0x4] sm:$0xf]
      %s228 = scalar_lea.vmem %s1, 24
      %v229 = vld [vmem:[%s228] sm:$0xf]
      %v230 = vld [vmem:[%s228 + $0x4] sm:$0xf]
      %v263 = vunpack.c.l.b16 %v175
      %v264 = vunpack.c.l.b16 %v176
      %v265 = vunpack.c.l.b16 %v178
      %v266 = vunpack.c.l.b16 %v179
      %v267 = vunpack.c.l.b16 %v181
      %v268 = vunpack.c.l.b16 %v182
      %v269 = vunpack.c.l.b16 %v184
      %v270 = vunpack.c.l.b16 %v185
      %v271 = vunpack.c.l.b16 %v187
      %v272 = vunpack.c.l.b16 %v188
      %v273 = vunpack.c.l.b16 %v190
      %v274 = vunpack.c.l.b16 %v191
      %v275 = vunpack.c.l.b16 %v193
      %v276 = vunpack.c.l.b16 %v194
      %v277 = vunpack.c.l.b16 %v196
      %v278 = vunpack.c.l.b16 %v197
      %v279 = vunpack.c.l.b16 %v199
      %v280 = vunpack.c.l.b16 %v200
      %v281 = vunpack.c.l.b16 %v202
      %v282 = vunpack.c.l.b16 %v203
      %v283 = vunpack.c.l.b16 %v205
      %v284 = vunpack.c.l.b16 %v206
      %v285 = vunpack.c.l.b16 %v208
      %v286 = vunpack.c.l.b16 %v209
      %v287 = vunpack.c.l.b16 %v211
      %v288 = vunpack.c.l.b16 %v212
      %v289 = vunpack.c.l.b16 %v214
      %v290 = vunpack.c.l.b16 %v215
      %v291 = vunpack.c.l.b16 %v217
      %v292 = vunpack.c.l.b16 %v218
      %v293 = vunpack.c.l.b16 %v220
      %v294 = vunpack.c.l.b16 %v221
      %v295 = vpack.c.b16 %v264, %v263
      %v296 = vpack.c.b16 %v266, %v265
      %v297 = vpack.c.b16 %v268, %v267
      %v298 = vpack.c.b16 %v270, %v269
      %v299 = vpack.c.b16 %v272, %v271
      %v300 = vpack.c.b16 %v274, %v273
      %v301 = vpack.c.b16 %v276, %v275
      %v302 = vpack.c.b16 %v278, %v277
      %v303 = vpack.c.b16 %v280, %v279
      %v304 = vpack.c.b16 %v282, %v281
      %v305 = vpack.c.b16 %v284, %v283
      %v306 = vpack.c.b16 %v286, %v285
      %v307 = vpack.c.b16 %v288, %v287
      %v308 = vpack.c.b16 %v290, %v289
      %v309 = vpack.c.b16 %v292, %v291
      %v310 = vpack.c.b16 %v294, %v293
      %v313 = vunpack.c.l.b16 %v229
      %v314 = vunpack.c.l.b16 %v230
      %v315 = vpack.c.b16 %v314, %v313
      %vm317 = vcmask 130048
      %v319 = vsel %vm317, %v295, 0
      %v322 = vsel %vm317, %v296, 0
      %v325 = vsel %vm317, %v297, 0
      %v328 = vsel %vm317, %v298, 0
      %v331 = vsel %vm317, %v299, 0
      %v334 = vsel %vm317, %v300, 0
      %v337 = vsel %vm317, %v301, 0
      %v340 = vsel %vm317, %v302, 0
      %v343 = vsel %vm317, %v303, 0
      %v346 = vsel %vm317, %v304, 0
      %v349 = vsel %vm317, %v305, 0
      %v352 = vsel %vm317, %v306, 0
      %v355 = vsel %vm317, %v307, 0
      %v358 = vsel %vm317, %v308, 0
      %v361 = vsel %vm317, %v309, 0
      %v364 = vsel %vm317, %v310, 0
      %366 = vmatpush.bf16.msra.mxu0 0
      %367 = vmatpush.bf16.msra.mxu0 0
      %368 = vmatpush.bf16.msra.mxu0 0
      %369 = vmatpush.bf16.msra.mxu0 0
      %370 = vmatpush.bf16.msra.mxu0 0
      %371 = vmatpush.bf16.msra.mxu0 0
      %372 = vmatpush.bf16.msra.mxu0 0
      %373 = vmatpush.bf16.msra.mxu0 %v315
      %374 = vmatmul.bf16.gmra.mxu0 %v319
      %v375 = vpop.f32.mrf.mxu0
      %v376 = vadd.f32 0.0, %v375
      %v377 = vpop.f32.mrf.mxu0
      %v378 = vadd.f32 0.0, %v377
      %379 = vmatmul.bf16.gmra.mxu0 %v322
      %v380 = vpop.f32.mrf.mxu0
      %v381 = vadd.f32 0.0, %v380
      %v382 = vpop.f32.mrf.mxu0
      %v383 = vadd.f32 0.0, %v382
      %384 = vmatmul.bf16.gmra.mxu0 %v325
      %v385 = vpop.f32.mrf.mxu0
      %v386 = vadd.f32 0.0, %v385
      %v387 = vpop.f32.mrf.mxu0
      %v388 = vadd.f32 0.0, %v387
      %389 = vmatmul.bf16.gmra.mxu0 %v328
      %v390 = vpop.f32.mrf.mxu0
      %v391 = vadd.f32 0.0, %v390
      %v392 = vpop.f32.mrf.mxu0
      %v393 = vadd.f32 0.0, %v392
      %394 = vmatmul.bf16.gmra.mxu0 %v331
      %v395 = vpop.f32.mrf.mxu0
      %v396 = vadd.f32 0.0, %v395
      %v397 = vpop.f32.mrf.mxu0
      %v398 = vadd.f32 0.0, %v397
      %399 = vmatmul.bf16.gmra.mxu0 %v334
      %v400 = vpop.f32.mrf.mxu0
      %v401 = vadd.f32 0.0, %v400
      %v402 = vpop.f32.mrf.mxu0
      %v403 = vadd.f32 0.0, %v402
      %404 = vmatmul.bf16.gmra.mxu0 %v337
      %v405 = vpop.f32.mrf.mxu0
      %v406 = vadd.f32 0.0, %v405
      %v407 = vpop.f32.mrf.mxu0
      %v408 = vadd.f32 0.0, %v407
      %409 = vmatmul.bf16.gmra.mxu0 %v340
      %v410 = vpop.f32.mrf.mxu0
      %v411 = vadd.f32 0.0, %v410
      %v412 = vpop.f32.mrf.mxu0
      %v413 = vadd.f32 0.0, %v412
      %414 = vmatmul.bf16.gmra.mxu0 %v343
      %v415 = vpop.f32.mrf.mxu0
      %v416 = vadd.f32 0.0, %v415
      %v417 = vpop.f32.mrf.mxu0
      %v418 = vadd.f32 0.0, %v417
      %419 = vmatmul.bf16.gmra.mxu0 %v346
      %v420 = vpop.f32.mrf.mxu0
      %v421 = vadd.f32 0.0, %v420
      %v422 = vpop.f32.mrf.mxu0
      %v423 = vadd.f32 0.0, %v422
      %424 = vmatmul.bf16.gmra.mxu0 %v349
      %v425 = vpop.f32.mrf.mxu0
      %v426 = vadd.f32 0.0, %v425
      %v427 = vpop.f32.mrf.mxu0
      %v428 = vadd.f32 0.0, %v427
      %429 = vmatmul.bf16.gmra.mxu0 %v352
      %v430 = vpop.f32.mrf.mxu0
      %v431 = vadd.f32 0.0, %v430
      %v432 = vpop.f32.mrf.mxu0
      %v433 = vadd.f32 0.0, %v432
      %434 = vmatmul.bf16.gmra.mxu0 %v355
      %v435 = vpop.f32.mrf.mxu0
      %v436 = vadd.f32 0.0, %v435
      %v437 = vpop.f32.mrf.mxu0
      %v438 = vadd.f32 0.0, %v437
      %439 = vmatmul.bf16.gmra.mxu0 %v358
      %v440 = vpop.f32.mrf.mxu0
      %v441 = vadd.f32 0.0, %v440
      %v442 = vpop.f32.mrf.mxu0
      %v443 = vadd.f32 0.0, %v442
      %444 = vmatmul.bf16.gmra.mxu0 %v361
      %v445 = vpop.f32.mrf.mxu0
      %v446 = vadd.f32 0.0, %v445
      %v447 = vpop.f32.mrf.mxu0
      %v448 = vadd.f32 0.0, %v447
      %449 = vmatmul.bf16.gmra.mxu0 %v364
      %v450 = vpop.f32.mrf.mxu0
      %v451 = vadd.f32 0.0, %v450
      %v452 = vpop.f32.mrf.mxu0
      %v453 = vadd.f32 0.0, %v452
      %454 = vdwg.mxu0
      %v457 = vunpack.c.l.b16 %v172
      %v458 = vunpack.c.l.b16 %v173
      %v459 = vpack.c.b16 %v458, %v457
      %v462 = vunpack.c.l.b16 %v226
      %v463 = vunpack.c.l.b16 %v227
      %v464 = vpack.c.b16 %v463, %v462
      %v467 = vsel %vm317, %v459, 0
      %469 = vmatpush.bf16.msra.mxu0 0
      %470 = vmatpush.bf16.msra.mxu0 0
      %471 = vmatpush.bf16.msra.mxu0 0
      %472 = vmatpush.bf16.msra.mxu0 0
      %473 = vmatpush.bf16.msra.mxu0 0
      %474 = vmatpush.bf16.msra.mxu0 0
      %475 = vmatpush.bf16.msra.mxu0 0
      %476 = vmatpush.bf16.msra.mxu0 %v464
      %477 = vmatmul.bf16.gmra.mxu0 %v467
      %v478 = vpop.f32.mrf.mxu0
      %v479 = vadd.f32 %v376, %v478
      %v480 = vpop.f32.mrf.mxu0
      %v481 = vadd.f32 %v378, %v480
      %482 = vmatmul.bf16.gmra.mxu0 %v319
      %v483 = vpop.f32.mrf.mxu0
      %v484 = vadd.f32 %v381, %v483
      %v485 = vpop.f32.mrf.mxu0
      %v486 = vadd.f32 %v383, %v485
      %487 = vmatmul.bf16.gmra.mxu0 %v322
      %v488 = vpop.f32.mrf.mxu0
      %v489 = vadd.f32 %v386, %v488
      %v490 = vpop.f32.mrf.mxu0
      %v491 = vadd.f32 %v388, %v490
      %492 = vmatmul.bf16.gmra.mxu0 %v325
      %v493 = vpop.f32.mrf.mxu0
      %v494 = vadd.f32 %v391, %v493
      %v495 = vpop.f32.mrf.mxu0
      %v496 = vadd.f32 %v393, %v495
      %497 = vmatmul.bf16.gmra.mxu0 %v328
      %v498 = vpop.f32.mrf.mxu0
      %v499 = vadd.f32 %v396, %v498
      %v500 = vpop.f32.mrf.mxu0
      %v501 = vadd.f32 %v398, %v500
      %502 = vmatmul.bf16.gmra.mxu0 %v331
      %v503 = vpop.f32.mrf.mxu0
      %v504 = vadd.f32 %v401, %v503
      %v505 = vpop.f32.mrf.mxu0
      %v506 = vadd.f32 %v403, %v505
      %507 = vmatmul.bf16.gmra.mxu0 %v334
      %v508 = vpop.f32.mrf.mxu0
      %v509 = vadd.f32 %v406, %v508
      %v510 = vpop.f32.mrf.mxu0
      %v511 = vadd.f32 %v408, %v510
      %512 = vmatmul.bf16.gmra.mxu0 %v337
      %v513 = vpop.f32.mrf.mxu0
      %v514 = vadd.f32 %v411, %v513
      %v515 = vpop.f32.mrf.mxu0
      %v516 = vadd.f32 %v413, %v515
      %517 = vmatmul.bf16.gmra.mxu0 %v340
      %v518 = vpop.f32.mrf.mxu0
      %v519 = vadd.f32 %v416, %v518
      %v520 = vpop.f32.mrf.mxu0
      %v521 = vadd.f32 %v418, %v520
      %522 = vmatmul.bf16.gmra.mxu0 %v343
      %v523 = vpop.f32.mrf.mxu0
      %v524 = vadd.f32 %v421, %v523
      %v525 = vpop.f32.mrf.mxu0
      %v526 = vadd.f32 %v423, %v525
      %527 = vmatmul.bf16.gmra.mxu0 %v346
      %v528 = vpop.f32.mrf.mxu0
      %v529 = vadd.f32 %v426, %v528
      %v530 = vpop.f32.mrf.mxu0
      %v531 = vadd.f32 %v428, %v530
      %532 = vmatmul.bf16.gmra.mxu0 %v349
      %v533 = vpop.f32.mrf.mxu0
      %v534 = vadd.f32 %v431, %v533
      %v535 = vpop.f32.mrf.mxu0
      %v536 = vadd.f32 %v433, %v535
      %537 = vmatmul.bf16.gmra.mxu0 %v352
      %v538 = vpop.f32.mrf.mxu0
      %v539 = vadd.f32 %v436, %v538
      %v540 = vpop.f32.mrf.mxu0
      %v541 = vadd.f32 %v438, %v540
      %542 = vmatmul.bf16.gmra.mxu0 %v355
      %v543 = vpop.f32.mrf.mxu0
      %v544 = vadd.f32 %v441, %v543
      %v545 = vpop.f32.mrf.mxu0
      %v546 = vadd.f32 %v443, %v545
      %547 = vmatmul.bf16.gmra.mxu0 %v358
      %v548 = vpop.f32.mrf.mxu0
      %v549 = vadd.f32 %v446, %v548
      %v550 = vpop.f32.mrf.mxu0
      %v551 = vadd.f32 %v448, %v550
      %552 = vmatmul.bf16.gmra.mxu0 %v361
      %v553 = vpop.f32.mrf.mxu0
      %v554 = vadd.f32 %v451, %v553
      %v555 = vpop.f32.mrf.mxu0
      %v556 = vadd.f32 %v453, %v555
      %557 = vdwg.mxu0
      %s558 = scalar_lea.vmem %s1, 48
      %v559 = vld [vmem:[%s558] sm:$0xf]
      %v560 = vld [vmem:[%s558 + $0x4] sm:$0xf]
      %v563 = vunpack.c.l.b16 %v223
      %v564 = vunpack.c.l.b16 %v224
      %v565 = vpack.c.b16 %v564, %v563
      %v568 = vunpack.c.l.b16 %v559
      %v569 = vunpack.c.l.b16 %v560
      %v570 = vpack.c.b16 %v569, %v568
      %v573 = vsel %vm317, %v565, 0
      %575 = vmatpush.bf16.msra.mxu0 0
      %576 = vmatpush.bf16.msra.mxu0 0
      %577 = vmatpush.bf16.msra.mxu0 0
      %578 = vmatpush.bf16.msra.mxu0 0
      %579 = vmatpush.bf16.msra.mxu0 0
      %580 = vmatpush.bf16.msra.mxu0 0
      %581 = vmatpush.bf16.msra.mxu0 0
      %582 = vmatpush.bf16.msra.mxu0 %v570
      %583 = vmatmul.bf16.gmra.mxu0 %v322
      %v584 = vpop.f32.mrf.mxu0
      %v585 = vadd.f32 0.0, %v584
      %v586 = vpop.f32.mrf.mxu0
      %v587 = vadd.f32 0.0, %v586
      %588 = vmatmul.bf16.gmra.mxu0 %v325
      %v589 = vpop.f32.mrf.mxu0
      %v590 = vadd.f32 0.0, %v589
      %v591 = vpop.f32.mrf.mxu0
      %v592 = vadd.f32 0.0, %v591
      %593 = vmatmul.bf16.gmra.mxu0 %v328
      %v594 = vpop.f32.mrf.mxu0
      %v595 = vadd.f32 0.0, %v594
      %v596 = vpop.f32.mrf.mxu0
      %v597 = vadd.f32 0.0, %v596
      %598 = vmatmul.bf16.gmra.mxu0 %v331
      %v599 = vpop.f32.mrf.mxu0
      %v600 = vadd.f32 0.0, %v599
      %v601 = vpop.f32.mrf.mxu0
      %v602 = vadd.f32 0.0, %v601
      %603 = vmatmul.bf16.gmra.mxu0 %v334
      %v604 = vpop.f32.mrf.mxu0
      %v605 = vadd.f32 0.0, %v604
      %v606 = vpop.f32.mrf.mxu0
      %v607 = vadd.f32 0.0, %v606
      %608 = vmatmul.bf16.gmra.mxu0 %v337
      %v609 = vpop.f32.mrf.mxu0
      %v610 = vadd.f32 0.0, %v609
      %v611 = vpop.f32.mrf.mxu0
      %v612 = vadd.f32 0.0, %v611
      %613 = vmatmul.bf16.gmra.mxu0 %v340
      %v614 = vpop.f32.mrf.mxu0
      %v615 = vadd.f32 0.0, %v614
      %v616 = vpop.f32.mrf.mxu0
      %v617 = vadd.f32 0.0, %v616
      %618 = vmatmul.bf16.gmra.mxu0 %v343
      %v619 = vpop.f32.mrf.mxu0
      %v620 = vadd.f32 0.0, %v619
      %v621 = vpop.f32.mrf.mxu0
      %v622 = vadd.f32 0.0, %v621
      %623 = vmatmul.bf16.gmra.mxu0 %v346
      %v624 = vpop.f32.mrf.mxu0
      %v625 = vadd.f32 0.0, %v624
      %v626 = vpop.f32.mrf.mxu0
      %v627 = vadd.f32 0.0, %v626
      %628 = vmatmul.bf16.gmra.mxu0 %v349
      %v629 = vpop.f32.mrf.mxu0
      %v630 = vadd.f32 0.0, %v629
      %v631 = vpop.f32.mrf.mxu0
      %v632 = vadd.f32 0.0, %v631
      %633 = vmatmul.bf16.gmra.mxu0 %v352
      %v634 = vpop.f32.mrf.mxu0
      %v635 = vadd.f32 0.0, %v634
      %v636 = vpop.f32.mrf.mxu0
      %v637 = vadd.f32 0.0, %v636
      %638 = vmatmul.bf16.gmra.mxu0 %v355
      %v639 = vpop.f32.mrf.mxu0
      %v640 = vadd.f32 0.0, %v639
      %v641 = vpop.f32.mrf.mxu0
      %v642 = vadd.f32 0.0, %v641
      %643 = vmatmul.bf16.gmra.mxu0 %v358
      %v644 = vpop.f32.mrf.mxu0
      %v645 = vadd.f32 0.0, %v644
      %v646 = vpop.f32.mrf.mxu0
      %v647 = vadd.f32 0.0, %v646
      %648 = vmatmul.bf16.gmra.mxu0 %v361
      %v649 = vpop.f32.mrf.mxu0
      %v650 = vadd.f32 0.0, %v649
      %v651 = vpop.f32.mrf.mxu0
      %v652 = vadd.f32 0.0, %v651
      %653 = vmatmul.bf16.gmra.mxu0 %v364
      %v654 = vpop.f32.mrf.mxu0
      %v655 = vadd.f32 0.0, %v654
      %v656 = vpop.f32.mrf.mxu0
      %v657 = vadd.f32 0.0, %v656
      %658 = vmatmul.bf16.gmra.mxu0 %v573
      %v659 = vpop.f32.mrf.mxu0
      %v660 = vadd.f32 0.0, %v659
      %v661 = vpop.f32.mrf.mxu0
      %v662 = vadd.f32 0.0, %v661
      %663 = vdwg.mxu0
      %v664 = vadd.f32 %v479, %v585
      %v665 = vadd.f32 %v481, %v587
      %v666 = vadd.f32 %v484, %v590
      %v667 = vadd.f32 %v486, %v592
      %v668 = vadd.f32 %v489, %v595
      %v669 = vadd.f32 %v491, %v597
      %v670 = vadd.f32 %v494, %v600
      %v671 = vadd.f32 %v496, %v602
      %v672 = vadd.f32 %v499, %v605
      %v673 = vadd.f32 %v501, %v607
      %v674 = vadd.f32 %v504, %v610
      %v675 = vadd.f32 %v506, %v612
      %v676 = vadd.f32 %v509, %v615
      %v677 = vadd.f32 %v511, %v617
      %v678 = vadd.f32 %v514, %v620
      %v679 = vadd.f32 %v516, %v622
      %v680 = vadd.f32 %v519, %v625
      %v681 = vadd.f32 %v521, %v627
      %v682 = vadd.f32 %v524, %v630
      %v683 = vadd.f32 %v526, %v632
      %v684 = vadd.f32 %v529, %v635
      %v685 = vadd.f32 %v531, %v637
      %v686 = vadd.f32 %v534, %v640
      %v687 = vadd.f32 %v536, %v642
      %v688 = vadd.f32 %v539, %v645
      %v689 = vadd.f32 %v541, %v647
      %v690 = vadd.f32 %v544, %v650
      %v691 = vadd.f32 %v546, %v652
      %v692 = vadd.f32 %v549, %v655
      %v693 = vadd.f32 %v551, %v657
      %v694 = vadd.f32 %v554, %v660
      %v695 = vadd.f32 %v556, %v662
      %vm696 = vsmask.f32 3328
      %vm697 = vsmask.f32 7440
      %vm698 = vmor %vm696, %vm697
      %v700 = vshrl.u32 %v172, 16
      %v702 = vrot.slane %v700, 4
      %v703 = vshll.u32 %v172, 16
      %v705 = vrot.slane %v703, 5
      %v706 = vor.u32 %v702, %v705
      %v707 = vrot.slane %v706, 4
      %v709 = vshll.u32 %v173, 16
      %v711 = vrot.slane %v709, 5
      %v712 = vsel %vm698, %v707, %v711
      %v713 = vshrl.u32 %v173, 16
      %v715 = vrot.slane %v713, 4
      %v716 = vor.u32 %v715, %v711
      %v717 = vrot.slane %v716, 4
      %v719 = vshll.u32 %v174, 16
      %v721 = vrot.slane %v719, 5
      %v722 = vsel %vm698, %v717, %v721
      %v724 = vshrl.u32 %v175, 16
      %v726 = vrot.slane %v724, 4
      %v727 = vshll.u32 %v175, 16
      %v729 = vrot.slane %v727, 5
      %v730 = vor.u32 %v726, %v729
      %v731 = vrot.slane %v730, 4
      %v733 = vshll.u32 %v176, 16
      %v735 = vrot.slane %v733, 5
      %v736 = vsel %vm698, %v731, %v735
      %v737 = vshrl.u32 %v176, 16
      %v739 = vrot.slane %v737, 4
      %v740 = vor.u32 %v739, %v735
      %v741 = vrot.slane %v740, 4
      %v743 = vshll.u32 %v177, 16
      %v745 = vrot.slane %v743, 5
      %v746 = vsel %vm698, %v741, %v745
      %v748 = vshrl.u32 %v178, 16
      %v750 = vrot.slane %v748, 4
      %v751 = vshll.u32 %v178, 16
      %v753 = vrot.slane %v751, 5
      %v754 = vor.u32 %v750, %v753
      %v755 = vrot.slane %v754, 4
      %v757 = vshll.u32 %v179, 16
      %v759 = vrot.slane %v757, 5
      %v760 = vsel %vm698, %v755, %v759
      %v761 = vshrl.u32 %v179, 16
      %v763 = vrot.slane %v761, 4
      %v764 = vor.u32 %v763, %v759
      %v765 = vrot.slane %v764, 4
      %v767 = vshll.u32 %v180, 16
      %v769 = vrot.slane %v767, 5
      %v770 = vsel %vm698, %v765, %v769
      %v772 = vshrl.u32 %v181, 16
      %v774 = vrot.slane %v772, 4
      %v775 = vshll.u32 %v181, 16
      %v777 = vrot.slane %v775, 5
      %v778 = vor.u32 %v774, %v777
      %v779 = vrot.slane %v778, 4
      %v781 = vshll.u32 %v182, 16
      %v783 = vrot.slane %v781, 5
      %v784 = vsel %vm698, %v779, %v783
      %v785 = vshrl.u32 %v182, 16
      %v787 = vrot.slane %v785, 4
      %v788 = vor.u32 %v787, %v783
      %v789 = vrot.slane %v788, 4
      %v791 = vshll.u32 %v183, 16
      %v793 = vrot.slane %v791, 5
      %v794 = vsel %vm698, %v789, %v793
      %v796 = vshrl.u32 %v184, 16
      %v798 = vrot.slane %v796, 4
      %v799 = vshll.u32 %v184, 16
      %v801 = vrot.slane %v799, 5
      %v802 = vor.u32 %v798, %v801
      %v803 = vrot.slane %v802, 4
      %v805 = vshll.u32 %v185, 16
      %v807 = vrot.slane %v805, 5
      %v808 = vsel %vm698, %v803, %v807
      %v809 = vshrl.u32 %v185, 16
      %v811 = vrot.slane %v809, 4
      %v812 = vor.u32 %v811, %v807
      %v813 = vrot.slane %v812, 4
      %v815 = vshll.u32 %v186, 16
      %v817 = vrot.slane %v815, 5
      %v818 = vsel %vm698, %v813, %v817
      %v820 = vshrl.u32 %v187, 16
      %v822 = vrot.slane %v820, 4
      %v823 = vshll.u32 %v187, 16
      %v825 = vrot.slane %v823, 5
      %v826 = vor.u32 %v822, %v825
      %v827 = vrot.slane %v826, 4
      %v829 = vshll.u32 %v188, 16
      %v831 = vrot.slane %v829, 5
      %v832 = vsel %vm698, %v827, %v831
      %v833 = vshrl.u32 %v188, 16
      %v835 = vrot.slane %v833, 4
      %v836 = vor.u32 %v835, %v831
      %v837 = vrot.slane %v836, 4
      %v839 = vshll.u32 %v189, 16
      %v841 = vrot.slane %v839, 5
      %v842 = vsel %vm698, %v837, %v841
      %v844 = vshrl.u32 %v190, 16
      %v846 = vrot.slane %v844, 4
      %v847 = vshll.u32 %v190, 16
      %v849 = vrot.slane %v847, 5
      %v850 = vor.u32 %v846, %v849
      %v851 = vrot.slane %v850, 4
      %v853 = vshll.u32 %v191, 16
      %v855 = vrot.slane %v853, 5
      %v856 = vsel %vm698, %v851, %v855
      %v857 = vshrl.u32 %v191, 16
      %v859 = vrot.slane %v857, 4
      %v860 = vor.u32 %v859, %v855
      %v861 = vrot.slane %v860, 4
      %v863 = vshll.u32 %v192, 16
      %v865 = vrot.slane %v863, 5
      %v866 = vsel %vm698, %v861, %v865
      %v868 = vshrl.u32 %v193, 16
      %v870 = vrot.slane %v868, 4
      %v871 = vshll.u32 %v193, 16
      %v873 = vrot.slane %v871, 5
      %v874 = vor.u32 %v870, %v873
      %v875 = vrot.slane %v874, 4
      %v877 = vshll.u32 %v194, 16
      %v879 = vrot.slane %v877, 5
      %v880 = vsel %vm698, %v875, %v879
      %v881 = vshrl.u32 %v194, 16
      %v883 = vrot.slane %v881, 4
      %v884 = vor.u32 %v883, %v879
      %v885 = vrot.slane %v884, 4
      %v887 = vshll.u32 %v195, 16
      %v889 = vrot.slane %v887, 5
      %v890 = vsel %vm698, %v885, %v889
      %v892 = vshrl.u32 %v196, 16
      %v894 = vrot.slane %v892, 4
      %v895 = vshll.u32 %v196, 16
      %v897 = vrot.slane %v895, 5
      %v898 = vor.u32 %v894, %v897
      %v899 = vrot.slane %v898, 4
      %v901 = vshll.u32 %v197, 16
      %v903 = vrot.slane %v901, 5
      %v904 = vsel %vm698, %v899, %v903
      %v905 = vshrl.u32 %v197, 16
      %v907 = vrot.slane %v905, 4
      %v908 = vor.u32 %v907, %v903
      %v909 = vrot.slane %v908, 4
      %v911 = vshll.u32 %v198, 16
      %v913 = vrot.slane %v911, 5
      %v914 = vsel %vm698, %v909, %v913
      %v916 = vshrl.u32 %v199, 16
      %v918 = vrot.slane %v916, 4
      %v919 = vshll.u32 %v199, 16
      %v921 = vrot.slane %v919, 5
      %v922 = vor.u32 %v918, %v921
      %v923 = vrot.slane %v922, 4
      %v925 = vshll.u32 %v200, 16
      %v927 = vrot.slane %v925, 5
      %v928 = vsel %vm698, %v923, %v927
      %v929 = vshrl.u32 %v200, 16
      %v931 = vrot.slane %v929, 4
      %v932 = vor.u32 %v931, %v927
      %v933 = vrot.slane %v932, 4
      %v935 = vshll.u32 %v201, 16
      %v937 = vrot.slane %v935, 5
      %v938 = vsel %vm698, %v933, %v937
      %v940 = vshrl.u32 %v202, 16
      %v942 = vrot.slane %v940, 4
      %v943 = vshll.u32 %v202, 16
      %v945 = vrot.slane %v943, 5
      %v946 = vor.u32 %v942, %v945
      %v947 = vrot.slane %v946, 4
      %v949 = vshll.u32 %v203, 16
      %v951 = vrot.slane %v949, 5
      %v952 = vsel %vm698, %v947, %v951
      %v953 = vshrl.u32 %v203, 16
      %v955 = vrot.slane %v953, 4
      %v956 = vor.u32 %v955, %v951
      %v957 = vrot.slane %v956, 4
      %v959 = vshll.u32 %v204, 16
      %v961 = vrot.slane %v959, 5
      %v962 = vsel %vm698, %v957, %v961
      %v964 = vshrl.u32 %v205, 16
      %v966 = vrot.slane %v964, 4
      %v967 = vshll.u32 %v205, 16
      %v969 = vrot.slane %v967, 5
      %v970 = vor.u32 %v966, %v969
      %v971 = vrot.slane %v970, 4
      %v973 = vshll.u32 %v206, 16
      %v975 = vrot.slane %v973, 5
      %v976 = vsel %vm698, %v971, %v975
      %v977 = vshrl.u32 %v206, 16
      %v979 = vrot.slane %v977, 4
      %v980 = vor.u32 %v979, %v975
      %v981 = vrot.slane %v980, 4
      %v983 = vshll.u32 %v207, 16
      %v985 = vrot.slane %v983, 5
      %v986 = vsel %vm698, %v981, %v985
      %v988 = vshrl.u32 %v208, 16
      %v990 = vrot.slane %v988, 4
      %v991 = vshll.u32 %v208, 16
      %v993 = vrot.slane %v991, 5
      %v994 = vor.u32 %v990, %v993
      %v995 = vrot.slane %v994, 4
      %v997 = vshll.u32 %v209, 16
      %v999 = vrot.slane %v997, 5
      %v1000 = vsel %vm698, %v995, %v999
      %v1001 = vshrl.u32 %v209, 16
      %v1003 = vrot.slane %v1001, 4
      %v1004 = vor.u32 %v1003, %v999
      %v1005 = vrot.slane %v1004, 4
      %v1007 = vshll.u32 %v210, 16
      %v1009 = vrot.slane %v1007, 5
      %v1010 = vsel %vm698, %v1005, %v1009
      %v1012 = vshrl.u32 %v211, 16
      %v1014 = vrot.slane %v1012, 4
      %v1015 = vshll.u32 %v211, 16
      %v1017 = vrot.slane %v1015, 5
      %v1018 = vor.u32 %v1014, %v1017
      %v1019 = vrot.slane %v1018, 4
      %v1021 = vshll.u32 %v212, 16
      %v1023 = vrot.slane %v1021, 5
      %v1024 = vsel %vm698, %v1019, %v1023
      %v1025 = vshrl.u32 %v212, 16
      %v1027 = vrot.slane %v1025, 4
      %v1028 = vor.u32 %v1027, %v1023
      %v1029 = vrot.slane %v1028, 4
      %v1031 = vshll.u32 %v213, 16
      %v1033 = vrot.slane %v1031, 5
      %v1034 = vsel %vm698, %v1029, %v1033
      %v1036 = vshrl.u32 %v214, 16
      %v1038 = vrot.slane %v1036, 4
      %v1039 = vshll.u32 %v214, 16
      %v1041 = vrot.slane %v1039, 5
      %v1042 = vor.u32 %v1038, %v1041
      %v1043 = vrot.slane %v1042, 4
      %v1045 = vshll.u32 %v215, 16
      %v1047 = vrot.slane %v1045, 5
      %v1048 = vsel %vm698, %v1043, %v1047
      %v1049 = vshrl.u32 %v215, 16
      %v1051 = vrot.slane %v1049, 4
      %v1052 = vor.u32 %v1051, %v1047
      %v1053 = vrot.slane %v1052, 4
      %v1055 = vshll.u32 %v216, 16
      %v1057 = vrot.slane %v1055, 5
      %v1058 = vsel %vm698, %v1053, %v1057
      %v1060 = vshrl.u32 %v217, 16
      %v1062 = vrot.slane %v1060, 4
      %v1063 = vshll.u32 %v217, 16
      %v1065 = vrot.slane %v1063, 5
      %v1066 = vor.u32 %v1062, %v1065
      %v1067 = vrot.slane %v1066, 4
      %v1069 = vshll.u32 %v218, 16
      %v1071 = vrot.slane %v1069, 5
      %v1072 = vsel %vm698, %v1067, %v1071
      %v1073 = vshrl.u32 %v218, 16
      %v1075 = vrot.slane %v1073, 4
      %v1076 = vor.u32 %v1075, %v1071
      %v1077 = vrot.slane %v1076, 4
      %v1079 = vshll.u32 %v219, 16
      %v1081 = vrot.slane %v1079, 5
      %v1082 = vsel %vm698, %v1077, %v1081
      %s1083 = scalar_lea.vmem %s1, 8
      %v1084 = vld [vmem:[%s1083] sm:$0xf]
      %v1085 = vld [vmem:[%s1083 + $0x4] sm:$0xf]
      %v1086 = vunpack.c.l.b16 %v712
      %v1087 = vunpack.c.l.b16 %v722
      %v1088 = vunpack.c.l.b16 %v736
      %v1089 = vunpack.c.l.b16 %v746
      %v1090 = vunpack.c.l.b16 %v760
      %v1091 = vunpack.c.l.b16 %v770
      %v1092 = vunpack.c.l.b16 %v784
      %v1093 = vunpack.c.l.b16 %v794
      %v1094 = vunpack.c.l.b16 %v808
      %v1095 = vunpack.c.l.b16 %v818
      %v1096 = vunpack.c.l.b16 %v832
      %v1097 = vunpack.c.l.b16 %v842
      %v1098 = vunpack.c.l.b16 %v856
      %v1099 = vunpack.c.l.b16 %v866
      %v1100 = vunpack.c.l.b16 %v880
      %v1101 = vunpack.c.l.b16 %v890
      %v1102 = vunpack.c.l.b16 %v904
      %v1103 = vunpack.c.l.b16 %v914
      %v1104 = vunpack.c.l.b16 %v928
      %v1105 = vunpack.c.l.b16 %v938
      %v1106 = vunpack.c.l.b16 %v952
      %v1107 = vunpack.c.l.b16 %v962
      %v1108 = vunpack.c.l.b16 %v976
      %v1109 = vunpack.c.l.b16 %v986
      %v1110 = vunpack.c.l.b16 %v1000
      %v1111 = vunpack.c.l.b16 %v1010
      %v1112 = vunpack.c.l.b16 %v1024
      %v1113 = vunpack.c.l.b16 %v1034
      %v1114 = vunpack.c.l.b16 %v1048
      %v1115 = vunpack.c.l.b16 %v1058
      %v1116 = vunpack.c.l.b16 %v1072
      %v1117 = vunpack.c.l.b16 %v1082
      %v1118 = vpack.c.b16 %v1087, %v1086
      %v1119 = vpack.c.b16 %v1089, %v1088
      %v1120 = vpack.c.b16 %v1091, %v1090
      %v1121 = vpack.c.b16 %v1093, %v1092
      %v1122 = vpack.c.b16 %v1095, %v1094
      %v1123 = vpack.c.b16 %v1097, %v1096
      %v1124 = vpack.c.b16 %v1099, %v1098
      %v1125 = vpack.c.b16 %v1101, %v1100
      %v1126 = vpack.c.b16 %v1103, %v1102
      %v1127 = vpack.c.b16 %v1105, %v1104
      %v1128 = vpack.c.b16 %v1107, %v1106
      %v1129 = vpack.c.b16 %v1109, %v1108
      %v1130 = vpack.c.b16 %v1111, %v1110
      %v1131 = vpack.c.b16 %v1113, %v1112
      %v1132 = vpack.c.b16 %v1115, %v1114
      %v1133 = vpack.c.b16 %v1117, %v1116
      %v1136 = vunpack.c.l.b16 %v1084
      %v1137 = vunpack.c.l.b16 %v1085
      %v1138 = vpack.c.b16 %v1137, %v1136
      %v1141 = vsel %vm317, %v1118, 0
      %v1144 = vsel %vm317, %v1119, 0
      %v1147 = vsel %vm317, %v1120, 0
      %v1150 = vsel %vm317, %v1121, 0
      %v1153 = vsel %vm317, %v1122, 0
      %v1156 = vsel %vm317, %v1123, 0
      %v1159 = vsel %vm317, %v1124, 0
      %v1162 = vsel %vm317, %v1125, 0
      %v1165 = vsel %vm317, %v1126, 0
      %v1168 = vsel %vm317, %v1127, 0
      %v1171 = vsel %vm317, %v1128, 0
      %v1174 = vsel %vm317, %v1129, 0
      %v1177 = vsel %vm317, %v1130, 0
      %v1180 = vsel %vm317, %v1131, 0
      %v1183 = vsel %vm317, %v1132, 0
      %v1186 = vsel %vm317, %v1133, 0
      %1188 = vmatpush.bf16.msra.mxu0 0
      %1189 = vmatpush.bf16.msra.mxu0 0
      %1190 = vmatpush.bf16.msra.mxu0 0
      %1191 = vmatpush.bf16.msra.mxu0 0
      %1192 = vmatpush.bf16.msra.mxu0 0
      %1193 = vmatpush.bf16.msra.mxu0 0
      %1194 = vmatpush.bf16.msra.mxu0 0
      %1195 = vmatpush.bf16.msra.mxu0 %v1138
      %1196 = vmatmul.bf16.gmra.mxu0 %v1141
      %v1197 = vpop.f32.mrf.mxu0
      %v1198 = vadd.f32 0.0, %v1197
      %v1199 = vpop.f32.mrf.mxu0
      %v1200 = vadd.f32 0.0, %v1199
      %1201 = vmatmul.bf16.gmra.mxu0 %v1144
      %v1202 = vpop.f32.mrf.mxu0
      %v1203 = vadd.f32 0.0, %v1202
      %v1204 = vpop.f32.mrf.mxu0
      %v1205 = vadd.f32 0.0, %v1204
      %1206 = vmatmul.bf16.gmra.mxu0 %v1147
      %v1207 = vpop.f32.mrf.mxu0
      %v1208 = vadd.f32 0.0, %v1207
      %v1209 = vpop.f32.mrf.mxu0
      %v1210 = vadd.f32 0.0, %v1209
      %1211 = vmatmul.bf16.gmra.mxu0 %v1150
      %v1212 = vpop.f32.mrf.mxu0
      %v1213 = vadd.f32 0.0, %v1212
      %v1214 = vpop.f32.mrf.mxu0
      %v1215 = vadd.f32 0.0, %v1214
      %1216 = vmatmul.bf16.gmra.mxu0 %v1153
      %v1217 = vpop.f32.mrf.mxu0
      %v1218 = vadd.f32 0.0, %v1217
      %v1219 = vpop.f32.mrf.mxu0
      %v1220 = vadd.f32 0.0, %v1219
      %1221 = vmatmul.bf16.gmra.mxu0 %v1156
      %v1222 = vpop.f32.mrf.mxu0
      %v1223 = vadd.f32 0.0, %v1222
      %v1224 = vpop.f32.mrf.mxu0
      %v1225 = vadd.f32 0.0, %v1224
      %1226 = vmatmul.bf16.gmra.mxu0 %v1159
      %v1227 = vpop.f32.mrf.mxu0
      %v1228 = vadd.f32 0.0, %v1227
      %v1229 = vpop.f32.mrf.mxu0
      %v1230 = vadd.f32 0.0, %v1229
      %1231 = vmatmul.bf16.gmra.mxu0 %v1162
      %v1232 = vpop.f32.mrf.mxu0
      %v1233 = vadd.f32 0.0, %v1232
      %v1234 = vpop.f32.mrf.mxu0
      %v1235 = vadd.f32 0.0, %v1234
      %1236 = vmatmul.bf16.gmra.mxu0 %v1165
      %v1237 = vpop.f32.mrf.mxu0
      %v1238 = vadd.f32 0.0, %v1237
      %v1239 = vpop.f32.mrf.mxu0
      %v1240 = vadd.f32 0.0, %v1239
      %1241 = vmatmul.bf16.gmra.mxu0 %v1168
      %v1242 = vpop.f32.mrf.mxu0
      %v1243 = vadd.f32 0.0, %v1242
      %v1244 = vpop.f32.mrf.mxu0
      %v1245 = vadd.f32 0.0, %v1244
      %1246 = vmatmul.bf16.gmra.mxu0 %v1171
      %v1247 = vpop.f32.mrf.mxu0
      %v1248 = vadd.f32 0.0, %v1247
      %v1249 = vpop.f32.mrf.mxu0
      %v1250 = vadd.f32 0.0, %v1249
      %1251 = vmatmul.bf16.gmra.mxu0 %v1174
      %v1252 = vpop.f32.mrf.mxu0
      %v1253 = vadd.f32 0.0, %v1252
      %v1254 = vpop.f32.mrf.mxu0
      %v1255 = vadd.f32 0.0, %v1254
      %1256 = vmatmul.bf16.gmra.mxu0 %v1177
      %v1257 = vpop.f32.mrf.mxu0
      %v1258 = vadd.f32 0.0, %v1257
      %v1259 = vpop.f32.mrf.mxu0
      %v1260 = vadd.f32 0.0, %v1259
      %1261 = vmatmul.bf16.gmra.mxu0 %v1180
      %v1262 = vpop.f32.mrf.mxu0
      %v1263 = vadd.f32 0.0, %v1262
      %v1264 = vpop.f32.mrf.mxu0
      %v1265 = vadd.f32 0.0, %v1264
      %1266 = vmatmul.bf16.gmra.mxu0 %v1183
      %v1267 = vpop.f32.mrf.mxu0
      %v1268 = vadd.f32 0.0, %v1267
      %v1269 = vpop.f32.mrf.mxu0
      %v1270 = vadd.f32 0.0, %v1269
      %1271 = vmatmul.bf16.gmra.mxu0 %v1186
      %v1272 = vpop.f32.mrf.mxu0
      %v1273 = vadd.f32 0.0, %v1272
      %v1274 = vpop.f32.mrf.mxu0
      %v1275 = vadd.f32 0.0, %v1274
      %1276 = vdwg.mxu0
      %v1277 = vadd.f32 %v664, %v1198
      %v1278 = vadd.f32 %v665, %v1200
      %v1279 = vadd.f32 %v666, %v1203
      %v1280 = vadd.f32 %v667, %v1205
      %v1281 = vadd.f32 %v668, %v1208
      %v1282 = vadd.f32 %v669, %v1210
      %v1283 = vadd.f32 %v670, %v1213
      %v1284 = vadd.f32 %v671, %v1215
      %v1285 = vadd.f32 %v672, %v1218
      %v1286 = vadd.f32 %v673, %v1220
      %v1287 = vadd.f32 %v674, %v1223
      %v1288 = vadd.f32 %v675, %v1225
      %v1289 = vadd.f32 %v676, %v1228
      %v1290 = vadd.f32 %v677, %v1230
      %v1291 = vadd.f32 %v678, %v1233
      %v1292 = vadd.f32 %v679, %v1235
      %v1293 = vadd.f32 %v680, %v1238
      %v1294 = vadd.f32 %v681, %v1240
      %v1295 = vadd.f32 %v682, %v1243
      %v1296 = vadd.f32 %v683, %v1245
      %v1297 = vadd.f32 %v684, %v1248
      %v1298 = vadd.f32 %v685, %v1250
      %v1299 = vadd.f32 %v686, %v1253
      %v1300 = vadd.f32 %v687, %v1255
      %v1301 = vadd.f32 %v688, %v1258
      %v1302 = vadd.f32 %v689, %v1260
      %v1303 = vadd.f32 %v690, %v1263
      %v1304 = vadd.f32 %v691, %v1265
      %v1305 = vadd.f32 %v692, %v1268
      %v1306 = vadd.f32 %v693, %v1270
      %v1307 = vadd.f32 %v694, %v1273
      %v1308 = vadd.f32 %v695, %v1275
      %v1310 = vshrl.u32 %v220, 16
      %v1312 = vrot.slane %v1310, 4
      %v1313 = vshll.u32 %v220, 16
      %v1315 = vrot.slane %v1313, 5
      %v1316 = vor.u32 %v1312, %v1315
      %v1317 = vrot.slane %v1316, 4
      %v1319 = vshll.u32 %v221, 16
      %v1321 = vrot.slane %v1319, 5
      %v1322 = vsel %vm698, %v1317, %v1321
      %v1323 = vshrl.u32 %v221, 16
      %v1325 = vrot.slane %v1323, 4
      %v1326 = vor.u32 %v1325, %v1321
      %v1327 = vrot.slane %v1326, 4
      %v1329 = vshll.u32 %v222, 16
      %v1331 = vrot.slane %v1329, 5
      %v1332 = vsel %vm698, %v1327, %v1331
      %s1333 = scalar_lea.vmem %s1, 32
      %v1334 = vld [vmem:[%s1333] sm:$0xf]
      %v1335 = vld [vmem:[%s1333 + $0x4] sm:$0xf]
      %v1336 = vunpack.c.l.b16 %v1322
      %v1337 = vunpack.c.l.b16 %v1332
      %v1338 = vpack.c.b16 %v1337, %v1336
      %v1341 = vunpack.c.l.b16 %v1334
      %v1342 = vunpack.c.l.b16 %v1335
      %v1343 = vpack.c.b16 %v1342, %v1341
      %v1346 = vsel %vm317, %v1338, 0
      %1348 = vmatpush.bf16.msra.mxu0 0
      %1349 = vmatpush.bf16.msra.mxu0 0
      %1350 = vmatpush.bf16.msra.mxu0 0
      %1351 = vmatpush.bf16.msra.mxu0 0
      %1352 = vmatpush.bf16.msra.mxu0 0
      %1353 = vmatpush.bf16.msra.mxu0 0
      %1354 = vmatpush.bf16.msra.mxu0 0
      %1355 = vmatpush.bf16.msra.mxu0 %v1343
      %1356 = vmatmul.bf16.gmra.mxu0 %v1144
      %v1357 = vpop.f32.mrf.mxu0
      %v1358 = vadd.f32 0.0, %v1357
      %v1359 = vpop.f32.mrf.mxu0
      %v1360 = vadd.f32 0.0, %v1359
      %1361 = vmatmul.bf16.gmra.mxu0 %v1147
      %v1362 = vpop.f32.mrf.mxu0
      %v1363 = vadd.f32 0.0, %v1362
      %v1364 = vpop.f32.mrf.mxu0
      %v1365 = vadd.f32 0.0, %v1364
      %1366 = vmatmul.bf16.gmra.mxu0 %v1150
      %v1367 = vpop.f32.mrf.mxu0
      %v1368 = vadd.f32 0.0, %v1367
      %v1369 = vpop.f32.mrf.mxu0
      %v1370 = vadd.f32 0.0, %v1369
      %1371 = vmatmul.bf16.gmra.mxu0 %v1153
      %v1372 = vpop.f32.mrf.mxu0
      %v1373 = vadd.f32 0.0, %v1372
      %v1374 = vpop.f32.mrf.mxu0
      %v1375 = vadd.f32 0.0, %v1374
      %1376 = vmatmul.bf16.gmra.mxu0 %v1156
      %v1377 = vpop.f32.mrf.mxu0
      %v1378 = vadd.f32 0.0, %v1377
      %v1379 = vpop.f32.mrf.mxu0
      %v1380 = vadd.f32 0.0, %v1379
      %1381 = vmatmul.bf16.gmra.mxu0 %v1159
      %v1382 = vpop.f32.mrf.mxu0
      %v1383 = vadd.f32 0.0, %v1382
      %v1384 = vpop.f32.mrf.mxu0
      %v1385 = vadd.f32 0.0, %v1384
      %1386 = vmatmul.bf16.gmra.mxu0 %v1162
      %v1387 = vpop.f32.mrf.mxu0
      %v1388 = vadd.f32 0.0, %v1387
      %v1389 = vpop.f32.mrf.mxu0
      %v1390 = vadd.f32 0.0, %v1389
      %1391 = vmatmul.bf16.gmra.mxu0 %v1165
      %v1392 = vpop.f32.mrf.mxu0
      %v1393 = vadd.f32 0.0, %v1392
      %v1394 = vpop.f32.mrf.mxu0
      %v1395 = vadd.f32 0.0, %v1394
      %1396 = vmatmul.bf16.gmra.mxu0 %v1168
      %v1397 = vpop.f32.mrf.mxu0
      %v1398 = vadd.f32 0.0, %v1397
      %v1399 = vpop.f32.mrf.mxu0
      %v1400 = vadd.f32 0.0, %v1399
      %1401 = vmatmul.bf16.gmra.mxu0 %v1171
      %v1402 = vpop.f32.mrf.mxu0
      %v1403 = vadd.f32 0.0, %v1402
      %v1404 = vpop.f32.mrf.mxu0
      %v1405 = vadd.f32 0.0, %v1404
      %1406 = vmatmul.bf16.gmra.mxu0 %v1174
      %v1407 = vpop.f32.mrf.mxu0
      %v1408 = vadd.f32 0.0, %v1407
      %v1409 = vpop.f32.mrf.mxu0
      %v1410 = vadd.f32 0.0, %v1409
      %1411 = vmatmul.bf16.gmra.mxu0 %v1177
      %v1412 = vpop.f32.mrf.mxu0
      %v1413 = vadd.f32 0.0, %v1412
      %v1414 = vpop.f32.mrf.mxu0
      %v1415 = vadd.f32 0.0, %v1414
      %1416 = vmatmul.bf16.gmra.mxu0 %v1180
      %v1417 = vpop.f32.mrf.mxu0
      %v1418 = vadd.f32 0.0, %v1417
      %v1419 = vpop.f32.mrf.mxu0
      %v1420 = vadd.f32 0.0, %v1419
      %1421 = vmatmul.bf16.gmra.mxu0 %v1183
      %v1422 = vpop.f32.mrf.mxu0
      %v1423 = vadd.f32 0.0, %v1422
      %v1424 = vpop.f32.mrf.mxu0
      %v1425 = vadd.f32 0.0, %v1424
      %1426 = vmatmul.bf16.gmra.mxu0 %v1186
      %v1427 = vpop.f32.mrf.mxu0
      %v1428 = vadd.f32 0.0, %v1427
      %v1429 = vpop.f32.mrf.mxu0
      %v1430 = vadd.f32 0.0, %v1429
      %1431 = vmatmul.bf16.gmra.mxu0 %v1346
      %v1432 = vpop.f32.mrf.mxu0
      %v1433 = vadd.f32 0.0, %v1432
      %v1434 = vpop.f32.mrf.mxu0
      %v1435 = vadd.f32 0.0, %v1434
      %1436 = vdwg.mxu0
      %v1437 = vadd.f32 %v1277, %v1358
      %v1438 = vadd.f32 %v1278, %v1360
      %v1439 = vadd.f32 %v1279, %v1363
      %v1440 = vadd.f32 %v1280, %v1365
      %v1441 = vadd.f32 %v1281, %v1368
      %v1442 = vadd.f32 %v1282, %v1370
      %v1443 = vadd.f32 %v1283, %v1373
      %v1444 = vadd.f32 %v1284, %v1375
      %v1445 = vadd.f32 %v1285, %v1378
      %v1446 = vadd.f32 %v1286, %v1380
      %v1447 = vadd.f32 %v1287, %v1383
      %v1448 = vadd.f32 %v1288, %v1385
      %v1449 = vadd.f32 %v1289, %v1388
      %v1450 = vadd.f32 %v1290, %v1390
      %v1451 = vadd.f32 %v1291, %v1393
      %v1452 = vadd.f32 %v1292, %v1395
      %v1453 = vadd.f32 %v1293, %v1398
      %v1454 = vadd.f32 %v1294, %v1400
      %v1455 = vadd.f32 %v1295, %v1403
      %v1456 = vadd.f32 %v1296, %v1405
      %v1457 = vadd.f32 %v1297, %v1408
      %v1458 = vadd.f32 %v1298, %v1410
      %v1459 = vadd.f32 %v1299, %v1413
      %v1460 = vadd.f32 %v1300, %v1415
      %v1461 = vadd.f32 %v1301, %v1418
      %v1462 = vadd.f32 %v1302, %v1420
      %v1463 = vadd.f32 %v1303, %v1423
      %v1464 = vadd.f32 %v1304, %v1425
      %v1465 = vadd.f32 %v1305, %v1428
      %v1466 = vadd.f32 %v1306, %v1430
      %v1467 = vadd.f32 %v1307, %v1433
      %v1468 = vadd.f32 %v1308, %v1435
      %v1470 = vshrl.u32 %v223, 16
      %v1472 = vrot.slane %v1470, 4
      %v1473 = vshll.u32 %v223, 16
      %v1475 = vrot.slane %v1473, 5
      %v1476 = vor.u32 %v1472, %v1475
      %v1477 = vrot.slane %v1476, 4
      %v1479 = vshll.u32 %v224, 16
      %v1481 = vrot.slane %v1479, 5
      %v1482 = vsel %vm698, %v1477, %v1481
      %v1483 = vshrl.u32 %v224, 16
      %v1485 = vrot.slane %v1483, 4
      %v1486 = vor.u32 %v1485, %v1481
      %v1487 = vrot.slane %v1486, 4
      %v1489 = vshll.u32 %v225, 16
      %v1491 = vrot.slane %v1489, 5
      %v1492 = vsel %vm698, %v1487, %v1491
      %s1493 = scalar_lea.vmem %s1, 56
      %v1494 = vld [vmem:[%s1493] sm:$0xf]
      %v1495 = vld [vmem:[%s1493 + $0x4] sm:$0xf]
      %v1496 = vunpack.c.l.b16 %v1482
      %v1497 = vunpack.c.l.b16 %v1492
      %v1498 = vpack.c.b16 %v1497, %v1496
      %v1501 = vunpack.c.l.b16 %v1494
      %v1502 = vunpack.c.l.b16 %v1495
      %v1503 = vpack.c.b16 %v1502, %v1501
      %v1506 = vsel %vm317, %v1498, 0
      %1508 = vmatpush.bf16.msra.mxu0 0
      %1509 = vmatpush.bf16.msra.mxu0 0
      %1510 = vmatpush.bf16.msra.mxu0 0
      %1511 = vmatpush.bf16.msra.mxu0 0
      %1512 = vmatpush.bf16.msra.mxu0 0
      %1513 = vmatpush.bf16.msra.mxu0 0
      %1514 = vmatpush.bf16.msra.mxu0 0
      %1515 = vmatpush.bf16.msra.mxu0 %v1503
      %1516 = vmatmul.bf16.gmra.mxu0 %v1147
      %v1517 = vpop.f32.mrf.mxu0
      %v1518 = vadd.f32 0.0, %v1517
      %v1519 = vpop.f32.mrf.mxu0
      %v1520 = vadd.f32 0.0, %v1519
      %1521 = vmatmul.bf16.gmra.mxu0 %v1150
      %v1522 = vpop.f32.mrf.mxu0
      %v1523 = vadd.f32 0.0, %v1522
      %v1524 = vpop.f32.mrf.mxu0
      %v1525 = vadd.f32 0.0, %v1524
      %1526 = vmatmul.bf16.gmra.mxu0 %v1153
      %v1527 = vpop.f32.mrf.mxu0
      %v1528 = vadd.f32 0.0, %v1527
      %v1529 = vpop.f32.mrf.mxu0
      %v1530 = vadd.f32 0.0, %v1529
      %1531 = vmatmul.bf16.gmra.mxu0 %v1156
      %v1532 = vpop.f32.mrf.mxu0
      %v1533 = vadd.f32 0.0, %v1532
      %v1534 = vpop.f32.mrf.mxu0
      %v1535 = vadd.f32 0.0, %v1534
      %1536 = vmatmul.bf16.gmra.mxu0 %v1159
      %v1537 = vpop.f32.mrf.mxu0
      %v1538 = vadd.f32 0.0, %v1537
      %v1539 = vpop.f32.mrf.mxu0
      %v1540 = vadd.f32 0.0, %v1539
      %1541 = vmatmul.bf16.gmra.mxu0 %v1162
      %v1542 = vpop.f32.mrf.mxu0
      %v1543 = vadd.f32 0.0, %v1542
      %v1544 = vpop.f32.mrf.mxu0
      %v1545 = vadd.f32 0.0, %v1544
      %1546 = vmatmul.bf16.gmra.mxu0 %v1165
      %v1547 = vpop.f32.mrf.mxu0
      %v1548 = vadd.f32 0.0, %v1547
      %v1549 = vpop.f32.mrf.mxu0
      %v1550 = vadd.f32 0.0, %v1549
      %1551 = vmatmul.bf16.gmra.mxu0 %v1168
      %v1552 = vpop.f32.mrf.mxu0
      %v1553 = vadd.f32 0.0, %v1552
      %v1554 = vpop.f32.mrf.mxu0
      %v1555 = vadd.f32 0.0, %v1554
      %1556 = vmatmul.bf16.gmra.mxu0 %v1171
      %v1557 = vpop.f32.mrf.mxu0
      %v1558 = vadd.f32 0.0, %v1557
      %v1559 = vpop.f32.mrf.mxu0
      %v1560 = vadd.f32 0.0, %v1559
      %1561 = vmatmul.bf16.gmra.mxu0 %v1174
      %v1562 = vpop.f32.mrf.mxu0
      %v1563 = vadd.f32 0.0, %v1562
      %v1564 = vpop.f32.mrf.mxu0
      %v1565 = vadd.f32 0.0, %v1564
      %1566 = vmatmul.bf16.gmra.mxu0 %v1177
      %v1567 = vpop.f32.mrf.mxu0
      %v1568 = vadd.f32 0.0, %v1567
      %v1569 = vpop.f32.mrf.mxu0
      %v1570 = vadd.f32 0.0, %v1569
      %1571 = vmatmul.bf16.gmra.mxu0 %v1180
      %v1572 = vpop.f32.mrf.mxu0
      %v1573 = vadd.f32 0.0, %v1572
      %v1574 = vpop.f32.mrf.mxu0
      %v1575 = vadd.f32 0.0, %v1574
      %1576 = vmatmul.bf16.gmra.mxu0 %v1183
      %v1577 = vpop.f32.mrf.mxu0
      %v1578 = vadd.f32 0.0, %v1577
      %v1579 = vpop.f32.mrf.mxu0
      %v1580 = vadd.f32 0.0, %v1579
      %1581 = vmatmul.bf16.gmra.mxu0 %v1186
      %v1582 = vpop.f32.mrf.mxu0
      %v1583 = vadd.f32 0.0, %v1582
      %v1584 = vpop.f32.mrf.mxu0
      %v1585 = vadd.f32 0.0, %v1584
      %1586 = vmatmul.bf16.gmra.mxu0 %v1346
      %v1587 = vpop.f32.mrf.mxu0
      %v1588 = vadd.f32 0.0, %v1587
      %v1589 = vpop.f32.mrf.mxu0
      %v1590 = vadd.f32 0.0, %v1589
      %1591 = vmatmul.bf16.gmra.mxu0 %v1506
      %v1592 = vpop.f32.mrf.mxu0
      %v1593 = vadd.f32 0.0, %v1592
      %v1594 = vpop.f32.mrf.mxu0
      %v1595 = vadd.f32 0.0, %v1594
      %1596 = vdwg.mxu0
      %v1597 = vadd.f32 %v1437, %v1518
      %v1598 = vadd.f32 %v1438, %v1520
      %v1599 = vadd.f32 %v1439, %v1523
      %v1600 = vadd.f32 %v1440, %v1525
      %v1601 = vadd.f32 %v1441, %v1528
      %v1602 = vadd.f32 %v1442, %v1530
      %v1603 = vadd.f32 %v1443, %v1533
      %v1604 = vadd.f32 %v1444, %v1535
      %v1605 = vadd.f32 %v1445, %v1538
      %v1606 = vadd.f32 %v1446, %v1540
      %v1607 = vadd.f32 %v1447, %v1543
      %v1608 = vadd.f32 %v1448, %v1545
      %v1609 = vadd.f32 %v1449, %v1548
      %v1610 = vadd.f32 %v1450, %v1550
      %v1611 = vadd.f32 %v1451, %v1553
      %v1612 = vadd.f32 %v1452, %v1555
      %v1613 = vadd.f32 %v1453, %v1558
      %v1614 = vadd.f32 %v1454, %v1560
      %v1615 = vadd.f32 %v1455, %v1563
      %v1616 = vadd.f32 %v1456, %v1565
      %v1617 = vadd.f32 %v1457, %v1568
      %v1618 = vadd.f32 %v1458, %v1570
      %v1619 = vadd.f32 %v1459, %v1573
      %v1620 = vadd.f32 %v1460, %v1575
      %v1621 = vadd.f32 %v1461, %v1578
      %v1622 = vadd.f32 %v1462, %v1580
      %v1623 = vadd.f32 %v1463, %v1583
      %v1624 = vadd.f32 %v1464, %v1585
      %v1625 = vadd.f32 %v1465, %v1588
      %v1626 = vadd.f32 %v1466, %v1590
      %v1627 = vadd.f32 %v1467, %v1593
      %v1628 = vadd.f32 %v1468, %v1595
      %vm1645 = vcmask 1042432
      %vm1646 = vcmask 1046532
      %vm1647 = vmor %vm1645, %vm1646
      %v1648 = vrot.slane %v172, 5
      %v1649 = vrot.slane %v1648, 4
      %v1650 = vrot.slane %v173, 5
      %v1651 = vsel %vm1647, %v1649, %v1650
      %v1652 = vrot.slane %v1650, 4
      %v1653 = vrot.slane %v174, 5
      %v1654 = vsel %vm1647, %v1652, %v1653
      %v1655 = vrot.slane %v175, 5
      %v1656 = vrot.slane %v1655, 4
      %v1657 = vrot.slane %v176, 5
      %v1658 = vsel %vm1647, %v1656, %v1657
      %v1659 = vrot.slane %v1657, 4
      %v1660 = vrot.slane %v177, 5
      %v1661 = vsel %vm1647, %v1659, %v1660
      %v1662 = vrot.slane %v178, 5
      %v1663 = vrot.slane %v1662, 4
      %v1664 = vrot.slane %v179, 5
      %v1665 = vsel %vm1647, %v1663, %v1664
      %v1666 = vrot.slane %v1664, 4
      %v1667 = vrot.slane %v180, 5
      %v1668 = vsel %vm1647, %v1666, %v1667
      %v1669 = vrot.slane %v181, 5
      %v1670 = vrot.slane %v1669, 4
      %v1671 = vrot.slane %v182, 5
      %v1672 = vsel %vm1647, %v1670, %v1671
      %v1673 = vrot.slane %v1671, 4
      %v1674 = vrot.slane %v183, 5
      %v1675 = vsel %vm1647, %v1673, %v1674
      %v1676 = vrot.slane %v184, 5
      %v1677 = vrot.slane %v1676, 4
      %v1678 = vrot.slane %v185, 5
      %v1679 = vsel %vm1647, %v1677, %v1678
      %v1680 = vrot.slane %v1678, 4
      %v1681 = vrot.slane %v186, 5
      %v1682 = vsel %vm1647, %v1680, %v1681
      %v1683 = vrot.slane %v187, 5
      %v1684 = vrot.slane %v1683, 4
      %v1685 = vrot.slane %v188, 5
      %v1686 = vsel %vm1647, %v1684, %v1685
      %v1687 = vrot.slane %v1685, 4
      %v1688 = vrot.slane %v189, 5
      %v1689 = vsel %vm1647, %v1687, %v1688
      %v1690 = vrot.slane %v190, 5
      %v1691 = vrot.slane %v1690, 4
      %v1692 = vrot.slane %v191, 5
      %v1693 = vsel %vm1647, %v1691, %v1692
      %v1694 = vrot.slane %v1692, 4
      %v1695 = vrot.slane %v192, 5
      %v1696 = vsel %vm1647, %v1694, %v1695
      %v1697 = vrot.slane %v193, 5
      %v1698 = vrot.slane %v1697, 4
      %v1699 = vrot.slane %v194, 5
      %v1700 = vsel %vm1647, %v1698, %v1699
      %v1701 = vrot.slane %v1699, 4
      %v1702 = vrot.slane %v195, 5
      %v1703 = vsel %vm1647, %v1701, %v1702
      %v1704 = vrot.slane %v196, 5
      %v1705 = vrot.slane %v1704, 4
      %v1706 = vrot.slane %v197, 5
      %v1707 = vsel %vm1647, %v1705, %v1706
      %v1708 = vrot.slane %v1706, 4
      %v1709 = vrot.slane %v198, 5
      %v1710 = vsel %vm1647, %v1708, %v1709
      %v1711 = vrot.slane %v199, 5
      %v1712 = vrot.slane %v1711, 4
      %v1713 = vrot.slane %v200, 5
      %v1714 = vsel %vm1647, %v1712, %v1713
      %v1715 = vrot.slane %v1713, 4
      %v1716 = vrot.slane %v201, 5
      %v1717 = vsel %vm1647, %v1715, %v1716
      %v1718 = vrot.slane %v202, 5
      %v1719 = vrot.slane %v1718, 4
      %v1720 = vrot.slane %v203, 5
      %v1721 = vsel %vm1647, %v1719, %v1720
      %v1722 = vrot.slane %v1720, 4
      %v1723 = vrot.slane %v204, 5
      %v1724 = vsel %vm1647, %v1722, %v1723
      %v1725 = vrot.slane %v205, 5
      %v1726 = vrot.slane %v1725, 4
      %v1727 = vrot.slane %v206, 5
      %v1728 = vsel %vm1647, %v1726, %v1727
      %v1729 = vrot.slane %v1727, 4
      %v1730 = vrot.slane %v207, 5
      %v1731 = vsel %vm1647, %v1729, %v1730
      %v1732 = vrot.slane %v208, 5
      %v1733 = vrot.slane %v1732, 4
      %v1734 = vrot.slane %v209, 5
      %v1735 = vsel %vm1647, %v1733, %v1734
      %v1736 = vrot.slane %v1734, 4
      %v1737 = vrot.slane %v210, 5
      %v1738 = vsel %vm1647, %v1736, %v1737
      %v1739 = vrot.slane %v211, 5
      %v1740 = vrot.slane %v1739, 4
      %v1741 = vrot.slane %v212, 5
      %v1742 = vsel %vm1647, %v1740, %v1741
      %v1743 = vrot.slane %v1741, 4
      %v1744 = vrot.slane %v213, 5
      %v1745 = vsel %vm1647, %v1743, %v1744
      %v1746 = vrot.slane %v214, 5
      %v1747 = vrot.slane %v1746, 4
      %v1748 = vrot.slane %v215, 5
      %v1749 = vsel %vm1647, %v1747, %v1748
      %v1750 = vrot.slane %v1748, 4
      %v1751 = vrot.slane %v216, 5
      %v1752 = vsel %vm1647, %v1750, %v1751
      %v1753 = vrot.slane %v217, 5
      %v1754 = vrot.slane %v1753, 4
      %v1755 = vrot.slane %v218, 5
      %v1756 = vsel %vm1647, %v1754, %v1755
      %v1757 = vrot.slane %v1755, 4
      %v1758 = vrot.slane %v219, 5
      %v1759 = vsel %vm1647, %v1757, %v1758
      %s1760 = scalar_lea.vmem %s1, 16
      %v1761 = vld [vmem:[%s1760] sm:$0xf]
      %v1762 = vld [vmem:[%s1760 + $0x4] sm:$0xf]
      %v1763 = vunpack.c.l.b16 %v1651
      %v1764 = vunpack.c.l.b16 %v1654
      %v1765 = vunpack.c.l.b16 %v1658
      %v1766 = vunpack.c.l.b16 %v1661
      %v1767 = vunpack.c.l.b16 %v1665
      %v1768 = vunpack.c.l.b16 %v1668
      %v1769 = vunpack.c.l.b16 %v1672
      %v1770 = vunpack.c.l.b16 %v1675
      %v1771 = vunpack.c.l.b16 %v1679
      %v1772 = vunpack.c.l.b16 %v1682
      %v1773 = vunpack.c.l.b16 %v1686
      %v1774 = vunpack.c.l.b16 %v1689
      %v1775 = vunpack.c.l.b16 %v1693
      %v1776 = vunpack.c.l.b16 %v1696
      %v1777 = vunpack.c.l.b16 %v1700
      %v1778 = vunpack.c.l.b16 %v1703
      %v1779 = vunpack.c.l.b16 %v1707
      %v1780 = vunpack.c.l.b16 %v1710
      %v1781 = vunpack.c.l.b16 %v1714
      %v1782 = vunpack.c.l.b16 %v1717
      %v1783 = vunpack.c.l.b16 %v1721
      %v1784 = vunpack.c.l.b16 %v1724
      %v1785 = vunpack.c.l.b16 %v1728
      %v1786 = vunpack.c.l.b16 %v1731
      %v1787 = vunpack.c.l.b16 %v1735
      %v1788 = vunpack.c.l.b16 %v1738
      %v1789 = vunpack.c.l.b16 %v1742
      %v1790 = vunpack.c.l.b16 %v1745
      %v1791 = vunpack.c.l.b16 %v1749
      %v1792 = vunpack.c.l.b16 %v1752
      %v1793 = vunpack.c.l.b16 %v1756
      %v1794 = vunpack.c.l.b16 %v1759
      %v1795 = vpack.c.b16 %v1764, %v1763
      %v1796 = vpack.c.b16 %v1766, %v1765
      %v1797 = vpack.c.b16 %v1768, %v1767
      %v1798 = vpack.c.b16 %v1770, %v1769
      %v1799 = vpack.c.b16 %v1772, %v1771
      %v1800 = vpack.c.b16 %v1774, %v1773
      %v1801 = vpack.c.b16 %v1776, %v1775
      %v1802 = vpack.c.b16 %v1778, %v1777
      %v1803 = vpack.c.b16 %v1780, %v1779
      %v1804 = vpack.c.b16 %v1782, %v1781
      %v1805 = vpack.c.b16 %v1784, %v1783
      %v1806 = vpack.c.b16 %v1786, %v1785
      %v1807 = vpack.c.b16 %v1788, %v1787
      %v1808 = vpack.c.b16 %v1790, %v1789
      %v1809 = vpack.c.b16 %v1792, %v1791
      %v1810 = vpack.c.b16 %v1794, %v1793
      %v1813 = vunpack.c.l.b16 %v1761
      %v1814 = vunpack.c.l.b16 %v1762
      %v1815 = vpack.c.b16 %v1814, %v1813
      %v1818 = vsel %vm317, %v1795, 0
      %v1821 = vsel %vm317, %v1796, 0
      %v1824 = vsel %vm317, %v1797, 0
      %v1827 = vsel %vm317, %v1798, 0
      %v1830 = vsel %vm317, %v1799, 0
      %v1833 = vsel %vm317, %v1800, 0
      %v1836 = vsel %vm317, %v1801, 0
      %v1839 = vsel %vm317, %v1802, 0
      %v1842 = vsel %vm317, %v1803, 0
      %v1845 = vsel %vm317, %v1804, 0
      %v1848 = vsel %vm317, %v1805, 0
      %v1851 = vsel %vm317, %v1806, 0
      %v1854 = vsel %vm317, %v1807, 0
      %v1857 = vsel %vm317, %v1808, 0
      %v1860 = vsel %vm317, %v1809, 0
      %v1863 = vsel %vm317, %v1810, 0
      %1865 = vmatpush.bf16.msra.mxu0 0
      %1866 = vmatpush.bf16.msra.mxu0 0
      %1867 = vmatpush.bf16.msra.mxu0 0
      %1868 = vmatpush.bf16.msra.mxu0 0
      %1869 = vmatpush.bf16.msra.mxu0 0
      %1870 = vmatpush.bf16.msra.mxu0 0
      %1871 = vmatpush.bf16.msra.mxu0 0
      %1872 = vmatpush.bf16.msra.mxu0 %v1815
      %1873 = vmatmul.bf16.gmra.mxu0 %v1818
      %v1874 = vpop.f32.mrf.mxu0
      %v1875 = vadd.f32 0.0, %v1874
      %v1876 = vpop.f32.mrf.mxu0
      %v1877 = vadd.f32 0.0, %v1876
      %1878 = vmatmul.bf16.gmra.mxu0 %v1821
      %v1879 = vpop.f32.mrf.mxu0
      %v1880 = vadd.f32 0.0, %v1879
      %v1881 = vpop.f32.mrf.mxu0
      %v1882 = vadd.f32 0.0, %v1881
      %1883 = vmatmul.bf16.gmra.mxu0 %v1824
      %v1884 = vpop.f32.mrf.mxu0
      %v1885 = vadd.f32 0.0, %v1884
      %v1886 = vpop.f32.mrf.mxu0
      %v1887 = vadd.f32 0.0, %v1886
      %1888 = vmatmul.bf16.gmra.mxu0 %v1827
      %v1889 = vpop.f32.mrf.mxu0
      %v1890 = vadd.f32 0.0, %v1889
      %v1891 = vpop.f32.mrf.mxu0
      %v1892 = vadd.f32 0.0, %v1891
      %1893 = vmatmul.bf16.gmra.mxu0 %v1830
      %v1894 = vpop.f32.mrf.mxu0
      %v1895 = vadd.f32 0.0, %v1894
      %v1896 = vpop.f32.mrf.mxu0
      %v1897 = vadd.f32 0.0, %v1896
      %1898 = vmatmul.bf16.gmra.mxu0 %v1833
      %v1899 = vpop.f32.mrf.mxu0
      %v1900 = vadd.f32 0.0, %v1899
      %v1901 = vpop.f32.mrf.mxu0
      %v1902 = vadd.f32 0.0, %v1901
      %1903 = vmatmul.bf16.gmra.mxu0 %v1836
      %v1904 = vpop.f32.mrf.mxu0
      %v1905 = vadd.f32 0.0, %v1904
      %v1906 = vpop.f32.mrf.mxu0
      %v1907 = vadd.f32 0.0, %v1906
      %1908 = vmatmul.bf16.gmra.mxu0 %v1839
      %v1909 = vpop.f32.mrf.mxu0
      %v1910 = vadd.f32 0.0, %v1909
      %v1911 = vpop.f32.mrf.mxu0
      %v1912 = vadd.f32 0.0, %v1911
      %1913 = vmatmul.bf16.gmra.mxu0 %v1842
      %v1914 = vpop.f32.mrf.mxu0
      %v1915 = vadd.f32 0.0, %v1914
      %v1916 = vpop.f32.mrf.mxu0
      %v1917 = vadd.f32 0.0, %v1916
      %1918 = vmatmul.bf16.gmra.mxu0 %v1845
      %v1919 = vpop.f32.mrf.mxu0
      %v1920 = vadd.f32 0.0, %v1919
      %v1921 = vpop.f32.mrf.mxu0
      %v1922 = vadd.f32 0.0, %v1921
      %1923 = vmatmul.bf16.gmra.mxu0 %v1848
      %v1924 = vpop.f32.mrf.mxu0
      %v1925 = vadd.f32 0.0, %v1924
      %v1926 = vpop.f32.mrf.mxu0
      %v1927 = vadd.f32 0.0, %v1926
      %1928 = vmatmul.bf16.gmra.mxu0 %v1851
      %v1929 = vpop.f32.mrf.mxu0
      %v1930 = vadd.f32 0.0, %v1929
      %v1931 = vpop.f32.mrf.mxu0
      %v1932 = vadd.f32 0.0, %v1931
      %1933 = vmatmul.bf16.gmra.mxu0 %v1854
      %v1934 = vpop.f32.mrf.mxu0
      %v1935 = vadd.f32 0.0, %v1934
      %v1936 = vpop.f32.mrf.mxu0
      %v1937 = vadd.f32 0.0, %v1936
      %1938 = vmatmul.bf16.gmra.mxu0 %v1857
      %v1939 = vpop.f32.mrf.mxu0
      %v1940 = vadd.f32 0.0, %v1939
      %v1941 = vpop.f32.mrf.mxu0
      %v1942 = vadd.f32 0.0, %v1941
      %1943 = vmatmul.bf16.gmra.mxu0 %v1860
      %v1944 = vpop.f32.mrf.mxu0
      %v1945 = vadd.f32 0.0, %v1944
      %v1946 = vpop.f32.mrf.mxu0
      %v1947 = vadd.f32 0.0, %v1946
      %1948 = vmatmul.bf16.gmra.mxu0 %v1863
      %v1949 = vpop.f32.mrf.mxu0
      %v1950 = vadd.f32 0.0, %v1949
      %v1951 = vpop.f32.mrf.mxu0
      %v1952 = vadd.f32 0.0, %v1951
      %1953 = vdwg.mxu0
      %v1954 = vadd.f32 %v1597, %v1875
      %v1955 = vadd.f32 %v1598, %v1877
      %v1956 = vadd.f32 %v1599, %v1880
      %v1957 = vadd.f32 %v1600, %v1882
      %v1958 = vadd.f32 %v1601, %v1885
      %v1959 = vadd.f32 %v1602, %v1887
      %v1960 = vadd.f32 %v1603, %v1890
      %v1961 = vadd.f32 %v1604, %v1892
      %v1962 = vadd.f32 %v1605, %v1895
      %v1963 = vadd.f32 %v1606, %v1897
      %v1964 = vadd.f32 %v1607, %v1900
      %v1965 = vadd.f32 %v1608, %v1902
      %v1966 = vadd.f32 %v1609, %v1905
      %v1967 = vadd.f32 %v1610, %v1907
      %v1968 = vadd.f32 %v1611, %v1910
      %v1969 = vadd.f32 %v1612, %v1912
      %v1970 = vadd.f32 %v1613, %v1915
      %v1971 = vadd.f32 %v1614, %v1917
      %v1972 = vadd.f32 %v1615, %v1920
      %v1973 = vadd.f32 %v1616, %v1922
      %v1974 = vadd.f32 %v1617, %v1925
      %v1975 = vadd.f32 %v1618, %v1927
      %v1976 = vadd.f32 %v1619, %v1930
      %v1977 = vadd.f32 %v1620, %v1932
      %v1978 = vadd.f32 %v1621, %v1935
      %v1979 = vadd.f32 %v1622, %v1937
      %v1980 = vadd.f32 %v1623, %v1940
      %v1981 = vadd.f32 %v1624, %v1942
      %v1982 = vadd.f32 %v1625, %v1945
      %v1983 = vadd.f32 %v1626, %v1947
      %v1984 = vadd.f32 %v1627, %v1950
      %v1985 = vadd.f32 %v1628, %v1952
      %v1987 = vrot.slane %v220, 5
      %v1988 = vrot.slane %v1987, 4
      %v1989 = vrot.slane %v221, 5
      %v1990 = vsel %vm1647, %v1988, %v1989
      %v1991 = vrot.slane %v1989, 4
      %v1992 = vrot.slane %v222, 5
      %v1993 = vsel %vm1647, %v1991, %v1992
      %s1994 = scalar_lea.vmem %s1, 40
      %v1995 = vld [vmem:[%s1994] sm:$0xf]
      %v1996 = vld [vmem:[%s1994 + $0x4] sm:$0xf]
      %v1997 = vunpack.c.l.b16 %v1990
      %v1998 = vunpack.c.l.b16 %v1993
      %v1999 = vpack.c.b16 %v1998, %v1997
      %v2002 = vunpack.c.l.b16 %v1995
      %v2003 = vunpack.c.l.b16 %v1996
      %v2004 = vpack.c.b16 %v2003, %v2002
      %v2007 = vsel %vm317, %v1999, 0
      %2009 = vmatpush.bf16.msra.mxu0 0
      %2010 = vmatpush.bf16.msra.mxu0 0
      %2011 = vmatpush.bf16.msra.mxu0 0
      %2012 = vmatpush.bf16.msra.mxu0 0
      %2013 = vmatpush.bf16.msra.mxu0 0
      %2014 = vmatpush.bf16.msra.mxu0 0
      %2015 = vmatpush.bf16.msra.mxu0 0
      %2016 = vmatpush.bf16.msra.mxu0 %v2004
      %2017 = vmatmul.bf16.gmra.mxu0 %v1821
      %v2018 = vpop.f32.mrf.mxu0
      %v2019 = vadd.f32 0.0, %v2018
      %v2020 = vpop.f32.mrf.mxu0
      %v2021 = vadd.f32 0.0, %v2020
      %2022 = vmatmul.bf16.gmra.mxu0 %v1824
      %v2023 = vpop.f32.mrf.mxu0
      %v2024 = vadd.f32 0.0, %v2023
      %v2025 = vpop.f32.mrf.mxu0
      %v2026 = vadd.f32 0.0, %v2025
      %2027 = vmatmul.bf16.gmra.mxu0 %v1827
      %v2028 = vpop.f32.mrf.mxu0
      %v2029 = vadd.f32 0.0, %v2028
      %v2030 = vpop.f32.mrf.mxu0
      %v2031 = vadd.f32 0.0, %v2030
      %2032 = vmatmul.bf16.gmra.mxu0 %v1830
      %v2033 = vpop.f32.mrf.mxu0
      %v2034 = vadd.f32 0.0, %v2033
      %v2035 = vpop.f32.mrf.mxu0
      %v2036 = vadd.f32 0.0, %v2035
      %2037 = vmatmul.bf16.gmra.mxu0 %v1833
      %v2038 = vpop.f32.mrf.mxu0
      %v2039 = vadd.f32 0.0, %v2038
      %v2040 = vpop.f32.mrf.mxu0
      %v2041 = vadd.f32 0.0, %v2040
      %2042 = vmatmul.bf16.gmra.mxu0 %v1836
      %v2043 = vpop.f32.mrf.mxu0
      %v2044 = vadd.f32 0.0, %v2043
      %v2045 = vpop.f32.mrf.mxu0
      %v2046 = vadd.f32 0.0, %v2045
      %2047 = vmatmul.bf16.gmra.mxu0 %v1839
      %v2048 = vpop.f32.mrf.mxu0
      %v2049 = vadd.f32 0.0, %v2048
      %v2050 = vpop.f32.mrf.mxu0
      %v2051 = vadd.f32 0.0, %v2050
      %2052 = vmatmul.bf16.gmra.mxu0 %v1842
      %v2053 = vpop.f32.mrf.mxu0
      %v2054 = vadd.f32 0.0, %v2053
      %v2055 = vpop.f32.mrf.mxu0
      %v2056 = vadd.f32 0.0, %v2055
      %2057 = vmatmul.bf16.gmra.mxu0 %v1845
      %v2058 = vpop.f32.mrf.mxu0
      %v2059 = vadd.f32 0.0, %v2058
      %v2060 = vpop.f32.mrf.mxu0
      %v2061 = vadd.f32 0.0, %v2060
      %2062 = vmatmul.bf16.gmra.mxu0 %v1848
      %v2063 = vpop.f32.mrf.mxu0
      %v2064 = vadd.f32 0.0, %v2063
      %v2065 = vpop.f32.mrf.mxu0
      %v2066 = vadd.f32 0.0, %v2065
      %2067 = vmatmul.bf16.gmra.mxu0 %v1851
      %v2068 = vpop.f32.mrf.mxu0
      %v2069 = vadd.f32 0.0, %v2068
      %v2070 = vpop.f32.mrf.mxu0
      %v2071 = vadd.f32 0.0, %v2070
      %2072 = vmatmul.bf16.gmra.mxu0 %v1854
      %v2073 = vpop.f32.mrf.mxu0
      %v2074 = vadd.f32 0.0, %v2073
      %v2075 = vpop.f32.mrf.mxu0
      %v2076 = vadd.f32 0.0, %v2075
      %2077 = vmatmul.bf16.gmra.mxu0 %v1857
      %v2078 = vpop.f32.mrf.mxu0
      %v2079 = vadd.f32 0.0, %v2078
      %v2080 = vpop.f32.mrf.mxu0
      %v2081 = vadd.f32 0.0, %v2080
      %2082 = vmatmul.bf16.gmra.mxu0 %v1860
      %v2083 = vpop.f32.mrf.mxu0
      %v2084 = vadd.f32 0.0, %v2083
      %v2085 = vpop.f32.mrf.mxu0
      %v2086 = vadd.f32 0.0, %v2085
      %2087 = vmatmul.bf16.gmra.mxu0 %v1863
      %v2088 = vpop.f32.mrf.mxu0
      %v2089 = vadd.f32 0.0, %v2088
      %v2090 = vpop.f32.mrf.mxu0
      %v2091 = vadd.f32 0.0, %v2090
      %2092 = vmatmul.bf16.gmra.mxu0 %v2007
      %v2093 = vpop.f32.mrf.mxu0
      %v2094 = vadd.f32 0.0, %v2093
      %v2095 = vpop.f32.mrf.mxu0
      %v2096 = vadd.f32 0.0, %v2095
      %2097 = vdwg.mxu0
      %v2098 = vadd.f32 %v1954, %v2019
      %v2099 = vadd.f32 %v1955, %v2021
      %v2100 = vadd.f32 %v1956, %v2024
      %v2101 = vadd.f32 %v1957, %v2026
      %v2102 = vadd.f32 %v1958, %v2029
      %v2103 = vadd.f32 %v1959, %v2031
      %v2104 = vadd.f32 %v1960, %v2034
      %v2105 = vadd.f32 %v1961, %v2036
      %v2106 = vadd.f32 %v1962, %v2039
      %v2107 = vadd.f32 %v1963, %v2041
      %v2108 = vadd.f32 %v1964, %v2044
      %v2109 = vadd.f32 %v1965, %v2046
      %v2110 = vadd.f32 %v1966, %v2049
      %v2111 = vadd.f32 %v1967, %v2051
      %v2112 = vadd.f32 %v1968, %v2054
      %v2113 = vadd.f32 %v1969, %v2056
      %v2114 = vadd.f32 %v1970, %v2059
      %v2115 = vadd.f32 %v1971, %v2061
      %v2116 = vadd.f32 %v1972, %v2064
      %v2117 = vadd.f32 %v1973, %v2066
      %v2118 = vadd.f32 %v1974, %v2069
      %v2119 = vadd.f32 %v1975, %v2071
      %v2120 = vadd.f32 %v1976, %v2074
      %v2121 = vadd.f32 %v1977, %v2076
      %v2122 = vadd.f32 %v1978, %v2079
      %v2123 = vadd.f32 %v1979, %v2081
      %v2124 = vadd.f32 %v1980, %v2084
      %v2125 = vadd.f32 %v1981, %v2086
      %v2126 = vadd.f32 %v1982, %v2089
      %v2127 = vadd.f32 %v1983, %v2091
      %v2128 = vadd.f32 %v1984, %v2094
      %v2129 = vadd.f32 %v1985, %v2096
      %v2131 = vrot.slane %v223, 5
      %v2132 = vrot.slane %v2131, 4
      %v2133 = vrot.slane %v224, 5
      %v2134 = vsel %vm1647, %v2132, %v2133
      %v2135 = vrot.slane %v2133, 4
      %v2136 = vrot.slane %v225, 5
      %v2137 = vsel %vm1647, %v2135, %v2136
      %s2138 = scalar_lea.vmem %s1, 64
      %v2139 = vld [vmem:[%s2138] sm:$0xf]
      %v2140 = vld [vmem:[%s2138 + $0x4] sm:$0xf]
      %v2141 = vunpack.c.l.b16 %v2134
      %v2142 = vunpack.c.l.b16 %v2137
      %v2143 = vpack.c.b16 %v2142, %v2141
      %v2146 = vunpack.c.l.b16 %v2139
      %v2147 = vunpack.c.l.b16 %v2140
      %v2148 = vpack.c.b16 %v2147, %v2146
      %v2151 = vsel %vm317, %v2143, 0
      %2153 = vmatpush.bf16.msra.mxu0 0
      %2154 = vmatpush.bf16.msra.mxu0 0
      %2155 = vmatpush.bf16.msra.mxu0 0
      %2156 = vmatpush.bf16.msra.mxu0 0
      %2157 = vmatpush.bf16.msra.mxu0 0
      %2158 = vmatpush.bf16.msra.mxu0 0
      %2159 = vmatpush.bf16.msra.mxu0 0
      %2160 = vmatpush.bf16.msra.mxu0 %v2148
      %2161 = vmatmul.bf16.gmra.mxu0 %v1824
      %v2162 = vpop.f32.mrf.mxu0
      %v2163 = vadd.f32 0.0, %v2162
      %v2164 = vpop.f32.mrf.mxu0
      %v2165 = vadd.f32 0.0, %v2164
      %2166 = vmatmul.bf16.gmra.mxu0 %v1827
      %v2167 = vpop.f32.mrf.mxu0
      %v2168 = vadd.f32 0.0, %v2167
      %v2169 = vpop.f32.mrf.mxu0
      %v2170 = vadd.f32 0.0, %v2169
      %2171 = vmatmul.bf16.gmra.mxu0 %v1830
      %v2172 = vpop.f32.mrf.mxu0
      %v2173 = vadd.f32 0.0, %v2172
      %v2174 = vpop.f32.mrf.mxu0
      %v2175 = vadd.f32 0.0, %v2174
      %2176 = vmatmul.bf16.gmra.mxu0 %v1833
      %v2177 = vpop.f32.mrf.mxu0
      %v2178 = vadd.f32 0.0, %v2177
      %v2179 = vpop.f32.mrf.mxu0
      %v2180 = vadd.f32 0.0, %v2179
      %2181 = vmatmul.bf16.gmra.mxu0 %v1836
      %v2182 = vpop.f32.mrf.mxu0
      %v2183 = vadd.f32 0.0, %v2182
      %v2184 = vpop.f32.mrf.mxu0
      %v2185 = vadd.f32 0.0, %v2184
      %2186 = vmatmul.bf16.gmra.mxu0 %v1839
      %v2187 = vpop.f32.mrf.mxu0
      %v2188 = vadd.f32 0.0, %v2187
      %v2189 = vpop.f32.mrf.mxu0
      %v2190 = vadd.f32 0.0, %v2189
      %2191 = vmatmul.bf16.gmra.mxu0 %v1842
      %v2192 = vpop.f32.mrf.mxu0
      %v2193 = vadd.f32 0.0, %v2192
      %v2194 = vpop.f32.mrf.mxu0
      %v2195 = vadd.f32 0.0, %v2194
      %2196 = vmatmul.bf16.gmra.mxu0 %v1845
      %v2197 = vpop.f32.mrf.mxu0
      %v2198 = vadd.f32 0.0, %v2197
      %v2199 = vpop.f32.mrf.mxu0
      %v2200 = vadd.f32 0.0, %v2199
      %2201 = vmatmul.bf16.gmra.mxu0 %v1848
      %v2202 = vpop.f32.mrf.mxu0
      %v2203 = vadd.f32 0.0, %v2202
      %v2204 = vpop.f32.mrf.mxu0
      %v2205 = vadd.f32 0.0, %v2204
      %2206 = vmatmul.bf16.gmra.mxu0 %v1851
      %v2207 = vpop.f32.mrf.mxu0
      %v2208 = vadd.f32 0.0, %v2207
      %v2209 = vpop.f32.mrf.mxu0
      %v2210 = vadd.f32 0.0, %v2209
      %2211 = vmatmul.bf16.gmra.mxu0 %v1854
      %v2212 = vpop.f32.mrf.mxu0
      %v2213 = vadd.f32 0.0, %v2212
      %v2214 = vpop.f32.mrf.mxu0
      %v2215 = vadd.f32 0.0, %v2214
      %2216 = vmatmul.bf16.gmra.mxu0 %v1857
      %v2217 = vpop.f32.mrf.mxu0
      %v2218 = vadd.f32 0.0, %v2217
      %v2219 = vpop.f32.mrf.mxu0
      %v2220 = vadd.f32 0.0, %v2219
      %2221 = vmatmul.bf16.gmra.mxu0 %v1860
      %v2222 = vpop.f32.mrf.mxu0
      %v2223 = vadd.f32 0.0, %v2222
      %v2224 = vpop.f32.mrf.mxu0
      %v2225 = vadd.f32 0.0, %v2224
      %2226 = vmatmul.bf16.gmra.mxu0 %v1863
      %v2227 = vpop.f32.mrf.mxu0
      %v2228 = vadd.f32 0.0, %v2227
      %v2229 = vpop.f32.mrf.mxu0
      %v2230 = vadd.f32 0.0, %v2229
      %2231 = vmatmul.bf16.gmra.mxu0 %v2007
      %v2232 = vpop.f32.mrf.mxu0
      %v2233 = vadd.f32 0.0, %v2232
      %v2234 = vpop.f32.mrf.mxu0
      %v2235 = vadd.f32 0.0, %v2234
      %2236 = vmatmul.bf16.gmra.mxu0 %v2151
      %v2237 = vpop.f32.mrf.mxu0
      %v2238 = vadd.f32 0.0, %v2237
      %v2239 = vpop.f32.mrf.mxu0
      %v2240 = vadd.f32 0.0, %v2239
      %2241 = vdwg.mxu0
      %v2242 = vadd.f32 %v2098, %v2163
      %v2243 = vadd.f32 %v2099, %v2165
      %v2244 = vadd.f32 %v2100, %v2168
      %v2245 = vadd.f32 %v2101, %v2170
      %v2246 = vadd.f32 %v2102, %v2173
      %v2247 = vadd.f32 %v2103, %v2175
      %v2248 = vadd.f32 %v2104, %v2178
      %v2249 = vadd.f32 %v2105, %v2180
      %v2250 = vadd.f32 %v2106, %v2183
      %v2251 = vadd.f32 %v2107, %v2185
      %v2252 = vadd.f32 %v2108, %v2188
      %v2253 = vadd.f32 %v2109, %v2190
      %v2254 = vadd.f32 %v2110, %v2193
      %v2255 = vadd.f32 %v2111, %v2195
      %v2256 = vadd.f32 %v2112, %v2198
      %v2257 = vadd.f32 %v2113, %v2200
      %v2258 = vadd.f32 %v2114, %v2203
      %v2259 = vadd.f32 %v2115, %v2205
      %v2260 = vadd.f32 %v2116, %v2208
      %v2261 = vadd.f32 %v2117, %v2210
      %v2262 = vadd.f32 %v2118, %v2213
      %v2263 = vadd.f32 %v2119, %v2215
      %v2264 = vadd.f32 %v2120, %v2218
      %v2265 = vadd.f32 %v2121, %v2220
      %v2266 = vadd.f32 %v2122, %v2223
      %v2267 = vadd.f32 %v2123, %v2225
      %v2268 = vadd.f32 %v2124, %v2228
      %v2269 = vadd.f32 %v2125, %v2230
      %v2270 = vadd.f32 %v2126, %v2233
      %v2271 = vadd.f32 %v2127, %v2235
      %v2272 = vadd.f32 %v2128, %v2238
      %v2273 = vadd.f32 %v2129, %v2240
      %v2274 = vld [vmem:[%s2] sm:$0x1]
      %v2276 = vperm.slane %v2274, 0
      %v2278 = vadd.f32 %v2242, %v2276
      %v2279 = vadd.f32 %v2243, %v2276
      %v2280 = vadd.f32 %v2244, %v2276
      %v2281 = vadd.f32 %v2245, %v2276
      %v2282 = vadd.f32 %v2246, %v2276
      %v2283 = vadd.f32 %v2247, %v2276
      %v2284 = vadd.f32 %v2248, %v2276
      %v2285 = vadd.f32 %v2249, %v2276
      %v2286 = vadd.f32 %v2250, %v2276
      %v2287 = vadd.f32 %v2251, %v2276
      %v2288 = vadd.f32 %v2252, %v2276
      %v2289 = vadd.f32 %v2253, %v2276
      %v2290 = vadd.f32 %v2254, %v2276
      %v2291 = vadd.f32 %v2255, %v2276
      %v2292 = vadd.f32 %v2256, %v2276
      %v2293 = vadd.f32 %v2257, %v2276
      %v2294 = vadd.f32 %v2258, %v2276
      %v2295 = vadd.f32 %v2259, %v2276
      %v2296 = vadd.f32 %v2260, %v2276
      %v2297 = vadd.f32 %v2261, %v2276
      %v2298 = vadd.f32 %v2262, %v2276
      %v2299 = vadd.f32 %v2263, %v2276
      %v2300 = vadd.f32 %v2264, %v2276
      %v2301 = vadd.f32 %v2265, %v2276
      %v2302 = vadd.f32 %v2266, %v2276
      %v2303 = vadd.f32 %v2267, %v2276
      %v2304 = vadd.f32 %v2268, %v2276
      %v2305 = vadd.f32 %v2269, %v2276
      %v2306 = vadd.f32 %v2270, %v2276
      %v2307 = vadd.f32 %v2271, %v2276
      %v2308 = vadd.f32 %v2272, %v2276
      %v2309 = vadd.f32 %v2273, %v2276
      %v2310 = vmax.f32 %v2278, 0.0
      %v2311 = vmax.f32 %v2279, 0.0
      %v2312 = vmax.f32 %v2280, 0.0
      %v2313 = vmax.f32 %v2281, 0.0
      %v2314 = vmax.f32 %v2282, 0.0
      %v2315 = vmax.f32 %v2283, 0.0
      %v2316 = vmax.f32 %v2284, 0.0
      %v2317 = vmax.f32 %v2285, 0.0
      %v2318 = vmax.f32 %v2286, 0.0
      %v2319 = vmax.f32 %v2287, 0.0
      %v2320 = vmax.f32 %v2288, 0.0
      %v2321 = vmax.f32 %v2289, 0.0
      %v2322 = vmax.f32 %v2290, 0.0
      %v2323 = vmax.f32 %v2291, 0.0
      %v2324 = vmax.f32 %v2292, 0.0
      %v2325 = vmax.f32 %v2293, 0.0
      %v2326 = vmax.f32 %v2294, 0.0
      %v2327 = vmax.f32 %v2295, 0.0
      %v2328 = vmax.f32 %v2296, 0.0
      %v2329 = vmax.f32 %v2297, 0.0
      %v2330 = vmax.f32 %v2298, 0.0
      %v2331 = vmax.f32 %v2299, 0.0
      %v2332 = vmax.f32 %v2300, 0.0
      %v2333 = vmax.f32 %v2301, 0.0
      %v2334 = vmax.f32 %v2302, 0.0
      %v2335 = vmax.f32 %v2303, 0.0
      %v2336 = vmax.f32 %v2304, 0.0
      %v2337 = vmax.f32 %v2305, 0.0
      %v2338 = vmax.f32 %v2306, 0.0
      %v2339 = vmax.f32 %v2307, 0.0
      %v2340 = vmax.f32 %v2308, 0.0
      %v2341 = vmax.f32 %v2309, 0.0
      %v2342 = vmax.f32 %v2310, %v2312
      %v2343 = vmax.f32 %v2311, %v2313
      %v2344 = vmax.f32 %v2314, %v2316
      %v2345 = vmax.f32 %v2315, %v2317
      %v2346 = vmax.f32 %v2318, %v2320
      %v2347 = vmax.f32 %v2319, %v2321
      %v2348 = vmax.f32 %v2322, %v2324
      %v2349 = vmax.f32 %v2323, %v2325
      %v2350 = vmax.f32 %v2326, %v2328
      %v2351 = vmax.f32 %v2327, %v2329
      %v2352 = vmax.f32 %v2330, %v2332
      %v2353 = vmax.f32 %v2331, %v2333
      %v2354 = vmax.f32 %v2334, %v2336
      %v2355 = vmax.f32 %v2335, %v2337
      %v2356 = vmax.f32 %v2338, %v2340
      %v2357 = vmax.f32 %v2339, %v2341
      %vm2358 = vcmask 261120
      %2359 = vst.msk [vmem:[#allocation2] sm:$0xff] %vm2358, %v2342
      %2360 = vst.msk [vmem:[#allocation2 + $0x8] sm:$0xff] %vm2358, %v2343
      %2361 = vst.msk [vmem:[#allocation2 + $0x10] sm:$0xff] %vm2358, %v2344
      %2362 = vst.msk [vmem:[#allocation2 + $0x18] sm:$0xff] %vm2358, %v2345
      %2363 = vst.msk [vmem:[#allocation2 + $0x20] sm:$0xff] %vm2358, %v2346
      %2364 = vst.msk [vmem:[#allocation2 + $0x28] sm:$0xff] %vm2358, %v2347
      %2365 = vst.msk [vmem:[#allocation2 + $0x30] sm:$0xff] %vm2358, %v2348
      %2366 = vst.msk [vmem:[#allocation2 + $0x38] sm:$0xff] %vm2358, %v2349
      %2367 = vst.msk [vmem:[#allocation2 + $0x40] sm:$0xff] %vm2358, %v2350
      %2368 = vst.msk [vmem:[#allocation2 + $0x48] sm:$0xff] %vm2358, %v2351
      %2369 = vst.msk [vmem:[#allocation2 + $0x50] sm:$0xff] %vm2358, %v2352
      %2370 = vst.msk [vmem:[#allocation2 + $0x58] sm:$0xff] %vm2358, %v2353
      %2371 = vst.msk [vmem:[#allocation2 + $0x60] sm:$0xff] %vm2358, %v2354
      %2372 = vst.msk [vmem:[#allocation2 + $0x68] sm:$0xff] %vm2358, %v2355
      %2373 = vst.msk [vmem:[#allocation2 + $0x70] sm:$0xff] %vm2358, %v2356
      %2374 = vst.msk [vmem:[#allocation2 + $0x78] sm:$0xff] %vm2358, %v2357
      %v2375 = vld [vmem:[#allocation2] ss:$2 sm:$0xff]
      %s2376 = scalar_lea.vmem [#allocation2], 16
      %v2377 = vld [vmem:[%s2376] ss:$2 sm:$0xff]
      %s2378 = scalar_lea.vmem [#allocation2], 32
      %v2379 = vld [vmem:[%s2378] ss:$2 sm:$0xff]
      %s2380 = scalar_lea.vmem [#allocation2], 48
      %v2381 = vld [vmem:[%s2380] ss:$2 sm:$0xff]
      %s2382 = scalar_lea.vmem [#allocation2], 64
      %v2383 = vld [vmem:[%s2382] ss:$2 sm:$0xff]
      %s2384 = scalar_lea.vmem [#allocation2], 80
      %v2385 = vld [vmem:[%s2384] ss:$2 sm:$0xff]
      %s2386 = scalar_lea.vmem [#allocation2], 96
      %v2387 = vld [vmem:[%s2386] ss:$2 sm:$0xff]
      %s2388 = scalar_lea.vmem [#allocation2], 112
      %v2389 = vld [vmem:[%s2388] ss:$2 sm:$0xff]
      %s2390 = scalar_lea.vmem [#allocation2], 1
      %v2391 = vld [vmem:[%s2390] ss:$2 sm:$0xff]
      %s2392 = scalar_lea.vmem [#allocation2], 17
      %v2393 = vld [vmem:[%s2392] ss:$2 sm:$0xff]
      %s2394 = scalar_lea.vmem [#allocation2], 33
      %v2395 = vld [vmem:[%s2394] ss:$2 sm:$0xff]
      %s2396 = scalar_lea.vmem [#allocation2], 49
      %v2397 = vld [vmem:[%s2396] ss:$2 sm:$0xff]
      %s2398 = scalar_lea.vmem [#allocation2], 65
      %v2399 = vld [vmem:[%s2398] ss:$2 sm:$0xff]
      %s2400 = scalar_lea.vmem [#allocation2], 81
      %v2401 = vld [vmem:[%s2400] ss:$2 sm:$0xff]
      %s2402 = scalar_lea.vmem [#allocation2], 97
      %v2403 = vld [vmem:[%s2402] ss:$2 sm:$0xff]
      %s2404 = scalar_lea.vmem [#allocation2], 113
      %v2405 = vld [vmem:[%s2404] ss:$2 sm:$0xff]
      %v2406 = vmax.f32 %v2375, %v2391
      %v2407 = vmax.f32 %v2377, %v2393
      %v2408 = vmax.f32 %v2379, %v2395
      %v2409 = vmax.f32 %v2381, %v2397
      %v2410 = vmax.f32 %v2383, %v2399
      %v2411 = vmax.f32 %v2385, %v2401
      %v2412 = vmax.f32 %v2387, %v2403
      %v2413 = vmax.f32 %v2389, %v2405
      %v2414 = vpack.c.bf16 %v2406, %v2406
      %v2415 = vpack.c.bf16 %v2407, %v2407
      %v2416 = vpack.c.bf16 %v2408, %v2408
      %v2417 = vpack.c.bf16 %v2409, %v2409
      %v2418 = vpack.c.bf16 %v2410, %v2410
      %v2419 = vpack.c.bf16 %v2411, %v2411
      %v2420 = vpack.c.bf16 %v2412, %v2412
      %v2421 = vpack.c.bf16 %v2413, %v2413
      %vm2422 = vcmask 257024
      %2423 = vst.msk [vmem:[%s170] sm:$0xf] %vm2422, %v2414
      %2424 = vst.msk [vmem:[%s170 + $0x4] sm:$0xf] %vm2422, %v2415
      %2425 = vst.msk [vmem:[%s170 + $0x8] sm:$0xf] %vm2422, %v2416
      %2426 = vst.msk [vmem:[%s170 + $0xc] sm:$0xf] %vm2422, %v2417
      %2427 = vst.msk [vmem:[%s170 + $0x10] sm:$0xf] %vm2422, %v2418
      %2428 = vst.msk [vmem:[%s170 + $0x14] sm:$0xf] %vm2422, %v2419
      %2429 = vst.msk [vmem:[%s170 + $0x18] sm:$0xf] %vm2422, %v2420
      %2430 = vst.msk [vmem:[%s170 + $0x1c] sm:$0xf] %vm2422, %v2421
      %p2431 = scmp.lt.s32.totalorder %s14, 1
      %s2432 = scalar_select %p2431, %s14, 1
      %s2433 = smul.addr %s2432, 8
      %s2434 = smul.addr %s2433, 4
      %s2435 = scalar_lea.vmem %s3, %s2434
      // Predicated region
      $region33: #{cnn_forward.6} parent=31 // pred_check
        %p2436 = pneg %p100
      $region34: #{cnn_forward.6} parent=31 // pred_check_branch
        %2438 = sbr.rel (%p2436) target = $region36
      $region35: #{cnn_forward.6} parent=31 // pred_region
        _
      $region36: #{cnn_forward.6} parent=31 // pred_fallthru
        _
    $region32: #{cnn_forward.6} parent=5 // pred_fallthru
      _
    %p2439 = scmp.le.s32.totalorder 2, %s9
    // Predicated region
    $region37: #{cnn_forward.6} parent=5 // pred_check
      %p2440 = pneg %p2439
    $region38: #{cnn_forward.6} parent=5 // pred_check_branch
      %2442 = sbr.rel (%p2440) target = $region40
    $region39: #{cnn_forward.6} parent=5 // pred_region
      %s2443 = ssub.s32 %s9, 2
      // Predicated region
      $region41: #{cnn_forward.6} parent=39 // pred_check
        %p2444 = pneg %p106
      $region42: #{cnn_forward.6} parent=39 // pred_check_branch
        %2446 = sbr.rel (%p2444) target = $region44
      $region43: #{cnn_forward.6} parent=39 // pred_region
        %p2447 = scmp.lt.s32.totalorder %s15, 1
        %s2448 = scalar_select %p2447, %s15, 1
        %s2449 = smul.addr %s2448, 8
        %s2450 = smul.addr %s2449, 4
        %s2451 = scalar_lea.vmem %s3, %s2450
      $region44: #{cnn_forward.6} parent=39 // pred_fallthru
        _
    $region40: #{cnn_forward.6} parent=5 // pred_fallthru
      _
  $region6: #{cnn_forward.6} parent=0 // loop_footer
    %s13 = sadd.s32 1, %s9
  $region7: #{cnn_forward.6} parent=0 // loop_footer_branch
    %8 = sbr.rel target = $region3
  $region8: #{cnn_forward.6} parent=0 // loop_exit
    _

// kernel: cnn_forward.8
$region0: #{cnn_forward.8}
  #allocation0 [shape = 'u32[]', space=smem, size = 0x4, offset = 0x4, fixed_abs, tag = 'smem constant byte address 0x4 - core index']
  #allocation1 [shape = 'u32[72,128]{1,0:T(1,128)}', space=vmem, size = 0x9000, scoped, tag = 'internal scratch']
  #allocation2 [shape = 'f32[2,4,128]{2,1,0:T(4,128)}', space=vmem, size = 0x1000, scoped, tag = 'scratch operand']
  %s0 = inlined_call_operand.vmem [shape: bf16[32,576], index: 0, kind: input, shape index: {}]
  %s1 = inlined_call_operand.vmem [shape: bf16[576,128], index: 1, kind: input, shape index: {}]
  %s2 = inlined_call_operand.vmem [shape: f32[1,128], index: 2, kind: input, shape index: {}]
  %s3 = inlined_call_operand.vmem [shape: bf16[4,2,128], index: 3, kind: output, shape index: {}]
  %s4 = sld [smem:[#allocation0]]
  $region45: #{cnn_forward.8} parent=0
    _
  %s6 = ssub.s32 1, %s4
  %s7 = scalar_select 0, %s6, %s4
  loop: start=0, step=1, limit=4
  $region2: #{cnn_forward.8} parent=0 // loop_pre_header
    _
  $region3: #{cnn_forward.8} parent=0 // loop_header
    %s9 = sphi 0, %s13
    %p10 = scmp.ge.s32.totalorder %s9, 4
    %s19 = sphi 0, %s21
    %s22 = sphi 0, %s19
    %s23 = sphi 0, %s22
    %s39 = sphi 0, %s23
    %s43 = sphi 0, %s43
    %s45 = sphi 0, %s43
    %s46 = sphi 0, %s45
    %s60 = sphi 0, %s46
    %s64 = sphi 0, %s64
    %s66 = sphi 0, %s64
    %s67 = sphi 0, %s66
    %s81 = sphi 0, %s67
    %s87 = sphi 0, %s89
    %s90 = sphi 0, %s87
    %s91 = sphi 0, %s90
    %s107 = sphi 0, %s91
  $region4: #{cnn_forward.8} parent=0 // loop_header_branch
    %12 = sbr.rel (%p10) target = $region8
  $region5: #{cnn_forward.8} parent=0 // loop_body
    %s14 = ssub.s32 %s9, 1
    %s15 = ssub.s32 %s9, 2
    %s16 = sadd.s32 %s9, 1
    %s17 = ssub.s32 %s9, %s16
    %p18 = scmp.eq.s32.totalorder %s17, 0
    %s20 = sadd.s32 %s19, 1
    %s21 = scalar_select %p18, %s19, %s20
    %p24 = pneg %p18
    %p25 = scmp.eq.s32.totalorder %s9, 1
    %p26 = por %p24, %p25
    %p27 = scmp.ne.s32.totalorder %s19, %s22
    %p28 = scmp.eq.s32.totalorder %s9, 0
    %p29 = por %p27, %p28
    %p30 = scmp.ne.s32.totalorder %s19, %s22
    %p31 = scmp.eq.s32.totalorder %s14, 1
    %p32 = por %p30, %p31
    %p33 = scmp.ne.s32.totalorder %s22, %s23
    %p34 = scmp.eq.s32.totalorder %s14, 0
    %p35 = por %p33, %p34
    %p36 = scmp.ne.s32.totalorder %s22, %s23
    %p37 = scmp.eq.s32.totalorder %s15, 1
    %p38 = por %p36, %p37
    %p40 = scmp.ne.s32.totalorder %s23, %s39
    %p41 = scmp.eq.s32.totalorder %s15, 0
    %p42 = por %p40, %p41
    %s44 = sadd.s32 %s43, 1
    %p47 = scmp.eq.s32.totalorder %s9, 1
    %p48 = scmp.ne.s32.totalorder %s43, %s45
    %p49 = scmp.eq.s32.totalorder %s9, 0
    %p50 = por %p48, %p49
    %p51 = scmp.ne.s32.totalorder %s43, %s45
    %p52 = scmp.eq.s32.totalorder %s14, 1
    %p53 = por %p51, %p52
    %p54 = scmp.ne.s32.totalorder %s45, %s46
    %p55 = scmp.eq.s32.totalorder %s14, 0
    %p56 = por %p54, %p55
    %p57 = scmp.ne.s32.totalorder %s45, %s46
    %p58 = scmp.eq.s32.totalorder %s15, 1
    %p59 = por %p57, %p58
    %p61 = scmp.ne.s32.totalorder %s46, %s60
    %p62 = scmp.eq.s32.totalorder %s15, 0
    %p63 = por %p61, %p62
    %s65 = sadd.s32 %s64, 1
    %p68 = scmp.eq.s32.totalorder %s9, 1
    %p69 = scmp.ne.s32.totalorder %s64, %s66
    %p70 = scmp.eq.s32.totalorder %s9, 0
    %p71 = por %p69, %p70
    %p72 = scmp.ne.s32.totalorder %s64, %s66
    %p73 = scmp.eq.s32.totalorder %s14, 1
    %p74 = por %p72, %p73
    %p75 = scmp.ne.s32.totalorder %s66, %s67
    %p76 = scmp.eq.s32.totalorder %s14, 0
    %p77 = por %p75, %p76
    %p78 = scmp.ne.s32.totalorder %s66, %s67
    %p79 = scmp.eq.s32.totalorder %s15, 1
    %p80 = por %p78, %p79
    %p82 = scmp.ne.s32.totalorder %s67, %s81
    %p83 = scmp.eq.s32.totalorder %s15, 0
    %p84 = por %p82, %p83
    %s85 = ssub.s32 %s9, %s16
    %p86 = scmp.eq.s32.totalorder %s85, 0
    %s88 = sadd.s32 %s87, 1
    %s89 = scalar_select %p86, %s87, %s88
    %p92 = pneg %p86
    %p93 = scmp.eq.s32.totalorder %s9, 1
    %p94 = por %p92, %p93
    %p95 = scmp.ne.s32.totalorder %s87, %s90
    %p96 = scmp.eq.s32.totalorder %s9, 0
    %p97 = por %p95, %p96
    %p98 = scmp.ne.s32.totalorder %s87, %s90
    %p99 = scmp.eq.s32.totalorder %s14, 1
    %p100 = por %p98, %p99
    %p101 = scmp.ne.s32.totalorder %s90, %s91
    %p102 = scmp.eq.s32.totalorder %s14, 0
    %p103 = por %p101, %p102
    %p104 = scmp.ne.s32.totalorder %s90, %s91
    %p105 = scmp.eq.s32.totalorder %s15, 1
    %p106 = por %p104, %p105
    %p108 = scmp.ne.s32.totalorder %s91, %s107
    %p109 = scmp.eq.s32.totalorder %s15, 0
    %p110 = por %p108, %p109
    %p111 = scmp.le.s32.totalorder 1, %s9
    %p112 = scmp.lt.s32.totalorder %s9, 3
    %p113 = pnand %p111, %p112
    %p114 = pneg %p113
    // Predicated region
    $region9: #{cnn_forward.8} parent=5 // pred_check
      _
    $region10: #{cnn_forward.8} parent=5 // pred_check_branch
      %116 = sbr.rel (%p113) target = $region12
    $region11: #{cnn_forward.8} parent=5 // pred_region
      %s117 = ssub.s32 %s9, 1
      // Predicated region
      $region13: #{cnn_forward.8} parent=11 // pred_check
        %p118 = pneg %p56
      $region14: #{cnn_forward.8} parent=11 // pred_check_branch
        %120 = sbr.rel (%p118) target = $region16
      $region15: #{cnn_forward.8} parent=11 // pred_region
        _
      $region16: #{cnn_forward.8} parent=11 // pred_fallthru
        _
      // Predicated region
      $region17: #{cnn_forward.8} parent=11 // pred_check
        %p121 = pneg %p77
      $region18: #{cnn_forward.8} parent=11 // pred_check_branch
        %123 = sbr.rel (%p121) target = $region20
      $region19: #{cnn_forward.8} parent=11 // pred_region
        _
      $region20: #{cnn_forward.8} parent=11 // pred_fallthru
        _
    $region12: #{cnn_forward.8} parent=5 // pred_fallthru
      _
    %p124 = scmp.lt.s32.totalorder %s9, 2
    // Predicated region
    $region21: #{cnn_forward.8} parent=5 // pred_check
      %p125 = pneg %p124
    $region22: #{cnn_forward.8} parent=5 // pred_check_branch
      %127 = sbr.rel (%p125) target = $region24
    $region23: #{cnn_forward.8} parent=5 // pred_region
      // Predicated region
      $region25: #{cnn_forward.8} parent=23 // pred_check
        %p128 = pneg %p29
      $region26: #{cnn_forward.8} parent=23 // pred_check_branch
        %130 = sbr.rel (%p128) target = $region28
      $region27: #{cnn_forward.8} parent=23 // pred_region
        %s131 = smul.u32 2, %s9
        %p132 = scmp.lt.s32.totalorder %s131, 3
        %s133 = scalar_select %p132, %s131, 3
        %s134 = smul.addr %s133, 5
        %s135 = smul.addr %s134, 4
        %s136 = scalar_lea.vmem %s0, %s135
        %s137 = smul.u32 2, %s9
      $region28: #{cnn_forward.8} parent=23 // pred_fallthru
        _
    $region24: #{cnn_forward.8} parent=5 // pred_fallthru
      _
    %p138 = scmp.le.s32.totalorder 1, %s9
    %p139 = scmp.lt.s32.totalorder %s9, 3
    %p140 = pnand %p138, %p139
    %p141 = pneg %p140
    // Predicated region
    $region29: #{cnn_forward.8} parent=5 // pred_check
      _
    $region30: #{cnn_forward.8} parent=5 // pred_check_branch
      %143 = sbr.rel (%p140) target = $region32
    $region31: #{cnn_forward.8} parent=5 // pred_region
      %s144 = ssub.s32 %s9, 1
      %s145 = smul.u32 2, %s14
      %p146 = scmp.lt.s32.totalorder %s145, 3
      %s147 = scalar_select %p146, %s145, 3
      %s148 = smul.addr %s147, 5
      %s149 = smul.addr %s148, 4
      %s150 = scalar_lea.vmem %s0, %s149
      %p151 = pneg %p35
      %p152 = pneg %p32
      %p153 = pneg %p56
      %p154 = pneg %p53
      %p155 = pneg %p77
      %p156 = pneg %p74
      %p157 = pneg %p103
      %p158 = pneg %p100
      %s159 = smul.u32 2, %s14
      %p160 = scmp.lt.s32.totalorder %s159, 3
      %s161 = scalar_select %p160, %s159, 3
      %s162 = scalar_lea.vmem %s3, %s161
      %s163 = smul.u32 2, %s14
      %p164 = scmp.lt.s32.totalorder %s163, 3
      %s165 = scalar_select %p164, %s163, 3
      %s166 = smul.addr %s165, 5
      %s167 = smul.addr %s166, 4
      %s168 = scalar_lea.vmem %s0, %s167
      %s169 = smul.u32 2, %s14
      %s170 = smul.u32 2, %s14
      %p171 = scmp.lt.s32.totalorder %s170, 3
      %s172 = scalar_select %p171, %s170, 3
      %s173 = scalar_lea.vmem %s3, %s172
      %s174 = smul.u32 2, %s14
      %v176 = vld [vmem:[%s168] sm:$0xff]
      %v177 = vld [vmem:[%s168 + $0x8] sm:$0xff]
      %v178 = vld [vmem:[%s168 + $0x10] sm:$0xf]
      %v179 = vld [vmem:[%s168 + $0x14] sm:$0xff]
      %v180 = vld [vmem:[%s168 + $0x1c] sm:$0xff]
      %v181 = vld [vmem:[%s168 + $0x24] sm:$0xf]
      %v182 = vld [vmem:[%s1] sm:$0xf]
      %v183 = vld [vmem:[%s1 + $0x4] sm:$0xf]
      %v184 = vld [vmem:[%s1 + $0x8] sm:$0xf]
      %v185 = vld [vmem:[%s1 + $0xc] sm:$0xf]
      %v186 = vld [vmem:[%s1 + $0x10] sm:$0xf]
      %v187 = vld [vmem:[%s1 + $0x14] sm:$0xf]
      %v188 = vld [vmem:[%s1 + $0x18] sm:$0xf]
      %v189 = vld [vmem:[%s1 + $0x1c] sm:$0xf]
      %v190 = vld [vmem:[%s1 + $0x20] sm:$0xf]
      %v191 = vld [vmem:[%s1 + $0x24] sm:$0xf]
      %v192 = vld [vmem:[%s1 + $0x28] sm:$0xf]
      %v193 = vld [vmem:[%s1 + $0x2c] sm:$0xf]
      %v194 = vld [vmem:[%s1 + $0x30] sm:$0xf]
      %v195 = vld [vmem:[%s1 + $0x34] sm:$0xf]
      %v196 = vld [vmem:[%s1 + $0x38] sm:$0xf]
      %v197 = vld [vmem:[%s1 + $0x3c] sm:$0xf]
      %v198 = vld [vmem:[%s1 + $0x40] sm:$0xf]
      %v199 = vld [vmem:[%s1 + $0x44] sm:$0xf]
      %v200 = vld [vmem:[%s1 + $0x48] sm:$0xf]
      %v201 = vld [vmem:[%s1 + $0x4c] sm:$0xf]
      %v202 = vld [vmem:[%s1 + $0x50] sm:$0xf]
      %v203 = vld [vmem:[%s1 + $0x54] sm:$0xf]
      %v204 = vld [vmem:[%s1 + $0x58] sm:$0xf]
      %v205 = vld [vmem:[%s1 + $0x5c] sm:$0xf]
      %v206 = vld [vmem:[%s1 + $0x60] sm:$0xf]
      %v207 = vld [vmem:[%s1 + $0x64] sm:$0xf]
      %v208 = vld [vmem:[%s1 + $0x68] sm:$0xf]
      %v209 = vld [vmem:[%s1 + $0x6c] sm:$0xf]
      %v210 = vld [vmem:[%s1 + $0x70] sm:$0xf]
      %v211 = vld [vmem:[%s1 + $0x74] sm:$0xf]
      %v212 = vld [vmem:[%s1 + $0x78] sm:$0xf]
      %v213 = vld [vmem:[%s1 + $0x7c] sm:$0xf]
      %v214 = vld [vmem:[%s1 + $0x80] sm:$0xf]
      %v215 = vld [vmem:[%s1 + $0x84] sm:$0xf]
      %v216 = vld [vmem:[%s1 + $0x88] sm:$0xf]
      %v217 = vld [vmem:[%s1 + $0x8c] sm:$0xf]
      %v218 = vld [vmem:[%s1 + $0x90] sm:$0xf]
      %v219 = vld [vmem:[%s1 + $0x94] sm:$0xf]
      %v220 = vld [vmem:[%s1 + $0x98] sm:$0xf]
      %v221 = vld [vmem:[%s1 + $0x9c] sm:$0xf]
      %v222 = vld [vmem:[%s1 + $0xa0] sm:$0xf]
      %v223 = vld [vmem:[%s1 + $0xa4] sm:$0xf]
      %v224 = vld [vmem:[%s1 + $0xa8] sm:$0xf]
      %v225 = vld [vmem:[%s1 + $0xac] sm:$0xf]
      %v226 = vld [vmem:[%s1 + $0xb0] sm:$0xf]
      %v227 = vld [vmem:[%s1 + $0xb4] sm:$0xf]
      %v228 = vld [vmem:[%s1 + $0xb8] sm:$0xf]
      %v229 = vld [vmem:[%s1 + $0xbc] sm:$0xf]
      %v230 = vld [vmem:[%s1 + $0xc0] sm:$0xf]
      %v231 = vld [vmem:[%s1 + $0xc4] sm:$0xf]
      %v232 = vld [vmem:[%s1 + $0xc8] sm:$0xf]
      %v233 = vld [vmem:[%s1 + $0xcc] sm:$0xf]
      %v234 = vld [vmem:[%s1 + $0xd0] sm:$0xf]
      %v235 = vld [vmem:[%s1 + $0xd4] sm:$0xf]
      %v236 = vld [vmem:[%s1 + $0xd8] sm:$0xf]
      %v237 = vld [vmem:[%s1 + $0xdc] sm:$0xf]
      %v238 = vld [vmem:[%s1 + $0xe0] sm:$0xf]
      %v239 = vld [vmem:[%s1 + $0xe4] sm:$0xf]
      %v240 = vld [vmem:[%s1 + $0xe8] sm:$0xf]
      %v241 = vld [vmem:[%s1 + $0xec] sm:$0xf]
      %v242 = vld [vmem:[%s1 + $0xf0] sm:$0xf]
      %v243 = vld [vmem:[%s1 + $0xf4] sm:$0xf]
      %v244 = vld [vmem:[%s1 + $0xf8] sm:$0xf]
      %v245 = vld [vmem:[%s1 + $0xfc] sm:$0xf]
      %v246 = vld [vmem:[%s1 + $0x100] sm:$0xf]
      %v247 = vld [vmem:[%s1 + $0x104] sm:$0xf]
      %v248 = vld [vmem:[%s1 + $0x108] sm:$0xf]
      %v249 = vld [vmem:[%s1 + $0x10c] sm:$0xf]
      %v250 = vld [vmem:[%s1 + $0x110] sm:$0xf]
      %v251 = vld [vmem:[%s1 + $0x114] sm:$0xf]
      %v252 = vld [vmem:[%s1 + $0x118] sm:$0xf]
      %v253 = vld [vmem:[%s1 + $0x11c] sm:$0xf]
      %v254 = vld [vmem:[%s2] sm:$0x1]
      %v256 = vperm.slane %v254, 0
      %v264 = vunpack.c.l.b16 %v176
      %v265 = vunpack.c.h.b16 %v176
      %v266 = vunpack.c.l.b16 %v177
      %v267 = vunpack.c.h.b16 %v177
      %v268 = vunpack.c.l.b16 %v178
      %v269 = vunpack.c.l.b16 %v179
      %v270 = vunpack.c.h.b16 %v179
      %v271 = vunpack.c.l.b16 %v180
      %v272 = vunpack.c.h.b16 %v180
      %v273 = vunpack.c.l.b16 %v181
      %v274 = vpack.c.b16 %v269, %v264
      %v275 = vpack.c.b16 %v270, %v265
      %v276 = vpack.c.b16 %v271, %v266
      %v277 = vpack.c.b16 %v272, %v267
      %v278 = vpack.c.b16 %v273, %v268
      %v355 = vunpack.c.l.b16 %v182
      %v356 = vunpack.c.l.b16 %v183
      %v357 = vunpack.c.l.b16 %v184
      %v358 = vunpack.c.l.b16 %v185
      %v359 = vunpack.c.l.b16 %v186
      %v360 = vunpack.c.l.b16 %v187
      %v361 = vunpack.c.l.b16 %v188
      %v362 = vunpack.c.l.b16 %v189
      %v363 = vunpack.c.l.b16 %v190
      %v364 = vunpack.c.l.b16 %v191
      %v365 = vunpack.c.l.b16 %v192
      %v366 = vunpack.c.l.b16 %v193
      %v367 = vunpack.c.l.b16 %v194
      %v368 = vunpack.c.l.b16 %v195
      %v369 = vunpack.c.l.b16 %v196
      %v370 = vunpack.c.l.b16 %v197
      %v371 = vunpack.c.l.b16 %v198
      %v372 = vunpack.c.l.b16 %v199
      %v373 = vunpack.c.l.b16 %v200
      %v374 = vunpack.c.l.b16 %v201
      %v375 = vunpack.c.l.b16 %v202
      %v376 = vunpack.c.l.b16 %v203
      %v377 = vunpack.c.l.b16 %v204
      %v378 = vunpack.c.l.b16 %v205
      %v379 = vunpack.c.l.b16 %v206
      %v380 = vunpack.c.l.b16 %v207
      %v381 = vunpack.c.l.b16 %v208
      %v382 = vunpack.c.l.b16 %v209
      %v383 = vunpack.c.l.b16 %v210
      %v384 = vunpack.c.l.b16 %v211
      %v385 = vunpack.c.l.b16 %v212
      %v386 = vunpack.c.l.b16 %v213
      %v387 = vunpack.c.l.b16 %v214
      %v388 = vunpack.c.l.b16 %v215
      %v389 = vunpack.c.l.b16 %v216
      %v390 = vunpack.c.l.b16 %v217
      %v391 = vunpack.c.l.b16 %v218
      %v392 = vunpack.c.l.b16 %v219
      %v393 = vunpack.c.l.b16 %v220
      %v394 = vunpack.c.l.b16 %v221
      %v395 = vunpack.c.l.b16 %v222
      %v396 = vunpack.c.l.b16 %v223
      %v397 = vunpack.c.l.b16 %v224
      %v398 = vunpack.c.l.b16 %v225
      %v399 = vunpack.c.l.b16 %v226
      %v400 = vunpack.c.l.b16 %v227
      %v401 = vunpack.c.l.b16 %v228
      %v402 = vunpack.c.l.b16 %v229
      %v403 = vunpack.c.l.b16 %v230
      %v404 = vunpack.c.l.b16 %v231
      %v405 = vunpack.c.l.b16 %v232
      %v406 = vunpack.c.l.b16 %v233
      %v407 = vunpack.c.l.b16 %v234
      %v408 = vunpack.c.l.b16 %v235
      %v409 = vunpack.c.l.b16 %v236
      %v410 = vunpack.c.l.b16 %v237
      %v411 = vunpack.c.l.b16 %v238
      %v412 = vunpack.c.l.b16 %v239
      %v413 = vunpack.c.l.b16 %v240
      %v414 = vunpack.c.l.b16 %v241
      %v415 = vunpack.c.l.b16 %v242
      %v416 = vunpack.c.l.b16 %v243
      %v417 = vunpack.c.l.b16 %v244
      %v418 = vunpack.c.l.b16 %v245
      %v419 = vunpack.c.l.b16 %v246
      %v420 = vunpack.c.l.b16 %v247
      %v421 = vunpack.c.l.b16 %v248
      %v422 = vunpack.c.l.b16 %v249
      %v423 = vunpack.c.l.b16 %v250
      %v424 = vunpack.c.l.b16 %v251
      %v425 = vunpack.c.l.b16 %v252
      %v426 = vunpack.c.l.b16 %v253
      %v427 = vpack.c.b16 %v356, %v355
      %v428 = vpack.c.b16 %v358, %v357
      %v429 = vpack.c.b16 %v360, %v359
      %v430 = vpack.c.b16 %v362, %v361
      %v431 = vpack.c.b16 %v364, %v363
      %v432 = vpack.c.b16 %v366, %v365
      %v433 = vpack.c.b16 %v368, %v367
      %v434 = vpack.c.b16 %v370, %v369
      %v435 = vpack.c.b16 %v372, %v371
      %v436 = vpack.c.b16 %v374, %v373
      %v437 = vpack.c.b16 %v376, %v375
      %v438 = vpack.c.b16 %v378, %v377
      %v439 = vpack.c.b16 %v380, %v379
      %v440 = vpack.c.b16 %v382, %v381
      %v441 = vpack.c.b16 %v384, %v383
      %v442 = vpack.c.b16 %v386, %v385
      %v443 = vpack.c.b16 %v388, %v387
      %v444 = vpack.c.b16 %v390, %v389
      %v445 = vpack.c.b16 %v392, %v391
      %v446 = vpack.c.b16 %v394, %v393
      %v447 = vpack.c.b16 %v396, %v395
      %v448 = vpack.c.b16 %v398, %v397
      %v449 = vpack.c.b16 %v400, %v399
      %v450 = vpack.c.b16 %v402, %v401
      %v451 = vpack.c.b16 %v404, %v403
      %v452 = vpack.c.b16 %v406, %v405
      %v453 = vpack.c.b16 %v408, %v407
      %v454 = vpack.c.b16 %v410, %v409
      %v455 = vpack.c.b16 %v412, %v411
      %v456 = vpack.c.b16 %v414, %v413
      %v457 = vpack.c.b16 %v416, %v415
      %v458 = vpack.c.b16 %v418, %v417
      %v459 = vpack.c.b16 %v420, %v419
      %v460 = vpack.c.b16 %v422, %v421
      %v461 = vpack.c.b16 %v424, %v423
      %v462 = vpack.c.b16 %v426, %v425
      %vm499 = vcmask 523264
      %v501 = vsel %vm499, %v278, 0
      %503 = vmatpush.bf16.msra.mxu0 %v434
      %504 = vmatpush.bf16.msra.mxu0 %v433
      %505 = vmatpush.bf16.msra.mxu0 %v432
      %506 = vmatpush.bf16.msra.mxu0 %v431
      %507 = vmatpush.bf16.msra.mxu0 %v430
      %508 = vmatpush.bf16.msra.mxu0 %v429
      %509 = vmatpush.bf16.msra.mxu0 %v428
      %510 = vmatpush.bf16.msra.mxu0 %v427
      %511 = vmatmul.bf16.gmra.mxu0 %v274
      %v512 = vpop.f32.mrf.mxu0
      %v513 = vadd.f32 %v256, %v512
      %v514 = vpop.f32.mrf.mxu0
      %v515 = vadd.f32 %v256, %v514
      %516 = vdwg.mxu0
      %517 = vmatpush.bf16.msra.mxu0 %v442
      %518 = vmatpush.bf16.msra.mxu0 %v441
      %519 = vmatpush.bf16.msra.mxu0 %v440
      %520 = vmatpush.bf16.msra.mxu0 %v439
      %521 = vmatpush.bf16.msra.mxu0 %v438
      %522 = vmatpush.bf16.msra.mxu0 %v437
      %523 = vmatpush.bf16.msra.mxu0 %v436
      %524 = vmatpush.bf16.msra.mxu0 %v435
      %525 = vmatmul.bf16.gmra.mxu0 %v275
      %v526 = vpop.f32.mrf.mxu0
      %v527 = vadd.f32 %v513, %v526
      %v528 = vpop.f32.mrf.mxu0
      %v529 = vadd.f32 %v515, %v528
      %530 = vdwg.mxu0
      %531 = vmatpush.bf16.msra.mxu0 %v450
      %532 = vmatpush.bf16.msra.mxu0 %v449
      %533 = vmatpush.bf16.msra.mxu0 %v448
      %534 = vmatpush.bf16.msra.mxu0 %v447
      %535 = vmatpush.bf16.msra.mxu0 %v446
      %536 = vmatpush.bf16.msra.mxu0 %v445
      %537 = vmatpush.bf16.msra.mxu0 %v444
      %538 = vmatpush.bf16.msra.mxu0 %v443
      %539 = vmatmul.bf16.gmra.mxu0 %v276
      %v540 = vpop.f32.mrf.mxu0
      %v541 = vadd.f32 %v527, %v540
      %v542 = vpop.f32.mrf.mxu0
      %v543 = vadd.f32 %v529, %v542
      %544 = vdwg.mxu0
      %545 = vmatpush.bf16.msra.mxu0 %v458
      %546 = vmatpush.bf16.msra.mxu0 %v457
      %547 = vmatpush.bf16.msra.mxu0 %v456
      %548 = vmatpush.bf16.msra.mxu0 %v455
      %549 = vmatpush.bf16.msra.mxu0 %v454
      %550 = vmatpush.bf16.msra.mxu0 %v453
      %551 = vmatpush.bf16.msra.mxu0 %v452
      %552 = vmatpush.bf16.msra.mxu0 %v451
      %553 = vmatmul.bf16.gmra.mxu0 %v277
      %v554 = vpop.f32.mrf.mxu0
      %v555 = vadd.f32 %v541, %v554
      %v556 = vpop.f32.mrf.mxu0
      %v557 = vadd.f32 %v543, %v556
      %558 = vdwg.mxu0
      %559 = vmatpush.bf16.msra.mxu0 0
      %560 = vmatpush.bf16.msra.mxu0 0
      %561 = vmatpush.bf16.msra.mxu0 0
      %562 = vmatpush.bf16.msra.mxu0 0
      %563 = vmatpush.bf16.msra.mxu0 %v462
      %564 = vmatpush.bf16.msra.mxu0 %v461
      %565 = vmatpush.bf16.msra.mxu0 %v460
      %566 = vmatpush.bf16.msra.mxu0 %v459
      %567 = vmatmul.bf16.gmra.mxu0 %v501
      %v568 = vpop.f32.mrf.mxu0
      %v569 = vadd.f32 %v555, %v568
      %v570 = vpop.f32.mrf.mxu0
      %v571 = vadd.f32 %v557, %v570
      %572 = vdwg.mxu0
      %v573 = vmax.f32 %v569, 0.0
      %v574 = vmax.f32 %v571, 0.0
      %v577 = vrot.slane %v573, 4
      %v578 = vrot.slane %v574, 4
      %v581 = vmax.f32 %v573, %v577
      %v582 = vmax.f32 %v574, %v578
      %583 = vst [vmem:[#allocation2] sm:$0xf] %v581
      %584 = vst [vmem:[#allocation2 + $0x4] sm:$0xf] %v582
      %v585 = vld [vmem:[#allocation2] ss:$2 sm:$0x3]
      %s586 = scalar_lea.vmem [#allocation2], 4
      %v587 = vld [vmem:[%s586] ss:$2 sm:$0x3]
      %s588 = scalar_lea.vmem [#allocation2], 1
      %v589 = vld [vmem:[%s588] ss:$2 sm:$0x3]
      %s590 = scalar_lea.vmem [#allocation2], 5
      %v591 = vld [vmem:[%s590] ss:$2 sm:$0x3]
      %v592 = vmax.f32 %v585, %v589
      %v593 = vmax.f32 %v587, %v591
      %v594 = vpack.c.bf16 %v592, %v592
      %v595 = vpack.c.bf16 %v593, %v593
      %596 = vst [vmem:[%s173] sm:$0x1] %v594
      %597 = vst [vmem:[%s173 + $0x1] sm:$0x1] %v595
      %s598 = smul.u32 2, %s14
      %p599 = scmp.lt.s32.totalorder %s598, 3
      %s600 = scalar_select %p599, %s598, 3
      %s601 = scalar_lea.vmem %s3, %s600
      // Predicated region
      $region33: #{cnn_forward.8} parent=31 // pred_check
        %p602 = pneg %p100
      $region34: #{cnn_forward.8} parent=31 // pred_check_branch
        %604 = sbr.rel (%p602) target = $region36
      $region35: #{cnn_forward.8} parent=31 // pred_region
        %s605 = smul.u32 2, %s14
      $region36: #{cnn_forward.8} parent=31 // pred_fallthru
        _
    $region32: #{cnn_forward.8} parent=5 // pred_fallthru
      _
    %p606 = scmp.le.s32.totalorder 2, %s9
    // Predicated region
    $region37: #{cnn_forward.8} parent=5 // pred_check
      %p607 = pneg %p606
    $region38: #{cnn_forward.8} parent=5 // pred_check_branch
      %609 = sbr.rel (%p607) target = $region40
    $region39: #{cnn_forward.8} parent=5 // pred_region
      %s610 = ssub.s32 %s9, 2
      // Predicated region
      $region41: #{cnn_forward.8} parent=39 // pred_check
        %p611 = pneg %p106
      $region42: #{cnn_forward.8} parent=39 // pred_check_branch
        %613 = sbr.rel (%p611) target = $region44
      $region43: #{cnn_forward.8} parent=39 // pred_region
        %s614 = smul.u32 2, %s15
        %p615 = scmp.lt.s32.totalorder %s614, 3
        %s616 = scalar_select %p615, %s614, 3
        %s617 = scalar_lea.vmem %s3, %s616
      $region44: #{cnn_forward.8} parent=39 // pred_fallthru
        _
    $region40: #{cnn_forward.8} parent=5 // pred_fallthru
      _
  $region6: #{cnn_forward.8} parent=0 // loop_footer
    %s13 = sadd.s32 1, %s9
  $region7: #{cnn_forward.8} parent=0 // loop_footer_branch
    %8 = sbr.rel target = $region3
  $region8: #{cnn_forward.8} parent=0 // loop_exit
    _

// kernel: cnn_forward.9
$region0: #{cnn_forward.9}
  #allocation0 [shape = 'u32[]', space=smem, size = 0x4, offset = 0x4, fixed_abs, tag = 'smem constant byte address 0x4 - core index']
  #allocation1 [shape = 'u32[72,128]{1,0:T(1,128)}', space=vmem, size = 0x9000, scoped, tag = 'internal scratch']
  %s0 = inlined_call_operand.vmem [shape: bf16[2,512], index: 0, kind: input, shape index: {}]
  %s1 = inlined_call_operand.vmem [shape: bf16[512,32], index: 1, kind: input, shape index: {}]
  %s2 = inlined_call_operand.vmem [shape: f32[1,32], index: 2, kind: input, shape index: {}]
  %s3 = inlined_call_operand.vmem [shape: bf16[32,10], index: 3, kind: input, shape index: {}]
  %s4 = inlined_call_operand.vmem [shape: f32[1,10], index: 4, kind: input, shape index: {}]
  %s5 = inlined_call_operand.hbm [shape: f32[2,10], index: 5, kind: output, shape index: {}]
  %s6 = sld [smem:[#allocation0]]
  $region30: #{cnn_forward.9} parent=0
    _
  %s8 = ssub.s32 1, %s6
  %s9 = scalar_select 0, %s8, %s6
  $region1: #{cnn_forward.9} parent=0
    #allocation2 [shape = 'u8[1024]{0}', space=vmem, size = 0x400, scoped, tag = 'output window, operand 0, single buffered']
    #allocation3 [shape = 's32[1]{0}', space=sflag, size = 0x4, scoped, tag = 'scoped memory for cnn_forward.9']
    %10 = vsyncpa [#allocation3], 0
    // Predicated region
    $region2: #{cnn_forward.9} parent=1 // pred_check
      _
    $region3: #{cnn_forward.9} parent=1 // pred_check_branch
      %12 = sbr.rel (0) target = $region5
    $region4: #{cnn_forward.9} parent=1 // pred_region
      _
    $region5: #{cnn_forward.9} parent=1 // pred_fallthru
      _
    // Predicated region
    $region6: #{cnn_forward.9} parent=1 // pred_check
      _
    $region7: #{cnn_forward.9} parent=1 // pred_check_branch
      %14 = sbr.rel (0) target = $region9
    $region8: #{cnn_forward.9} parent=1 // pred_region
      _
    $region9: #{cnn_forward.9} parent=1 // pred_fallthru
      _
    // Predicated region
    $region10: #{cnn_forward.9} parent=1 // pred_check
      _
    $region11: #{cnn_forward.9} parent=1 // pred_check_branch
      %16 = sbr.rel (0) target = $region13
    $region12: #{cnn_forward.9} parent=1 // pred_region
      _
    $region13: #{cnn_forward.9} parent=1 // pred_fallthru
      _
    // Predicated region
    $region14: #{cnn_forward.9} parent=1 // pred_check
      _
    $region15: #{cnn_forward.9} parent=1 // pred_check_branch
      %18 = sbr.rel (0) target = $region17
    $region16: #{cnn_forward.9} parent=1 // pred_region
      _
    $region17: #{cnn_forward.9} parent=1 // pred_fallthru
      _
    // Predicated region
    $region18: #{cnn_forward.9} parent=1 // pred_check
      _
    $region19: #{cnn_forward.9} parent=1 // pred_check_branch
      %20 = sbr.rel (0) target = $region21
    $region20: #{cnn_forward.9} parent=1 // pred_region
      _
    $region21: #{cnn_forward.9} parent=1 // pred_fallthru
      _
    %v22 = vld [vmem:[%s0] sm:$0xf]
    %v23 = vld [vmem:[%s1] sm:$0xf]
    %v24 = vld [vmem:[%s1 + $0x4] sm:$0xf]
    %v25 = vld [vmem:[%s1 + $0x8] sm:$0xf]
    %v26 = vld [vmem:[%s1 + $0xc] sm:$0xf]
    %v27 = vld [vmem:[%s1 + $0x10] sm:$0xf]
    %v28 = vld [vmem:[%s1 + $0x14] sm:$0xf]
    %v29 = vld [vmem:[%s1 + $0x18] sm:$0xf]
    %v30 = vld [vmem:[%s1 + $0x1c] sm:$0xf]
    %v31 = vld [vmem:[%s1 + $0x20] sm:$0xf]
    %v32 = vld [vmem:[%s1 + $0x24] sm:$0xf]
    %v33 = vld [vmem:[%s1 + $0x28] sm:$0xf]
    %v34 = vld [vmem:[%s1 + $0x2c] sm:$0xf]
    %v35 = vld [vmem:[%s1 + $0x30] sm:$0xf]
    %v36 = vld [vmem:[%s1 + $0x34] sm:$0xf]
    %v37 = vld [vmem:[%s1 + $0x38] sm:$0xf]
    %v38 = vld [vmem:[%s1 + $0x3c] sm:$0xf]
    %v39 = vld [vmem:[%s1 + $0x40] sm:$0xf]
    %v40 = vld [vmem:[%s1 + $0x44] sm:$0xf]
    %v41 = vld [vmem:[%s1 + $0x48] sm:$0xf]
    %v42 = vld [vmem:[%s1 + $0x4c] sm:$0xf]
    %v43 = vld [vmem:[%s1 + $0x50] sm:$0xf]
    %v44 = vld [vmem:[%s1 + $0x54] sm:$0xf]
    %v45 = vld [vmem:[%s1 + $0x58] sm:$0xf]
    %v46 = vld [vmem:[%s1 + $0x5c] sm:$0xf]
    %v47 = vld [vmem:[%s1 + $0x60] sm:$0xf]
    %v48 = vld [vmem:[%s1 + $0x64] sm:$0xf]
    %v49 = vld [vmem:[%s1 + $0x68] sm:$0xf]
    %v50 = vld [vmem:[%s1 + $0x6c] sm:$0xf]
    %v51 = vld [vmem:[%s1 + $0x70] sm:$0xf]
    %v52 = vld [vmem:[%s1 + $0x74] sm:$0xf]
    %v53 = vld [vmem:[%s1 + $0x78] sm:$0xf]
    %v54 = vld [vmem:[%s1 + $0x7c] sm:$0xf]
    %v55 = vld [vmem:[%s1 + $0x80] sm:$0xf]
    %v56 = vld [vmem:[%s1 + $0x84] sm:$0xf]
    %v57 = vld [vmem:[%s1 + $0x88] sm:$0xf]
    %v58 = vld [vmem:[%s1 + $0x8c] sm:$0xf]
    %v59 = vld [vmem:[%s1 + $0x90] sm:$0xf]
    %v60 = vld [vmem:[%s1 + $0x94] sm:$0xf]
    %v61 = vld [vmem:[%s1 + $0x98] sm:$0xf]
    %v62 = vld [vmem:[%s1 + $0x9c] sm:$0xf]
    %v63 = vld [vmem:[%s1 + $0xa0] sm:$0xf]
    %v64 = vld [vmem:[%s1 + $0xa4] sm:$0xf]
    %v65 = vld [vmem:[%s1 + $0xa8] sm:$0xf]
    %v66 = vld [vmem:[%s1 + $0xac] sm:$0xf]
    %v67 = vld [vmem:[%s1 + $0xb0] sm:$0xf]
    %v68 = vld [vmem:[%s1 + $0xb4] sm:$0xf]
    %v69 = vld [vmem:[%s1 + $0xb8] sm:$0xf]
    %v70 = vld [vmem:[%s1 + $0xbc] sm:$0xf]
    %v71 = vld [vmem:[%s1 + $0xc0] sm:$0xf]
    %v72 = vld [vmem:[%s1 + $0xc4] sm:$0xf]
    %v73 = vld [vmem:[%s1 + $0xc8] sm:$0xf]
    %v74 = vld [vmem:[%s1 + $0xcc] sm:$0xf]
    %v75 = vld [vmem:[%s1 + $0xd0] sm:$0xf]
    %v76 = vld [vmem:[%s1 + $0xd4] sm:$0xf]
    %v77 = vld [vmem:[%s1 + $0xd8] sm:$0xf]
    %v78 = vld [vmem:[%s1 + $0xdc] sm:$0xf]
    %v79 = vld [vmem:[%s1 + $0xe0] sm:$0xf]
    %v80 = vld [vmem:[%s1 + $0xe4] sm:$0xf]
    %v81 = vld [vmem:[%s1 + $0xe8] sm:$0xf]
    %v82 = vld [vmem:[%s1 + $0xec] sm:$0xf]
    %v83 = vld [vmem:[%s1 + $0xf0] sm:$0xf]
    %v84 = vld [vmem:[%s1 + $0xf4] sm:$0xf]
    %v85 = vld [vmem:[%s1 + $0xf8] sm:$0xf]
    %v86 = vld [vmem:[%s1 + $0xfc] sm:$0xf]
    %v87 = vld [vmem:[%s2] sm:$0x1]
    %v89 = vperm.slane %v87, 0
    %92 = vst [vmem:[#allocation1] ss:$9 sm:$0xff] %v22
    %v93 = vld [vmem:[#allocation1] sm:$0xff]
    %v94 = vld [vmem:[#allocation1 + $0x9] sm:$0xff]
    %v95 = vld [vmem:[#allocation1 + $0x12] sm:$0xff]
    %v96 = vld [vmem:[#allocation1 + $0x1b] sm:$0xff]
    %v165 = vunpack.c.l.b16 %v23
    %v166 = vunpack.c.l.b16 %v24
    %v167 = vunpack.c.l.b16 %v25
    %v168 = vunpack.c.l.b16 %v26
    %v169 = vunpack.c.l.b16 %v27
    %v170 = vunpack.c.l.b16 %v28
    %v171 = vunpack.c.l.b16 %v29
    %v172 = vunpack.c.l.b16 %v30
    %v173 = vunpack.c.l.b16 %v31
    %v174 = vunpack.c.l.b16 %v32
    %v175 = vunpack.c.l.b16 %v33
    %v176 = vunpack.c.l.b16 %v34
    %v177 = vunpack.c.l.b16 %v35
    %v178 = vunpack.c.l.b16 %v36
    %v179 = vunpack.c.l.b16 %v37
    %v180 = vunpack.c.l.b16 %v38
    %v181 = vunpack.c.l.b16 %v39
    %v182 = vunpack.c.l.b16 %v40
    %v183 = vunpack.c.l.b16 %v41
    %v184 = vunpack.c.l.b16 %v42
    %v185 = vunpack.c.l.b16 %v43
    %v186 = vunpack.c.l.b16 %v44
    %v187 = vunpack.c.l.b16 %v45
    %v188 = vunpack.c.l.b16 %v46
    %v189 = vunpack.c.l.b16 %v47
    %v190 = vunpack.c.l.b16 %v48
    %v191 = vunpack.c.l.b16 %v49
    %v192 = vunpack.c.l.b16 %v50
    %v193 = vunpack.c.l.b16 %v51
    %v194 = vunpack.c.l.b16 %v52
    %v195 = vunpack.c.l.b16 %v53
    %v196 = vunpack.c.l.b16 %v54
    %v197 = vunpack.c.l.b16 %v55
    %v198 = vunpack.c.l.b16 %v56
    %v199 = vunpack.c.l.b16 %v57
    %v200 = vunpack.c.l.b16 %v58
    %v201 = vunpack.c.l.b16 %v59
    %v202 = vunpack.c.l.b16 %v60
    %v203 = vunpack.c.l.b16 %v61
    %v204 = vunpack.c.l.b16 %v62
    %v205 = vunpack.c.l.b16 %v63
    %v206 = vunpack.c.l.b16 %v64
    %v207 = vunpack.c.l.b16 %v65
    %v208 = vunpack.c.l.b16 %v66
    %v209 = vunpack.c.l.b16 %v67
    %v210 = vunpack.c.l.b16 %v68
    %v211 = vunpack.c.l.b16 %v69
    %v212 = vunpack.c.l.b16 %v70
    %v213 = vunpack.c.l.b16 %v71
    %v214 = vunpack.c.l.b16 %v72
    %v215 = vunpack.c.l.b16 %v73
    %v216 = vunpack.c.l.b16 %v74
    %v217 = vunpack.c.l.b16 %v75
    %v218 = vunpack.c.l.b16 %v76
    %v219 = vunpack.c.l.b16 %v77
    %v220 = vunpack.c.l.b16 %v78
    %v221 = vunpack.c.l.b16 %v79
    %v222 = vunpack.c.l.b16 %v80
    %v223 = vunpack.c.l.b16 %v81
    %v224 = vunpack.c.l.b16 %v82
    %v225 = vunpack.c.l.b16 %v83
    %v226 = vunpack.c.l.b16 %v84
    %v227 = vunpack.c.l.b16 %v85
    %v228 = vunpack.c.l.b16 %v86
    %v229 = vpack.c.b16 %v166, %v165
    %v230 = vpack.c.b16 %v168, %v167
    %v231 = vpack.c.b16 %v170, %v169
    %v232 = vpack.c.b16 %v172, %v171
    %v233 = vpack.c.b16 %v174, %v173
    %v234 = vpack.c.b16 %v176, %v175
    %v235 = vpack.c.b16 %v178, %v177
    %v236 = vpack.c.b16 %v180, %v179
    %v237 = vpack.c.b16 %v182, %v181
    %v238 = vpack.c.b16 %v184, %v183
    %v239 = vpack.c.b16 %v186, %v185
    %v240 = vpack.c.b16 %v188, %v187
    %v241 = vpack.c.b16 %v190, %v189
    %v242 = vpack.c.b16 %v192, %v191
    %v243 = vpack.c.b16 %v194, %v193
    %v244 = vpack.c.b16 %v196, %v195
    %v245 = vpack.c.b16 %v198, %v197
    %v246 = vpack.c.b16 %v200, %v199
    %v247 = vpack.c.b16 %v202, %v201
    %v248 = vpack.c.b16 %v204, %v203
    %v249 = vpack.c.b16 %v206, %v205
    %v250 = vpack.c.b16 %v208, %v207
    %v251 = vpack.c.b16 %v210, %v209
    %v252 = vpack.c.b16 %v212, %v211
    %v253 = vpack.c.b16 %v214, %v213
    %v254 = vpack.c.b16 %v216, %v215
    %v255 = vpack.c.b16 %v218, %v217
    %v256 = vpack.c.b16 %v220, %v219
    %v257 = vpack.c.b16 %v222, %v221
    %v258 = vpack.c.b16 %v224, %v223
    %v259 = vpack.c.b16 %v226, %v225
    %v260 = vpack.c.b16 %v228, %v227
    %293 = vmatpush.bf16.msra.mxu0 %v236
    %294 = vmatpush.bf16.msra.mxu0 %v235
    %295 = vmatpush.bf16.msra.mxu0 %v234
    %296 = vmatpush.bf16.msra.mxu0 %v233
    %297 = vmatpush.bf16.msra.mxu0 %v232
    %298 = vmatpush.bf16.msra.mxu0 %v231
    %299 = vmatpush.bf16.msra.mxu0 %v230
    %300 = vmatpush.bf16.msra.mxu0 %v229
    %301 = vmatmul.bf16.gmra.mxu0 %v93
    %v302 = vpop.f32.mrf.mxu0
    %v303 = vadd.f32 %v89, %v302
    %v304 = vpop.f32.mrf.mxu0
    %305 = vdwg.mxu0
    %306 = vmatpush.bf16.msra.mxu0 %v244
    %307 = vmatpush.bf16.msra.mxu0 %v243
    %308 = vmatpush.bf16.msra.mxu0 %v242
    %309 = vmatpush.bf16.msra.mxu0 %v241
    %310 = vmatpush.bf16.msra.mxu0 %v240
    %311 = vmatpush.bf16.msra.mxu0 %v239
    %312 = vmatpush.bf16.msra.mxu0 %v238
    %313 = vmatpush.bf16.msra.mxu0 %v237
    %314 = vmatmul.bf16.gmra.mxu0 %v94
    %v315 = vpop.f32.mrf.mxu0
    %v316 = vadd.f32 %v303, %v315
    %v317 = vpop.f32.mrf.mxu0
    %318 = vdwg.mxu0
    %319 = vmatpush.bf16.msra.mxu0 %v252
    %320 = vmatpush.bf16.msra.mxu0 %v251
    %321 = vmatpush.bf16.msra.mxu0 %v250
    %322 = vmatpush.bf16.msra.mxu0 %v249
    %323 = vmatpush.bf16.msra.mxu0 %v248
    %324 = vmatpush.bf16.msra.mxu0 %v247
    %325 = vmatpush.bf16.msra.mxu0 %v246
    %326 = vmatpush.bf16.msra.mxu0 %v245
    %327 = vmatmul.bf16.gmra.mxu0 %v95
    %v328 = vpop.f32.mrf.mxu0
    %v329 = vadd.f32 %v316, %v328
    %v330 = vpop.f32.mrf.mxu0
    %331 = vdwg.mxu0
    %332 = vmatpush.bf16.msra.mxu0 %v260
    %333 = vmatpush.bf16.msra.mxu0 %v259
    %334 = vmatpush.bf16.msra.mxu0 %v258
    %335 = vmatpush.bf16.msra.mxu0 %v257
    %336 = vmatpush.bf16.msra.mxu0 %v256
    %337 = vmatpush.bf16.msra.mxu0 %v255
    %338 = vmatpush.bf16.msra.mxu0 %v254
    %339 = vmatpush.bf16.msra.mxu0 %v253
    %340 = vmatmul.bf16.gmra.mxu0 %v96
    %v341 = vpop.f32.mrf.mxu0
    %v342 = vadd.f32 %v329, %v341
    %v343 = vpop.f32.mrf.mxu0
    %344 = vdwg.mxu0
    %v345 = vmax.f32 %v342, 0.0
    %v346 = vpack.c.bf16 %v345, %v345
    %v347 = vld [vmem:[%s3] sm:$0xf]
    %v348 = vld [vmem:[%s3 + $0x4] sm:$0xf]
    %v349 = vld [vmem:[%s3 + $0x8] sm:$0xf]
    %v350 = vld [vmem:[%s3 + $0xc] sm:$0xf]
    %v351 = vld [vmem:[%s4] sm:$0x1]
    %v353 = vperm.slane %v351, 0
    %v359 = vunpack.c.l.b16 %v347
    %v360 = vunpack.c.l.b16 %v348
    %v361 = vunpack.c.l.b16 %v349
    %v362 = vunpack.c.l.b16 %v350
    %v363 = vpack.c.b16 %v360, %v359
    %v364 = vpack.c.b16 %v362, %v361
    %vm367 = vcmask 261120
    %v369 = vsel %vm367, %v346, 0
    %371 = vmatpush.bf16.msra.mxu0 0
    %372 = vmatpush.bf16.msra.mxu0 0
    %373 = vmatpush.bf16.msra.mxu0 0
    %374 = vmatpush.bf16.msra.mxu0 0
    %375 = vmatpush.bf16.msra.mxu0 0
    %376 = vmatpush.bf16.msra.mxu0 0
    %377 = vmatpush.bf16.msra.mxu0 %v364
    %378 = vmatpush.bf16.msra.mxu0 %v363
    %379 = vmatmul.bf16.gmra.mxu0 %v369
    %v380 = vpop.f32.mrf.mxu0
    %v381 = vadd.f32 %v353, %v380
    %v382 = vpop.f32.mrf.mxu0
    %383 = vdwg.mxu0
    %vm384 = vcmask 74752
    %385 = vst.msk [vmem:[#allocation2] sm:$0x3] %vm384, %v381
    // Predicated region
    $region22: #{cnn_forward.9} parent=1 // pred_check
      _
    $region23: #{cnn_forward.9} parent=1 // pred_check_branch
      %387 = sbr.rel (0) target = $region25
    $region24: #{cnn_forward.9} parent=1 // pred_region
      %389 = vsyncadd [#allocation3], 0
      %s391 = sshll.u32 [#allocation2], 4
      %s392 = int_to_ptr.vmem [resolvable:$true] %s391
      %s393 = sshll.u32 %s5, 4
      %s394 = int_to_ptr.hbm [resolvable:$true] %s393
      %396 = dma.vmem_to_hbm [thread:$0]  %s392, 32, %s394, [#allocation3]
    $region25: #{cnn_forward.9} parent=1 // pred_fallthru
      _
    // Predicated region
    $region26: #{cnn_forward.9} parent=1 // pred_check
      _
    $region27: #{cnn_forward.9} parent=1 // pred_check_branch
      %398 = sbr.rel (0) target = $region29
    $region28: #{cnn_forward.9} parent=1 // pred_region
      %400 = dma.done [#allocation3], 32
    $region29: #{cnn_forward.9} parent=1 // pred_fallthru
      _
    %401 = vsyncpa [#allocation3], 1

// kernel: cnn_forward.5
$region0: #{cnn_forward.5}
  #allocation0 [shape = 'u32[]', space=smem, size = 0x4, offset = 0x4, fixed_abs, tag = 'smem constant byte address 0x4 - core index']
  #allocation1 [shape = 'u32[72,128]{1,0:T(1,128)}', space=vmem, size = 0x9000, scoped, tag = 'internal scratch']
  #allocation2 [shape = 'f32[16,32,16]{2,1,0:T(8,128)}', space=vmem, size = 0x40000, scoped, tag = 'scratch operand']
  %s0 = inlined_call_operand.vmem [shape: bf16[2,34,34,3], index: 0, kind: input, shape index: {}]
  %s1 = inlined_call_operand.vmem [shape: bf16[9,3,16], index: 1, kind: input, shape index: {}]
  %s2 = inlined_call_operand.vmem [shape: f32[1,16], index: 2, kind: input, shape index: {}]
  %s3 = inlined_call_operand.vmem [shape: bf16[2,16,16,16], index: 3, kind: output, shape index: {}]
  %s4 = sld [smem:[#allocation0]]
  $region45: #{cnn_forward.5} parent=0
    _
  %s6 = ssub.s32 1, %s4
  %s7 = scalar_select 0, %s6, %s4
  loop: start=0, step=1, limit=4
  $region2: #{cnn_forward.5} parent=0 // loop_pre_header
    _
  $region3: #{cnn_forward.5} parent=0 // loop_header
    %s9 = sphi 0, %s13
    %p10 = scmp.ge.s32.totalorder %s9, 4
    %s19 = sphi 0, %s21
    %s22 = sphi 0, %s19
    %s23 = sphi 0, %s22
    %s39 = sphi 0, %s23
    %s43 = sphi 0, %s43
    %s45 = sphi 0, %s43
    %s46 = sphi 0, %s45
    %s60 = sphi 0, %s46
    %s64 = sphi 0, %s64
    %s66 = sphi 0, %s64
    %s67 = sphi 0, %s66
    %s81 = sphi 0, %s67
    %s87 = sphi 0, %s89
    %s90 = sphi 0, %s87
    %s91 = sphi 0, %s90
    %s107 = sphi 0, %s91
  $region4: #{cnn_forward.5} parent=0 // loop_header_branch
    %12 = sbr.rel (%p10) target = $region8
  $region5: #{cnn_forward.5} parent=0 // loop_body
    %s14 = ssub.s32 %s9, 1
    %s15 = ssub.s32 %s9, 2
    %s16 = sadd.s32 %s9, 1
    %s17 = ssub.s32 %s9, %s16
    %p18 = scmp.eq.s32.totalorder %s17, 0
    %s20 = sadd.s32 %s19, 1
    %s21 = scalar_select %p18, %s19, %s20
    %p24 = pneg %p18
    %p25 = scmp.eq.s32.totalorder %s9, 1
    %p26 = por %p24, %p25
    %p27 = scmp.ne.s32.totalorder %s19, %s22
    %p28 = scmp.eq.s32.totalorder %s9, 0
    %p29 = por %p27, %p28
    %p30 = scmp.ne.s32.totalorder %s19, %s22
    %p31 = scmp.eq.s32.totalorder %s14, 1
    %p32 = por %p30, %p31
    %p33 = scmp.ne.s32.totalorder %s22, %s23
    %p34 = scmp.eq.s32.totalorder %s14, 0
    %p35 = por %p33, %p34
    %p36 = scmp.ne.s32.totalorder %s22, %s23
    %p37 = scmp.eq.s32.totalorder %s15, 1
    %p38 = por %p36, %p37
    %p40 = scmp.ne.s32.totalorder %s23, %s39
    %p41 = scmp.eq.s32.totalorder %s15, 0
    %p42 = por %p40, %p41
    %s44 = sadd.s32 %s43, 1
    %p47 = scmp.eq.s32.totalorder %s9, 1
    %p48 = scmp.ne.s32.totalorder %s43, %s45
    %p49 = scmp.eq.s32.totalorder %s9, 0
    %p50 = por %p48, %p49
    %p51 = scmp.ne.s32.totalorder %s43, %s45
    %p52 = scmp.eq.s32.totalorder %s14, 1
    %p53 = por %p51, %p52
    %p54 = scmp.ne.s32.totalorder %s45, %s46
    %p55 = scmp.eq.s32.totalorder %s14, 0
    %p56 = por %p54, %p55
    %p57 = scmp.ne.s32.totalorder %s45, %s46
    %p58 = scmp.eq.s32.totalorder %s15, 1
    %p59 = por %p57, %p58
    %p61 = scmp.ne.s32.totalorder %s46, %s60
    %p62 = scmp.eq.s32.totalorder %s15, 0
    %p63 = por %p61, %p62
    %s65 = sadd.s32 %s64, 1
    %p68 = scmp.eq.s32.totalorder %s9, 1
    %p69 = scmp.ne.s32.totalorder %s64, %s66
    %p70 = scmp.eq.s32.totalorder %s9, 0
    %p71 = por %p69, %p70
    %p72 = scmp.ne.s32.totalorder %s64, %s66
    %p73 = scmp.eq.s32.totalorder %s14, 1
    %p74 = por %p72, %p73
    %p75 = scmp.ne.s32.totalorder %s66, %s67
    %p76 = scmp.eq.s32.totalorder %s14, 0
    %p77 = por %p75, %p76
    %p78 = scmp.ne.s32.totalorder %s66, %s67
    %p79 = scmp.eq.s32.totalorder %s15, 1
    %p80 = por %p78, %p79
    %p82 = scmp.ne.s32.totalorder %s67, %s81
    %p83 = scmp.eq.s32.totalorder %s15, 0
    %p84 = por %p82, %p83
    %s85 = ssub.s32 %s9, %s16
    %p86 = scmp.eq.s32.totalorder %s85, 0
    %s88 = sadd.s32 %s87, 1
    %s89 = scalar_select %p86, %s87, %s88
    %p92 = pneg %p86
    %p93 = scmp.eq.s32.totalorder %s9, 1
    %p94 = por %p92, %p93
    %p95 = scmp.ne.s32.totalorder %s87, %s90
    %p96 = scmp.eq.s32.totalorder %s9, 0
    %p97 = por %p95, %p96
    %p98 = scmp.ne.s32.totalorder %s87, %s90
    %p99 = scmp.eq.s32.totalorder %s14, 1
    %p100 = por %p98, %p99
    %p101 = scmp.ne.s32.totalorder %s90, %s91
    %p102 = scmp.eq.s32.totalorder %s14, 0
    %p103 = por %p101, %p102
    %p104 = scmp.ne.s32.totalorder %s90, %s91
    %p105 = scmp.eq.s32.totalorder %s15, 1
    %p106 = por %p104, %p105
    %p108 = scmp.ne.s32.totalorder %s91, %s107
    %p109 = scmp.eq.s32.totalorder %s15, 0
    %p110 = por %p108, %p109
    %p111 = scmp.le.s32.totalorder 1, %s9
    %p112 = scmp.lt.s32.totalorder %s9, 3
    %p113 = pnand %p111, %p112
    %p114 = pneg %p113
    // Predicated region
    $region9: #{cnn_forward.5} parent=5 // pred_check
      _
    $region10: #{cnn_forward.5} parent=5 // pred_check_branch
      %116 = sbr.rel (%p113) target = $region12
    $region11: #{cnn_forward.5} parent=5 // pred_region
      %s117 = ssub.s32 %s9, 1
      // Predicated region
      $region13: #{cnn_forward.5} parent=11 // pred_check
        %p118 = pneg %p56
      $region14: #{cnn_forward.5} parent=11 // pred_check_branch
        %120 = sbr.rel (%p118) target = $region16
      $region15: #{cnn_forward.5} parent=11 // pred_region
        _
      $region16: #{cnn_forward.5} parent=11 // pred_fallthru
        _
      // Predicated region
      $region17: #{cnn_forward.5} parent=11 // pred_check
        %p121 = pneg %p77
      $region18: #{cnn_forward.5} parent=11 // pred_check_branch
        %123 = sbr.rel (%p121) target = $region20
      $region19: #{cnn_forward.5} parent=11 // pred_region
        _
      $region20: #{cnn_forward.5} parent=11 // pred_fallthru
        _
    $region12: #{cnn_forward.5} parent=5 // pred_fallthru
      _
    %p124 = scmp.lt.s32.totalorder %s9, 2
    // Predicated region
    $region21: #{cnn_forward.5} parent=5 // pred_check
      %p125 = pneg %p124
    $region22: #{cnn_forward.5} parent=5 // pred_check_branch
      %127 = sbr.rel (%p125) target = $region24
    $region23: #{cnn_forward.5} parent=5 // pred_region
      // Predicated region
      $region25: #{cnn_forward.5} parent=23 // pred_check
        %p128 = pneg %p29
      $region26: #{cnn_forward.5} parent=23 // pred_check_branch
        %130 = sbr.rel (%p128) target = $region28
      $region27: #{cnn_forward.5} parent=23 // pred_region
        %p131 = scmp.lt.s32.totalorder %s9, 1
        %s132 = scalar_select %p131, %s9, 1
        %s133 = smul.addr %s132, 170
        %s134 = smul.addr %s133, 4
        %s135 = scalar_lea.vmem %s0, %s134
      $region28: #{cnn_forward.5} parent=23 // pred_fallthru
        _
    $region24: #{cnn_forward.5} parent=5 // pred_fallthru
      _
    %p136 = scmp.le.s32.totalorder 1, %s9
    %p137 = scmp.lt.s32.totalorder %s9, 3
    %p138 = pnand %p136, %p137
    %p139 = pneg %p138
    // Predicated region
    $region29: #{cnn_forward.5} parent=5 // pred_check
      _
    $region30: #{cnn_forward.5} parent=5 // pred_check_branch
      %141 = sbr.rel (%p138) target = $region32
    $region31: #{cnn_forward.5} parent=5 // pred_region
      %s142 = ssub.s32 %s9, 1
      %p143 = scmp.lt.s32.totalorder %s14, 1
      %s144 = scalar_select %p143, %s14, 1
      %s145 = smul.addr %s144, 170
      %s146 = smul.addr %s145, 4
      %s147 = scalar_lea.vmem %s0, %s146
      %p148 = pneg %p35
      %p149 = pneg %p32
      %p150 = pneg %p56
      %p151 = pneg %p53
      %p152 = pneg %p77
      %p153 = pneg %p74
      %p154 = pneg %p103
      %p155 = pneg %p100
      %p156 = scmp.lt.s32.totalorder %s14, 1
      %s157 = scalar_select %p156, %s14, 1
      %s158 = smul.addr %s157, 32
      %s159 = smul.addr %s158, 4
      %s160 = scalar_lea.vmem %s3, %s159
      %p161 = scmp.lt.s32.totalorder %s14, 1
      %s162 = scalar_select %p161, %s14, 1
      %s163 = smul.addr %s162, 170
      %s164 = smul.addr %s163, 4
      %s165 = scalar_lea.vmem %s0, %s164
      %p166 = scmp.lt.s32.totalorder %s14, 1
      %s167 = scalar_select %p166, %s14, 1
      %s168 = smul.addr %s167, 32
      %s169 = smul.addr %s168, 4
      %s170 = scalar_lea.vmem %s3, %s169
      %v172 = vld [vmem:[%s165] sm:$0xf]
      %v173 = vld [vmem:[%s165 + $0x4] sm:$0xf]
      %v174 = vld [vmem:[%s165 + $0x8] sm:$0xf]
      %v175 = vld [vmem:[%s165 + $0xc] sm:$0xf]
      %v176 = vld [vmem:[%s165 + $0x10] sm:$0x1]
      %v177 = vld [vmem:[%s165 + $0x14] sm:$0xf]
      %v178 = vld [vmem:[%s165 + $0x18] sm:$0xf]
      %v179 = vld [vmem:[%s165 + $0x1c] sm:$0xf]
      %v180 = vld [vmem:[%s165 + $0x20] sm:$0xf]
      %v181 = vld [vmem:[%s165 + $0x24] sm:$0x1]
      %v182 = vld [vmem:[%s165 + $0x28] sm:$0xf]
      %v183 = vld [vmem:[%s165 + $0x2c] sm:$0xf]
      %v184 = vld [vmem:[%s165 + $0x30] sm:$0xf]
      %v185 = vld [vmem:[%s165 + $0x34] sm:$0xf]
      %v186 = vld [vmem:[%s165 + $0x38] sm:$0x1]
      %v187 = vld [vmem:[%s165 + $0x3c] sm:$0xf]
      %v188 = vld [vmem:[%s165 + $0x40] sm:$0xf]
      %v189 = vld [vmem:[%s165 + $0x44] sm:$0xf]
      %v190 = vld [vmem:[%s165 + $0x48] sm:$0xf]
      %v191 = vld [vmem:[%s165 + $0x4c] sm:$0x1]
      %v192 = vld [vmem:[%s165 + $0x50] sm:$0xf]
      %v193 = vld [vmem:[%s165 + $0x54] sm:$0xf]
      %v194 = vld [vmem:[%s165 + $0x58] sm:$0xf]
      %v195 = vld [vmem:[%s165 + $0x5c] sm:$0xf]
      %v196 = vld [vmem:[%s165 + $0x60] sm:$0x1]
      %v197 = vld [vmem:[%s165 + $0x64] sm:$0xf]
      %v198 = vld [vmem:[%s165 + $0x68] sm:$0xf]
      %v199 = vld [vmem:[%s165 + $0x6c] sm:$0xf]
      %v200 = vld [vmem:[%s165 + $0x70] sm:$0xf]
      %v201 = vld [vmem:[%s165 + $0x74] sm:$0x1]
      %v202 = vld [vmem:[%s165 + $0x78] sm:$0xf]
      %v203 = vld [vmem:[%s165 + $0x7c] sm:$0xf]
      %v204 = vld [vmem:[%s165 + $0x80] sm:$0xf]
      %v205 = vld [vmem:[%s165 + $0x84] sm:$0xf]
      %v206 = vld [vmem:[%s165 + $0x88] sm:$0x1]
      %v207 = vld [vmem:[%s165 + $0x8c] sm:$0xf]
      %v208 = vld [vmem:[%s165 + $0x90] sm:$0xf]
      %v209 = vld [vmem:[%s165 + $0x94] sm:$0xf]
      %v210 = vld [vmem:[%s165 + $0x98] sm:$0xf]
      %v211 = vld [vmem:[%s165 + $0x9c] sm:$0x1]
      %v212 = vld [vmem:[%s165 + $0xa0] sm:$0xf]
      %v213 = vld [vmem:[%s165 + $0xa4] sm:$0xf]
      %v214 = vld [vmem:[%s165 + $0xa8] sm:$0xf]
      %v215 = vld [vmem:[%s165 + $0xac] sm:$0xf]
      %v216 = vld [vmem:[%s165 + $0xb0] sm:$0x1]
      %v217 = vld [vmem:[%s165 + $0xb4] sm:$0xf]
      %v218 = vld [vmem:[%s165 + $0xb8] sm:$0xf]
      %v219 = vld [vmem:[%s165 + $0xbc] sm:$0xf]
      %v220 = vld [vmem:[%s165 + $0xc0] sm:$0xf]
      %v221 = vld [vmem:[%s165 + $0xc4] sm:$0x1]
      %v222 = vld [vmem:[%s165 + $0xc8] sm:$0xf]
      %v223 = vld [vmem:[%s165 + $0xcc] sm:$0xf]
      %v224 = vld [vmem:[%s165 + $0xd0] sm:$0xf]
      %v225 = vld [vmem:[%s165 + $0xd4] sm:$0xf]
      %v226 = vld [vmem:[%s165 + $0xd8] sm:$0x1]
      %v227 = vld [vmem:[%s165 + $0xdc] sm:$0xf]
      %v228 = vld [vmem:[%s165 + $0xe0] sm:$0xf]
      %v229 = vld [vmem:[%s165 + $0xe4] sm:$0xf]
      %v230 = vld [vmem:[%s165 + $0xe8] sm:$0xf]
      %v231 = vld [vmem:[%s165 + $0xec] sm:$0x1]
      %v232 = vld [vmem:[%s165 + $0xf0] sm:$0xf]
      %v233 = vld [vmem:[%s165 + $0xf4] sm:$0xf]
      %v234 = vld [vmem:[%s165 + $0xf8] sm:$0xf]
      %v235 = vld [vmem:[%s165 + $0xfc] sm:$0xf]
      %v236 = vld [vmem:[%s165 + $0x100] sm:$0x1]
      %v237 = vld [vmem:[%s165 + $0x104] sm:$0xf]
      %v238 = vld [vmem:[%s165 + $0x108] sm:$0xf]
      %v239 = vld [vmem:[%s165 + $0x10c] sm:$0xf]
      %v240 = vld [vmem:[%s165 + $0x110] sm:$0xf]
      %v241 = vld [vmem:[%s165 + $0x114] sm:$0x1]
      %v242 = vld [vmem:[%s165 + $0x118] sm:$0xf]
      %v243 = vld [vmem:[%s165 + $0x11c] sm:$0xf]
      %v244 = vld [vmem:[%s165 + $0x120] sm:$0xf]
      %v245 = vld [vmem:[%s165 + $0x124] sm:$0xf]
      %v246 = vld [vmem:[%s165 + $0x128] sm:$0x1]
      %v247 = vld [vmem:[%s165 + $0x12c] sm:$0xf]
      %v248 = vld [vmem:[%s165 + $0x130] sm:$0xf]
      %v249 = vld [vmem:[%s165 + $0x134] sm:$0xf]
      %v250 = vld [vmem:[%s165 + $0x138] sm:$0xf]
      %v251 = vld [vmem:[%s165 + $0x13c] sm:$0x1]
      %v252 = vld [vmem:[%s165 + $0x140] sm:$0xf]
      %v253 = vld [vmem:[%s165 + $0x144] sm:$0xf]
      %v254 = vld [vmem:[%s165 + $0x148] sm:$0xf]
      %v255 = vld [vmem:[%s165 + $0x14c] sm:$0xf]
      %v256 = vld [vmem:[%s165 + $0x150] sm:$0x1]
      %v257 = vld [vmem:[%s165 + $0x154] sm:$0xf]
      %v258 = vld [vmem:[%s165 + $0x158] sm:$0xf]
      %v259 = vld [vmem:[%s165 + $0x15c] sm:$0xf]
      %v260 = vld [vmem:[%s165 + $0x160] sm:$0xf]
      %v261 = vld [vmem:[%s165 + $0x164] sm:$0x1]
      %v262 = vld [vmem:[%s165 + $0x168] sm:$0xf]
      %v263 = vld [vmem:[%s165 + $0x16c] sm:$0xf]
      %v264 = vld [vmem:[%s165 + $0x170] sm:$0xf]
      %v265 = vld [vmem:[%s165 + $0x174] sm:$0xf]
      %v266 = vld [vmem:[%s165 + $0x178] sm:$0x1]
      %v267 = vld [vmem:[%s165 + $0x17c] sm:$0xf]
      %v268 = vld [vmem:[%s165 + $0x180] sm:$0xf]
      %v269 = vld [vmem:[%s165 + $0x184] sm:$0xf]
      %v270 = vld [vmem:[%s165 + $0x188] sm:$0xf]
      %v271 = vld [vmem:[%s165 + $0x18c] sm:$0x1]
      %v272 = vld [vmem:[%s165 + $0x190] sm:$0xf]
      %v273 = vld [vmem:[%s165 + $0x194] sm:$0xf]
      %v274 = vld [vmem:[%s165 + $0x198] sm:$0xf]
      %v275 = vld [vmem:[%s165 + $0x19c] sm:$0xf]
      %v276 = vld [vmem:[%s165 + $0x1a0] sm:$0x1]
      %v277 = vld [vmem:[%s165 + $0x1a4] sm:$0xf]
      %v278 = vld [vmem:[%s165 + $0x1a8] sm:$0xf]
      %v279 = vld [vmem:[%s165 + $0x1ac] sm:$0xf]
      %v280 = vld [vmem:[%s165 + $0x1b0] sm:$0xf]
      %v281 = vld [vmem:[%s165 + $0x1b4] sm:$0x1]
      %v282 = vld [vmem:[%s165 + $0x1b8] sm:$0xf]
      %v283 = vld [vmem:[%s165 + $0x1bc] sm:$0xf]
      %v284 = vld [vmem:[%s165 + $0x1c0] sm:$0xf]
      %v285 = vld [vmem:[%s165 + $0x1c4] sm:$0xf]
      %v286 = vld [vmem:[%s165 + $0x1c8] sm:$0x1]
      %v287 = vld [vmem:[%s165 + $0x1cc] sm:$0xf]
      %v288 = vld [vmem:[%s165 + $0x1d0] sm:$0xf]
      %v289 = vld [vmem:[%s165 + $0x1d4] sm:$0xf]
      %v290 = vld [vmem:[%s165 + $0x1d8] sm:$0xf]
      %v291 = vld [vmem:[%s165 + $0x1dc] sm:$0x1]
      %v292 = vld [vmem:[%s165 + $0x1e0] sm:$0xf]
      %v293 = vld [vmem:[%s165 + $0x1e4] sm:$0xf]
      %v294 = vld [vmem:[%s165 + $0x1e8] sm:$0xf]
      %v295 = vld [vmem:[%s165 + $0x1ec] sm:$0xf]
      %v296 = vld [vmem:[%s165 + $0x1f0] sm:$0x1]
      %v297 = vld [vmem:[%s165 + $0x1f4] sm:$0xf]
      %v298 = vld [vmem:[%s165 + $0x1f8] sm:$0xf]
      %v299 = vld [vmem:[%s165 + $0x1fc] sm:$0xf]
      %v300 = vld [vmem:[%s165 + $0x200] sm:$0xf]
      %v301 = vld [vmem:[%s165 + $0x204] sm:$0x1]
      %v302 = vld [vmem:[%s165 + $0x208] sm:$0xf]
      %v303 = vld [vmem:[%s165 + $0x20c] sm:$0xf]
      %v304 = vld [vmem:[%s165 + $0x210] sm:$0xf]
      %v305 = vld [vmem:[%s165 + $0x214] sm:$0xf]
      %v306 = vld [vmem:[%s165 + $0x218] sm:$0x1]
      %v307 = vld [vmem:[%s165 + $0x21c] sm:$0xf]
      %v308 = vld [vmem:[%s165 + $0x220] sm:$0xf]
      %v309 = vld [vmem:[%s165 + $0x224] sm:$0xf]
      %v310 = vld [vmem:[%s165 + $0x228] sm:$0xf]
      %v311 = vld [vmem:[%s165 + $0x22c] sm:$0x1]
      %v312 = vld [vmem:[%s165 + $0x230] sm:$0xf]
      %v313 = vld [vmem:[%s165 + $0x234] sm:$0xf]
      %v314 = vld [vmem:[%s165 + $0x238] sm:$0xf]
      %v315 = vld [vmem:[%s165 + $0x23c] sm:$0xf]
      %v316 = vld [vmem:[%s165 + $0x240] sm:$0x1]
      %v317 = vld [vmem:[%s165 + $0x244] sm:$0xf]
      %v318 = vld [vmem:[%s165 + $0x248] sm:$0xf]
      %v319 = vld [vmem:[%s165 + $0x24c] sm:$0xf]
      %v320 = vld [vmem:[%s165 + $0x250] sm:$0xf]
      %v321 = vld [vmem:[%s165 + $0x254] sm:$0x1]
      %v322 = vld [vmem:[%s165 + $0x258] sm:$0xf]
      %v323 = vld [vmem:[%s165 + $0x25c] sm:$0xf]
      %v324 = vld [vmem:[%s165 + $0x260] sm:$0xf]
      %v325 = vld [vmem:[%s165 + $0x264] sm:$0xf]
      %v326 = vld [vmem:[%s165 + $0x268] sm:$0x1]
      %v327 = vld [vmem:[%s165 + $0x26c] sm:$0xf]
      %v328 = vld [vmem:[%s165 + $0x270] sm:$0xf]
      %v329 = vld [vmem:[%s165 + $0x274] sm:$0xf]
      %v330 = vld [vmem:[%s165 + $0x278] sm:$0xf]
      %v331 = vld [vmem:[%s165 + $0x27c] sm:$0x1]
      %v332 = vld [vmem:[%s165 + $0x280] sm:$0xf]
      %v333 = vld [vmem:[%s165 + $0x284] sm:$0xf]
      %v334 = vld [vmem:[%s165 + $0x288] sm:$0xf]
      %v335 = vld [vmem:[%s165 + $0x28c] sm:$0xf]
      %v336 = vld [vmem:[%s165 + $0x290] sm:$0x1]
      %v337 = vld [vmem:[%s165 + $0x294] sm:$0xf]
      %v338 = vld [vmem:[%s165 + $0x298] sm:$0xf]
      %v339 = vld [vmem:[%s165 + $0x29c] sm:$0xf]
      %v340 = vld [vmem:[%s165 + $0x2a0] sm:$0xf]
      %v341 = vld [vmem:[%s165 + $0x2a4] sm:$0x1]
      %v342 = vld [vmem:[%s1] sm:$0x3]
      %s343 = scalar_lea.vmem %s1, 6
      %v344 = vld [vmem:[%s343] sm:$0x3]
      %v473 = vunpack.c.l.b16 %v177
      %v474 = vunpack.c.l.b16 %v178
      %v475 = vunpack.c.l.b16 %v179
      %v476 = vunpack.c.l.b16 %v180
      %v477 = vunpack.c.l.b16 %v182
      %v478 = vunpack.c.l.b16 %v183
      %v479 = vunpack.c.l.b16 %v184
      %v480 = vunpack.c.l.b16 %v185
      %v481 = vunpack.c.l.b16 %v187
      %v482 = vunpack.c.l.b16 %v188
      %v483 = vunpack.c.l.b16 %v189
      %v484 = vunpack.c.l.b16 %v190
      %v485 = vunpack.c.l.b16 %v192
      %v486 = vunpack.c.l.b16 %v193
      %v487 = vunpack.c.l.b16 %v194
      %v488 = vunpack.c.l.b16 %v195
      %v489 = vunpack.c.l.b16 %v197
      %v490 = vunpack.c.l.b16 %v198
      %v491 = vunpack.c.l.b16 %v199
      %v492 = vunpack.c.l.b16 %v200
      %v493 = vunpack.c.l.b16 %v202
      %v494 = vunpack.c.l.b16 %v203
      %v495 = vunpack.c.l.b16 %v204
      %v496 = vunpack.c.l.b16 %v205
      %v497 = vunpack.c.l.b16 %v207
      %v498 = vunpack.c.l.b16 %v208
      %v499 = vunpack.c.l.b16 %v209
      %v500 = vunpack.c.l.b16 %v210
      %v501 = vunpack.c.l.b16 %v212
      %v502 = vunpack.c.l.b16 %v213
      %v503 = vunpack.c.l.b16 %v214
      %v504 = vunpack.c.l.b16 %v215
      %v505 = vunpack.c.l.b16 %v217
      %v506 = vunpack.c.l.b16 %v218
      %v507 = vunpack.c.l.b16 %v219
      %v508 = vunpack.c.l.b16 %v220
      %v509 = vunpack.c.l.b16 %v222
      %v510 = vunpack.c.l.b16 %v223
      %v511 = vunpack.c.l.b16 %v224
      %v512 = vunpack.c.l.b16 %v225
      %v513 = vunpack.c.l.b16 %v227
      %v514 = vunpack.c.l.b16 %v228
      %v515 = vunpack.c.l.b16 %v229
      %v516 = vunpack.c.l.b16 %v230
      %v517 = vunpack.c.l.b16 %v232
      %v518 = vunpack.c.l.b16 %v233
      %v519 = vunpack.c.l.b16 %v234
      %v520 = vunpack.c.l.b16 %v235
      %v521 = vunpack.c.l.b16 %v237
      %v522 = vunpack.c.l.b16 %v238
      %v523 = vunpack.c.l.b16 %v239
      %v524 = vunpack.c.l.b16 %v240
      %v525 = vunpack.c.l.b16 %v242
      %v526 = vunpack.c.l.b16 %v243
      %v527 = vunpack.c.l.b16 %v244
      %v528 = vunpack.c.l.b16 %v245
      %v529 = vunpack.c.l.b16 %v247
      %v530 = vunpack.c.l.b16 %v248
      %v531 = vunpack.c.l.b16 %v249
      %v532 = vunpack.c.l.b16 %v250
      %v533 = vunpack.c.l.b16 %v252
      %v534 = vunpack.c.l.b16 %v253
      %v535 = vunpack.c.l.b16 %v254
      %v536 = vunpack.c.l.b16 %v255
      %v537 = vunpack.c.l.b16 %v257
      %v538 = vunpack.c.l.b16 %v258
      %v539 = vunpack.c.l.b16 %v259
      %v540 = vunpack.c.l.b16 %v260
      %v541 = vunpack.c.l.b16 %v262
      %v542 = vunpack.c.l.b16 %v263
      %v543 = vunpack.c.l.b16 %v264
      %v544 = vunpack.c.l.b16 %v265
      %v545 = vunpack.c.l.b16 %v267
      %v546 = vunpack.c.l.b16 %v268
      %v547 = vunpack.c.l.b16 %v269
      %v548 = vunpack.c.l.b16 %v270
      %v549 = vunpack.c.l.b16 %v272
      %v550 = vunpack.c.l.b16 %v273
      %v551 = vunpack.c.l.b16 %v274
      %v552 = vunpack.c.l.b16 %v275
      %v553 = vunpack.c.l.b16 %v277
      %v554 = vunpack.c.l.b16 %v278
      %v555 = vunpack.c.l.b16 %v279
      %v556 = vunpack.c.l.b16 %v280
      %v557 = vunpack.c.l.b16 %v282
      %v558 = vunpack.c.l.b16 %v283
      %v559 = vunpack.c.l.b16 %v284
      %v560 = vunpack.c.l.b16 %v285
      %v561 = vunpack.c.l.b16 %v287
      %v562 = vunpack.c.l.b16 %v288
      %v563 = vunpack.c.l.b16 %v289
      %v564 = vunpack.c.l.b16 %v290
      %v565 = vunpack.c.l.b16 %v292
      %v566 = vunpack.c.l.b16 %v293
      %v567 = vunpack.c.l.b16 %v294
      %v568 = vunpack.c.l.b16 %v295
      %v569 = vunpack.c.l.b16 %v297
      %v570 = vunpack.c.l.b16 %v298
      %v571 = vunpack.c.l.b16 %v299
      %v572 = vunpack.c.l.b16 %v300
      %v573 = vunpack.c.l.b16 %v302
      %v574 = vunpack.c.l.b16 %v303
      %v575 = vunpack.c.l.b16 %v304
      %v576 = vunpack.c.l.b16 %v305
      %v577 = vunpack.c.l.b16 %v307
      %v578 = vunpack.c.l.b16 %v308
      %v579 = vunpack.c.l.b16 %v309
      %v580 = vunpack.c.l.b16 %v310
      %v581 = vunpack.c.l.b16 %v312
      %v582 = vunpack.c.l.b16 %v313
      %v583 = vunpack.c.l.b16 %v314
      %v584 = vunpack.c.l.b16 %v315
      %v585 = vunpack.c.l.b16 %v317
      %v586 = vunpack.c.l.b16 %v318
      %v587 = vunpack.c.l.b16 %v319
      %v588 = vunpack.c.l.b16 %v320
      %v589 = vunpack.c.l.b16 %v322
      %v590 = vunpack.c.l.b16 %v323
      %v591 = vunpack.c.l.b16 %v324
      %v592 = vunpack.c.l.b16 %v325
      %v593 = vunpack.c.l.b16 %v327
      %v594 = vunpack.c.l.b16 %v328
      %v595 = vunpack.c.l.b16 %v329
      %v596 = vunpack.c.l.b16 %v330
      %v597 = vunpack.c.l.b16 %v332
      %v598 = vunpack.c.l.b16 %v333
      %v599 = vunpack.c.l.b16 %v334
      %v600 = vunpack.c.l.b16 %v335
      %v601 = vpack.c.b16 %v474, %v473
      %v602 = vpack.c.b16 %v476, %v475
      %v603 = vpack.c.b16 %v478, %v477
      %v604 = vpack.c.b16 %v480, %v479
      %v605 = vpack.c.b16 %v482, %v481
      %v606 = vpack.c.b16 %v484, %v483
      %v607 = vpack.c.b16 %v486, %v485
      %v608 = vpack.c.b16 %v488, %v487
      %v609 = vpack.c.b16 %v490, %v489
      %v610 = vpack.c.b16 %v492, %v491
      %v611 = vpack.c.b16 %v494, %v493
      %v612 = vpack.c.b16 %v496, %v495
      %v613 = vpack.c.b16 %v498, %v497
      %v614 = vpack.c.b16 %v500, %v499
      %v615 = vpack.c.b16 %v502, %v501
      %v616 = vpack.c.b16 %v504, %v503
      %v617 = vpack.c.b16 %v506, %v505
      %v618 = vpack.c.b16 %v508, %v507
      %v619 = vpack.c.b16 %v510, %v509
      %v620 = vpack.c.b16 %v512, %v511
      %v621 = vpack.c.b16 %v514, %v513
      %v622 = vpack.c.b16 %v516, %v515
      %v623 = vpack.c.b16 %v518, %v517
      %v624 = vpack.c.b16 %v520, %v519
      %v625 = vpack.c.b16 %v522, %v521
      %v626 = vpack.c.b16 %v524, %v523
      %v627 = vpack.c.b16 %v526, %v525
      %v628 = vpack.c.b16 %v528, %v527
      %v629 = vpack.c.b16 %v530, %v529
      %v630 = vpack.c.b16 %v532, %v531
      %v631 = vpack.c.b16 %v534, %v533
      %v632 = vpack.c.b16 %v536, %v535
      %v633 = vpack.c.b16 %v538, %v537
      %v634 = vpack.c.b16 %v540, %v539
      %v635 = vpack.c.b16 %v542, %v541
      %v636 = vpack.c.b16 %v544, %v543
      %v637 = vpack.c.b16 %v546, %v545
      %v638 = vpack.c.b16 %v548, %v547
      %v639 = vpack.c.b16 %v550, %v549
      %v640 = vpack.c.b16 %v552, %v551
      %v641 = vpack.c.b16 %v554, %v553
      %v642 = vpack.c.b16 %v556, %v555
      %v643 = vpack.c.b16 %v558, %v557
      %v644 = vpack.c.b16 %v560, %v559
      %v645 = vpack.c.b16 %v562, %v561
      %v646 = vpack.c.b16 %v564, %v563
      %v647 = vpack.c.b16 %v566, %v565
      %v648 = vpack.c.b16 %v568, %v567
      %v649 = vpack.c.b16 %v570, %v569
      %v650 = vpack.c.b16 %v572, %v571
      %v651 = vpack.c.b16 %v574, %v573
      %v652 = vpack.c.b16 %v576, %v575
      %v653 = vpack.c.b16 %v578, %v577
      %v654 = vpack.c.b16 %v580, %v579
      %v655 = vpack.c.b16 %v582, %v581
      %v656 = vpack.c.b16 %v584, %v583
      %v657 = vpack.c.b16 %v586, %v585
      %v658 = vpack.c.b16 %v588, %v587
      %v659 = vpack.c.b16 %v590, %v589
      %v660 = vpack.c.b16 %v592, %v591
      %v661 = vpack.c.b16 %v594, %v593
      %v662 = vpack.c.b16 %v596, %v595
      %v663 = vpack.c.b16 %v598, %v597
      %v664 = vpack.c.b16 %v600, %v599
      %vm665 = vcmask 23552
      %v667 = vsel %vm665, %v601, 0
      %v670 = vsel %vm665, %v602, 0
      %v673 = vsel %vm665, %v603, 0
      %v676 = vsel %vm665, %v604, 0
      %v679 = vsel %vm665, %v605, 0
      %v682 = vsel %vm665, %v606, 0
      %v685 = vsel %vm665, %v607, 0
      %v688 = vsel %vm665, %v608, 0
      %v691 = vsel %vm665, %v609, 0
      %v694 = vsel %vm665, %v610, 0
      %v697 = vsel %vm665, %v611, 0
      %v700 = vsel %vm665, %v612, 0
      %v703 = vsel %vm665, %v613, 0
      %v706 = vsel %vm665, %v614, 0
      %v709 = vsel %vm665, %v615, 0
      %v712 = vsel %vm665, %v616, 0
      %v715 = vsel %vm665, %v617, 0
      %v718 = vsel %vm665, %v618, 0
      %v721 = vsel %vm665, %v619, 0
      %v724 = vsel %vm665, %v620, 0
      %v727 = vsel %vm665, %v621, 0
      %v730 = vsel %vm665, %v622, 0
      %v733 = vsel %vm665, %v623, 0
      %v736 = vsel %vm665, %v624, 0
      %v739 = vsel %vm665, %v625, 0
      %v742 = vsel %vm665, %v626, 0
      %v745 = vsel %vm665, %v627, 0
      %v748 = vsel %vm665, %v628, 0
      %v751 = vsel %vm665, %v629, 0
      %v754 = vsel %vm665, %v630, 0
      %v757 = vsel %vm665, %v631, 0
      %v760 = vsel %vm665, %v632, 0
      %v763 = vsel %vm665, %v633, 0
      %v766 = vsel %vm665, %v634, 0
      %v769 = vsel %vm665, %v635, 0
      %v772 = vsel %vm665, %v636, 0
      %v775 = vsel %vm665, %v637, 0
      %v778 = vsel %vm665, %v638, 0
      %v781 = vsel %vm665, %v639, 0
      %v784 = vsel %vm665, %v640, 0
      %v787 = vsel %vm665, %v641, 0
      %v790 = vsel %vm665, %v642, 0
      %v793 = vsel %vm665, %v643, 0
      %v796 = vsel %vm665, %v644, 0
      %v799 = vsel %vm665, %v645, 0
      %v802 = vsel %vm665, %v646, 0
      %v805 = vsel %vm665, %v647, 0
      %v808 = vsel %vm665, %v648, 0
      %v811 = vsel %vm665, %v649, 0
      %v814 = vsel %vm665, %v650, 0
      %v817 = vsel %vm665, %v651, 0
      %v820 = vsel %vm665, %v652, 0
      %v823 = vsel %vm665, %v653, 0
      %v826 = vsel %vm665, %v654, 0
      %v829 = vsel %vm665, %v655, 0
      %v832 = vsel %vm665, %v656, 0
      %v835 = vsel %vm665, %v657, 0
      %v838 = vsel %vm665, %v658, 0
      %v841 = vsel %vm665, %v659, 0
      %v844 = vsel %vm665, %v660, 0
      %v847 = vsel %vm665, %v661, 0
      %v850 = vsel %vm665, %v662, 0
      %v853 = vsel %vm665, %v663, 0
      %v856 = vsel %vm665, %v664, 0
      %vm858 = vcmask 1040384
      %vm859 = vcmask 1041408
      %v860 = vsel %vm858, 4294967295, 65535
      %v861 = vsel %vm859, %v860, 0
      %v863 = vand.u32 %v344, %v861
      %865 = vmatpush.bf16.msra.mxu0 0
      %866 = vmatpush.bf16.msra.mxu0 0
      %867 = vmatpush.bf16.msra.mxu0 0
      %868 = vmatpush.bf16.msra.mxu0 0
      %869 = vmatpush.bf16.msra.mxu0 0
      %870 = vmatpush.bf16.msra.mxu0 0
      %871 = vmatpush.bf16.msra.mxu0 0
      %872 = vmatpush.bf16.msra.mxu0 %v863
      %873 = vmatmul.bf16.gmra.mxu0 %v667
      %v874 = vpop.f32.mrf.mxu0
      %v875 = vadd.f32 0.0, %v874
      %v876 = vpop.f32.mrf.mxu0
      %v877 = vadd.f32 0.0, %v876
      %878 = vmatmul.bf16.gmra.mxu0 %v670
      %v879 = vpop.f32.mrf.mxu0
      %v880 = vadd.f32 0.0, %v879
      %v881 = vpop.f32.mrf.mxu0
      %v882 = vadd.f32 0.0, %v881
      %883 = vmatmul.bf16.gmra.mxu0 %v673
      %v884 = vpop.f32.mrf.mxu0
      %v885 = vadd.f32 0.0, %v884
      %v886 = vpop.f32.mrf.mxu0
      %v887 = vadd.f32 0.0, %v886
      %888 = vmatmul.bf16.gmra.mxu0 %v676
      %v889 = vpop.f32.mrf.mxu0
      %v890 = vadd.f32 0.0, %v889
      %v891 = vpop.f32.mrf.mxu0
      %v892 = vadd.f32 0.0, %v891
      %893 = vmatmul.bf16.gmra.mxu0 %v679
      %v894 = vpop.f32.mrf.mxu0
      %v895 = vadd.f32 0.0, %v894
      %v896 = vpop.f32.mrf.mxu0
      %v897 = vadd.f32 0.0, %v896
      %898 = vmatmul.bf16.gmra.mxu0 %v682
      %v899 = vpop.f32.mrf.mxu0
      %v900 = vadd.f32 0.0, %v899
      %v901 = vpop.f32.mrf.mxu0
      %v902 = vadd.f32 0.0, %v901
      %903 = vmatmul.bf16.gmra.mxu0 %v685
      %v904 = vpop.f32.mrf.mxu0
      %v905 = vadd.f32 0.0, %v904
      %v906 = vpop.f32.mrf.mxu0
      %v907 = vadd.f32 0.0, %v906
      %908 = vmatmul.bf16.gmra.mxu0 %v688
      %v909 = vpop.f32.mrf.mxu0
      %v910 = vadd.f32 0.0, %v909
      %v911 = vpop.f32.mrf.mxu0
      %v912 = vadd.f32 0.0, %v911
      %913 = vmatmul.bf16.gmra.mxu0 %v691
      %v914 = vpop.f32.mrf.mxu0
      %v915 = vadd.f32 0.0, %v914
      %v916 = vpop.f32.mrf.mxu0
      %v917 = vadd.f32 0.0, %v916
      %918 = vmatmul.bf16.gmra.mxu0 %v694
      %v919 = vpop.f32.mrf.mxu0
      %v920 = vadd.f32 0.0, %v919
      %v921 = vpop.f32.mrf.mxu0
      %v922 = vadd.f32 0.0, %v921
      %923 = vmatmul.bf16.gmra.mxu0 %v697
      %v924 = vpop.f32.mrf.mxu0
      %v925 = vadd.f32 0.0, %v924
      %v926 = vpop.f32.mrf.mxu0
      %v927 = vadd.f32 0.0, %v926
      %928 = vmatmul.bf16.gmra.mxu0 %v700
      %v929 = vpop.f32.mrf.mxu0
      %v930 = vadd.f32 0.0, %v929
      %v931 = vpop.f32.mrf.mxu0
      %v932 = vadd.f32 0.0, %v931
      %933 = vmatmul.bf16.gmra.mxu0 %v703
      %v934 = vpop.f32.mrf.mxu0
      %v935 = vadd.f32 0.0, %v934
      %v936 = vpop.f32.mrf.mxu0
      %v937 = vadd.f32 0.0, %v936
      %938 = vmatmul.bf16.gmra.mxu0 %v706
      %v939 = vpop.f32.mrf.mxu0
      %v940 = vadd.f32 0.0, %v939
      %v941 = vpop.f32.mrf.mxu0
      %v942 = vadd.f32 0.0, %v941
      %943 = vmatmul.bf16.gmra.mxu0 %v709
      %v944 = vpop.f32.mrf.mxu0
      %v945 = vadd.f32 0.0, %v944
      %v946 = vpop.f32.mrf.mxu0
      %v947 = vadd.f32 0.0, %v946
      %948 = vmatmul.bf16.gmra.mxu0 %v712
      %v949 = vpop.f32.mrf.mxu0
      %v950 = vadd.f32 0.0, %v949
      %v951 = vpop.f32.mrf.mxu0
      %v952 = vadd.f32 0.0, %v951
      %953 = vmatmul.bf16.gmra.mxu0 %v715
      %v954 = vpop.f32.mrf.mxu0
      %v955 = vadd.f32 0.0, %v954
      %v956 = vpop.f32.mrf.mxu0
      %v957 = vadd.f32 0.0, %v956
      %958 = vmatmul.bf16.gmra.mxu0 %v718
      %v959 = vpop.f32.mrf.mxu0
      %v960 = vadd.f32 0.0, %v959
      %v961 = vpop.f32.mrf.mxu0
      %v962 = vadd.f32 0.0, %v961
      %963 = vmatmul.bf16.gmra.mxu0 %v721
      %v964 = vpop.f32.mrf.mxu0
      %v965 = vadd.f32 0.0, %v964
      %v966 = vpop.f32.mrf.mxu0
      %v967 = vadd.f32 0.0, %v966
      %968 = vmatmul.bf16.gmra.mxu0 %v724
      %v969 = vpop.f32.mrf.mxu0
      %v970 = vadd.f32 0.0, %v969
      %v971 = vpop.f32.mrf.mxu0
      %v972 = vadd.f32 0.0, %v971
      %973 = vmatmul.bf16.gmra.mxu0 %v727
      %v974 = vpop.f32.mrf.mxu0
      %v975 = vadd.f32 0.0, %v974
      %v976 = vpop.f32.mrf.mxu0
      %v977 = vadd.f32 0.0, %v976
      %978 = vmatmul.bf16.gmra.mxu0 %v730
      %v979 = vpop.f32.mrf.mxu0
      %v980 = vadd.f32 0.0, %v979
      %v981 = vpop.f32.mrf.mxu0
      %v982 = vadd.f32 0.0, %v981
      %983 = vmatmul.bf16.gmra.mxu0 %v733
      %v984 = vpop.f32.mrf.mxu0
      %v985 = vadd.f32 0.0, %v984
      %v986 = vpop.f32.mrf.mxu0
      %v987 = vadd.f32 0.0, %v986
      %988 = vmatmul.bf16.gmra.mxu0 %v736
      %v989 = vpop.f32.mrf.mxu0
      %v990 = vadd.f32 0.0, %v989
      %v991 = vpop.f32.mrf.mxu0
      %v992 = vadd.f32 0.0, %v991
      %993 = vmatmul.bf16.gmra.mxu0 %v739
      %v994 = vpop.f32.mrf.mxu0
      %v995 = vadd.f32 0.0, %v994
      %v996 = vpop.f32.mrf.mxu0
      %v997 = vadd.f32 0.0, %v996
      %998 = vmatmul.bf16.gmra.mxu0 %v742
      %v999 = vpop.f32.mrf.mxu0
      %v1000 = vadd.f32 0.0, %v999
      %v1001 = vpop.f32.mrf.mxu0
      %v1002 = vadd.f32 0.0, %v1001
      %1003 = vmatmul.bf16.gmra.mxu0 %v745
      %v1004 = vpop.f32.mrf.mxu0
      %v1005 = vadd.f32 0.0, %v1004
      %v1006 = vpop.f32.mrf.mxu0
      %v1007 = vadd.f32 0.0, %v1006
      %1008 = vmatmul.bf16.gmra.mxu0 %v748
      %v1009 = vpop.f32.mrf.mxu0
      %v1010 = vadd.f32 0.0, %v1009
      %v1011 = vpop.f32.mrf.mxu0
      %v1012 = vadd.f32 0.0, %v1011
      %1013 = vmatmul.bf16.gmra.mxu0 %v751
      %v1014 = vpop.f32.mrf.mxu0
      %v1015 = vadd.f32 0.0, %v1014
      %v1016 = vpop.f32.mrf.mxu0
      %v1017 = vadd.f32 0.0, %v1016
      %1018 = vmatmul.bf16.gmra.mxu0 %v754
      %v1019 = vpop.f32.mrf.mxu0
      %v1020 = vadd.f32 0.0, %v1019
      %v1021 = vpop.f32.mrf.mxu0
      %v1022 = vadd.f32 0.0, %v1021
      %1023 = vmatmul.bf16.gmra.mxu0 %v757
      %v1024 = vpop.f32.mrf.mxu0
      %v1025 = vadd.f32 0.0, %v1024
      %v1026 = vpop.f32.mrf.mxu0
      %v1027 = vadd.f32 0.0, %v1026
      %1028 = vmatmul.bf16.gmra.mxu0 %v760
      %v1029 = vpop.f32.mrf.mxu0
      %v1030 = vadd.f32 0.0, %v1029
      %v1031 = vpop.f32.mrf.mxu0
      %v1032 = vadd.f32 0.0, %v1031
      %1033 = vmatmul.bf16.gmra.mxu0 %v763
      %v1034 = vpop.f32.mrf.mxu0
      %v1035 = vadd.f32 0.0, %v1034
      %v1036 = vpop.f32.mrf.mxu0
      %v1037 = vadd.f32 0.0, %v1036
      %1038 = vmatmul.bf16.gmra.mxu0 %v766
      %v1039 = vpop.f32.mrf.mxu0
      %v1040 = vadd.f32 0.0, %v1039
      %v1041 = vpop.f32.mrf.mxu0
      %v1042 = vadd.f32 0.0, %v1041
      %1043 = vmatmul.bf16.gmra.mxu0 %v769
      %v1044 = vpop.f32.mrf.mxu0
      %v1045 = vadd.f32 0.0, %v1044
      %v1046 = vpop.f32.mrf.mxu0
      %v1047 = vadd.f32 0.0, %v1046
      %1048 = vmatmul.bf16.gmra.mxu0 %v772
      %v1049 = vpop.f32.mrf.mxu0
      %v1050 = vadd.f32 0.0, %v1049
      %v1051 = vpop.f32.mrf.mxu0
      %v1052 = vadd.f32 0.0, %v1051
      %1053 = vmatmul.bf16.gmra.mxu0 %v775
      %v1054 = vpop.f32.mrf.mxu0
      %v1055 = vadd.f32 0.0, %v1054
      %v1056 = vpop.f32.mrf.mxu0
      %v1057 = vadd.f32 0.0, %v1056
      %1058 = vmatmul.bf16.gmra.mxu0 %v778
      %v1059 = vpop.f32.mrf.mxu0
      %v1060 = vadd.f32 0.0, %v1059
      %v1061 = vpop.f32.mrf.mxu0
      %v1062 = vadd.f32 0.0, %v1061
      %1063 = vmatmul.bf16.gmra.mxu0 %v781
      %v1064 = vpop.f32.mrf.mxu0
      %v1065 = vadd.f32 0.0, %v1064
      %v1066 = vpop.f32.mrf.mxu0
      %v1067 = vadd.f32 0.0, %v1066
      %1068 = vmatmul.bf16.gmra.mxu0 %v784
      %v1069 = vpop.f32.mrf.mxu0
      %v1070 = vadd.f32 0.0, %v1069
      %v1071 = vpop.f32.mrf.mxu0
      %v1072 = vadd.f32 0.0, %v1071
      %1073 = vmatmul.bf16.gmra.mxu0 %v787
      %v1074 = vpop.f32.mrf.mxu0
      %v1075 = vadd.f32 0.0, %v1074
      %v1076 = vpop.f32.mrf.mxu0
      %v1077 = vadd.f32 0.0, %v1076
      %1078 = vmatmul.bf16.gmra.mxu0 %v790
      %v1079 = vpop.f32.mrf.mxu0
      %v1080 = vadd.f32 0.0, %v1079
      %v1081 = vpop.f32.mrf.mxu0
      %v1082 = vadd.f32 0.0, %v1081
      %1083 = vmatmul.bf16.gmra.mxu0 %v793
      %v1084 = vpop.f32.mrf.mxu0
      %v1085 = vadd.f32 0.0, %v1084
      %v1086 = vpop.f32.mrf.mxu0
      %v1087 = vadd.f32 0.0, %v1086
      %1088 = vmatmul.bf16.gmra.mxu0 %v796
      %v1089 = vpop.f32.mrf.mxu0
      %v1090 = vadd.f32 0.0, %v1089
      %v1091 = vpop.f32.mrf.mxu0
      %v1092 = vadd.f32 0.0, %v1091
      %1093 = vmatmul.bf16.gmra.mxu0 %v799
      %v1094 = vpop.f32.mrf.mxu0
      %v1095 = vadd.f32 0.0, %v1094
      %v1096 = vpop.f32.mrf.mxu0
      %v1097 = vadd.f32 0.0, %v1096
      %1098 = vmatmul.bf16.gmra.mxu0 %v802
      %v1099 = vpop.f32.mrf.mxu0
      %v1100 = vadd.f32 0.0, %v1099
      %v1101 = vpop.f32.mrf.mxu0
      %v1102 = vadd.f32 0.0, %v1101
      %1103 = vmatmul.bf16.gmra.mxu0 %v805
      %v1104 = vpop.f32.mrf.mxu0
      %v1105 = vadd.f32 0.0, %v1104
      %v1106 = vpop.f32.mrf.mxu0
      %v1107 = vadd.f32 0.0, %v1106
      %1108 = vmatmul.bf16.gmra.mxu0 %v808
      %v1109 = vpop.f32.mrf.mxu0
      %v1110 = vadd.f32 0.0, %v1109
      %v1111 = vpop.f32.mrf.mxu0
      %v1112 = vadd.f32 0.0, %v1111
      %1113 = vmatmul.bf16.gmra.mxu0 %v811
      %v1114 = vpop.f32.mrf.mxu0
      %v1115 = vadd.f32 0.0, %v1114
      %v1116 = vpop.f32.mrf.mxu0
      %v1117 = vadd.f32 0.0, %v1116
      %1118 = vmatmul.bf16.gmra.mxu0 %v814
      %v1119 = vpop.f32.mrf.mxu0
      %v1120 = vadd.f32 0.0, %v1119
      %v1121 = vpop.f32.mrf.mxu0
      %v1122 = vadd.f32 0.0, %v1121
      %1123 = vmatmul.bf16.gmra.mxu0 %v817
      %v1124 = vpop.f32.mrf.mxu0
      %v1125 = vadd.f32 0.0, %v1124
      %v1126 = vpop.f32.mrf.mxu0
      %v1127 = vadd.f32 0.0, %v1126
      %1128 = vmatmul.bf16.gmra.mxu0 %v820
      %v1129 = vpop.f32.mrf.mxu0
      %v1130 = vadd.f32 0.0, %v1129
      %v1131 = vpop.f32.mrf.mxu0
      %v1132 = vadd.f32 0.0, %v1131
      %1133 = vmatmul.bf16.gmra.mxu0 %v823
      %v1134 = vpop.f32.mrf.mxu0
      %v1135 = vadd.f32 0.0, %v1134
      %v1136 = vpop.f32.mrf.mxu0
      %v1137 = vadd.f32 0.0, %v1136
      %1138 = vmatmul.bf16.gmra.mxu0 %v826
      %v1139 = vpop.f32.mrf.mxu0
      %v1140 = vadd.f32 0.0, %v1139
      %v1141 = vpop.f32.mrf.mxu0
      %v1142 = vadd.f32 0.0, %v1141
      %1143 = vmatmul.bf16.gmra.mxu0 %v829
      %v1144 = vpop.f32.mrf.mxu0
      %v1145 = vadd.f32 0.0, %v1144
      %v1146 = vpop.f32.mrf.mxu0
      %v1147 = vadd.f32 0.0, %v1146
      %1148 = vmatmul.bf16.gmra.mxu0 %v832
      %v1149 = vpop.f32.mrf.mxu0
      %v1150 = vadd.f32 0.0, %v1149
      %v1151 = vpop.f32.mrf.mxu0
      %v1152 = vadd.f32 0.0, %v1151
      %1153 = vmatmul.bf16.gmra.mxu0 %v835
      %v1154 = vpop.f32.mrf.mxu0
      %v1155 = vadd.f32 0.0, %v1154
      %v1156 = vpop.f32.mrf.mxu0
      %v1157 = vadd.f32 0.0, %v1156
      %1158 = vmatmul.bf16.gmra.mxu0 %v838
      %v1159 = vpop.f32.mrf.mxu0
      %v1160 = vadd.f32 0.0, %v1159
      %v1161 = vpop.f32.mrf.mxu0
      %v1162 = vadd.f32 0.0, %v1161
      %1163 = vmatmul.bf16.gmra.mxu0 %v841
      %v1164 = vpop.f32.mrf.mxu0
      %v1165 = vadd.f32 0.0, %v1164
      %v1166 = vpop.f32.mrf.mxu0
      %v1167 = vadd.f32 0.0, %v1166
      %1168 = vmatmul.bf16.gmra.mxu0 %v844
      %v1169 = vpop.f32.mrf.mxu0
      %v1170 = vadd.f32 0.0, %v1169
      %v1171 = vpop.f32.mrf.mxu0
      %v1172 = vadd.f32 0.0, %v1171
      %1173 = vmatmul.bf16.gmra.mxu0 %v847
      %v1174 = vpop.f32.mrf.mxu0
      %v1175 = vadd.f32 0.0, %v1174
      %v1176 = vpop.f32.mrf.mxu0
      %v1177 = vadd.f32 0.0, %v1176
      %1178 = vmatmul.bf16.gmra.mxu0 %v850
      %v1179 = vpop.f32.mrf.mxu0
      %v1180 = vadd.f32 0.0, %v1179
      %v1181 = vpop.f32.mrf.mxu0
      %v1182 = vadd.f32 0.0, %v1181
      %1183 = vmatmul.bf16.gmra.mxu0 %v853
      %v1184 = vpop.f32.mrf.mxu0
      %v1185 = vadd.f32 0.0, %v1184
      %v1186 = vpop.f32.mrf.mxu0
      %v1187 = vadd.f32 0.0, %v1186
      %1188 = vmatmul.bf16.gmra.mxu0 %v856
      %v1189 = vpop.f32.mrf.mxu0
      %v1190 = vadd.f32 0.0, %v1189
      %v1191 = vpop.f32.mrf.mxu0
      %v1192 = vadd.f32 0.0, %v1191
      %1193 = vdwg.mxu0
      %v1198 = vunpack.c.l.b16 %v172
      %v1199 = vunpack.c.l.b16 %v173
      %v1200 = vunpack.c.l.b16 %v174
      %v1201 = vunpack.c.l.b16 %v175
      %v1202 = vpack.c.b16 %v1199, %v1198
      %v1203 = vpack.c.b16 %v1201, %v1200
      %v1205 = vsel %vm665, %v1202, 0
      %v1208 = vsel %vm665, %v1203, 0
      %v1211 = vand.u32 %v342, %v861
      %1213 = vmatpush.bf16.msra.mxu0 0
      %1214 = vmatpush.bf16.msra.mxu0 0
      %1215 = vmatpush.bf16.msra.mxu0 0
      %1216 = vmatpush.bf16.msra.mxu0 0
      %1217 = vmatpush.bf16.msra.mxu0 0
      %1218 = vmatpush.bf16.msra.mxu0 0
      %1219 = vmatpush.bf16.msra.mxu0 0
      %1220 = vmatpush.bf16.msra.mxu0 %v1211
      %1221 = vmatmul.bf16.gmra.mxu0 %v1205
      %v1222 = vpop.f32.mrf.mxu0
      %v1223 = vadd.f32 %v875, %v1222
      %v1224 = vpop.f32.mrf.mxu0
      %v1225 = vadd.f32 %v877, %v1224
      %1226 = vmatmul.bf16.gmra.mxu0 %v1208
      %v1227 = vpop.f32.mrf.mxu0
      %v1228 = vadd.f32 %v880, %v1227
      %v1229 = vpop.f32.mrf.mxu0
      %v1230 = vadd.f32 %v882, %v1229
      %1231 = vmatmul.bf16.gmra.mxu0 %v667
      %v1232 = vpop.f32.mrf.mxu0
      %v1233 = vadd.f32 %v885, %v1232
      %v1234 = vpop.f32.mrf.mxu0
      %v1235 = vadd.f32 %v887, %v1234
      %1236 = vmatmul.bf16.gmra.mxu0 %v670
      %v1237 = vpop.f32.mrf.mxu0
      %v1238 = vadd.f32 %v890, %v1237
      %v1239 = vpop.f32.mrf.mxu0
      %v1240 = vadd.f32 %v892, %v1239
      %1241 = vmatmul.bf16.gmra.mxu0 %v673
      %v1242 = vpop.f32.mrf.mxu0
      %v1243 = vadd.f32 %v895, %v1242
      %v1244 = vpop.f32.mrf.mxu0
      %v1245 = vadd.f32 %v897, %v1244
      %1246 = vmatmul.bf16.gmra.mxu0 %v676
      %v1247 = vpop.f32.mrf.mxu0
      %v1248 = vadd.f32 %v900, %v1247
      %v1249 = vpop.f32.mrf.mxu0
      %v1250 = vadd.f32 %v902, %v1249
      %1251 = vmatmul.bf16.gmra.mxu0 %v679
      %v1252 = vpop.f32.mrf.mxu0
      %v1253 = vadd.f32 %v905, %v1252
      %v1254 = vpop.f32.mrf.mxu0
      %v1255 = vadd.f32 %v907, %v1254
      %1256 = vmatmul.bf16.gmra.mxu0 %v682
      %v1257 = vpop.f32.mrf.mxu0
      %v1258 = vadd.f32 %v910, %v1257
      %v1259 = vpop.f32.mrf.mxu0
      %v1260 = vadd.f32 %v912, %v1259
      %1261 = vmatmul.bf16.gmra.mxu0 %v685
      %v1262 = vpop.f32.mrf.mxu0
      %v1263 = vadd.f32 %v915, %v1262
      %v1264 = vpop.f32.mrf.mxu0
      %v1265 = vadd.f32 %v917, %v1264
      %1266 = vmatmul.bf16.gmra.mxu0 %v688
      %v1267 = vpop.f32.mrf.mxu0
      %v1268 = vadd.f32 %v920, %v1267
      %v1269 = vpop.f32.mrf.mxu0
      %v1270 = vadd.f32 %v922, %v1269
      %1271 = vmatmul.bf16.gmra.mxu0 %v691
      %v1272 = vpop.f32.mrf.mxu0
      %v1273 = vadd.f32 %v925, %v1272
      %v1274 = vpop.f32.mrf.mxu0
      %v1275 = vadd.f32 %v927, %v1274
      %1276 = vmatmul.bf16.gmra.mxu0 %v694
      %v1277 = vpop.f32.mrf.mxu0
      %v1278 = vadd.f32 %v930, %v1277
      %v1279 = vpop.f32.mrf.mxu0
      %v1280 = vadd.f32 %v932, %v1279
      %1281 = vmatmul.bf16.gmra.mxu0 %v697
      %v1282 = vpop.f32.mrf.mxu0
      %v1283 = vadd.f32 %v935, %v1282
      %v1284 = vpop.f32.mrf.mxu0
      %v1285 = vadd.f32 %v937, %v1284
      %1286 = vmatmul.bf16.gmra.mxu0 %v700
      %v1287 = vpop.f32.mrf.mxu0
      %v1288 = vadd.f32 %v940, %v1287
      %v1289 = vpop.f32.mrf.mxu0
      %v1290 = vadd.f32 %v942, %v1289
      %1291 = vmatmul.bf16.gmra.mxu0 %v703
      %v1292 = vpop.f32.mrf.mxu0
      %v1293 = vadd.f32 %v945, %v1292
      %v1294 = vpop.f32.mrf.mxu0
      %v1295 = vadd.f32 %v947, %v1294
      %1296 = vmatmul.bf16.gmra.mxu0 %v706
      %v1297 = vpop.f32.mrf.mxu0
      %v1298 = vadd.f32 %v950, %v1297
      %v1299 = vpop.f32.mrf.mxu0
      %v1300 = vadd.f32 %v952, %v1299
      %1301 = vmatmul.bf16.gmra.mxu0 %v709
      %v1302 = vpop.f32.mrf.mxu0
      %v1303 = vadd.f32 %v955, %v1302
      %v1304 = vpop.f32.mrf.mxu0
      %v1305 = vadd.f32 %v957, %v1304
      %1306 = vmatmul.bf16.gmra.mxu0 %v712
      %v1307 = vpop.f32.mrf.mxu0
      %v1308 = vadd.f32 %v960, %v1307
      %v1309 = vpop.f32.mrf.mxu0
      %v1310 = vadd.f32 %v962, %v1309
      %1311 = vmatmul.bf16.gmra.mxu0 %v715
      %v1312 = vpop.f32.mrf.mxu0
      %v1313 = vadd.f32 %v965, %v1312
      %v1314 = vpop.f32.mrf.mxu0
      %v1315 = vadd.f32 %v967, %v1314
      %1316 = vmatmul.bf16.gmra.mxu0 %v718
      %v1317 = vpop.f32.mrf.mxu0
      %v1318 = vadd.f32 %v970, %v1317
      %v1319 = vpop.f32.mrf.mxu0
      %v1320 = vadd.f32 %v972, %v1319
      %1321 = vmatmul.bf16.gmra.mxu0 %v721
      %v1322 = vpop.f32.mrf.mxu0
      %v1323 = vadd.f32 %v975, %v1322
      %v1324 = vpop.f32.mrf.mxu0
      %v1325 = vadd.f32 %v977, %v1324
      %1326 = vmatmul.bf16.gmra.mxu0 %v724
      %v1327 = vpop.f32.mrf.mxu0
      %v1328 = vadd.f32 %v980, %v1327
      %v1329 = vpop.f32.mrf.mxu0
      %v1330 = vadd.f32 %v982, %v1329
      %1331 = vmatmul.bf16.gmra.mxu0 %v727
      %v1332 = vpop.f32.mrf.mxu0
      %v1333 = vadd.f32 %v985, %v1332
      %v1334 = vpop.f32.mrf.mxu0
      %v1335 = vadd.f32 %v987, %v1334
      %1336 = vmatmul.bf16.gmra.mxu0 %v730
      %v1337 = vpop.f32.mrf.mxu0
      %v1338 = vadd.f32 %v990, %v1337
      %v1339 = vpop.f32.mrf.mxu0
      %v1340 = vadd.f32 %v992, %v1339
      %1341 = vmatmul.bf16.gmra.mxu0 %v733
      %v1342 = vpop.f32.mrf.mxu0
      %v1343 = vadd.f32 %v995, %v1342
      %v1344 = vpop.f32.mrf.mxu0
      %v1345 = vadd.f32 %v997, %v1344
      %1346 = vmatmul.bf16.gmra.mxu0 %v736
      %v1347 = vpop.f32.mrf.mxu0
      %v1348 = vadd.f32 %v1000, %v1347
      %v1349 = vpop.f32.mrf.mxu0
      %v1350 = vadd.f32 %v1002, %v1349
      %1351 = vmatmul.bf16.gmra.mxu0 %v739
      %v1352 = vpop.f32.mrf.mxu0
      %v1353 = vadd.f32 %v1005, %v1352
      %v1354 = vpop.f32.mrf.mxu0
      %v1355 = vadd.f32 %v1007, %v1354
      %1356 = vmatmul.bf16.gmra.mxu0 %v742
      %v1357 = vpop.f32.mrf.mxu0
      %v1358 = vadd.f32 %v1010, %v1357
      %v1359 = vpop.f32.mrf.mxu0
      %v1360 = vadd.f32 %v1012, %v1359
      %1361 = vmatmul.bf16.gmra.mxu0 %v745
      %v1362 = vpop.f32.mrf.mxu0
      %v1363 = vadd.f32 %v1015, %v1362
      %v1364 = vpop.f32.mrf.mxu0
      %v1365 = vadd.f32 %v1017, %v1364
      %1366 = vmatmul.bf16.gmra.mxu0 %v748
      %v1367 = vpop.f32.mrf.mxu0
      %v1368 = vadd.f32 %v1020, %v1367
      %v1369 = vpop.f32.mrf.mxu0
      %v1370 = vadd.f32 %v1022, %v1369
      %1371 = vmatmul.bf16.gmra.mxu0 %v751
      %v1372 = vpop.f32.mrf.mxu0
      %v1373 = vadd.f32 %v1025, %v1372
      %v1374 = vpop.f32.mrf.mxu0
      %v1375 = vadd.f32 %v1027, %v1374
      %1376 = vmatmul.bf16.gmra.mxu0 %v754
      %v1377 = vpop.f32.mrf.mxu0
      %v1378 = vadd.f32 %v1030, %v1377
      %v1379 = vpop.f32.mrf.mxu0
      %v1380 = vadd.f32 %v1032, %v1379
      %1381 = vmatmul.bf16.gmra.mxu0 %v757
      %v1382 = vpop.f32.mrf.mxu0
      %v1383 = vadd.f32 %v1035, %v1382
      %v1384 = vpop.f32.mrf.mxu0
      %v1385 = vadd.f32 %v1037, %v1384
      %1386 = vmatmul.bf16.gmra.mxu0 %v760
      %v1387 = vpop.f32.mrf.mxu0
      %v1388 = vadd.f32 %v1040, %v1387
      %v1389 = vpop.f32.mrf.mxu0
      %v1390 = vadd.f32 %v1042, %v1389
      %1391 = vmatmul.bf16.gmra.mxu0 %v763
      %v1392 = vpop.f32.mrf.mxu0
      %v1393 = vadd.f32 %v1045, %v1392
      %v1394 = vpop.f32.mrf.mxu0
      %v1395 = vadd.f32 %v1047, %v1394
      %1396 = vmatmul.bf16.gmra.mxu0 %v766
      %v1397 = vpop.f32.mrf.mxu0
      %v1398 = vadd.f32 %v1050, %v1397
      %v1399 = vpop.f32.mrf.mxu0
      %v1400 = vadd.f32 %v1052, %v1399
      %1401 = vmatmul.bf16.gmra.mxu0 %v769
      %v1402 = vpop.f32.mrf.mxu0
      %v1403 = vadd.f32 %v1055, %v1402
      %v1404 = vpop.f32.mrf.mxu0
      %v1405 = vadd.f32 %v1057, %v1404
      %1406 = vmatmul.bf16.gmra.mxu0 %v772
      %v1407 = vpop.f32.mrf.mxu0
      %v1408 = vadd.f32 %v1060, %v1407
      %v1409 = vpop.f32.mrf.mxu0
      %v1410 = vadd.f32 %v1062, %v1409
      %1411 = vmatmul.bf16.gmra.mxu0 %v775
      %v1412 = vpop.f32.mrf.mxu0
      %v1413 = vadd.f32 %v1065, %v1412
      %v1414 = vpop.f32.mrf.mxu0
      %v1415 = vadd.f32 %v1067, %v1414
      %1416 = vmatmul.bf16.gmra.mxu0 %v778
      %v1417 = vpop.f32.mrf.mxu0
      %v1418 = vadd.f32 %v1070, %v1417
      %v1419 = vpop.f32.mrf.mxu0
      %v1420 = vadd.f32 %v1072, %v1419
      %1421 = vmatmul.bf16.gmra.mxu0 %v781
      %v1422 = vpop.f32.mrf.mxu0
      %v1423 = vadd.f32 %v1075, %v1422
      %v1424 = vpop.f32.mrf.mxu0
      %v1425 = vadd.f32 %v1077, %v1424
      %1426 = vmatmul.bf16.gmra.mxu0 %v784
      %v1427 = vpop.f32.mrf.mxu0
      %v1428 = vadd.f32 %v1080, %v1427
      %v1429 = vpop.f32.mrf.mxu0
      %v1430 = vadd.f32 %v1082, %v1429
      %1431 = vmatmul.bf16.gmra.mxu0 %v787
      %v1432 = vpop.f32.mrf.mxu0
      %v1433 = vadd.f32 %v1085, %v1432
      %v1434 = vpop.f32.mrf.mxu0
      %v1435 = vadd.f32 %v1087, %v1434
      %1436 = vmatmul.bf16.gmra.mxu0 %v790
      %v1437 = vpop.f32.mrf.mxu0
      %v1438 = vadd.f32 %v1090, %v1437
      %v1439 = vpop.f32.mrf.mxu0
      %v1440 = vadd.f32 %v1092, %v1439
      %1441 = vmatmul.bf16.gmra.mxu0 %v793
      %v1442 = vpop.f32.mrf.mxu0
      %v1443 = vadd.f32 %v1095, %v1442
      %v1444 = vpop.f32.mrf.mxu0
      %v1445 = vadd.f32 %v1097, %v1444
      %1446 = vmatmul.bf16.gmra.mxu0 %v796
      %v1447 = vpop.f32.mrf.mxu0
      %v1448 = vadd.f32 %v1100, %v1447
      %v1449 = vpop.f32.mrf.mxu0
      %v1450 = vadd.f32 %v1102, %v1449
      %1451 = vmatmul.bf16.gmra.mxu0 %v799
      %v1452 = vpop.f32.mrf.mxu0
      %v1453 = vadd.f32 %v1105, %v1452
      %v1454 = vpop.f32.mrf.mxu0
      %v1455 = vadd.f32 %v1107, %v1454
      %1456 = vmatmul.bf16.gmra.mxu0 %v802
      %v1457 = vpop.f32.mrf.mxu0
      %v1458 = vadd.f32 %v1110, %v1457
      %v1459 = vpop.f32.mrf.mxu0
      %v1460 = vadd.f32 %v1112, %v1459
      %1461 = vmatmul.bf16.gmra.mxu0 %v805
      %v1462 = vpop.f32.mrf.mxu0
      %v1463 = vadd.f32 %v1115, %v1462
      %v1464 = vpop.f32.mrf.mxu0
      %v1465 = vadd.f32 %v1117, %v1464
      %1466 = vmatmul.bf16.gmra.mxu0 %v808
      %v1467 = vpop.f32.mrf.mxu0
      %v1468 = vadd.f32 %v1120, %v1467
      %v1469 = vpop.f32.mrf.mxu0
      %v1470 = vadd.f32 %v1122, %v1469
      %1471 = vmatmul.bf16.gmra.mxu0 %v811
      %v1472 = vpop.f32.mrf.mxu0
      %v1473 = vadd.f32 %v1125, %v1472
      %v1474 = vpop.f32.mrf.mxu0
      %v1475 = vadd.f32 %v1127, %v1474
      %1476 = vmatmul.bf16.gmra.mxu0 %v814
      %v1477 = vpop.f32.mrf.mxu0
      %v1478 = vadd.f32 %v1130, %v1477
      %v1479 = vpop.f32.mrf.mxu0
      %v1480 = vadd.f32 %v1132, %v1479
      %1481 = vmatmul.bf16.gmra.mxu0 %v817
      %v1482 = vpop.f32.mrf.mxu0
      %v1483 = vadd.f32 %v1135, %v1482
      %v1484 = vpop.f32.mrf.mxu0
      %v1485 = vadd.f32 %v1137, %v1484
      %1486 = vmatmul.bf16.gmra.mxu0 %v820
      %v1487 = vpop.f32.mrf.mxu0
      %v1488 = vadd.f32 %v1140, %v1487
      %v1489 = vpop.f32.mrf.mxu0
      %v1490 = vadd.f32 %v1142, %v1489
      %1491 = vmatmul.bf16.gmra.mxu0 %v823
      %v1492 = vpop.f32.mrf.mxu0
      %v1493 = vadd.f32 %v1145, %v1492
      %v1494 = vpop.f32.mrf.mxu0
      %v1495 = vadd.f32 %v1147, %v1494
      %1496 = vmatmul.bf16.gmra.mxu0 %v826
      %v1497 = vpop.f32.mrf.mxu0
      %v1498 = vadd.f32 %v1150, %v1497
      %v1499 = vpop.f32.mrf.mxu0
      %v1500 = vadd.f32 %v1152, %v1499
      %1501 = vmatmul.bf16.gmra.mxu0 %v829
      %v1502 = vpop.f32.mrf.mxu0
      %v1503 = vadd.f32 %v1155, %v1502
      %v1504 = vpop.f32.mrf.mxu0
      %v1505 = vadd.f32 %v1157, %v1504
      %1506 = vmatmul.bf16.gmra.mxu0 %v832
      %v1507 = vpop.f32.mrf.mxu0
      %v1508 = vadd.f32 %v1160, %v1507
      %v1509 = vpop.f32.mrf.mxu0
      %v1510 = vadd.f32 %v1162, %v1509
      %1511 = vmatmul.bf16.gmra.mxu0 %v835
      %v1512 = vpop.f32.mrf.mxu0
      %v1513 = vadd.f32 %v1165, %v1512
      %v1514 = vpop.f32.mrf.mxu0
      %v1515 = vadd.f32 %v1167, %v1514
      %1516 = vmatmul.bf16.gmra.mxu0 %v838
      %v1517 = vpop.f32.mrf.mxu0
      %v1518 = vadd.f32 %v1170, %v1517
      %v1519 = vpop.f32.mrf.mxu0
      %v1520 = vadd.f32 %v1172, %v1519
      %1521 = vmatmul.bf16.gmra.mxu0 %v841
      %v1522 = vpop.f32.mrf.mxu0
      %v1523 = vadd.f32 %v1175, %v1522
      %v1524 = vpop.f32.mrf.mxu0
      %v1525 = vadd.f32 %v1177, %v1524
      %1526 = vmatmul.bf16.gmra.mxu0 %v844
      %v1527 = vpop.f32.mrf.mxu0
      %v1528 = vadd.f32 %v1180, %v1527
      %v1529 = vpop.f32.mrf.mxu0
      %v1530 = vadd.f32 %v1182, %v1529
      %1531 = vmatmul.bf16.gmra.mxu0 %v847
      %v1532 = vpop.f32.mrf.mxu0
      %v1533 = vadd.f32 %v1185, %v1532
      %v1534 = vpop.f32.mrf.mxu0
      %v1535 = vadd.f32 %v1187, %v1534
      %1536 = vmatmul.bf16.gmra.mxu0 %v850
      %v1537 = vpop.f32.mrf.mxu0
      %v1538 = vadd.f32 %v1190, %v1537
      %v1539 = vpop.f32.mrf.mxu0
      %v1540 = vadd.f32 %v1192, %v1539
      %1541 = vdwg.mxu0
      %s1542 = scalar_lea.vmem %s1, 12
      %v1543 = vld [vmem:[%s1542] sm:$0x3]
      %v1548 = vunpack.c.l.b16 %v337
      %v1549 = vunpack.c.l.b16 %v338
      %v1550 = vunpack.c.l.b16 %v339
      %v1551 = vunpack.c.l.b16 %v340
      %v1552 = vpack.c.b16 %v1549, %v1548
      %v1553 = vpack.c.b16 %v1551, %v1550
      %v1555 = vsel %vm665, %v1552, 0
      %v1558 = vsel %vm665, %v1553, 0
      %v1561 = vand.u32 %v1543, %v861
      %1563 = vmatpush.bf16.msra.mxu0 0
      %1564 = vmatpush.bf16.msra.mxu0 0
      %1565 = vmatpush.bf16.msra.mxu0 0
      %1566 = vmatpush.bf16.msra.mxu0 0
      %1567 = vmatpush.bf16.msra.mxu0 0
      %1568 = vmatpush.bf16.msra.mxu0 0
      %1569 = vmatpush.bf16.msra.mxu0 0
      %1570 = vmatpush.bf16.msra.mxu0 %v1561
      %1571 = vmatmul.bf16.gmra.mxu0 %v673
      %v1572 = vpop.f32.mrf.mxu0
      %v1573 = vadd.f32 0.0, %v1572
      %v1574 = vpop.f32.mrf.mxu0
      %v1575 = vadd.f32 0.0, %v1574
      %1576 = vmatmul.bf16.gmra.mxu0 %v676
      %v1577 = vpop.f32.mrf.mxu0
      %v1578 = vadd.f32 0.0, %v1577
      %v1579 = vpop.f32.mrf.mxu0
      %v1580 = vadd.f32 0.0, %v1579
      %1581 = vmatmul.bf16.gmra.mxu0 %v679
      %v1582 = vpop.f32.mrf.mxu0
      %v1583 = vadd.f32 0.0, %v1582
      %v1584 = vpop.f32.mrf.mxu0
      %v1585 = vadd.f32 0.0, %v1584
      %1586 = vmatmul.bf16.gmra.mxu0 %v682
      %v1587 = vpop.f32.mrf.mxu0
      %v1588 = vadd.f32 0.0, %v1587
      %v1589 = vpop.f32.mrf.mxu0
      %v1590 = vadd.f32 0.0, %v1589
      %1591 = vmatmul.bf16.gmra.mxu0 %v685
      %v1592 = vpop.f32.mrf.mxu0
      %v1593 = vadd.f32 0.0, %v1592
      %v1594 = vpop.f32.mrf.mxu0
      %v1595 = vadd.f32 0.0, %v1594
      %1596 = vmatmul.bf16.gmra.mxu0 %v688
      %v1597 = vpop.f32.mrf.mxu0
      %v1598 = vadd.f32 0.0, %v1597
      %v1599 = vpop.f32.mrf.mxu0
      %v1600 = vadd.f32 0.0, %v1599
      %1601 = vmatmul.bf16.gmra.mxu0 %v691
      %v1602 = vpop.f32.mrf.mxu0
      %v1603 = vadd.f32 0.0, %v1602
      %v1604 = vpop.f32.mrf.mxu0
      %v1605 = vadd.f32 0.0, %v1604
      %1606 = vmatmul.bf16.gmra.mxu0 %v694
      %v1607 = vpop.f32.mrf.mxu0
      %v1608 = vadd.f32 0.0, %v1607
      %v1609 = vpop.f32.mrf.mxu0
      %v1610 = vadd.f32 0.0, %v1609
      %1611 = vmatmul.bf16.gmra.mxu0 %v697
      %v1612 = vpop.f32.mrf.mxu0
      %v1613 = vadd.f32 0.0, %v1612
      %v1614 = vpop.f32.mrf.mxu0
      %v1615 = vadd.f32 0.0, %v1614
      %1616 = vmatmul.bf16.gmra.mxu0 %v700
      %v1617 = vpop.f32.mrf.mxu0
      %v1618 = vadd.f32 0.0, %v1617
      %v1619 = vpop.f32.mrf.mxu0
      %v1620 = vadd.f32 0.0, %v1619
      %1621 = vmatmul.bf16.gmra.mxu0 %v703
      %v1622 = vpop.f32.mrf.mxu0
      %v1623 = vadd.f32 0.0, %v1622
      %v1624 = vpop.f32.mrf.mxu0
      %v1625 = vadd.f32 0.0, %v1624
      %1626 = vmatmul.bf16.gmra.mxu0 %v706
      %v1627 = vpop.f32.mrf.mxu0
      %v1628 = vadd.f32 0.0, %v1627
      %v1629 = vpop.f32.mrf.mxu0
      %v1630 = vadd.f32 0.0, %v1629
      %1631 = vmatmul.bf16.gmra.mxu0 %v709
      %v1632 = vpop.f32.mrf.mxu0
      %v1633 = vadd.f32 0.0, %v1632
      %v1634 = vpop.f32.mrf.mxu0
      %v1635 = vadd.f32 0.0, %v1634
      %1636 = vmatmul.bf16.gmra.mxu0 %v712
      %v1637 = vpop.f32.mrf.mxu0
      %v1638 = vadd.f32 0.0, %v1637
      %v1639 = vpop.f32.mrf.mxu0
      %v1640 = vadd.f32 0.0, %v1639
      %1641 = vmatmul.bf16.gmra.mxu0 %v715
      %v1642 = vpop.f32.mrf.mxu0
      %v1643 = vadd.f32 0.0, %v1642
      %v1644 = vpop.f32.mrf.mxu0
      %v1645 = vadd.f32 0.0, %v1644
      %1646 = vmatmul.bf16.gmra.mxu0 %v718
      %v1647 = vpop.f32.mrf.mxu0
      %v1648 = vadd.f32 0.0, %v1647
      %v1649 = vpop.f32.mrf.mxu0
      %v1650 = vadd.f32 0.0, %v1649
      %1651 = vmatmul.bf16.gmra.mxu0 %v721
      %v1652 = vpop.f32.mrf.mxu0
      %v1653 = vadd.f32 0.0, %v1652
      %v1654 = vpop.f32.mrf.mxu0
      %v1655 = vadd.f32 0.0, %v1654
      %1656 = vmatmul.bf16.gmra.mxu0 %v724
      %v1657 = vpop.f32.mrf.mxu0
      %v1658 = vadd.f32 0.0, %v1657
      %v1659 = vpop.f32.mrf.mxu0
      %v1660 = vadd.f32 0.0, %v1659
      %1661 = vmatmul.bf16.gmra.mxu0 %v727
      %v1662 = vpop.f32.mrf.mxu0
      %v1663 = vadd.f32 0.0, %v1662
      %v1664 = vpop.f32.mrf.mxu0
      %v1665 = vadd.f32 0.0, %v1664
      %1666 = vmatmul.bf16.gmra.mxu0 %v730
      %v1667 = vpop.f32.mrf.mxu0
      %v1668 = vadd.f32 0.0, %v1667
      %v1669 = vpop.f32.mrf.mxu0
      %v1670 = vadd.f32 0.0, %v1669
      %1671 = vmatmul.bf16.gmra.mxu0 %v733
      %v1672 = vpop.f32.mrf.mxu0
      %v1673 = vadd.f32 0.0, %v1672
      %v1674 = vpop.f32.mrf.mxu0
      %v1675 = vadd.f32 0.0, %v1674
      %1676 = vmatmul.bf16.gmra.mxu0 %v736
      %v1677 = vpop.f32.mrf.mxu0
      %v1678 = vadd.f32 0.0, %v1677
      %v1679 = vpop.f32.mrf.mxu0
      %v1680 = vadd.f32 0.0, %v1679
      %1681 = vmatmul.bf16.gmra.mxu0 %v739
      %v1682 = vpop.f32.mrf.mxu0
      %v1683 = vadd.f32 0.0, %v1682
      %v1684 = vpop.f32.mrf.mxu0
      %v1685 = vadd.f32 0.0, %v1684
      %1686 = vmatmul.bf16.gmra.mxu0 %v742
      %v1687 = vpop.f32.mrf.mxu0
      %v1688 = vadd.f32 0.0, %v1687
      %v1689 = vpop.f32.mrf.mxu0
      %v1690 = vadd.f32 0.0, %v1689
      %1691 = vmatmul.bf16.gmra.mxu0 %v745
      %v1692 = vpop.f32.mrf.mxu0
      %v1693 = vadd.f32 0.0, %v1692
      %v1694 = vpop.f32.mrf.mxu0
      %v1695 = vadd.f32 0.0, %v1694
      %1696 = vmatmul.bf16.gmra.mxu0 %v748
      %v1697 = vpop.f32.mrf.mxu0
      %v1698 = vadd.f32 0.0, %v1697
      %v1699 = vpop.f32.mrf.mxu0
      %v1700 = vadd.f32 0.0, %v1699
      %1701 = vmatmul.bf16.gmra.mxu0 %v751
      %v1702 = vpop.f32.mrf.mxu0
      %v1703 = vadd.f32 0.0, %v1702
      %v1704 = vpop.f32.mrf.mxu0
      %v1705 = vadd.f32 0.0, %v1704
      %1706 = vmatmul.bf16.gmra.mxu0 %v754
      %v1707 = vpop.f32.mrf.mxu0
      %v1708 = vadd.f32 0.0, %v1707
      %v1709 = vpop.f32.mrf.mxu0
      %v1710 = vadd.f32 0.0, %v1709
      %1711 = vmatmul.bf16.gmra.mxu0 %v757
      %v1712 = vpop.f32.mrf.mxu0
      %v1713 = vadd.f32 0.0, %v1712
      %v1714 = vpop.f32.mrf.mxu0
      %v1715 = vadd.f32 0.0, %v1714
      %1716 = vmatmul.bf16.gmra.mxu0 %v760
      %v1717 = vpop.f32.mrf.mxu0
      %v1718 = vadd.f32 0.0, %v1717
      %v1719 = vpop.f32.mrf.mxu0
      %v1720 = vadd.f32 0.0, %v1719
      %1721 = vmatmul.bf16.gmra.mxu0 %v763
      %v1722 = vpop.f32.mrf.mxu0
      %v1723 = vadd.f32 0.0, %v1722
      %v1724 = vpop.f32.mrf.mxu0
      %v1725 = vadd.f32 0.0, %v1724
      %1726 = vmatmul.bf16.gmra.mxu0 %v766
      %v1727 = vpop.f32.mrf.mxu0
      %v1728 = vadd.f32 0.0, %v1727
      %v1729 = vpop.f32.mrf.mxu0
      %v1730 = vadd.f32 0.0, %v1729
      %1731 = vmatmul.bf16.gmra.mxu0 %v769
      %v1732 = vpop.f32.mrf.mxu0
      %v1733 = vadd.f32 0.0, %v1732
      %v1734 = vpop.f32.mrf.mxu0
      %v1735 = vadd.f32 0.0, %v1734
      %1736 = vmatmul.bf16.gmra.mxu0 %v772
      %v1737 = vpop.f32.mrf.mxu0
      %v1738 = vadd.f32 0.0, %v1737
      %v1739 = vpop.f32.mrf.mxu0
      %v1740 = vadd.f32 0.0, %v1739
      %1741 = vmatmul.bf16.gmra.mxu0 %v775
      %v1742 = vpop.f32.mrf.mxu0
      %v1743 = vadd.f32 0.0, %v1742
      %v1744 = vpop.f32.mrf.mxu0
      %v1745 = vadd.f32 0.0, %v1744
      %1746 = vmatmul.bf16.gmra.mxu0 %v778
      %v1747 = vpop.f32.mrf.mxu0
      %v1748 = vadd.f32 0.0, %v1747
      %v1749 = vpop.f32.mrf.mxu0
      %v1750 = vadd.f32 0.0, %v1749
      %1751 = vmatmul.bf16.gmra.mxu0 %v781
      %v1752 = vpop.f32.mrf.mxu0
      %v1753 = vadd.f32 0.0, %v1752
      %v1754 = vpop.f32.mrf.mxu0
      %v1755 = vadd.f32 0.0, %v1754
      %1756 = vmatmul.bf16.gmra.mxu0 %v784
      %v1757 = vpop.f32.mrf.mxu0
      %v1758 = vadd.f32 0.0, %v1757
      %v1759 = vpop.f32.mrf.mxu0
      %v1760 = vadd.f32 0.0, %v1759
      %1761 = vmatmul.bf16.gmra.mxu0 %v787
      %v1762 = vpop.f32.mrf.mxu0
      %v1763 = vadd.f32 0.0, %v1762
      %v1764 = vpop.f32.mrf.mxu0
      %v1765 = vadd.f32 0.0, %v1764
      %1766 = vmatmul.bf16.gmra.mxu0 %v790
      %v1767 = vpop.f32.mrf.mxu0
      %v1768 = vadd.f32 0.0, %v1767
      %v1769 = vpop.f32.mrf.mxu0
      %v1770 = vadd.f32 0.0, %v1769
      %1771 = vmatmul.bf16.gmra.mxu0 %v793
      %v1772 = vpop.f32.mrf.mxu0
      %v1773 = vadd.f32 0.0, %v1772
      %v1774 = vpop.f32.mrf.mxu0
      %v1775 = vadd.f32 0.0, %v1774
      %1776 = vmatmul.bf16.gmra.mxu0 %v796
      %v1777 = vpop.f32.mrf.mxu0
      %v1778 = vadd.f32 0.0, %v1777
      %v1779 = vpop.f32.mrf.mxu0
      %v1780 = vadd.f32 0.0, %v1779
      %1781 = vmatmul.bf16.gmra.mxu0 %v799
      %v1782 = vpop.f32.mrf.mxu0
      %v1783 = vadd.f32 0.0, %v1782
      %v1784 = vpop.f32.mrf.mxu0
      %v1785 = vadd.f32 0.0, %v1784
      %1786 = vmatmul.bf16.gmra.mxu0 %v802
      %v1787 = vpop.f32.mrf.mxu0
      %v1788 = vadd.f32 0.0, %v1787
      %v1789 = vpop.f32.mrf.mxu0
      %v1790 = vadd.f32 0.0, %v1789
      %1791 = vmatmul.bf16.gmra.mxu0 %v805
      %v1792 = vpop.f32.mrf.mxu0
      %v1793 = vadd.f32 0.0, %v1792
      %v1794 = vpop.f32.mrf.mxu0
      %v1795 = vadd.f32 0.0, %v1794
      %1796 = vmatmul.bf16.gmra.mxu0 %v808
      %v1797 = vpop.f32.mrf.mxu0
      %v1798 = vadd.f32 0.0, %v1797
      %v1799 = vpop.f32.mrf.mxu0
      %v1800 = vadd.f32 0.0, %v1799
      %1801 = vmatmul.bf16.gmra.mxu0 %v811
      %v1802 = vpop.f32.mrf.mxu0
      %v1803 = vadd.f32 0.0, %v1802
      %v1804 = vpop.f32.mrf.mxu0
      %v1805 = vadd.f32 0.0, %v1804
      %1806 = vmatmul.bf16.gmra.mxu0 %v814
      %v1807 = vpop.f32.mrf.mxu0
      %v1808 = vadd.f32 0.0, %v1807
      %v1809 = vpop.f32.mrf.mxu0
      %v1810 = vadd.f32 0.0, %v1809
      %1811 = vmatmul.bf16.gmra.mxu0 %v817
      %v1812 = vpop.f32.mrf.mxu0
      %v1813 = vadd.f32 0.0, %v1812
      %v1814 = vpop.f32.mrf.mxu0
      %v1815 = vadd.f32 0.0, %v1814
      %1816 = vmatmul.bf16.gmra.mxu0 %v820
      %v1817 = vpop.f32.mrf.mxu0
      %v1818 = vadd.f32 0.0, %v1817
      %v1819 = vpop.f32.mrf.mxu0
      %v1820 = vadd.f32 0.0, %v1819
      %1821 = vmatmul.bf16.gmra.mxu0 %v823
      %v1822 = vpop.f32.mrf.mxu0
      %v1823 = vadd.f32 0.0, %v1822
      %v1824 = vpop.f32.mrf.mxu0
      %v1825 = vadd.f32 0.0, %v1824
      %1826 = vmatmul.bf16.gmra.mxu0 %v826
      %v1827 = vpop.f32.mrf.mxu0
      %v1828 = vadd.f32 0.0, %v1827
      %v1829 = vpop.f32.mrf.mxu0
      %v1830 = vadd.f32 0.0, %v1829
      %1831 = vmatmul.bf16.gmra.mxu0 %v829
      %v1832 = vpop.f32.mrf.mxu0
      %v1833 = vadd.f32 0.0, %v1832
      %v1834 = vpop.f32.mrf.mxu0
      %v1835 = vadd.f32 0.0, %v1834
      %1836 = vmatmul.bf16.gmra.mxu0 %v832
      %v1837 = vpop.f32.mrf.mxu0
      %v1838 = vadd.f32 0.0, %v1837
      %v1839 = vpop.f32.mrf.mxu0
      %v1840 = vadd.f32 0.0, %v1839
      %1841 = vmatmul.bf16.gmra.mxu0 %v835
      %v1842 = vpop.f32.mrf.mxu0
      %v1843 = vadd.f32 0.0, %v1842
      %v1844 = vpop.f32.mrf.mxu0
      %v1845 = vadd.f32 0.0, %v1844
      %1846 = vmatmul.bf16.gmra.mxu0 %v838
      %v1847 = vpop.f32.mrf.mxu0
      %v1848 = vadd.f32 0.0, %v1847
      %v1849 = vpop.f32.mrf.mxu0
      %v1850 = vadd.f32 0.0, %v1849
      %1851 = vmatmul.bf16.gmra.mxu0 %v841
      %v1852 = vpop.f32.mrf.mxu0
      %v1853 = vadd.f32 0.0, %v1852
      %v1854 = vpop.f32.mrf.mxu0
      %v1855 = vadd.f32 0.0, %v1854
      %1856 = vmatmul.bf16.gmra.mxu0 %v844
      %v1857 = vpop.f32.mrf.mxu0
      %v1858 = vadd.f32 0.0, %v1857
      %v1859 = vpop.f32.mrf.mxu0
      %v1860 = vadd.f32 0.0, %v1859
      %1861 = vmatmul.bf16.gmra.mxu0 %v847
      %v1862 = vpop.f32.mrf.mxu0
      %v1863 = vadd.f32 0.0, %v1862
      %v1864 = vpop.f32.mrf.mxu0
      %v1865 = vadd.f32 0.0, %v1864
      %1866 = vmatmul.bf16.gmra.mxu0 %v850
      %v1867 = vpop.f32.mrf.mxu0
      %v1868 = vadd.f32 0.0, %v1867
      %v1869 = vpop.f32.mrf.mxu0
      %v1870 = vadd.f32 0.0, %v1869
      %1871 = vmatmul.bf16.gmra.mxu0 %v853
      %v1872 = vpop.f32.mrf.mxu0
      %v1873 = vadd.f32 0.0, %v1872
      %v1874 = vpop.f32.mrf.mxu0
      %v1875 = vadd.f32 0.0, %v1874
      %1876 = vmatmul.bf16.gmra.mxu0 %v856
      %v1877 = vpop.f32.mrf.mxu0
      %v1878 = vadd.f32 0.0, %v1877
      %v1879 = vpop.f32.mrf.mxu0
      %v1880 = vadd.f32 0.0, %v1879
      %1881 = vmatmul.bf16.gmra.mxu0 %v1555
      %v1882 = vpop.f32.mrf.mxu0
      %v1883 = vadd.f32 0.0, %v1882
      %v1884 = vpop.f32.mrf.mxu0
      %v1885 = vadd.f32 0.0, %v1884
      %1886 = vmatmul.bf16.gmra.mxu0 %v1558
      %v1887 = vpop.f32.mrf.mxu0
      %v1888 = vadd.f32 0.0, %v1887
      %v1889 = vpop.f32.mrf.mxu0
      %v1890 = vadd.f32 0.0, %v1889
      %1891 = vdwg.mxu0
      %v1892 = vadd.f32 %v1223, %v1573
      %v1893 = vadd.f32 %v1225, %v1575
      %v1894 = vadd.f32 %v1228, %v1578
      %v1895 = vadd.f32 %v1230, %v1580
      %v1896 = vadd.f32 %v1233, %v1583
      %v1897 = vadd.f32 %v1235, %v1585
      %v1898 = vadd.f32 %v1238, %v1588
      %v1899 = vadd.f32 %v1240, %v1590
      %v1900 = vadd.f32 %v1243, %v1593
      %v1901 = vadd.f32 %v1245, %v1595
      %v1902 = vadd.f32 %v1248, %v1598
      %v1903 = vadd.f32 %v1250, %v1600
      %v1904 = vadd.f32 %v1253, %v1603
      %v1905 = vadd.f32 %v1255, %v1605
      %v1906 = vadd.f32 %v1258, %v1608
      %v1907 = vadd.f32 %v1260, %v1610
      %v1908 = vadd.f32 %v1263, %v1613
      %v1909 = vadd.f32 %v1265, %v1615
      %v1910 = vadd.f32 %v1268, %v1618
      %v1911 = vadd.f32 %v1270, %v1620
      %v1912 = vadd.f32 %v1273, %v1623
      %v1913 = vadd.f32 %v1275, %v1625
      %v1914 = vadd.f32 %v1278, %v1628
      %v1915 = vadd.f32 %v1280, %v1630
      %v1916 = vadd.f32 %v1283, %v1633
      %v1917 = vadd.f32 %v1285, %v1635
      %v1918 = vadd.f32 %v1288, %v1638
      %v1919 = vadd.f32 %v1290, %v1640
      %v1920 = vadd.f32 %v1293, %v1643
      %v1921 = vadd.f32 %v1295, %v1645
      %v1922 = vadd.f32 %v1298, %v1648
      %v1923 = vadd.f32 %v1300, %v1650
      %v1924 = vadd.f32 %v1303, %v1653
      %v1925 = vadd.f32 %v1305, %v1655
      %v1926 = vadd.f32 %v1308, %v1658
      %v1927 = vadd.f32 %v1310, %v1660
      %v1928 = vadd.f32 %v1313, %v1663
      %v1929 = vadd.f32 %v1315, %v1665
      %v1930 = vadd.f32 %v1318, %v1668
      %v1931 = vadd.f32 %v1320, %v1670
      %v1932 = vadd.f32 %v1323, %v1673
      %v1933 = vadd.f32 %v1325, %v1675
      %v1934 = vadd.f32 %v1328, %v1678
      %v1935 = vadd.f32 %v1330, %v1680
      %v1936 = vadd.f32 %v1333, %v1683
      %v1937 = vadd.f32 %v1335, %v1685
      %v1938 = vadd.f32 %v1338, %v1688
      %v1939 = vadd.f32 %v1340, %v1690
      %v1940 = vadd.f32 %v1343, %v1693
      %v1941 = vadd.f32 %v1345, %v1695
      %v1942 = vadd.f32 %v1348, %v1698
      %v1943 = vadd.f32 %v1350, %v1700
      %v1944 = vadd.f32 %v1353, %v1703
      %v1945 = vadd.f32 %v1355, %v1705
      %v1946 = vadd.f32 %v1358, %v1708
      %v1947 = vadd.f32 %v1360, %v1710
      %v1948 = vadd.f32 %v1363, %v1713
      %v1949 = vadd.f32 %v1365, %v1715
      %v1950 = vadd.f32 %v1368, %v1718
      %v1951 = vadd.f32 %v1370, %v1720
      %v1952 = vadd.f32 %v1373, %v1723
      %v1953 = vadd.f32 %v1375, %v1725
      %v1954 = vadd.f32 %v1378, %v1728
      %v1955 = vadd.f32 %v1380, %v1730
      %v1956 = vadd.f32 %v1383, %v1733
      %v1957 = vadd.f32 %v1385, %v1735
      %v1958 = vadd.f32 %v1388, %v1738
      %v1959 = vadd.f32 %v1390, %v1740
      %v1960 = vadd.f32 %v1393, %v1743
      %v1961 = vadd.f32 %v1395, %v1745
      %v1962 = vadd.f32 %v1398, %v1748
      %v1963 = vadd.f32 %v1400, %v1750
      %v1964 = vadd.f32 %v1403, %v1753
      %v1965 = vadd.f32 %v1405, %v1755
      %v1966 = vadd.f32 %v1408, %v1758
      %v1967 = vadd.f32 %v1410, %v1760
      %v1968 = vadd.f32 %v1413, %v1763
      %v1969 = vadd.f32 %v1415, %v1765
      %v1970 = vadd.f32 %v1418, %v1768
      %v1971 = vadd.f32 %v1420, %v1770
      %v1972 = vadd.f32 %v1423, %v1773
      %v1973 = vadd.f32 %v1425, %v1775
      %v1974 = vadd.f32 %v1428, %v1778
      %v1975 = vadd.f32 %v1430, %v1780
      %v1976 = vadd.f32 %v1433, %v1783
      %v1977 = vadd.f32 %v1435, %v1785
      %v1978 = vadd.f32 %v1438, %v1788
      %v1979 = vadd.f32 %v1440, %v1790
      %v1980 = vadd.f32 %v1443, %v1793
      %v1981 = vadd.f32 %v1445, %v1795
      %v1982 = vadd.f32 %v1448, %v1798
      %v1983 = vadd.f32 %v1450, %v1800
      %v1984 = vadd.f32 %v1453, %v1803
      %v1985 = vadd.f32 %v1455, %v1805
      %v1986 = vadd.f32 %v1458, %v1808
      %v1987 = vadd.f32 %v1460, %v1810
      %v1988 = vadd.f32 %v1463, %v1813
      %v1989 = vadd.f32 %v1465, %v1815
      %v1990 = vadd.f32 %v1468, %v1818
      %v1991 = vadd.f32 %v1470, %v1820
      %v1992 = vadd.f32 %v1473, %v1823
      %v1993 = vadd.f32 %v1475, %v1825
      %v1994 = vadd.f32 %v1478, %v1828
      %v1995 = vadd.f32 %v1480, %v1830
      %v1996 = vadd.f32 %v1483, %v1833
      %v1997 = vadd.f32 %v1485, %v1835
      %v1998 = vadd.f32 %v1488, %v1838
      %v1999 = vadd.f32 %v1490, %v1840
      %v2000 = vadd.f32 %v1493, %v1843
      %v2001 = vadd.f32 %v1495, %v1845
      %v2002 = vadd.f32 %v1498, %v1848
      %v2003 = vadd.f32 %v1500, %v1850
      %v2004 = vadd.f32 %v1503, %v1853
      %v2005 = vadd.f32 %v1505, %v1855
      %v2006 = vadd.f32 %v1508, %v1858
      %v2007 = vadd.f32 %v1510, %v1860
      %v2008 = vadd.f32 %v1513, %v1863
      %v2009 = vadd.f32 %v1515, %v1865
      %v2010 = vadd.f32 %v1518, %v1868
      %v2011 = vadd.f32 %v1520, %v1870
      %v2012 = vadd.f32 %v1523, %v1873
      %v2013 = vadd.f32 %v1525, %v1875
      %v2014 = vadd.f32 %v1528, %v1878
      %v2015 = vadd.f32 %v1530, %v1880
      %v2016 = vadd.f32 %v1533, %v1883
      %v2017 = vadd.f32 %v1535, %v1885
      %v2018 = vadd.f32 %v1538, %v1888
      %v2019 = vadd.f32 %v1540, %v1890
      %vm2020 = vsmask.f32 3328
      %vm2021 = vsmask.f32 7440
      %vm2022 = vmor %vm2020, %vm2021
      %v2024 = vshrl.u32 %v172, 16
      %v2026 = vrot.slane %v2024, 4
      %v2027 = vshll.u32 %v172, 16
      %v2029 = vrot.slane %v2027, 5
      %v2030 = vor.u32 %v2026, %v2029
      %v2031 = vrot.slane %v2030, 4
      %v2033 = vshll.u32 %v173, 16
      %v2035 = vrot.slane %v2033, 5
      %v2036 = vsel %vm2022, %v2031, %v2035
      %v2037 = vshrl.u32 %v173, 16
      %v2039 = vrot.slane %v2037, 4
      %v2040 = vor.u32 %v2039, %v2035
      %v2041 = vrot.slane %v2040, 4
      %v2043 = vshll.u32 %v174, 16
      %v2045 = vrot.slane %v2043, 5
      %v2046 = vsel %vm2022, %v2041, %v2045
      %v2047 = vshrl.u32 %v174, 16
      %v2049 = vrot.slane %v2047, 4
      %v2050 = vor.u32 %v2049, %v2045
      %v2051 = vrot.slane %v2050, 4
      %v2053 = vshll.u32 %v175, 16
      %v2055 = vrot.slane %v2053, 5
      %v2056 = vsel %vm2022, %v2051, %v2055
      %v2057 = vshrl.u32 %v175, 16
      %v2059 = vrot.slane %v2057, 4
      %v2060 = vor.u32 %v2059, %v2055
      %v2061 = vrot.slane %v2060, 4
      %v2063 = vshll.u32 %v176, 16
      %v2065 = vrot.slane %v2063, 5
      %v2066 = vsel %vm2022, %v2061, %v2065
      %v2068 = vshrl.u32 %v177, 16
      %v2070 = vrot.slane %v2068, 4
      %v2071 = vshll.u32 %v177, 16
      %v2073 = vrot.slane %v2071, 5
      %v2074 = vor.u32 %v2070, %v2073
      %v2075 = vrot.slane %v2074, 4
      %v2077 = vshll.u32 %v178, 16
      %v2079 = vrot.slane %v2077, 5
      %v2080 = vsel %vm2022, %v2075, %v2079
      %v2081 = vshrl.u32 %v178, 16
      %v2083 = vrot.slane %v2081, 4
      %v2084 = vor.u32 %v2083, %v2079
      %v2085 = vrot.slane %v2084, 4
      %v2087 = vshll.u32 %v179, 16
      %v2089 = vrot.slane %v2087, 5
      %v2090 = vsel %vm2022, %v2085, %v2089
      %v2091 = vshrl.u32 %v179, 16
      %v2093 = vrot.slane %v2091, 4
      %v2094 = vor.u32 %v2093, %v2089
      %v2095 = vrot.slane %v2094, 4
      %v2097 = vshll.u32 %v180, 16
      %v2099 = vrot.slane %v2097, 5
      %v2100 = vsel %vm2022, %v2095, %v2099
      %v2101 = vshrl.u32 %v180, 16
      %v2103 = vrot.slane %v2101, 4
      %v2104 = vor.u32 %v2103, %v2099
      %v2105 = vrot.slane %v2104, 4
      %v2107 = vshll.u32 %v181, 16
      %v2109 = vrot.slane %v2107, 5
      %v2110 = vsel %vm2022, %v2105, %v2109
      %v2112 = vshrl.u32 %v182, 16
      %v2114 = vrot.slane %v2112, 4
      %v2115 = vshll.u32 %v182, 16
      %v2117 = vrot.slane %v2115, 5
      %v2118 = vor.u32 %v2114, %v2117
      %v2119 = vrot.slane %v2118, 4
      %v2121 = vshll.u32 %v183, 16
      %v2123 = vrot.slane %v2121, 5
      %v2124 = vsel %vm2022, %v2119, %v2123
      %v2125 = vshrl.u32 %v183, 16
      %v2127 = vrot.slane %v2125, 4
      %v2128 = vor.u32 %v2127, %v2123
      %v2129 = vrot.slane %v2128, 4
      %v2131 = vshll.u32 %v184, 16
      %v2133 = vrot.slane %v2131, 5
      %v2134 = vsel %vm2022, %v2129, %v2133
      %v2135 = vshrl.u32 %v184, 16
      %v2137 = vrot.slane %v2135, 4
      %v2138 = vor.u32 %v2137, %v2133
      %v2139 = vrot.slane %v2138, 4
      %v2141 = vshll.u32 %v185, 16
      %v2143 = vrot.slane %v2141, 5
      %v2144 = vsel %vm2022, %v2139, %v2143
      %v2145 = vshrl.u32 %v185, 16
      %v2147 = vrot.slane %v2145, 4
      %v2148 = vor.u32 %v2147, %v2143
      %v2149 = vrot.slane %v2148, 4
      %v2151 = vshll.u32 %v186, 16
      %v2153 = vrot.slane %v2151, 5
      %v2154 = vsel %vm2022, %v2149, %v2153
      %v2156 = vshrl.u32 %v187, 16
      %v2158 = vrot.slane %v2156, 4
      %v2159 = vshll.u32 %v187, 16
      %v2161 = vrot.slane %v2159, 5
      %v2162 = vor.u32 %v2158, %v2161
      %v2163 = vrot.slane %v2162, 4
      %v2165 = vshll.u32 %v188, 16
      %v2167 = vrot.slane %v2165, 5
      %v2168 = vsel %vm2022, %v2163, %v2167
      %v2169 = vshrl.u32 %v188, 16
      %v2171 = vrot.slane %v2169, 4
      %v2172 = vor.u32 %v2171, %v2167
      %v2173 = vrot.slane %v2172, 4
      %v2175 = vshll.u32 %v189, 16
      %v2177 = vrot.slane %v2175, 5
      %v2178 = vsel %vm2022, %v2173, %v2177
      %v2179 = vshrl.u32 %v189, 16
      %v2181 = vrot.slane %v2179, 4
      %v2182 = vor.u32 %v2181, %v2177
      %v2183 = vrot.slane %v2182, 4
      %v2185 = vshll.u32 %v190, 16
      %v2187 = vrot.slane %v2185, 5
      %v2188 = vsel %vm2022, %v2183, %v2187
      %v2189 = vshrl.u32 %v190, 16
      %v2191 = vrot.slane %v2189, 4
      %v2192 = vor.u32 %v2191, %v2187
      %v2193 = vrot.slane %v2192, 4
      %v2195 = vshll.u32 %v191, 16
      %v2197 = vrot.slane %v2195, 5
      %v2198 = vsel %vm2022, %v2193, %v2197
      %v2200 = vshrl.u32 %v192, 16
      %v2202 = vrot.slane %v2200, 4
      %v2203 = vshll.u32 %v192, 16
      %v2205 = vrot.slane %v2203, 5
      %v2206 = vor.u32 %v2202, %v2205
      %v2207 = vrot.slane %v2206, 4
      %v2209 = vshll.u32 %v193, 16
      %v2211 = vrot.slane %v2209, 5
      %v2212 = vsel %vm2022, %v2207, %v2211
      %v2213 = vshrl.u32 %v193, 16
      %v2215 = vrot.slane %v2213, 4
      %v2216 = vor.u32 %v2215, %v2211
      %v2217 = vrot.slane %v2216, 4
      %v2219 = vshll.u32 %v194, 16
      %v2221 = vrot.slane %v2219, 5
      %v2222 = vsel %vm2022, %v2217, %v2221
      %v2223 = vshrl.u32 %v194, 16
      %v2225 = vrot.slane %v2223, 4
      %v2226 = vor.u32 %v2225, %v2221
      %v2227 = vrot.slane %v2226, 4
      %v2229 = vshll.u32 %v195, 16
      %v2231 = vrot.slane %v2229, 5
      %v2232 = vsel %vm2022, %v2227, %v2231
      %v2233 = vshrl.u32 %v195, 16
      %v2235 = vrot.slane %v2233, 4
      %v2236 = vor.u32 %v2235, %v2231
      %v2237 = vrot.slane %v2236, 4
      %v2239 = vshll.u32 %v196, 16
      %v2241 = vrot.slane %v2239, 5
      %v2242 = vsel %vm2022, %v2237, %v2241
      %v2244 = vshrl.u32 %v197, 16
      %v2246 = vrot.slane %v2244, 4
      %v2247 = vshll.u32 %v197, 16
      %v2249 = vrot.slane %v2247, 5
      %v2250 = vor.u32 %v2246, %v2249
      %v2251 = vrot.slane %v2250, 4
      %v2253 = vshll.u32 %v198, 16
      %v2255 = vrot.slane %v2253, 5
      %v2256 = vsel %vm2022, %v2251, %v2255
      %v2257 = vshrl.u32 %v198, 16
      %v2259 = vrot.slane %v2257, 4
      %v2260 = vor.u32 %v2259, %v2255
      %v2261 = vrot.slane %v2260, 4
      %v2263 = vshll.u32 %v199, 16
      %v2265 = vrot.slane %v2263, 5
      %v2266 = vsel %vm2022, %v2261, %v2265
      %v2267 = vshrl.u32 %v199, 16
      %v2269 = vrot.slane %v2267, 4
      %v2270 = vor.u32 %v2269, %v2265
      %v2271 = vrot.slane %v2270, 4
      %v2273 = vshll.u32 %v200, 16
      %v2275 = vrot.slane %v2273, 5
      %v2276 = vsel %vm2022, %v2271, %v2275
      %v2277 = vshrl.u32 %v200, 16
      %v2279 = vrot.slane %v2277, 4
      %v2280 = vor.u32 %v2279, %v2275
      %v2281 = vrot.slane %v2280, 4
      %v2283 = vshll.u32 %v201, 16
      %v2285 = vrot.slane %v2283, 5
      %v2286 = vsel %vm2022, %v2281, %v2285
      %v2288 = vshrl.u32 %v202, 16
      %v2290 = vrot.slane %v2288, 4
      %v2291 = vshll.u32 %v202, 16
      %v2293 = vrot.slane %v2291, 5
      %v2294 = vor.u32 %v2290, %v2293
      %v2295 = vrot.slane %v2294, 4
      %v2297 = vshll.u32 %v203, 16
      %v2299 = vrot.slane %v2297, 5
      %v2300 = vsel %vm2022, %v2295, %v2299
      %v2301 = vshrl.u32 %v203, 16
      %v2303 = vrot.slane %v2301, 4
      %v2304 = vor.u32 %v2303, %v2299
      %v2305 = vrot.slane %v2304, 4
      %v2307 = vshll.u32 %v204, 16
      %v2309 = vrot.slane %v2307, 5
      %v2310 = vsel %vm2022, %v2305, %v2309
      %v2311 = vshrl.u32 %v204, 16
      %v2313 = vrot.slane %v2311, 4
      %v2314 = vor.u32 %v2313, %v2309
      %v2315 = vrot.slane %v2314, 4
      %v2317 = vshll.u32 %v205, 16
      %v2319 = vrot.slane %v2317, 5
      %v2320 = vsel %vm2022, %v2315, %v2319
      %v2321 = vshrl.u32 %v205, 16
      %v2323 = vrot.slane %v2321, 4
      %v2324 = vor.u32 %v2323, %v2319
      %v2325 = vrot.slane %v2324, 4
      %v2327 = vshll.u32 %v206, 16
      %v2329 = vrot.slane %v2327, 5
      %v2330 = vsel %vm2022, %v2325, %v2329
      %v2332 = vshrl.u32 %v207, 16
      %v2334 = vrot.slane %v2332, 4
      %v2335 = vshll.u32 %v207, 16
      %v2337 = vrot.slane %v2335, 5
      %v2338 = vor.u32 %v2334, %v2337
      %v2339 = vrot.slane %v2338, 4
      %v2341 = vshll.u32 %v208, 16
      %v2343 = vrot.slane %v2341, 5
      %v2344 = vsel %vm2022, %v2339, %v2343
      %v2345 = vshrl.u32 %v208, 16
      %v2347 = vrot.slane %v2345, 4
      %v2348 = vor.u32 %v2347, %v2343
      %v2349 = vrot.slane %v2348, 4
      %v2351 = vshll.u32 %v209, 16
      %v2353 = vrot.slane %v2351, 5
      %v2354 = vsel %vm2022, %v2349, %v2353
      %v2355 = vshrl.u32 %v209, 16
      %v2357 = vrot.slane %v2355, 4
      %v2358 = vor.u32 %v2357, %v2353
      %v2359 = vrot.slane %v2358, 4
      %v2361 = vshll.u32 %v210, 16
      %v2363 = vrot.slane %v2361, 5
      %v2364 = vsel %vm2022, %v2359, %v2363
      %v2365 = vshrl.u32 %v210, 16
      %v2367 = vrot.slane %v2365, 4
      %v2368 = vor.u32 %v2367, %v2363
      %v2369 = vrot.slane %v2368, 4
      %v2371 = vshll.u32 %v211, 16
      %v2373 = vrot.slane %v2371, 5
      %v2374 = vsel %vm2022, %v2369, %v2373
      %v2376 = vshrl.u32 %v212, 16
      %v2378 = vrot.slane %v2376, 4
      %v2379 = vshll.u32 %v212, 16
      %v2381 = vrot.slane %v2379, 5
      %v2382 = vor.u32 %v2378, %v2381
      %v2383 = vrot.slane %v2382, 4
      %v2385 = vshll.u32 %v213, 16
      %v2387 = vrot.slane %v2385, 5
      %v2388 = vsel %vm2022, %v2383, %v2387
      %v2389 = vshrl.u32 %v213, 16
      %v2391 = vrot.slane %v2389, 4
      %v2392 = vor.u32 %v2391, %v2387
      %v2393 = vrot.slane %v2392, 4
      %v2395 = vshll.u32 %v214, 16
      %v2397 = vrot.slane %v2395, 5
      %v2398 = vsel %vm2022, %v2393, %v2397
      %v2399 = vshrl.u32 %v214, 16
      %v2401 = vrot.slane %v2399, 4
      %v2402 = vor.u32 %v2401, %v2397
      %v2403 = vrot.slane %v2402, 4
      %v2405 = vshll.u32 %v215, 16
      %v2407 = vrot.slane %v2405, 5
      %v2408 = vsel %vm2022, %v2403, %v2407
      %v2409 = vshrl.u32 %v215, 16
      %v2411 = vrot.slane %v2409, 4
      %v2412 = vor.u32 %v2411, %v2407
      %v2413 = vrot.slane %v2412, 4
      %v2415 = vshll.u32 %v216, 16
      %v2417 = vrot.slane %v2415, 5
      %v2418 = vsel %vm2022, %v2413, %v2417
      %v2420 = vshrl.u32 %v217, 16
      %v2422 = vrot.slane %v2420, 4
      %v2423 = vshll.u32 %v217, 16
      %v2425 = vrot.slane %v2423, 5
      %v2426 = vor.u32 %v2422, %v2425
      %v2427 = vrot.slane %v2426, 4
      %v2429 = vshll.u32 %v218, 16
      %v2431 = vrot.slane %v2429, 5
      %v2432 = vsel %vm2022, %v2427, %v2431
      %v2433 = vshrl.u32 %v218, 16
      %v2435 = vrot.slane %v2433, 4
      %v2436 = vor.u32 %v2435, %v2431
      %v2437 = vrot.slane %v2436, 4
      %v2439 = vshll.u32 %v219, 16
      %v2441 = vrot.slane %v2439, 5
      %v2442 = vsel %vm2022, %v2437, %v2441
      %v2443 = vshrl.u32 %v219, 16
      %v2445 = vrot.slane %v2443, 4
      %v2446 = vor.u32 %v2445, %v2441
      %v2447 = vrot.slane %v2446, 4
      %v2449 = vshll.u32 %v220, 16
      %v2451 = vrot.slane %v2449, 5
      %v2452 = vsel %vm2022, %v2447, %v2451
      %v2453 = vshrl.u32 %v220, 16
      %v2455 = vrot.slane %v2453, 4
      %v2456 = vor.u32 %v2455, %v2451
      %v2457 = vrot.slane %v2456, 4
      %v2459 = vshll.u32 %v221, 16
      %v2461 = vrot.slane %v2459, 5
      %v2462 = vsel %vm2022, %v2457, %v2461
      %v2464 = vshrl.u32 %v222, 16
      %v2466 = vrot.slane %v2464, 4
      %v2467 = vshll.u32 %v222, 16
      %v2469 = vrot.slane %v2467, 5
      %v2470 = vor.u32 %v2466, %v2469
      %v2471 = vrot.slane %v2470, 4
      %v2473 = vshll.u32 %v223, 16
      %v2475 = vrot.slane %v2473, 5
      %v2476 = vsel %vm2022, %v2471, %v2475
      %v2477 = vshrl.u32 %v223, 16
      %v2479 = vrot.slane %v2477, 4
      %v2480 = vor.u32 %v2479, %v2475
      %v2481 = vrot.slane %v2480, 4
      %v2483 = vshll.u32 %v224, 16
      %v2485 = vrot.slane %v2483, 5
      %v2486 = vsel %vm2022, %v2481, %v2485
      %v2487 = vshrl.u32 %v224, 16
      %v2489 = vrot.slane %v2487, 4
      %v2490 = vor.u32 %v2489, %v2485
      %v2491 = vrot.slane %v2490, 4
      %v2493 = vshll.u32 %v225, 16
      %v2495 = vrot.slane %v2493, 5
      %v2496 = vsel %vm2022, %v2491, %v2495
      %v2497 = vshrl.u32 %v225, 16
      %v2499 = vrot.slane %v2497, 4
      %v2500 = vor.u32 %v2499, %v2495
      %v2501 = vrot.slane %v2500, 4
      %v2503 = vshll.u32 %v226, 16
      %v2505 = vrot.slane %v2503, 5
      %v2506 = vsel %vm2022, %v2501, %v2505
      %v2508 = vshrl.u32 %v227, 16
      %v2510 = vrot.slane %v2508, 4
      %v2511 = vshll.u32 %v227, 16
      %v2513 = vrot.slane %v2511, 5
      %v2514 = vor.u32 %v2510, %v2513
      %v2515 = vrot.slane %v2514, 4
      %v2517 = vshll.u32 %v228, 16
      %v2519 = vrot.slane %v2517, 5
      %v2520 = vsel %vm2022, %v2515, %v2519
      %v2521 = vshrl.u32 %v228, 16
      %v2523 = vrot.slane %v2521, 4
      %v2524 = vor.u32 %v2523, %v2519
      %v2525 = vrot.slane %v2524, 4
      %v2527 = vshll.u32 %v229, 16
      %v2529 = vrot.slane %v2527, 5
      %v2530 = vsel %vm2022, %v2525, %v2529
      %v2531 = vshrl.u32 %v229, 16
      %v2533 = vrot.slane %v2531, 4
      %v2534 = vor.u32 %v2533, %v2529
      %v2535 = vrot.slane %v2534, 4
      %v2537 = vshll.u32 %v230, 16
      %v2539 = vrot.slane %v2537, 5
      %v2540 = vsel %vm2022, %v2535, %v2539
      %v2541 = vshrl.u32 %v230, 16
      %v2543 = vrot.slane %v2541, 4
      %v2544 = vor.u32 %v2543, %v2539
      %v2545 = vrot.slane %v2544, 4
      %v2547 = vshll.u32 %v231, 16
      %v2549 = vrot.slane %v2547, 5
      %v2550 = vsel %vm2022, %v2545, %v2549
      %v2552 = vshrl.u32 %v232, 16
      %v2554 = vrot.slane %v2552, 4
      %v2555 = vshll.u32 %v232, 16
      %v2557 = vrot.slane %v2555, 5
      %v2558 = vor.u32 %v2554, %v2557
      %v2559 = vrot.slane %v2558, 4
      %v2561 = vshll.u32 %v233, 16
      %v2563 = vrot.slane %v2561, 5
      %v2564 = vsel %vm2022, %v2559, %v2563
      %v2565 = vshrl.u32 %v233, 16
      %v2567 = vrot.slane %v2565, 4
      %v2568 = vor.u32 %v2567, %v2563
      %v2569 = vrot.slane %v2568, 4
      %v2571 = vshll.u32 %v234, 16
      %v2573 = vrot.slane %v2571, 5
      %v2574 = vsel %vm2022, %v2569, %v2573
      %v2575 = vshrl.u32 %v234, 16
      %v2577 = vrot.slane %v2575, 4
      %v2578 = vor.u32 %v2577, %v2573
      %v2579 = vrot.slane %v2578, 4
      %v2581 = vshll.u32 %v235, 16
      %v2583 = vrot.slane %v2581, 5
      %v2584 = vsel %vm2022, %v2579, %v2583
      %v2585 = vshrl.u32 %v235, 16
      %v2587 = vrot.slane %v2585, 4
      %v2588 = vor.u32 %v2587, %v2583
      %v2589 = vrot.slane %v2588, 4
      %v2591 = vshll.u32 %v236, 16
      %v2593 = vrot.slane %v2591, 5
      %v2594 = vsel %vm2022, %v2589, %v2593
      %v2596 = vshrl.u32 %v237, 16
      %v2598 = vrot.slane %v2596, 4
      %v2599 = vshll.u32 %v237, 16
      %v2601 = vrot.slane %v2599, 5
      %v2602 = vor.u32 %v2598, %v2601
      %v2603 = vrot.slane %v2602, 4
      %v2605 = vshll.u32 %v238, 16
      %v2607 = vrot.slane %v2605, 5
      %v2608 = vsel %vm2022, %v2603, %v2607
      %v2609 = vshrl.u32 %v238, 16
      %v2611 = vrot.slane %v2609, 4
      %v2612 = vor.u32 %v2611, %v2607
      %v2613 = vrot.slane %v2612, 4
      %v2615 = vshll.u32 %v239, 16
      %v2617 = vrot.slane %v2615, 5
      %v2618 = vsel %vm2022, %v2613, %v2617
      %v2619 = vshrl.u32 %v239, 16
      %v2621 = vrot.slane %v2619, 4
      %v2622 = vor.u32 %v2621, %v2617
      %v2623 = vrot.slane %v2622, 4
      %v2625 = vshll.u32 %v240, 16
      %v2627 = vrot.slane %v2625, 5
      %v2628 = vsel %vm2022, %v2623, %v2627
      %v2629 = vshrl.u32 %v240, 16
      %v2631 = vrot.slane %v2629, 4
      %v2632 = vor.u32 %v2631, %v2627
      %v2633 = vrot.slane %v2632, 4
      %v2635 = vshll.u32 %v241, 16
      %v2637 = vrot.slane %v2635, 5
      %v2638 = vsel %vm2022, %v2633, %v2637
      %v2640 = vshrl.u32 %v242, 16
      %v2642 = vrot.slane %v2640, 4
      %v2643 = vshll.u32 %v242, 16
      %v2645 = vrot.slane %v2643, 5
      %v2646 = vor.u32 %v2642, %v2645
      %v2647 = vrot.slane %v2646, 4
      %v2649 = vshll.u32 %v243, 16
      %v2651 = vrot.slane %v2649, 5
      %v2652 = vsel %vm2022, %v2647, %v2651
      %v2653 = vshrl.u32 %v243, 16
      %v2655 = vrot.slane %v2653, 4
      %v2656 = vor.u32 %v2655, %v2651
      %v2657 = vrot.slane %v2656, 4
      %v2659 = vshll.u32 %v244, 16
      %v2661 = vrot.slane %v2659, 5
      %v2662 = vsel %vm2022, %v2657, %v2661
      %v2663 = vshrl.u32 %v244, 16
      %v2665 = vrot.slane %v2663, 4
      %v2666 = vor.u32 %v2665, %v2661
      %v2667 = vrot.slane %v2666, 4
      %v2669 = vshll.u32 %v245, 16
      %v2671 = vrot.slane %v2669, 5
      %v2672 = vsel %vm2022, %v2667, %v2671
      %v2673 = vshrl.u32 %v245, 16
      %v2675 = vrot.slane %v2673, 4
      %v2676 = vor.u32 %v2675, %v2671
      %v2677 = vrot.slane %v2676, 4
      %v2679 = vshll.u32 %v246, 16
      %v2681 = vrot.slane %v2679, 5
      %v2682 = vsel %vm2022, %v2677, %v2681
      %v2684 = vshrl.u32 %v247, 16
      %v2686 = vrot.slane %v2684, 4
      %v2687 = vshll.u32 %v247, 16
      %v2689 = vrot.slane %v2687, 5
      %v2690 = vor.u32 %v2686, %v2689
      %v2691 = vrot.slane %v2690, 4
      %v2693 = vshll.u32 %v248, 16
      %v2695 = vrot.slane %v2693, 5
      %v2696 = vsel %vm2022, %v2691, %v2695
      %v2697 = vshrl.u32 %v248, 16
      %v2699 = vrot.slane %v2697, 4
      %v2700 = vor.u32 %v2699, %v2695
      %v2701 = vrot.slane %v2700, 4
      %v2703 = vshll.u32 %v249, 16
      %v2705 = vrot.slane %v2703, 5
      %v2706 = vsel %vm2022, %v2701, %v2705
      %v2707 = vshrl.u32 %v249, 16
      %v2709 = vrot.slane %v2707, 4
      %v2710 = vor.u32 %v2709, %v2705
      %v2711 = vrot.slane %v2710, 4
      %v2713 = vshll.u32 %v250, 16
      %v2715 = vrot.slane %v2713, 5
      %v2716 = vsel %vm2022, %v2711, %v2715
      %v2717 = vshrl.u32 %v250, 16
      %v2719 = vrot.slane %v2717, 4
      %v2720 = vor.u32 %v2719, %v2715
      %v2721 = vrot.slane %v2720, 4
      %v2723 = vshll.u32 %v251, 16
      %v2725 = vrot.slane %v2723, 5
      %v2726 = vsel %vm2022, %v2721, %v2725
      %v2728 = vshrl.u32 %v252, 16
      %v2730 = vrot.slane %v2728, 4
      %v2731 = vshll.u32 %v252, 16
      %v2733 = vrot.slane %v2731, 5
      %v2734 = vor.u32 %v2730, %v2733
      %v2735 = vrot.slane %v2734, 4
      %v2737 = vshll.u32 %v253, 16
      %v2739 = vrot.slane %v2737, 5
      %v2740 = vsel %vm2022, %v2735, %v2739
      %v2741 = vshrl.u32 %v253, 16
      %v2743 = vrot.slane %v2741, 4
      %v2744 = vor.u32 %v2743, %v2739
      %v2745 = vrot.slane %v2744, 4
      %v2747 = vshll.u32 %v254, 16
      %v2749 = vrot.slane %v2747, 5
      %v2750 = vsel %vm2022, %v2745, %v2749
      %v2751 = vshrl.u32 %v254, 16
      %v2753 = vrot.slane %v2751, 4
      %v2754 = vor.u32 %v2753, %v2749
      %v2755 = vrot.slane %v2754, 4
      %v2757 = vshll.u32 %v255, 16
      %v2759 = vrot.slane %v2757, 5
      %v2760 = vsel %vm2022, %v2755, %v2759
      %v2761 = vshrl.u32 %v255, 16
      %v2763 = vrot.slane %v2761, 4
      %v2764 = vor.u32 %v2763, %v2759
      %v2765 = vrot.slane %v2764, 4
      %v2767 = vshll.u32 %v256, 16
      %v2769 = vrot.slane %v2767, 5
      %v2770 = vsel %vm2022, %v2765, %v2769
      %v2772 = vshrl.u32 %v257, 16
      %v2774 = vrot.slane %v2772, 4
      %v2775 = vshll.u32 %v257, 16
      %v2777 = vrot.slane %v2775, 5
      %v2778 = vor.u32 %v2774, %v2777
      %v2779 = vrot.slane %v2778, 4
      %v2781 = vshll.u32 %v258, 16
      %v2783 = vrot.slane %v2781, 5
      %v2784 = vsel %vm2022, %v2779, %v2783
      %v2785 = vshrl.u32 %v258, 16
      %v2787 = vrot.slane %v2785, 4
      %v2788 = vor.u32 %v2787, %v2783
      %v2789 = vrot.slane %v2788, 4
      %v2791 = vshll.u32 %v259, 16
      %v2793 = vrot.slane %v2791, 5
      %v2794 = vsel %vm2022, %v2789, %v2793
      %v2795 = vshrl.u32 %v259, 16
      %v2797 = vrot.slane %v2795, 4
      %v2798 = vor.u32 %v2797, %v2793
      %v2799 = vrot.slane %v2798, 4
      %v2801 = vshll.u32 %v260, 16
      %v2803 = vrot.slane %v2801, 5
      %v2804 = vsel %vm2022, %v2799, %v2803
      %v2805 = vshrl.u32 %v260, 16
      %v2807 = vrot.slane %v2805, 4
      %v2808 = vor.u32 %v2807, %v2803
      %v2809 = vrot.slane %v2808, 4
      %v2811 = vshll.u32 %v261, 16
      %v2813 = vrot.slane %v2811, 5
      %v2814 = vsel %vm2022, %v2809, %v2813
      %v2816 = vshrl.u32 %v262, 16
      %v2818 = vrot.slane %v2816, 4
      %v2819 = vshll.u32 %v262, 16
      %v2821 = vrot.slane %v2819, 5
      %v2822 = vor.u32 %v2818, %v2821
      %v2823 = vrot.slane %v2822, 4
      %v2825 = vshll.u32 %v263, 16
      %v2827 = vrot.slane %v2825, 5
      %v2828 = vsel %vm2022, %v2823, %v2827
      %v2829 = vshrl.u32 %v263, 16
      %v2831 = vrot.slane %v2829, 4
      %v2832 = vor.u32 %v2831, %v2827
      %v2833 = vrot.slane %v2832, 4
      %v2835 = vshll.u32 %v264, 16
      %v2837 = vrot.slane %v2835, 5
      %v2838 = vsel %vm2022, %v2833, %v2837
      %v2839 = vshrl.u32 %v264, 16
      %v2841 = vrot.slane %v2839, 4
      %v2842 = vor.u32 %v2841, %v2837
      %v2843 = vrot.slane %v2842, 4
      %v2845 = vshll.u32 %v265, 16
      %v2847 = vrot.slane %v2845, 5
      %v2848 = vsel %vm2022, %v2843, %v2847
      %v2849 = vshrl.u32 %v265, 16
      %v2851 = vrot.slane %v2849, 4
      %v2852 = vor.u32 %v2851, %v2847
      %v2853 = vrot.slane %v2852, 4
      %v2855 = vshll.u32 %v266, 16
      %v2857 = vrot.slane %v2855, 5
      %v2858 = vsel %vm2022, %v2853, %v2857
      %v2860 = vshrl.u32 %v267, 16
      %v2862 = vrot.slane %v2860, 4
      %v2863 = vshll.u32 %v267, 16
      %v2865 = vrot.slane %v2863, 5
      %v2866 = vor.u32 %v2862, %v2865
      %v2867 = vrot.slane %v2866, 4
      %v2869 = vshll.u32 %v268, 16
      %v2871 = vrot.slane %v2869, 5
      %v2872 = vsel %vm2022, %v2867, %v2871
      %v2873 = vshrl.u32 %v268, 16
      %v2875 = vrot.slane %v2873, 4
      %v2876 = vor.u32 %v2875, %v2871
      %v2877 = vrot.slane %v2876, 4
      %v2879 = vshll.u32 %v269, 16
      %v2881 = vrot.slane %v2879, 5
      %v2882 = vsel %vm2022, %v2877, %v2881
      %v2883 = vshrl.u32 %v269, 16
      %v2885 = vrot.slane %v2883, 4
      %v2886 = vor.u32 %v2885, %v2881
      %v2887 = vrot.slane %v2886, 4
      %v2889 = vshll.u32 %v270, 16
      %v2891 = vrot.slane %v2889, 5
      %v2892 = vsel %vm2022, %v2887, %v2891
      %v2893 = vshrl.u32 %v270, 16
      %v2895 = vrot.slane %v2893, 4
      %v2896 = vor.u32 %v2895, %v2891
      %v2897 = vrot.slane %v2896, 4
      %v2899 = vshll.u32 %v271, 16
      %v2901 = vrot.slane %v2899, 5
      %v2902 = vsel %vm2022, %v2897, %v2901
      %v2904 = vshrl.u32 %v272, 16
      %v2906 = vrot.slane %v2904, 4
      %v2907 = vshll.u32 %v272, 16
      %v2909 = vrot.slane %v2907, 5
      %v2910 = vor.u32 %v2906, %v2909
      %v2911 = vrot.slane %v2910, 4
      %v2913 = vshll.u32 %v273, 16
      %v2915 = vrot.slane %v2913, 5
      %v2916 = vsel %vm2022, %v2911, %v2915
      %v2917 = vshrl.u32 %v273, 16
      %v2919 = vrot.slane %v2917, 4
      %v2920 = vor.u32 %v2919, %v2915
      %v2921 = vrot.slane %v2920, 4
      %v2923 = vshll.u32 %v274, 16
      %v2925 = vrot.slane %v2923, 5
      %v2926 = vsel %vm2022, %v2921, %v2925
      %v2927 = vshrl.u32 %v274, 16
      %v2929 = vrot.slane %v2927, 4
      %v2930 = vor.u32 %v2929, %v2925
      %v2931 = vrot.slane %v2930, 4
      %v2933 = vshll.u32 %v275, 16
      %v2935 = vrot.slane %v2933, 5
      %v2936 = vsel %vm2022, %v2931, %v2935
      %v2937 = vshrl.u32 %v275, 16
      %v2939 = vrot.slane %v2937, 4
      %v2940 = vor.u32 %v2939, %v2935
      %v2941 = vrot.slane %v2940, 4
      %v2943 = vshll.u32 %v276, 16
      %v2945 = vrot.slane %v2943, 5
      %v2946 = vsel %vm2022, %v2941, %v2945
      %v2948 = vshrl.u32 %v277, 16
      %v2950 = vrot.slane %v2948, 4
      %v2951 = vshll.u32 %v277, 16
      %v2953 = vrot.slane %v2951, 5
      %v2954 = vor.u32 %v2950, %v2953
      %v2955 = vrot.slane %v2954, 4
      %v2957 = vshll.u32 %v278, 16
      %v2959 = vrot.slane %v2957, 5
      %v2960 = vsel %vm2022, %v2955, %v2959
      %v2961 = vshrl.u32 %v278, 16
      %v2963 = vrot.slane %v2961, 4
      %v2964 = vor.u32 %v2963, %v2959
      %v2965 = vrot.slane %v2964, 4
      %v2967 = vshll.u32 %v279, 16
      %v2969 = vrot.slane %v2967, 5
      %v2970 = vsel %vm2022, %v2965, %v2969
      %v2971 = vshrl.u32 %v279, 16
      %v2973 = vrot.slane %v2971, 4
      %v2974 = vor.u32 %v2973, %v2969
      %v2975 = vrot.slane %v2974, 4
      %v2977 = vshll.u32 %v280, 16
      %v2979 = vrot.slane %v2977, 5
      %v2980 = vsel %vm2022, %v2975, %v2979
      %v2981 = vshrl.u32 %v280, 16
      %v2983 = vrot.slane %v2981, 4
      %v2984 = vor.u32 %v2983, %v2979
      %v2985 = vrot.slane %v2984, 4
      %v2987 = vshll.u32 %v281, 16
      %v2989 = vrot.slane %v2987, 5
      %v2990 = vsel %vm2022, %v2985, %v2989
      %v2992 = vshrl.u32 %v282, 16
      %v2994 = vrot.slane %v2992, 4
      %v2995 = vshll.u32 %v282, 16
      %v2997 = vrot.slane %v2995, 5
      %v2998 = vor.u32 %v2994, %v2997
      %v2999 = vrot.slane %v2998, 4
      %v3001 = vshll.u32 %v283, 16
      %v3003 = vrot.slane %v3001, 5
      %v3004 = vsel %vm2022, %v2999, %v3003
      %v3005 = vshrl.u32 %v283, 16
      %v3007 = vrot.slane %v3005, 4
      %v3008 = vor.u32 %v3007, %v3003
      %v3009 = vrot.slane %v3008, 4
      %v3011 = vshll.u32 %v284, 16
      %v3013 = vrot.slane %v3011, 5
      %v3014 = vsel %vm2022, %v3009, %v3013
      %v3015 = vshrl.u32 %v284, 16
      %v3017 = vrot.slane %v3015, 4
      %v3018 = vor.u32 %v3017, %v3013
      %v3019 = vrot.slane %v3018, 4
      %v3021 = vshll.u32 %v285, 16
      %v3023 = vrot.slane %v3021, 5
      %v3024 = vsel %vm2022, %v3019, %v3023
      %v3025 = vshrl.u32 %v285, 16
      %v3027 = vrot.slane %v3025, 4
      %v3028 = vor.u32 %v3027, %v3023
      %v3029 = vrot.slane %v3028, 4
      %v3031 = vshll.u32 %v286, 16
      %v3033 = vrot.slane %v3031, 5
      %v3034 = vsel %vm2022, %v3029, %v3033
      %v3036 = vshrl.u32 %v287, 16
      %v3038 = vrot.slane %v3036, 4
      %v3039 = vshll.u32 %v287, 16
      %v3041 = vrot.slane %v3039, 5
      %v3042 = vor.u32 %v3038, %v3041
      %v3043 = vrot.slane %v3042, 4
      %v3045 = vshll.u32 %v288, 16
      %v3047 = vrot.slane %v3045, 5
      %v3048 = vsel %vm2022, %v3043, %v3047
      %v3049 = vshrl.u32 %v288, 16
      %v3051 = vrot.slane %v3049, 4
      %v3052 = vor.u32 %v3051, %v3047
      %v3053 = vrot.slane %v3052, 4
      %v3055 = vshll.u32 %v289, 16
      %v3057 = vrot.slane %v3055, 5
      %v3058 = vsel %vm2022, %v3053, %v3057
      %v3059 = vshrl.u32 %v289, 16
      %v3061 = vrot.slane %v3059, 4
      %v3062 = vor.u32 %v3061, %v3057
      %v3063 = vrot.slane %v3062, 4
      %v3065 = vshll.u32 %v290, 16
      %v3067 = vrot.slane %v3065, 5
      %v3068 = vsel %vm2022, %v3063, %v3067
      %v3069 = vshrl.u32 %v290, 16
      %v3071 = vrot.slane %v3069, 4
      %v3072 = vor.u32 %v3071, %v3067
      %v3073 = vrot.slane %v3072, 4
      %v3075 = vshll.u32 %v291, 16
      %v3077 = vrot.slane %v3075, 5
      %v3078 = vsel %vm2022, %v3073, %v3077
      %v3080 = vshrl.u32 %v292, 16
      %v3082 = vrot.slane %v3080, 4
      %v3083 = vshll.u32 %v292, 16
      %v3085 = vrot.slane %v3083, 5
      %v3086 = vor.u32 %v3082, %v3085
      %v3087 = vrot.slane %v3086, 4
      %v3089 = vshll.u32 %v293, 16
      %v3091 = vrot.slane %v3089, 5
      %v3092 = vsel %vm2022, %v3087, %v3091
      %v3093 = vshrl.u32 %v293, 16
      %v3095 = vrot.slane %v3093, 4
      %v3096 = vor.u32 %v3095, %v3091
      %v3097 = vrot.slane %v3096, 4
      %v3099 = vshll.u32 %v294, 16
      %v3101 = vrot.slane %v3099, 5
      %v3102 = vsel %vm2022, %v3097, %v3101
      %v3103 = vshrl.u32 %v294, 16
      %v3105 = vrot.slane %v3103, 4
      %v3106 = vor.u32 %v3105, %v3101
      %v3107 = vrot.slane %v3106, 4
      %v3109 = vshll.u32 %v295, 16
      %v3111 = vrot.slane %v3109, 5
      %v3112 = vsel %vm2022, %v3107, %v3111
      %v3113 = vshrl.u32 %v295, 16
      %v3115 = vrot.slane %v3113, 4
      %v3116 = vor.u32 %v3115, %v3111
      %v3117 = vrot.slane %v3116, 4
      %v3119 = vshll.u32 %v296, 16
      %v3121 = vrot.slane %v3119, 5
      %v3122 = vsel %vm2022, %v3117, %v3121
      %v3124 = vshrl.u32 %v297, 16
      %v3126 = vrot.slane %v3124, 4
      %v3127 = vshll.u32 %v297, 16
      %v3129 = vrot.slane %v3127, 5
      %v3130 = vor.u32 %v3126, %v3129
      %v3131 = vrot.slane %v3130, 4
      %v3133 = vshll.u32 %v298, 16
      %v3135 = vrot.slane %v3133, 5
      %v3136 = vsel %vm2022, %v3131, %v3135
      %v3137 = vshrl.u32 %v298, 16
      %v3139 = vrot.slane %v3137, 4
      %v3140 = vor.u32 %v3139, %v3135
      %v3141 = vrot.slane %v3140, 4
      %v3143 = vshll.u32 %v299, 16
      %v3145 = vrot.slane %v3143, 5
      %v3146 = vsel %vm2022, %v3141, %v3145
      %v3147 = vshrl.u32 %v299, 16
      %v3149 = vrot.slane %v3147, 4
      %v3150 = vor.u32 %v3149, %v3145
      %v3151 = vrot.slane %v3150, 4
      %v3153 = vshll.u32 %v300, 16
      %v3155 = vrot.slane %v3153, 5
      %v3156 = vsel %vm2022, %v3151, %v3155
      %v3157 = vshrl.u32 %v300, 16
      %v3159 = vrot.slane %v3157, 4
      %v3160 = vor.u32 %v3159, %v3155
      %v3161 = vrot.slane %v3160, 4
      %v3163 = vshll.u32 %v301, 16
      %v3165 = vrot.slane %v3163, 5
      %v3166 = vsel %vm2022, %v3161, %v3165
      %v3168 = vshrl.u32 %v302, 16
      %v3170 = vrot.slane %v3168, 4
      %v3171 = vshll.u32 %v302, 16
      %v3173 = vrot.slane %v3171, 5
      %v3174 = vor.u32 %v3170, %v3173
      %v3175 = vrot.slane %v3174, 4
      %v3177 = vshll.u32 %v303, 16
      %v3179 = vrot.slane %v3177, 5
      %v3180 = vsel %vm2022, %v3175, %v3179
      %v3181 = vshrl.u32 %v303, 16
      %v3183 = vrot.slane %v3181, 4
      %v3184 = vor.u32 %v3183, %v3179
      %v3185 = vrot.slane %v3184, 4
      %v3187 = vshll.u32 %v304, 16
      %v3189 = vrot.slane %v3187, 5
      %v3190 = vsel %vm2022, %v3185, %v3189
      %v3191 = vshrl.u32 %v304, 16
      %v3193 = vrot.slane %v3191, 4
      %v3194 = vor.u32 %v3193, %v3189
      %v3195 = vrot.slane %v3194, 4
      %v3197 = vshll.u32 %v305, 16
      %v3199 = vrot.slane %v3197, 5
      %v3200 = vsel %vm2022, %v3195, %v3199
      %v3201 = vshrl.u32 %v305, 16
      %v3203 = vrot.slane %v3201, 4
      %v3204 = vor.u32 %v3203, %v3199
      %v3205 = vrot.slane %v3204, 4
      %v3207 = vshll.u32 %v306, 16
      %v3209 = vrot.slane %v3207, 5
      %v3210 = vsel %vm2022, %v3205, %v3209
      %v3212 = vshrl.u32 %v307, 16
      %v3214 = vrot.slane %v3212, 4
      %v3215 = vshll.u32 %v307, 16
      %v3217 = vrot.slane %v3215, 5
      %v3218 = vor.u32 %v3214, %v3217
      %v3219 = vrot.slane %v3218, 4
      %v3221 = vshll.u32 %v308, 16
      %v3223 = vrot.slane %v3221, 5
      %v3224 = vsel %vm2022, %v3219, %v3223
      %v3225 = vshrl.u32 %v308, 16
      %v3227 = vrot.slane %v3225, 4
      %v3228 = vor.u32 %v3227, %v3223
      %v3229 = vrot.slane %v3228, 4
      %v3231 = vshll.u32 %v309, 16
      %v3233 = vrot.slane %v3231, 5
      %v3234 = vsel %vm2022, %v3229, %v3233
      %v3235 = vshrl.u32 %v309, 16
      %v3237 = vrot.slane %v3235, 4
      %v3238 = vor.u32 %v3237, %v3233
      %v3239 = vrot.slane %v3238, 4
      %v3241 = vshll.u32 %v310, 16
      %v3243 = vrot.slane %v3241, 5
      %v3244 = vsel %vm2022, %v3239, %v3243
      %v3245 = vshrl.u32 %v310, 16
      %v3247 = vrot.slane %v3245, 4
      %v3248 = vor.u32 %v3247, %v3243
      %v3249 = vrot.slane %v3248, 4
      %v3251 = vshll.u32 %v311, 16
      %v3253 = vrot.slane %v3251, 5
      %v3254 = vsel %vm2022, %v3249, %v3253
      %v3256 = vshrl.u32 %v312, 16
      %v3258 = vrot.slane %v3256, 4
      %v3259 = vshll.u32 %v312, 16
      %v3261 = vrot.slane %v3259, 5
      %v3262 = vor.u32 %v3258, %v3261
      %v3263 = vrot.slane %v3262, 4
      %v3265 = vshll.u32 %v313, 16
      %v3267 = vrot.slane %v3265, 5
      %v3268 = vsel %vm2022, %v3263, %v3267
      %v3269 = vshrl.u32 %v313, 16
      %v3271 = vrot.slane %v3269, 4
      %v3272 = vor.u32 %v3271, %v3267
      %v3273 = vrot.slane %v3272, 4
      %v3275 = vshll.u32 %v314, 16
      %v3277 = vrot.slane %v3275, 5
      %v3278 = vsel %vm2022, %v3273, %v3277
      %v3279 = vshrl.u32 %v314, 16
      %v3281 = vrot.slane %v3279, 4
      %v3282 = vor.u32 %v3281, %v3277
      %v3283 = vrot.slane %v3282, 4
      %v3285 = vshll.u32 %v315, 16
      %v3287 = vrot.slane %v3285, 5
      %v3288 = vsel %vm2022, %v3283, %v3287
      %v3289 = vshrl.u32 %v315, 16
      %v3291 = vrot.slane %v3289, 4
      %v3292 = vor.u32 %v3291, %v3287
      %v3293 = vrot.slane %v3292, 4
      %v3295 = vshll.u32 %v316, 16
      %v3297 = vrot.slane %v3295, 5
      %v3298 = vsel %vm2022, %v3293, %v3297
      %v3300 = vshrl.u32 %v317, 16
      %v3302 = vrot.slane %v3300, 4
      %v3303 = vshll.u32 %v317, 16
      %v3305 = vrot.slane %v3303, 5
      %v3306 = vor.u32 %v3302, %v3305
      %v3307 = vrot.slane %v3306, 4
      %v3309 = vshll.u32 %v318, 16
      %v3311 = vrot.slane %v3309, 5
      %v3312 = vsel %vm2022, %v3307, %v3311
      %v3313 = vshrl.u32 %v318, 16
      %v3315 = vrot.slane %v3313, 4
      %v3316 = vor.u32 %v3315, %v3311
      %v3317 = vrot.slane %v3316, 4
      %v3319 = vshll.u32 %v319, 16
      %v3321 = vrot.slane %v3319, 5
      %v3322 = vsel %vm2022, %v3317, %v3321
      %v3323 = vshrl.u32 %v319, 16
      %v3325 = vrot.slane %v3323, 4
      %v3326 = vor.u32 %v3325, %v3321
      %v3327 = vrot.slane %v3326, 4
      %v3329 = vshll.u32 %v320, 16
      %v3331 = vrot.slane %v3329, 5
      %v3332 = vsel %vm2022, %v3327, %v3331
      %v3333 = vshrl.u32 %v320, 16
      %v3335 = vrot.slane %v3333, 4
      %v3336 = vor.u32 %v3335, %v3331
      %v3337 = vrot.slane %v3336, 4
      %v3339 = vshll.u32 %v321, 16
      %v3341 = vrot.slane %v3339, 5
      %v3342 = vsel %vm2022, %v3337, %v3341
      %v3344 = vshrl.u32 %v322, 16
      %v3346 = vrot.slane %v3344, 4
      %v3347 = vshll.u32 %v322, 16
      %v3349 = vrot.slane %v3347, 5
      %v3350 = vor.u32 %v3346, %v3349
      %v3351 = vrot.slane %v3350, 4
      %v3353 = vshll.u32 %v323, 16
      %v3355 = vrot.slane %v3353, 5
      %v3356 = vsel %vm2022, %v3351, %v3355
      %v3357 = vshrl.u32 %v323, 16
      %v3359 = vrot.slane %v3357, 4
      %v3360 = vor.u32 %v3359, %v3355
      %v3361 = vrot.slane %v3360, 4
      %v3363 = vshll.u32 %v324, 16
      %v3365 = vrot.slane %v3363, 5
      %v3366 = vsel %vm2022, %v3361, %v3365
      %v3367 = vshrl.u32 %v324, 16
      %v3369 = vrot.slane %v3367, 4
      %v3370 = vor.u32 %v3369, %v3365
      %v3371 = vrot.slane %v3370, 4
      %v3373 = vshll.u32 %v325, 16
      %v3375 = vrot.slane %v3373, 5
      %v3376 = vsel %vm2022, %v3371, %v3375
      %v3377 = vshrl.u32 %v325, 16
      %v3379 = vrot.slane %v3377, 4
      %v3380 = vor.u32 %v3379, %v3375
      %v3381 = vrot.slane %v3380, 4
      %v3383 = vshll.u32 %v326, 16
      %v3385 = vrot.slane %v3383, 5
      %v3386 = vsel %vm2022, %v3381, %v3385
      %v3388 = vshrl.u32 %v327, 16
      %v3390 = vrot.slane %v3388, 4
      %v3391 = vshll.u32 %v327, 16
      %v3393 = vrot.slane %v3391, 5
      %v3394 = vor.u32 %v3390, %v3393
      %v3395 = vrot.slane %v3394, 4
      %v3397 = vshll.u32 %v328, 16
      %v3399 = vrot.slane %v3397, 5
      %v3400 = vsel %vm2022, %v3395, %v3399
      %v3401 = vshrl.u32 %v328, 16
      %v3403 = vrot.slane %v3401, 4
      %v3404 = vor.u32 %v3403, %v3399
      %v3405 = vrot.slane %v3404, 4
      %v3407 = vshll.u32 %v329, 16
      %v3409 = vrot.slane %v3407, 5
      %v3410 = vsel %vm2022, %v3405, %v3409
      %v3411 = vshrl.u32 %v329, 16
      %v3413 = vrot.slane %v3411, 4
      %v3414 = vor.u32 %v3413, %v3409
      %v3415 = vrot.slane %v3414, 4
      %v3417 = vshll.u32 %v330, 16
      %v3419 = vrot.slane %v3417, 5
      %v3420 = vsel %vm2022, %v3415, %v3419
      %v3421 = vshrl.u32 %v330, 16
      %v3423 = vrot.slane %v3421, 4
      %v3424 = vor.u32 %v3423, %v3419
      %v3425 = vrot.slane %v3424, 4
      %v3427 = vshll.u32 %v331, 16
      %v3429 = vrot.slane %v3427, 5
      %v3430 = vsel %vm2022, %v3425, %v3429
      %s3431 = scalar_lea.vmem %s1, 2
      %v3432 = vld [vmem:[%s3431] sm:$0x3]
      %v3433 = vunpack.c.l.b16 %v2036
      %v3434 = vunpack.c.l.b16 %v2046
      %v3435 = vunpack.c.l.b16 %v2056
      %v3436 = vunpack.c.l.b16 %v2066
      %v3437 = vunpack.c.l.b16 %v2080
      %v3438 = vunpack.c.l.b16 %v2090
      %v3439 = vunpack.c.l.b16 %v2100
      %v3440 = vunpack.c.l.b16 %v2110
      %v3441 = vunpack.c.l.b16 %v2124
      %v3442 = vunpack.c.l.b16 %v2134
      %v3443 = vunpack.c.l.b16 %v2144
      %v3444 = vunpack.c.l.b16 %v2154
      %v3445 = vunpack.c.l.b16 %v2168
      %v3446 = vunpack.c.l.b16 %v2178
      %v3447 = vunpack.c.l.b16 %v2188
      %v3448 = vunpack.c.l.b16 %v2198
      %v3449 = vunpack.c.l.b16 %v2212
      %v3450 = vunpack.c.l.b16 %v2222
      %v3451 = vunpack.c.l.b16 %v2232
      %v3452 = vunpack.c.l.b16 %v2242
      %v3453 = vunpack.c.l.b16 %v2256
      %v3454 = vunpack.c.l.b16 %v2266
      %v3455 = vunpack.c.l.b16 %v2276
      %v3456 = vunpack.c.l.b16 %v2286
      %v3457 = vunpack.c.l.b16 %v2300
      %v3458 = vunpack.c.l.b16 %v2310
      %v3459 = vunpack.c.l.b16 %v2320
      %v3460 = vunpack.c.l.b16 %v2330
      %v3461 = vunpack.c.l.b16 %v2344
      %v3462 = vunpack.c.l.b16 %v2354
      %v3463 = vunpack.c.l.b16 %v2364
      %v3464 = vunpack.c.l.b16 %v2374
      %v3465 = vunpack.c.l.b16 %v2388
      %v3466 = vunpack.c.l.b16 %v2398
      %v3467 = vunpack.c.l.b16 %v2408
      %v3468 = vunpack.c.l.b16 %v2418
      %v3469 = vunpack.c.l.b16 %v2432
      %v3470 = vunpack.c.l.b16 %v2442
      %v3471 = vunpack.c.l.b16 %v2452
      %v3472 = vunpack.c.l.b16 %v2462
      %v3473 = vunpack.c.l.b16 %v2476
      %v3474 = vunpack.c.l.b16 %v2486
      %v3475 = vunpack.c.l.b16 %v2496
      %v3476 = vunpack.c.l.b16 %v2506
      %v3477 = vunpack.c.l.b16 %v2520
      %v3478 = vunpack.c.l.b16 %v2530
      %v3479 = vunpack.c.l.b16 %v2540
      %v3480 = vunpack.c.l.b16 %v2550
      %v3481 = vunpack.c.l.b16 %v2564
      %v3482 = vunpack.c.l.b16 %v2574
      %v3483 = vunpack.c.l.b16 %v2584
      %v3484 = vunpack.c.l.b16 %v2594
      %v3485 = vunpack.c.l.b16 %v2608
      %v3486 = vunpack.c.l.b16 %v2618
      %v3487 = vunpack.c.l.b16 %v2628
      %v3488 = vunpack.c.l.b16 %v2638
      %v3489 = vunpack.c.l.b16 %v2652
      %v3490 = vunpack.c.l.b16 %v2662
      %v3491 = vunpack.c.l.b16 %v2672
      %v3492 = vunpack.c.l.b16 %v2682
      %v3493 = vunpack.c.l.b16 %v2696
      %v3494 = vunpack.c.l.b16 %v2706
      %v3495 = vunpack.c.l.b16 %v2716
      %v3496 = vunpack.c.l.b16 %v2726
      %v3497 = vunpack.c.l.b16 %v2740
      %v3498 = vunpack.c.l.b16 %v2750
      %v3499 = vunpack.c.l.b16 %v2760
      %v3500 = vunpack.c.l.b16 %v2770
      %v3501 = vunpack.c.l.b16 %v2784
      %v3502 = vunpack.c.l.b16 %v2794
      %v3503 = vunpack.c.l.b16 %v2804
      %v3504 = vunpack.c.l.b16 %v2814
      %v3505 = vunpack.c.l.b16 %v2828
      %v3506 = vunpack.c.l.b16 %v2838
      %v3507 = vunpack.c.l.b16 %v2848
      %v3508 = vunpack.c.l.b16 %v2858
      %v3509 = vunpack.c.l.b16 %v2872
      %v3510 = vunpack.c.l.b16 %v2882
      %v3511 = vunpack.c.l.b16 %v2892
      %v3512 = vunpack.c.l.b16 %v2902
      %v3513 = vunpack.c.l.b16 %v2916
      %v3514 = vunpack.c.l.b16 %v2926
      %v3515 = vunpack.c.l.b16 %v2936
      %v3516 = vunpack.c.l.b16 %v2946
      %v3517 = vunpack.c.l.b16 %v2960
      %v3518 = vunpack.c.l.b16 %v2970
      %v3519 = vunpack.c.l.b16 %v2980
      %v3520 = vunpack.c.l.b16 %v2990
      %v3521 = vunpack.c.l.b16 %v3004
      %v3522 = vunpack.c.l.b16 %v3014
      %v3523 = vunpack.c.l.b16 %v3024
      %v3524 = vunpack.c.l.b16 %v3034
      %v3525 = vunpack.c.l.b16 %v3048
      %v3526 = vunpack.c.l.b16 %v3058
      %v3527 = vunpack.c.l.b16 %v3068
      %v3528 = vunpack.c.l.b16 %v3078
      %v3529 = vunpack.c.l.b16 %v3092
      %v3530 = vunpack.c.l.b16 %v3102
      %v3531 = vunpack.c.l.b16 %v3112
      %v3532 = vunpack.c.l.b16 %v3122
      %v3533 = vunpack.c.l.b16 %v3136
      %v3534 = vunpack.c.l.b16 %v3146
      %v3535 = vunpack.c.l.b16 %v3156
      %v3536 = vunpack.c.l.b16 %v3166
      %v3537 = vunpack.c.l.b16 %v3180
      %v3538 = vunpack.c.l.b16 %v3190
      %v3539 = vunpack.c.l.b16 %v3200
      %v3540 = vunpack.c.l.b16 %v3210
      %v3541 = vunpack.c.l.b16 %v3224
      %v3542 = vunpack.c.l.b16 %v3234
      %v3543 = vunpack.c.l.b16 %v3244
      %v3544 = vunpack.c.l.b16 %v3254
      %v3545 = vunpack.c.l.b16 %v3268
      %v3546 = vunpack.c.l.b16 %v3278
      %v3547 = vunpack.c.l.b16 %v3288
      %v3548 = vunpack.c.l.b16 %v3298
      %v3549 = vunpack.c.l.b16 %v3312
      %v3550 = vunpack.c.l.b16 %v3322
      %v3551 = vunpack.c.l.b16 %v3332
      %v3552 = vunpack.c.l.b16 %v3342
      %v3553 = vunpack.c.l.b16 %v3356
      %v3554 = vunpack.c.l.b16 %v3366
      %v3555 = vunpack.c.l.b16 %v3376
      %v3556 = vunpack.c.l.b16 %v3386
      %v3557 = vunpack.c.l.b16 %v3400
      %v3558 = vunpack.c.l.b16 %v3410
      %v3559 = vunpack.c.l.b16 %v3420
      %v3560 = vunpack.c.l.b16 %v3430
      %v3561 = vpack.c.b16 %v3434, %v3433
      %v3562 = vpack.c.b16 %v3436, %v3435
      %v3563 = vpack.c.b16 %v3438, %v3437
      %v3564 = vpack.c.b16 %v3440, %v3439
      %v3565 = vpack.c.b16 %v3442, %v3441
      %v3566 = vpack.c.b16 %v3444, %v3443
      %v3567 = vpack.c.b16 %v3446, %v3445
      %v3568 = vpack.c.b16 %v3448, %v3447
      %v3569 = vpack.c.b16 %v3450, %v3449
      %v3570 = vpack.c.b16 %v3452, %v3451
      %v3571 = vpack.c.b16 %v3454, %v3453
      %v3572 = vpack.c.b16 %v3456, %v3455
      %v3573 = vpack.c.b16 %v3458, %v3457
      %v3574 = vpack.c.b16 %v3460, %v3459
      %v3575 = vpack.c.b16 %v3462, %v3461
      %v3576 = vpack.c.b16 %v3464, %v3463
      %v3577 = vpack.c.b16 %v3466, %v3465
      %v3578 = vpack.c.b16 %v3468, %v3467
      %v3579 = vpack.c.b16 %v3470, %v3469
      %v3580 = vpack.c.b16 %v3472, %v3471
      %v3581 = vpack.c.b16 %v3474, %v3473
      %v3582 = vpack.c.b16 %v3476, %v3475
      %v3583 = vpack.c.b16 %v3478, %v3477
      %v3584 = vpack.c.b16 %v3480, %v3479
      %v3585 = vpack.c.b16 %v3482, %v3481
      %v3586 = vpack.c.b16 %v3484, %v3483
      %v3587 = vpack.c.b16 %v3486, %v3485
      %v3588 = vpack.c.b16 %v3488, %v3487
      %v3589 = vpack.c.b16 %v3490, %v3489
      %v3590 = vpack.c.b16 %v3492, %v3491
      %v3591 = vpack.c.b16 %v3494, %v3493
      %v3592 = vpack.c.b16 %v3496, %v3495
      %v3593 = vpack.c.b16 %v3498, %v3497
      %v3594 = vpack.c.b16 %v3500, %v3499
      %v3595 = vpack.c.b16 %v3502, %v3501
      %v3596 = vpack.c.b16 %v3504, %v3503
      %v3597 = vpack.c.b16 %v3506, %v3505
      %v3598 = vpack.c.b16 %v3508, %v3507
      %v3599 = vpack.c.b16 %v3510, %v3509
      %v3600 = vpack.c.b16 %v3512, %v3511
      %v3601 = vpack.c.b16 %v3514, %v3513
      %v3602 = vpack.c.b16 %v3516, %v3515
      %v3603 = vpack.c.b16 %v3518, %v3517
      %v3604 = vpack.c.b16 %v3520, %v3519
      %v3605 = vpack.c.b16 %v3522, %v3521
      %v3606 = vpack.c.b16 %v3524, %v3523
      %v3607 = vpack.c.b16 %v3526, %v3525
      %v3608 = vpack.c.b16 %v3528, %v3527
      %v3609 = vpack.c.b16 %v3530, %v3529
      %v3610 = vpack.c.b16 %v3532, %v3531
      %v3611 = vpack.c.b16 %v3534, %v3533
      %v3612 = vpack.c.b16 %v3536, %v3535
      %v3613 = vpack.c.b16 %v3538, %v3537
      %v3614 = vpack.c.b16 %v3540, %v3539
      %v3615 = vpack.c.b16 %v3542, %v3541
      %v3616 = vpack.c.b16 %v3544, %v3543
      %v3617 = vpack.c.b16 %v3546, %v3545
      %v3618 = vpack.c.b16 %v3548, %v3547
      %v3619 = vpack.c.b16 %v3550, %v3549
      %v3620 = vpack.c.b16 %v3552, %v3551
      %v3621 = vpack.c.b16 %v3554, %v3553
      %v3622 = vpack.c.b16 %v3556, %v3555
      %v3623 = vpack.c.b16 %v3558, %v3557
      %v3624 = vpack.c.b16 %v3560, %v3559
      %v3626 = vsel %vm665, %v3561, 0
      %v3629 = vsel %vm665, %v3562, 0
      %v3632 = vsel %vm665, %v3563, 0
      %v3635 = vsel %vm665, %v3564, 0
      %v3638 = vsel %vm665, %v3565, 0
      %v3641 = vsel %vm665, %v3566, 0
      %v3644 = vsel %vm665, %v3567, 0
      %v3647 = vsel %vm665, %v3568, 0
      %v3650 = vsel %vm665, %v3569, 0
      %v3653 = vsel %vm665, %v3570, 0
      %v3656 = vsel %vm665, %v3571, 0
      %v3659 = vsel %vm665, %v3572, 0
      %v3662 = vsel %vm665, %v3573, 0
      %v3665 = vsel %vm665, %v3574, 0
      %v3668 = vsel %vm665, %v3575, 0
      %v3671 = vsel %vm665, %v3576, 0
      %v3674 = vsel %vm665, %v3577, 0
      %v3677 = vsel %vm665, %v3578, 0
      %v3680 = vsel %vm665, %v3579, 0
      %v3683 = vsel %vm665, %v3580, 0
      %v3686 = vsel %vm665, %v3581, 0
      %v3689 = vsel %vm665, %v3582, 0
      %v3692 = vsel %vm665, %v3583, 0
      %v3695 = vsel %vm665, %v3584, 0
      %v3698 = vsel %vm665, %v3585, 0
      %v3701 = vsel %vm665, %v3586, 0
      %v3704 = vsel %vm665, %v3587, 0
      %v3707 = vsel %vm665, %v3588, 0
      %v3710 = vsel %vm665, %v3589, 0
      %v3713 = vsel %vm665, %v3590, 0
      %v3716 = vsel %vm665, %v3591, 0
      %v3719 = vsel %vm665, %v3592, 0
      %v3722 = vsel %vm665, %v3593, 0
      %v3725 = vsel %vm665, %v3594, 0
      %v3728 = vsel %vm665, %v3595, 0
      %v3731 = vsel %vm665, %v3596, 0
      %v3734 = vsel %vm665, %v3597, 0
      %v3737 = vsel %vm665, %v3598, 0
      %v3740 = vsel %vm665, %v3599, 0
      %v3743 = vsel %vm665, %v3600, 0
      %v3746 = vsel %vm665, %v3601, 0
      %v3749 = vsel %vm665, %v3602, 0
      %v3752 = vsel %vm665, %v3603, 0
      %v3755 = vsel %vm665, %v3604, 0
      %v3758 = vsel %vm665, %v3605, 0
      %v3761 = vsel %vm665, %v3606, 0
      %v3764 = vsel %vm665, %v3607, 0
      %v3767 = vsel %vm665, %v3608, 0
      %v3770 = vsel %vm665, %v3609, 0
      %v3773 = vsel %vm665, %v3610, 0
      %v3776 = vsel %vm665, %v3611, 0
      %v3779 = vsel %vm665, %v3612, 0
      %v3782 = vsel %vm665, %v3613, 0
      %v3785 = vsel %vm665, %v3614, 0
      %v3788 = vsel %vm665, %v3615, 0
      %v3791 = vsel %vm665, %v3616, 0
      %v3794 = vsel %vm665, %v3617, 0
      %v3797 = vsel %vm665, %v3618, 0
      %v3800 = vsel %vm665, %v3619, 0
      %v3803 = vsel %vm665, %v3620, 0
      %v3806 = vsel %vm665, %v3621, 0
      %v3809 = vsel %vm665, %v3622, 0
      %v3812 = vsel %vm665, %v3623, 0
      %v3815 = vsel %vm665, %v3624, 0
      %v3818 = vand.u32 %v3432, %v861
      %3820 = vmatpush.bf16.msra.mxu0 0
      %3821 = vmatpush.bf16.msra.mxu0 0
      %3822 = vmatpush.bf16.msra.mxu0 0
      %3823 = vmatpush.bf16.msra.mxu0 0
      %3824 = vmatpush.bf16.msra.mxu0 0
      %3825 = vmatpush.bf16.msra.mxu0 0
      %3826 = vmatpush.bf16.msra.mxu0 0
      %3827 = vmatpush.bf16.msra.mxu0 %v3818
      %3828 = vmatmul.bf16.gmra.mxu0 %v3626
      %v3829 = vpop.f32.mrf.mxu0
      %v3830 = vadd.f32 0.0, %v3829
      %v3831 = vpop.f32.mrf.mxu0
      %v3832 = vadd.f32 0.0, %v3831
      %3833 = vmatmul.bf16.gmra.mxu0 %v3629
      %v3834 = vpop.f32.mrf.mxu0
      %v3835 = vadd.f32 0.0, %v3834
      %v3836 = vpop.f32.mrf.mxu0
      %v3837 = vadd.f32 0.0, %v3836
      %3838 = vmatmul.bf16.gmra.mxu0 %v3632
      %v3839 = vpop.f32.mrf.mxu0
      %v3840 = vadd.f32 0.0, %v3839
      %v3841 = vpop.f32.mrf.mxu0
      %v3842 = vadd.f32 0.0, %v3841
      %3843 = vmatmul.bf16.gmra.mxu0 %v3635
      %v3844 = vpop.f32.mrf.mxu0
      %v3845 = vadd.f32 0.0, %v3844
      %v3846 = vpop.f32.mrf.mxu0
      %v3847 = vadd.f32 0.0, %v3846
      %3848 = vmatmul.bf16.gmra.mxu0 %v3638
      %v3849 = vpop.f32.mrf.mxu0
      %v3850 = vadd.f32 0.0, %v3849
      %v3851 = vpop.f32.mrf.mxu0
      %v3852 = vadd.f32 0.0, %v3851
      %3853 = vmatmul.bf16.gmra.mxu0 %v3641
      %v3854 = vpop.f32.mrf.mxu0
      %v3855 = vadd.f32 0.0, %v3854
      %v3856 = vpop.f32.mrf.mxu0
      %v3857 = vadd.f32 0.0, %v3856
      %3858 = vmatmul.bf16.gmra.mxu0 %v3644
      %v3859 = vpop.f32.mrf.mxu0
      %v3860 = vadd.f32 0.0, %v3859
      %v3861 = vpop.f32.mrf.mxu0
      %v3862 = vadd.f32 0.0, %v3861
      %3863 = vmatmul.bf16.gmra.mxu0 %v3647
      %v3864 = vpop.f32.mrf.mxu0
      %v3865 = vadd.f32 0.0, %v3864
      %v3866 = vpop.f32.mrf.mxu0
      %v3867 = vadd.f32 0.0, %v3866
      %3868 = vmatmul.bf16.gmra.mxu0 %v3650
      %v3869 = vpop.f32.mrf.mxu0
      %v3870 = vadd.f32 0.0, %v3869
      %v3871 = vpop.f32.mrf.mxu0
      %v3872 = vadd.f32 0.0, %v3871
      %3873 = vmatmul.bf16.gmra.mxu0 %v3653
      %v3874 = vpop.f32.mrf.mxu0
      %v3875 = vadd.f32 0.0, %v3874
      %v3876 = vpop.f32.mrf.mxu0
      %v3877 = vadd.f32 0.0, %v3876
      %3878 = vmatmul.bf16.gmra.mxu0 %v3656
      %v3879 = vpop.f32.mrf.mxu0
      %v3880 = vadd.f32 0.0, %v3879
      %v3881 = vpop.f32.mrf.mxu0
      %v3882 = vadd.f32 0.0, %v3881
      %3883 = vmatmul.bf16.gmra.mxu0 %v3659
      %v3884 = vpop.f32.mrf.mxu0
      %v3885 = vadd.f32 0.0, %v3884
      %v3886 = vpop.f32.mrf.mxu0
      %v3887 = vadd.f32 0.0, %v3886
      %3888 = vmatmul.bf16.gmra.mxu0 %v3662
      %v3889 = vpop.f32.mrf.mxu0
      %v3890 = vadd.f32 0.0, %v3889
      %v3891 = vpop.f32.mrf.mxu0
      %v3892 = vadd.f32 0.0, %v3891
      %3893 = vmatmul.bf16.gmra.mxu0 %v3665
      %v3894 = vpop.f32.mrf.mxu0
      %v3895 = vadd.f32 0.0, %v3894
      %v3896 = vpop.f32.mrf.mxu0
      %v3897 = vadd.f32 0.0, %v3896
      %3898 = vmatmul.bf16.gmra.mxu0 %v3668
      %v3899 = vpop.f32.mrf.mxu0
      %v3900 = vadd.f32 0.0, %v3899
      %v3901 = vpop.f32.mrf.mxu0
      %v3902 = vadd.f32 0.0, %v3901
      %3903 = vmatmul.bf16.gmra.mxu0 %v3671
      %v3904 = vpop.f32.mrf.mxu0
      %v3905 = vadd.f32 0.0, %v3904
      %v3906 = vpop.f32.mrf.mxu0
      %v3907 = vadd.f32 0.0, %v3906
      %3908 = vmatmul.bf16.gmra.mxu0 %v3674
      %v3909 = vpop.f32.mrf.mxu0
      %v3910 = vadd.f32 0.0, %v3909
      %v3911 = vpop.f32.mrf.mxu0
      %v3912 = vadd.f32 0.0, %v3911
      %3913 = vmatmul.bf16.gmra.mxu0 %v3677
      %v3914 = vpop.f32.mrf.mxu0
      %v3915 = vadd.f32 0.0, %v3914
      %v3916 = vpop.f32.mrf.mxu0
      %v3917 = vadd.f32 0.0, %v3916
      %3918 = vmatmul.bf16.gmra.mxu0 %v3680
      %v3919 = vpop.f32.mrf.mxu0
      %v3920 = vadd.f32 0.0, %v3919
      %v3921 = vpop.f32.mrf.mxu0
      %v3922 = vadd.f32 0.0, %v3921
      %3923 = vmatmul.bf16.gmra.mxu0 %v3683
      %v3924 = vpop.f32.mrf.mxu0
      %v3925 = vadd.f32 0.0, %v3924
      %v3926 = vpop.f32.mrf.mxu0
      %v3927 = vadd.f32 0.0, %v3926
      %3928 = vmatmul.bf16.gmra.mxu0 %v3686
      %v3929 = vpop.f32.mrf.mxu0
      %v3930 = vadd.f32 0.0, %v3929
      %v3931 = vpop.f32.mrf.mxu0
      %v3932 = vadd.f32 0.0, %v3931
      %3933 = vmatmul.bf16.gmra.mxu0 %v3689
      %v3934 = vpop.f32.mrf.mxu0
      %v3935 = vadd.f32 0.0, %v3934
      %v3936 = vpop.f32.mrf.mxu0
      %v3937 = vadd.f32 0.0, %v3936
      %3938 = vmatmul.bf16.gmra.mxu0 %v3692
      %v3939 = vpop.f32.mrf.mxu0
      %v3940 = vadd.f32 0.0, %v3939
      %v3941 = vpop.f32.mrf.mxu0
      %v3942 = vadd.f32 0.0, %v3941
      %3943 = vmatmul.bf16.gmra.mxu0 %v3695
      %v3944 = vpop.f32.mrf.mxu0
      %v3945 = vadd.f32 0.0, %v3944
      %v3946 = vpop.f32.mrf.mxu0
      %v3947 = vadd.f32 0.0, %v3946
      %3948 = vmatmul.bf16.gmra.mxu0 %v3698
      %v3949 = vpop.f32.mrf.mxu0
      %v3950 = vadd.f32 0.0, %v3949
      %v3951 = vpop.f32.mrf.mxu0
      %v3952 = vadd.f32 0.0, %v3951
      %3953 = vmatmul.bf16.gmra.mxu0 %v3701
      %v3954 = vpop.f32.mrf.mxu0
      %v3955 = vadd.f32 0.0, %v3954
      %v3956 = vpop.f32.mrf.mxu0
      %v3957 = vadd.f32 0.0, %v3956
      %3958 = vmatmul.bf16.gmra.mxu0 %v3704
      %v3959 = vpop.f32.mrf.mxu0
      %v3960 = vadd.f32 0.0, %v3959
      %v3961 = vpop.f32.mrf.mxu0
      %v3962 = vadd.f32 0.0, %v3961
      %3963 = vmatmul.bf16.gmra.mxu0 %v3707
      %v3964 = vpop.f32.mrf.mxu0
      %v3965 = vadd.f32 0.0, %v3964
      %v3966 = vpop.f32.mrf.mxu0
      %v3967 = vadd.f32 0.0, %v3966
      %3968 = vmatmul.bf16.gmra.mxu0 %v3710
      %v3969 = vpop.f32.mrf.mxu0
      %v3970 = vadd.f32 0.0, %v3969
      %v3971 = vpop.f32.mrf.mxu0
      %v3972 = vadd.f32 0.0, %v3971
      %3973 = vmatmul.bf16.gmra.mxu0 %v3713
      %v3974 = vpop.f32.mrf.mxu0
      %v3975 = vadd.f32 0.0, %v3974
      %v3976 = vpop.f32.mrf.mxu0
      %v3977 = vadd.f32 0.0, %v3976
      %3978 = vmatmul.bf16.gmra.mxu0 %v3716
      %v3979 = vpop.f32.mrf.mxu0
      %v3980 = vadd.f32 0.0, %v3979
      %v3981 = vpop.f32.mrf.mxu0
      %v3982 = vadd.f32 0.0, %v3981
      %3983 = vmatmul.bf16.gmra.mxu0 %v3719
      %v3984 = vpop.f32.mrf.mxu0
      %v3985 = vadd.f32 0.0, %v3984
      %v3986 = vpop.f32.mrf.mxu0
      %v3987 = vadd.f32 0.0, %v3986
      %3988 = vmatmul.bf16.gmra.mxu0 %v3722
      %v3989 = vpop.f32.mrf.mxu0
      %v3990 = vadd.f32 0.0, %v3989
      %v3991 = vpop.f32.mrf.mxu0
      %v3992 = vadd.f32 0.0, %v3991
      %3993 = vmatmul.bf16.gmra.mxu0 %v3725
      %v3994 = vpop.f32.mrf.mxu0
      %v3995 = vadd.f32 0.0, %v3994
      %v3996 = vpop.f32.mrf.mxu0
      %v3997 = vadd.f32 0.0, %v3996
      %3998 = vmatmul.bf16.gmra.mxu0 %v3728
      %v3999 = vpop.f32.mrf.mxu0
      %v4000 = vadd.f32 0.0, %v3999
      %v4001 = vpop.f32.mrf.mxu0
      %v4002 = vadd.f32 0.0, %v4001
      %4003 = vmatmul.bf16.gmra.mxu0 %v3731
      %v4004 = vpop.f32.mrf.mxu0
      %v4005 = vadd.f32 0.0, %v4004
      %v4006 = vpop.f32.mrf.mxu0
      %v4007 = vadd.f32 0.0, %v4006
      %4008 = vmatmul.bf16.gmra.mxu0 %v3734
      %v4009 = vpop.f32.mrf.mxu0
      %v4010 = vadd.f32 0.0, %v4009
      %v4011 = vpop.f32.mrf.mxu0
      %v4012 = vadd.f32 0.0, %v4011
      %4013 = vmatmul.bf16.gmra.mxu0 %v3737
      %v4014 = vpop.f32.mrf.mxu0
      %v4015 = vadd.f32 0.0, %v4014
      %v4016 = vpop.f32.mrf.mxu0
      %v4017 = vadd.f32 0.0, %v4016
      %4018 = vmatmul.bf16.gmra.mxu0 %v3740
      %v4019 = vpop.f32.mrf.mxu0
      %v4020 = vadd.f32 0.0, %v4019
      %v4021 = vpop.f32.mrf.mxu0
      %v4022 = vadd.f32 0.0, %v4021
      %4023 = vmatmul.bf16.gmra.mxu0 %v3743
      %v4024 = vpop.f32.mrf.mxu0
      %v4025 = vadd.f32 0.0, %v4024
      %v4026 = vpop.f32.mrf.mxu0
      %v4027 = vadd.f32 0.0, %v4026
      %4028 = vmatmul.bf16.gmra.mxu0 %v3746
      %v4029 = vpop.f32.mrf.mxu0
      %v4030 = vadd.f32 0.0, %v4029
      %v4031 = vpop.f32.mrf.mxu0
      %v4032 = vadd.f32 0.0, %v4031
      %4033 = vmatmul.bf16.gmra.mxu0 %v3749
      %v4034 = vpop.f32.mrf.mxu0
      %v4035 = vadd.f32 0.0, %v4034
      %v4036 = vpop.f32.mrf.mxu0
      %v4037 = vadd.f32 0.0, %v4036
      %4038 = vmatmul.bf16.gmra.mxu0 %v3752
      %v4039 = vpop.f32.mrf.mxu0
      %v4040 = vadd.f32 0.0, %v4039
      %v4041 = vpop.f32.mrf.mxu0
      %v4042 = vadd.f32 0.0, %v4041
      %4043 = vmatmul.bf16.gmra.mxu0 %v3755
      %v4044 = vpop.f32.mrf.mxu0
      %v4045 = vadd.f32 0.0, %v4044
      %v4046 = vpop.f32.mrf.mxu0
      %v4047 = vadd.f32 0.0, %v4046
      %4048 = vmatmul.bf16.gmra.mxu0 %v3758
      %v4049 = vpop.f32.mrf.mxu0
      %v4050 = vadd.f32 0.0, %v4049
      %v4051 = vpop.f32.mrf.mxu0
      %v4052 = vadd.f32 0.0, %v4051
      %4053 = vmatmul.bf16.gmra.mxu0 %v3761
      %v4054 = vpop.f32.mrf.mxu0
      %v4055 = vadd.f32 0.0, %v4054
      %v4056 = vpop.f32.mrf.mxu0
      %v4057 = vadd.f32 0.0, %v4056
      %4058 = vmatmul.bf16.gmra.mxu0 %v3764
      %v4059 = vpop.f32.mrf.mxu0
      %v4060 = vadd.f32 0.0, %v4059
      %v4061 = vpop.f32.mrf.mxu0
      %v4062 = vadd.f32 0.0, %v4061
      %4063 = vmatmul.bf16.gmra.mxu0 %v3767
      %v4064 = vpop.f32.mrf.mxu0
      %v4065 = vadd.f32 0.0, %v4064
      %v4066 = vpop.f32.mrf.mxu0
      %v4067 = vadd.f32 0.0, %v4066
      %4068 = vmatmul.bf16.gmra.mxu0 %v3770
      %v4069 = vpop.f32.mrf.mxu0
      %v4070 = vadd.f32 0.0, %v4069
      %v4071 = vpop.f32.mrf.mxu0
      %v4072 = vadd.f32 0.0, %v4071
      %4073 = vmatmul.bf16.gmra.mxu0 %v3773
      %v4074 = vpop.f32.mrf.mxu0
      %v4075 = vadd.f32 0.0, %v4074
      %v4076 = vpop.f32.mrf.mxu0
      %v4077 = vadd.f32 0.0, %v4076
      %4078 = vmatmul.bf16.gmra.mxu0 %v3776
      %v4079 = vpop.f32.mrf.mxu0
      %v4080 = vadd.f32 0.0, %v4079
      %v4081 = vpop.f32.mrf.mxu0
      %v4082 = vadd.f32 0.0, %v4081
      %4083 = vmatmul.bf16.gmra.mxu0 %v3779
      %v4084 = vpop.f32.mrf.mxu0
      %v4085 = vadd.f32 0.0, %v4084
      %v4086 = vpop.f32.mrf.mxu0
      %v4087 = vadd.f32 0.0, %v4086
      %4088 = vmatmul.bf16.gmra.mxu0 %v3782
      %v4089 = vpop.f32.mrf.mxu0
      %v4090 = vadd.f32 0.0, %v4089
      %v4091 = vpop.f32.mrf.mxu0
      %v4092 = vadd.f32 0.0, %v4091
      %4093 = vmatmul.bf16.gmra.mxu0 %v3785
      %v4094 = vpop.f32.mrf.mxu0
      %v4095 = vadd.f32 0.0, %v4094
      %v4096 = vpop.f32.mrf.mxu0
      %v4097 = vadd.f32 0.0, %v4096
      %4098 = vmatmul.bf16.gmra.mxu0 %v3788
      %v4099 = vpop.f32.mrf.mxu0
      %v4100 = vadd.f32 0.0, %v4099
      %v4101 = vpop.f32.mrf.mxu0
      %v4102 = vadd.f32 0.0, %v4101
      %4103 = vmatmul.bf16.gmra.mxu0 %v3791
      %v4104 = vpop.f32.mrf.mxu0
      %v4105 = vadd.f32 0.0, %v4104
      %v4106 = vpop.f32.mrf.mxu0
      %v4107 = vadd.f32 0.0, %v4106
      %4108 = vmatmul.bf16.gmra.mxu0 %v3794
      %v4109 = vpop.f32.mrf.mxu0
      %v4110 = vadd.f32 0.0, %v4109
      %v4111 = vpop.f32.mrf.mxu0
      %v4112 = vadd.f32 0.0, %v4111
      %4113 = vmatmul.bf16.gmra.mxu0 %v3797
      %v4114 = vpop.f32.mrf.mxu0
      %v4115 = vadd.f32 0.0, %v4114
      %v4116 = vpop.f32.mrf.mxu0
      %v4117 = vadd.f32 0.0, %v4116
      %4118 = vmatmul.bf16.gmra.mxu0 %v3800
      %v4119 = vpop.f32.mrf.mxu0
      %v4120 = vadd.f32 0.0, %v4119
      %v4121 = vpop.f32.mrf.mxu0
      %v4122 = vadd.f32 0.0, %v4121
      %4123 = vmatmul.bf16.gmra.mxu0 %v3803
      %v4124 = vpop.f32.mrf.mxu0
      %v4125 = vadd.f32 0.0, %v4124
      %v4126 = vpop.f32.mrf.mxu0
      %v4127 = vadd.f32 0.0, %v4126
      %4128 = vmatmul.bf16.gmra.mxu0 %v3806
      %v4129 = vpop.f32.mrf.mxu0
      %v4130 = vadd.f32 0.0, %v4129
      %v4131 = vpop.f32.mrf.mxu0
      %v4132 = vadd.f32 0.0, %v4131
      %4133 = vmatmul.bf16.gmra.mxu0 %v3809
      %v4134 = vpop.f32.mrf.mxu0
      %v4135 = vadd.f32 0.0, %v4134
      %v4136 = vpop.f32.mrf.mxu0
      %v4137 = vadd.f32 0.0, %v4136
      %4138 = vmatmul.bf16.gmra.mxu0 %v3812
      %v4139 = vpop.f32.mrf.mxu0
      %v4140 = vadd.f32 0.0, %v4139
      %v4141 = vpop.f32.mrf.mxu0
      %v4142 = vadd.f32 0.0, %v4141
      %4143 = vmatmul.bf16.gmra.mxu0 %v3815
      %v4144 = vpop.f32.mrf.mxu0
      %v4145 = vadd.f32 0.0, %v4144
      %v4146 = vpop.f32.mrf.mxu0
      %v4147 = vadd.f32 0.0, %v4146
      %4148 = vdwg.mxu0
      %v4149 = vadd.f32 %v1892, %v3830
      %v4150 = vadd.f32 %v1893, %v3832
      %v4151 = vadd.f32 %v1894, %v3835
      %v4152 = vadd.f32 %v1895, %v3837
      %v4153 = vadd.f32 %v1896, %v3840
      %v4154 = vadd.f32 %v1897, %v3842
      %v4155 = vadd.f32 %v1898, %v3845
      %v4156 = vadd.f32 %v1899, %v3847
      %v4157 = vadd.f32 %v1900, %v3850
      %v4158 = vadd.f32 %v1901, %v3852
      %v4159 = vadd.f32 %v1902, %v3855
      %v4160 = vadd.f32 %v1903, %v3857
      %v4161 = vadd.f32 %v1904, %v3860
      %v4162 = vadd.f32 %v1905, %v3862
      %v4163 = vadd.f32 %v1906, %v3865
      %v4164 = vadd.f32 %v1907, %v3867
      %v4165 = vadd.f32 %v1908, %v3870
      %v4166 = vadd.f32 %v1909, %v3872
      %v4167 = vadd.f32 %v1910, %v3875
      %v4168 = vadd.f32 %v1911, %v3877
      %v4169 = vadd.f32 %v1912, %v3880
      %v4170 = vadd.f32 %v1913, %v3882
      %v4171 = vadd.f32 %v1914, %v3885
      %v4172 = vadd.f32 %v1915, %v3887
      %v4173 = vadd.f32 %v1916, %v3890
      %v4174 = vadd.f32 %v1917, %v3892
      %v4175 = vadd.f32 %v1918, %v3895
      %v4176 = vadd.f32 %v1919, %v3897
      %v4177 = vadd.f32 %v1920, %v3900
      %v4178 = vadd.f32 %v1921, %v3902
      %v4179 = vadd.f32 %v1922, %v3905
      %v4180 = vadd.f32 %v1923, %v3907
      %v4181 = vadd.f32 %v1924, %v3910
      %v4182 = vadd.f32 %v1925, %v3912
      %v4183 = vadd.f32 %v1926, %v3915
      %v4184 = vadd.f32 %v1927, %v3917
      %v4185 = vadd.f32 %v1928, %v3920
      %v4186 = vadd.f32 %v1929, %v3922
      %v4187 = vadd.f32 %v1930, %v3925
      %v4188 = vadd.f32 %v1931, %v3927
      %v4189 = vadd.f32 %v1932, %v3930
      %v4190 = vadd.f32 %v1933, %v3932
      %v4191 = vadd.f32 %v1934, %v3935
      %v4192 = vadd.f32 %v1935, %v3937
      %v4193 = vadd.f32 %v1936, %v3940
      %v4194 = vadd.f32 %v1937, %v3942
      %v4195 = vadd.f32 %v1938, %v3945
      %v4196 = vadd.f32 %v1939, %v3947
      %v4197 = vadd.f32 %v1940, %v3950
      %v4198 = vadd.f32 %v1941, %v3952
      %v4199 = vadd.f32 %v1942, %v3955
      %v4200 = vadd.f32 %v1943, %v3957
      %v4201 = vadd.f32 %v1944, %v3960
      %v4202 = vadd.f32 %v1945, %v3962
      %v4203 = vadd.f32 %v1946, %v3965
      %v4204 = vadd.f32 %v1947, %v3967
      %v4205 = vadd.f32 %v1948, %v3970
      %v4206 = vadd.f32 %v1949, %v3972
      %v4207 = vadd.f32 %v1950, %v3975
      %v4208 = vadd.f32 %v1951, %v3977
      %v4209 = vadd.f32 %v1952, %v3980
      %v4210 = vadd.f32 %v1953, %v3982
      %v4211 = vadd.f32 %v1954, %v3985
      %v4212 = vadd.f32 %v1955, %v3987
      %v4213 = vadd.f32 %v1956, %v3990
      %v4214 = vadd.f32 %v1957, %v3992
      %v4215 = vadd.f32 %v1958, %v3995
      %v4216 = vadd.f32 %v1959, %v3997
      %v4217 = vadd.f32 %v1960, %v4000
      %v4218 = vadd.f32 %v1961, %v4002
      %v4219 = vadd.f32 %v1962, %v4005
      %v4220 = vadd.f32 %v1963, %v4007
      %v4221 = vadd.f32 %v1964, %v4010
      %v4222 = vadd.f32 %v1965, %v4012
      %v4223 = vadd.f32 %v1966, %v4015
      %v4224 = vadd.f32 %v1967, %v4017
      %v4225 = vadd.f32 %v1968, %v4020
      %v4226 = vadd.f32 %v1969, %v4022
      %v4227 = vadd.f32 %v1970, %v4025
      %v4228 = vadd.f32 %v1971, %v4027
      %v4229 = vadd.f32 %v1972, %v4030
      %v4230 = vadd.f32 %v1973, %v4032
      %v4231 = vadd.f32 %v1974, %v4035
      %v4232 = vadd.f32 %v1975, %v4037
      %v4233 = vadd.f32 %v1976, %v4040
      %v4234 = vadd.f32 %v1977, %v4042
      %v4235 = vadd.f32 %v1978, %v4045
      %v4236 = vadd.f32 %v1979, %v4047
      %v4237 = vadd.f32 %v1980, %v4050
      %v4238 = vadd.f32 %v1981, %v4052
      %v4239 = vadd.f32 %v1982, %v4055
      %v4240 = vadd.f32 %v1983, %v4057
      %v4241 = vadd.f32 %v1984, %v4060
      %v4242 = vadd.f32 %v1985, %v4062
      %v4243 = vadd.f32 %v1986, %v4065
      %v4244 = vadd.f32 %v1987, %v4067
      %v4245 = vadd.f32 %v1988, %v4070
      %v4246 = vadd.f32 %v1989, %v4072
      %v4247 = vadd.f32 %v1990, %v4075
      %v4248 = vadd.f32 %v1991, %v4077
      %v4249 = vadd.f32 %v1992, %v4080
      %v4250 = vadd.f32 %v1993, %v4082
      %v4251 = vadd.f32 %v1994, %v4085
      %v4252 = vadd.f32 %v1995, %v4087
      %v4253 = vadd.f32 %v1996, %v4090
      %v4254 = vadd.f32 %v1997, %v4092
      %v4255 = vadd.f32 %v1998, %v4095
      %v4256 = vadd.f32 %v1999, %v4097
      %v4257 = vadd.f32 %v2000, %v4100
      %v4258 = vadd.f32 %v2001, %v4102
      %v4259 = vadd.f32 %v2002, %v4105
      %v4260 = vadd.f32 %v2003, %v4107
      %v4261 = vadd.f32 %v2004, %v4110
      %v4262 = vadd.f32 %v2005, %v4112
      %v4263 = vadd.f32 %v2006, %v4115
      %v4264 = vadd.f32 %v2007, %v4117
      %v4265 = vadd.f32 %v2008, %v4120
      %v4266 = vadd.f32 %v2009, %v4122
      %v4267 = vadd.f32 %v2010, %v4125
      %v4268 = vadd.f32 %v2011, %v4127
      %v4269 = vadd.f32 %v2012, %v4130
      %v4270 = vadd.f32 %v2013, %v4132
      %v4271 = vadd.f32 %v2014, %v4135
      %v4272 = vadd.f32 %v2015, %v4137
      %v4273 = vadd.f32 %v2016, %v4140
      %v4274 = vadd.f32 %v2017, %v4142
      %v4275 = vadd.f32 %v2018, %v4145
      %v4276 = vadd.f32 %v2019, %v4147
      %v4278 = vshrl.u32 %v332, 16
      %v4280 = vrot.slane %v4278, 4
      %v4281 = vshll.u32 %v332, 16
      %v4283 = vrot.slane %v4281, 5
      %v4284 = vor.u32 %v4280, %v4283
      %v4285 = vrot.slane %v4284, 4
      %v4287 = vshll.u32 %v333, 16
      %v4289 = vrot.slane %v4287, 5
      %v4290 = vsel %vm2022, %v4285, %v4289
      %v4291 = vshrl.u32 %v333, 16
      %v4293 = vrot.slane %v4291, 4
      %v4294 = vor.u32 %v4293, %v4289
      %v4295 = vrot.slane %v4294, 4
      %v4297 = vshll.u32 %v334, 16
      %v4299 = vrot.slane %v4297, 5
      %v4300 = vsel %vm2022, %v4295, %v4299
      %v4301 = vshrl.u32 %v334, 16
      %v4303 = vrot.slane %v4301, 4
      %v4304 = vor.u32 %v4303, %v4299
      %v4305 = vrot.slane %v4304, 4
      %v4307 = vshll.u32 %v335, 16
      %v4309 = vrot.slane %v4307, 5
      %v4310 = vsel %vm2022, %v4305, %v4309
      %v4311 = vshrl.u32 %v335, 16
      %v4313 = vrot.slane %v4311, 4
      %v4314 = vor.u32 %v4313, %v4309
      %v4315 = vrot.slane %v4314, 4
      %v4317 = vshll.u32 %v336, 16
      %v4319 = vrot.slane %v4317, 5
      %v4320 = vsel %vm2022, %v4315, %v4319
      %s4321 = scalar_lea.vmem %s1, 8
      %v4322 = vld [vmem:[%s4321] sm:$0x3]
      %v4323 = vunpack.c.l.b16 %v4290
      %v4324 = vunpack.c.l.b16 %v4300
      %v4325 = vunpack.c.l.b16 %v4310
      %v4326 = vunpack.c.l.b16 %v4320
      %v4327 = vpack.c.b16 %v4324, %v4323
      %v4328 = vpack.c.b16 %v4326, %v4325
      %v4330 = vsel %vm665, %v4327, 0
      %v4333 = vsel %vm665, %v4328, 0
      %v4336 = vand.u32 %v4322, %v861
      %4338 = vmatpush.bf16.msra.mxu0 0
      %4339 = vmatpush.bf16.msra.mxu0 0
      %4340 = vmatpush.bf16.msra.mxu0 0
      %4341 = vmatpush.bf16.msra.mxu0 0
      %4342 = vmatpush.bf16.msra.mxu0 0
      %4343 = vmatpush.bf16.msra.mxu0 0
      %4344 = vmatpush.bf16.msra.mxu0 0
      %4345 = vmatpush.bf16.msra.mxu0 %v4336
      %4346 = vmatmul.bf16.gmra.mxu0 %v3632
      %v4347 = vpop.f32.mrf.mxu0
      %v4348 = vadd.f32 0.0, %v4347
      %v4349 = vpop.f32.mrf.mxu0
      %v4350 = vadd.f32 0.0, %v4349
      %4351 = vmatmul.bf16.gmra.mxu0 %v3635
      %v4352 = vpop.f32.mrf.mxu0
      %v4353 = vadd.f32 0.0, %v4352
      %v4354 = vpop.f32.mrf.mxu0
      %v4355 = vadd.f32 0.0, %v4354
      %4356 = vmatmul.bf16.gmra.mxu0 %v3638
      %v4357 = vpop.f32.mrf.mxu0
      %v4358 = vadd.f32 0.0, %v4357
      %v4359 = vpop.f32.mrf.mxu0
      %v4360 = vadd.f32 0.0, %v4359
      %4361 = vmatmul.bf16.gmra.mxu0 %v3641
      %v4362 = vpop.f32.mrf.mxu0
      %v4363 = vadd.f32 0.0, %v4362
      %v4364 = vpop.f32.mrf.mxu0
      %v4365 = vadd.f32 0.0, %v4364
      %4366 = vmatmul.bf16.gmra.mxu0 %v3644
      %v4367 = vpop.f32.mrf.mxu0
      %v4368 = vadd.f32 0.0, %v4367
      %v4369 = vpop.f32.mrf.mxu0
      %v4370 = vadd.f32 0.0, %v4369
      %4371 = vmatmul.bf16.gmra.mxu0 %v3647
      %v4372 = vpop.f32.mrf.mxu0
      %v4373 = vadd.f32 0.0, %v4372
      %v4374 = vpop.f32.mrf.mxu0
      %v4375 = vadd.f32 0.0, %v4374
      %4376 = vmatmul.bf16.gmra.mxu0 %v3650
      %v4377 = vpop.f32.mrf.mxu0
      %v4378 = vadd.f32 0.0, %v4377
      %v4379 = vpop.f32.mrf.mxu0
      %v4380 = vadd.f32 0.0, %v4379
      %4381 = vmatmul.bf16.gmra.mxu0 %v3653
      %v4382 = vpop.f32.mrf.mxu0
      %v4383 = vadd.f32 0.0, %v4382
      %v4384 = vpop.f32.mrf.mxu0
      %v4385 = vadd.f32 0.0, %v4384
      %4386 = vmatmul.bf16.gmra.mxu0 %v3656
      %v4387 = vpop.f32.mrf.mxu0
      %v4388 = vadd.f32 0.0, %v4387
      %v4389 = vpop.f32.mrf.mxu0
      %v4390 = vadd.f32 0.0, %v4389
      %4391 = vmatmul.bf16.gmra.mxu0 %v3659
      %v4392 = vpop.f32.mrf.mxu0
      %v4393 = vadd.f32 0.0, %v4392
      %v4394 = vpop.f32.mrf.mxu0
      %v4395 = vadd.f32 0.0, %v4394
      %4396 = vmatmul.bf16.gmra.mxu0 %v3662
      %v4397 = vpop.f32.mrf.mxu0
      %v4398 = vadd.f32 0.0, %v4397
      %v4399 = vpop.f32.mrf.mxu0
      %v4400 = vadd.f32 0.0, %v4399
      %4401 = vmatmul.bf16.gmra.mxu0 %v3665
      %v4402 = vpop.f32.mrf.mxu0
      %v4403 = vadd.f32 0.0, %v4402
      %v4404 = vpop.f32.mrf.mxu0
      %v4405 = vadd.f32 0.0, %v4404
      %4406 = vmatmul.bf16.gmra.mxu0 %v3668
      %v4407 = vpop.f32.mrf.mxu0
      %v4408 = vadd.f32 0.0, %v4407
      %v4409 = vpop.f32.mrf.mxu0
      %v4410 = vadd.f32 0.0, %v4409
      %4411 = vmatmul.bf16.gmra.mxu0 %v3671
      %v4412 = vpop.f32.mrf.mxu0
      %v4413 = vadd.f32 0.0, %v4412
      %v4414 = vpop.f32.mrf.mxu0
      %v4415 = vadd.f32 0.0, %v4414
      %4416 = vmatmul.bf16.gmra.mxu0 %v3674
      %v4417 = vpop.f32.mrf.mxu0
      %v4418 = vadd.f32 0.0, %v4417
      %v4419 = vpop.f32.mrf.mxu0
      %v4420 = vadd.f32 0.0, %v4419
      %4421 = vmatmul.bf16.gmra.mxu0 %v3677
      %v4422 = vpop.f32.mrf.mxu0
      %v4423 = vadd.f32 0.0, %v4422
      %v4424 = vpop.f32.mrf.mxu0
      %v4425 = vadd.f32 0.0, %v4424
      %4426 = vmatmul.bf16.gmra.mxu0 %v3680
      %v4427 = vpop.f32.mrf.mxu0
      %v4428 = vadd.f32 0.0, %v4427
      %v4429 = vpop.f32.mrf.mxu0
      %v4430 = vadd.f32 0.0, %v4429
      %4431 = vmatmul.bf16.gmra.mxu0 %v3683
      %v4432 = vpop.f32.mrf.mxu0
      %v4433 = vadd.f32 0.0, %v4432
      %v4434 = vpop.f32.mrf.mxu0
      %v4435 = vadd.f32 0.0, %v4434
      %4436 = vmatmul.bf16.gmra.mxu0 %v3686
      %v4437 = vpop.f32.mrf.mxu0
      %v4438 = vadd.f32 0.0, %v4437
      %v4439 = vpop.f32.mrf.mxu0
      %v4440 = vadd.f32 0.0, %v4439
      %4441 = vmatmul.bf16.gmra.mxu0 %v3689
      %v4442 = vpop.f32.mrf.mxu0
      %v4443 = vadd.f32 0.0, %v4442
      %v4444 = vpop.f32.mrf.mxu0
      %v4445 = vadd.f32 0.0, %v4444
      %4446 = vmatmul.bf16.gmra.mxu0 %v3692
      %v4447 = vpop.f32.mrf.mxu0
      %v4448 = vadd.f32 0.0, %v4447
      %v4449 = vpop.f32.mrf.mxu0
      %v4450 = vadd.f32 0.0, %v4449
      %4451 = vmatmul.bf16.gmra.mxu0 %v3695
      %v4452 = vpop.f32.mrf.mxu0
      %v4453 = vadd.f32 0.0, %v4452
      %v4454 = vpop.f32.mrf.mxu0
      %v4455 = vadd.f32 0.0, %v4454
      %4456 = vmatmul.bf16.gmra.mxu0 %v3698
      %v4457 = vpop.f32.mrf.mxu0
      %v4458 = vadd.f32 0.0, %v4457
      %v4459 = vpop.f32.mrf.mxu0
      %v4460 = vadd.f32 0.0, %v4459
      %4461 = vmatmul.bf16.gmra.mxu0 %v3701
      %v4462 = vpop.f32.mrf.mxu0
      %v4463 = vadd.f32 0.0, %v4462
      %v4464 = vpop.f32.mrf.mxu0
      %v4465 = vadd.f32 0.0, %v4464
      %4466 = vmatmul.bf16.gmra.mxu0 %v3704
      %v4467 = vpop.f32.mrf.mxu0
      %v4468 = vadd.f32 0.0, %v4467
      %v4469 = vpop.f32.mrf.mxu0
      %v4470 = vadd.f32 0.0, %v4469
      %4471 = vmatmul.bf16.gmra.mxu0 %v3707
      %v4472 = vpop.f32.mrf.mxu0
      %v4473 = vadd.f32 0.0, %v4472
      %v4474 = vpop.f32.mrf.mxu0
      %v4475 = vadd.f32 0.0, %v4474
      %4476 = vmatmul.bf16.gmra.mxu0 %v3710
      %v4477 = vpop.f32.mrf.mxu0
      %v4478 = vadd.f32 0.0, %v4477
      %v4479 = vpop.f32.mrf.mxu0
      %v4480 = vadd.f32 0.0, %v4479
      %4481 = vmatmul.bf16.gmra.mxu0 %v3713
      %v4482 = vpop.f32.mrf.mxu0
      %v4483 = vadd.f32 0.0, %v4482
      %v4484 = vpop.f32.mrf.mxu0
      %v4485 = vadd.f32 0.0, %v4484
      %4486 = vmatmul.bf16.gmra.mxu0 %v3716
      %v4487 = vpop.f32.mrf.mxu0
      %v4488 = vadd.f32 0.0, %v4487
      %v4489 = vpop.f32.mrf.mxu0
      %v4490 = vadd.f32 0.0, %v4489
      %4491 = vmatmul.bf16.gmra.mxu0 %v3719
      %v4492 = vpop.f32.mrf.mxu0
      %v4493 = vadd.f32 0.0, %v4492
      %v4494 = vpop.f32.mrf.mxu0
      %v4495 = vadd.f32 0.0, %v4494
      %4496 = vmatmul.bf16.gmra.mxu0 %v3722
      %v4497 = vpop.f32.mrf.mxu0
      %v4498 = vadd.f32 0.0, %v4497
      %v4499 = vpop.f32.mrf.mxu0
      %v4500 = vadd.f32 0.0, %v4499
      %4501 = vmatmul.bf16.gmra.mxu0 %v3725
      %v4502 = vpop.f32.mrf.mxu0
      %v4503 = vadd.f32 0.0, %v4502
      %v4504 = vpop.f32.mrf.mxu0
      %v4505 = vadd.f32 0.0, %v4504
      %4506 = vmatmul.bf16.gmra.mxu0 %v3728
      %v4507 = vpop.f32.mrf.mxu0
      %v4508 = vadd.f32 0.0, %v4507
      %v4509 = vpop.f32.mrf.mxu0
      %v4510 = vadd.f32 0.0, %v4509
      %4511 = vmatmul.bf16.gmra.mxu0 %v3731
      %v4512 = vpop.f32.mrf.mxu0
      %v4513 = vadd.f32 0.0, %v4512
      %v4514 = vpop.f32.mrf.mxu0
      %v4515 = vadd.f32 0.0, %v4514
      %4516 = vmatmul.bf16.gmra.mxu0 %v3734
      %v4517 = vpop.f32.mrf.mxu0
      %v4518 = vadd.f32 0.0, %v4517
      %v4519 = vpop.f32.mrf.mxu0
      %v4520 = vadd.f32 0.0, %v4519
      %4521 = vmatmul.bf16.gmra.mxu0 %v3737
      %v4522 = vpop.f32.mrf.mxu0
      %v4523 = vadd.f32 0.0, %v4522
      %v4524 = vpop.f32.mrf.mxu0
      %v4525 = vadd.f32 0.0, %v4524
      %4526 = vmatmul.bf16.gmra.mxu0 %v3740
      %v4527 = vpop.f32.mrf.mxu0
      %v4528 = vadd.f32 0.0, %v4527
      %v4529 = vpop.f32.mrf.mxu0
      %v4530 = vadd.f32 0.0, %v4529
      %4531 = vmatmul.bf16.gmra.mxu0 %v3743
      %v4532 = vpop.f32.mrf.mxu0
      %v4533 = vadd.f32 0.0, %v4532
      %v4534 = vpop.f32.mrf.mxu0
      %v4535 = vadd.f32 0.0, %v4534
      %4536 = vmatmul.bf16.gmra.mxu0 %v3746
      %v4537 = vpop.f32.mrf.mxu0
      %v4538 = vadd.f32 0.0, %v4537
      %v4539 = vpop.f32.mrf.mxu0
      %v4540 = vadd.f32 0.0, %v4539
      %4541 = vmatmul.bf16.gmra.mxu0 %v3749
      %v4542 = vpop.f32.mrf.mxu0
      %v4543 = vadd.f32 0.0, %v4542
      %v4544 = vpop.f32.mrf.mxu0
      %v4545 = vadd.f32 0.0, %v4544
      %4546 = vmatmul.bf16.gmra.mxu0 %v3752
      %v4547 = vpop.f32.mrf.mxu0
      %v4548 = vadd.f32 0.0, %v4547
      %v4549 = vpop.f32.mrf.mxu0
      %v4550 = vadd.f32 0.0, %v4549
      %4551 = vmatmul.bf16.gmra.mxu0 %v3755
      %v4552 = vpop.f32.mrf.mxu0
      %v4553 = vadd.f32 0.0, %v4552
      %v4554 = vpop.f32.mrf.mxu0
      %v4555 = vadd.f32 0.0, %v4554
      %4556 = vmatmul.bf16.gmra.mxu0 %v3758
      %v4557 = vpop.f32.mrf.mxu0
      %v4558 = vadd.f32 0.0, %v4557
      %v4559 = vpop.f32.mrf.mxu0
      %v4560 = vadd.f32 0.0, %v4559
      %4561 = vmatmul.bf16.gmra.mxu0 %v3761
      %v4562 = vpop.f32.mrf.mxu0
      %v4563 = vadd.f32 0.0, %v4562
      %v4564 = vpop.f32.mrf.mxu0
      %v4565 = vadd.f32 0.0, %v4564
      %4566 = vmatmul.bf16.gmra.mxu0 %v3764
      %v4567 = vpop.f32.mrf.mxu0
      %v4568 = vadd.f32 0.0, %v4567
      %v4569 = vpop.f32.mrf.mxu0
      %v4570 = vadd.f32 0.0, %v4569
      %4571 = vmatmul.bf16.gmra.mxu0 %v3767
      %v4572 = vpop.f32.mrf.mxu0
      %v4573 = vadd.f32 0.0, %v4572
      %v4574 = vpop.f32.mrf.mxu0
      %v4575 = vadd.f32 0.0, %v4574
      %4576 = vmatmul.bf16.gmra.mxu0 %v3770
      %v4577 = vpop.f32.mrf.mxu0
      %v4578 = vadd.f32 0.0, %v4577
      %v4579 = vpop.f32.mrf.mxu0
      %v4580 = vadd.f32 0.0, %v4579
      %4581 = vmatmul.bf16.gmra.mxu0 %v3773
      %v4582 = vpop.f32.mrf.mxu0
      %v4583 = vadd.f32 0.0, %v4582
      %v4584 = vpop.f32.mrf.mxu0
      %v4585 = vadd.f32 0.0, %v4584
      %4586 = vmatmul.bf16.gmra.mxu0 %v3776
      %v4587 = vpop.f32.mrf.mxu0
      %v4588 = vadd.f32 0.0, %v4587
      %v4589 = vpop.f32.mrf.mxu0
      %v4590 = vadd.f32 0.0, %v4589
      %4591 = vmatmul.bf16.gmra.mxu0 %v3779
      %v4592 = vpop.f32.mrf.mxu0
      %v4593 = vadd.f32 0.0, %v4592
      %v4594 = vpop.f32.mrf.mxu0
      %v4595 = vadd.f32 0.0, %v4594
      %4596 = vmatmul.bf16.gmra.mxu0 %v3782
      %v4597 = vpop.f32.mrf.mxu0
      %v4598 = vadd.f32 0.0, %v4597
      %v4599 = vpop.f32.mrf.mxu0
      %v4600 = vadd.f32 0.0, %v4599
      %4601 = vmatmul.bf16.gmra.mxu0 %v3785
      %v4602 = vpop.f32.mrf.mxu0
      %v4603 = vadd.f32 0.0, %v4602
      %v4604 = vpop.f32.mrf.mxu0
      %v4605 = vadd.f32 0.0, %v4604
      %4606 = vmatmul.bf16.gmra.mxu0 %v3788
      %v4607 = vpop.f32.mrf.mxu0
      %v4608 = vadd.f32 0.0, %v4607
      %v4609 = vpop.f32.mrf.mxu0
      %v4610 = vadd.f32 0.0, %v4609
      %4611 = vmatmul.bf16.gmra.mxu0 %v3791
      %v4612 = vpop.f32.mrf.mxu0
      %v4613 = vadd.f32 0.0, %v4612
      %v4614 = vpop.f32.mrf.mxu0
      %v4615 = vadd.f32 0.0, %v4614
      %4616 = vmatmul.bf16.gmra.mxu0 %v3794
      %v4617 = vpop.f32.mrf.mxu0
      %v4618 = vadd.f32 0.0, %v4617
      %v4619 = vpop.f32.mrf.mxu0
      %v4620 = vadd.f32 0.0, %v4619
      %4621 = vmatmul.bf16.gmra.mxu0 %v3797
      %v4622 = vpop.f32.mrf.mxu0
      %v4623 = vadd.f32 0.0, %v4622
      %v4624 = vpop.f32.mrf.mxu0
      %v4625 = vadd.f32 0.0, %v4624
      %4626 = vmatmul.bf16.gmra.mxu0 %v3800
      %v4627 = vpop.f32.mrf.mxu0
      %v4628 = vadd.f32 0.0, %v4627
      %v4629 = vpop.f32.mrf.mxu0
      %v4630 = vadd.f32 0.0, %v4629
      %4631 = vmatmul.bf16.gmra.mxu0 %v3803
      %v4632 = vpop.f32.mrf.mxu0
      %v4633 = vadd.f32 0.0, %v4632
      %v4634 = vpop.f32.mrf.mxu0
      %v4635 = vadd.f32 0.0, %v4634
      %4636 = vmatmul.bf16.gmra.mxu0 %v3806
      %v4637 = vpop.f32.mrf.mxu0
      %v4638 = vadd.f32 0.0, %v4637
      %v4639 = vpop.f32.mrf.mxu0
      %v4640 = vadd.f32 0.0, %v4639
      %4641 = vmatmul.bf16.gmra.mxu0 %v3809
      %v4642 = vpop.f32.mrf.mxu0
      %v4643 = vadd.f32 0.0, %v4642
      %v4644 = vpop.f32.mrf.mxu0
      %v4645 = vadd.f32 0.0, %v4644
      %4646 = vmatmul.bf16.gmra.mxu0 %v3812
      %v4647 = vpop.f32.mrf.mxu0
      %v4648 = vadd.f32 0.0, %v4647
      %v4649 = vpop.f32.mrf.mxu0
      %v4650 = vadd.f32 0.0, %v4649
      %4651 = vmatmul.bf16.gmra.mxu0 %v3815
      %v4652 = vpop.f32.mrf.mxu0
      %v4653 = vadd.f32 0.0, %v4652
      %v4654 = vpop.f32.mrf.mxu0
      %v4655 = vadd.f32 0.0, %v4654
      %4656 = vmatmul.bf16.gmra.mxu0 %v4330
      %v4657 = vpop.f32.mrf.mxu0
      %v4658 = vadd.f32 0.0, %v4657
      %v4659 = vpop.f32.mrf.mxu0
      %v4660 = vadd.f32 0.0, %v4659
      %4661 = vmatmul.bf16.gmra.mxu0 %v4333
      %v4662 = vpop.f32.mrf.mxu0
      %v4663 = vadd.f32 0.0, %v4662
      %v4664 = vpop.f32.mrf.mxu0
      %v4665 = vadd.f32 0.0, %v4664
      %4666 = vdwg.mxu0
      %v4667 = vadd.f32 %v4149, %v4348
      %v4668 = vadd.f32 %v4150, %v4350
      %v4669 = vadd.f32 %v4151, %v4353
      %v4670 = vadd.f32 %v4152, %v4355
      %v4671 = vadd.f32 %v4153, %v4358
      %v4672 = vadd.f32 %v4154, %v4360
      %v4673 = vadd.f32 %v4155, %v4363
      %v4674 = vadd.f32 %v4156, %v4365
      %v4675 = vadd.f32 %v4157, %v4368
      %v4676 = vadd.f32 %v4158, %v4370
      %v4677 = vadd.f32 %v4159, %v4373
      %v4678 = vadd.f32 %v4160, %v4375
      %v4679 = vadd.f32 %v4161, %v4378
      %v4680 = vadd.f32 %v4162, %v4380
      %v4681 = vadd.f32 %v4163, %v4383
      %v4682 = vadd.f32 %v4164, %v4385
      %v4683 = vadd.f32 %v4165, %v4388
      %v4684 = vadd.f32 %v4166, %v4390
      %v4685 = vadd.f32 %v4167, %v4393
      %v4686 = vadd.f32 %v4168, %v4395
      %v4687 = vadd.f32 %v4169, %v4398
      %v4688 = vadd.f32 %v4170, %v4400
      %v4689 = vadd.f32 %v4171, %v4403
      %v4690 = vadd.f32 %v4172, %v4405
      %v4691 = vadd.f32 %v4173, %v4408
      %v4692 = vadd.f32 %v4174, %v4410
      %v4693 = vadd.f32 %v4175, %v4413
      %v4694 = vadd.f32 %v4176, %v4415
      %v4695 = vadd.f32 %v4177, %v4418
      %v4696 = vadd.f32 %v4178, %v4420
      %v4697 = vadd.f32 %v4179, %v4423
      %v4698 = vadd.f32 %v4180, %v4425
      %v4699 = vadd.f32 %v4181, %v4428
      %v4700 = vadd.f32 %v4182, %v4430
      %v4701 = vadd.f32 %v4183, %v4433
      %v4702 = vadd.f32 %v4184, %v4435
      %v4703 = vadd.f32 %v4185, %v4438
      %v4704 = vadd.f32 %v4186, %v4440
      %v4705 = vadd.f32 %v4187, %v4443
      %v4706 = vadd.f32 %v4188, %v4445
      %v4707 = vadd.f32 %v4189, %v4448
      %v4708 = vadd.f32 %v4190, %v4450
      %v4709 = vadd.f32 %v4191, %v4453
      %v4710 = vadd.f32 %v4192, %v4455
      %v4711 = vadd.f32 %v4193, %v4458
      %v4712 = vadd.f32 %v4194, %v4460
      %v4713 = vadd.f32 %v4195, %v4463
      %v4714 = vadd.f32 %v4196, %v4465
      %v4715 = vadd.f32 %v4197, %v4468
      %v4716 = vadd.f32 %v4198, %v4470
      %v4717 = vadd.f32 %v4199, %v4473
      %v4718 = vadd.f32 %v4200, %v4475
      %v4719 = vadd.f32 %v4201, %v4478
      %v4720 = vadd.f32 %v4202, %v4480
      %v4721 = vadd.f32 %v4203, %v4483
      %v4722 = vadd.f32 %v4204, %v4485
      %v4723 = vadd.f32 %v4205, %v4488
      %v4724 = vadd.f32 %v4206, %v4490
      %v4725 = vadd.f32 %v4207, %v4493
      %v4726 = vadd.f32 %v4208, %v4495
      %v4727 = vadd.f32 %v4209, %v4498
      %v4728 = vadd.f32 %v4210, %v4500
      %v4729 = vadd.f32 %v4211, %v4503
      %v4730 = vadd.f32 %v4212, %v4505
      %v4731 = vadd.f32 %v4213, %v4508
      %v4732 = vadd.f32 %v4214, %v4510
      %v4733 = vadd.f32 %v4215, %v4513
      %v4734 = vadd.f32 %v4216, %v4515
      %v4735 = vadd.f32 %v4217, %v4518
      %v4736 = vadd.f32 %v4218, %v4520
      %v4737 = vadd.f32 %v4219, %v4523
      %v4738 = vadd.f32 %v4220, %v4525
      %v4739 = vadd.f32 %v4221, %v4528
      %v4740 = vadd.f32 %v4222, %v4530
      %v4741 = vadd.f32 %v4223, %v4533
      %v4742 = vadd.f32 %v4224, %v4535
      %v4743 = vadd.f32 %v4225, %v4538
      %v4744 = vadd.f32 %v4226, %v4540
      %v4745 = vadd.f32 %v4227, %v4543
      %v4746 = vadd.f32 %v4228, %v4545
      %v4747 = vadd.f32 %v4229, %v4548
      %v4748 = vadd.f32 %v4230, %v4550
      %v4749 = vadd.f32 %v4231, %v4553
      %v4750 = vadd.f32 %v4232, %v4555
      %v4751 = vadd.f32 %v4233, %v4558
      %v4752 = vadd.f32 %v4234, %v4560
      %v4753 = vadd.f32 %v4235, %v4563
      %v4754 = vadd.f32 %v4236, %v4565
      %v4755 = vadd.f32 %v4237, %v4568
      %v4756 = vadd.f32 %v4238, %v4570
      %v4757 = vadd.f32 %v4239, %v4573
      %v4758 = vadd.f32 %v4240, %v4575
      %v4759 = vadd.f32 %v4241, %v4578
      %v4760 = vadd.f32 %v4242, %v4580
      %v4761 = vadd.f32 %v4243, %v4583
      %v4762 = vadd.f32 %v4244, %v4585
      %v4763 = vadd.f32 %v4245, %v4588
      %v4764 = vadd.f32 %v4246, %v4590
      %v4765 = vadd.f32 %v4247, %v4593
      %v4766 = vadd.f32 %v4248, %v4595
      %v4767 = vadd.f32 %v4249, %v4598
      %v4768 = vadd.f32 %v4250, %v4600
      %v4769 = vadd.f32 %v4251, %v4603
      %v4770 = vadd.f32 %v4252, %v4605
      %v4771 = vadd.f32 %v4253, %v4608
      %v4772 = vadd.f32 %v4254, %v4610
      %v4773 = vadd.f32 %v4255, %v4613
      %v4774 = vadd.f32 %v4256, %v4615
      %v4775 = vadd.f32 %v4257, %v4618
      %v4776 = vadd.f32 %v4258, %v4620
      %v4777 = vadd.f32 %v4259, %v4623
      %v4778 = vadd.f32 %v4260, %v4625
      %v4779 = vadd.f32 %v4261, %v4628
      %v4780 = vadd.f32 %v4262, %v4630
      %v4781 = vadd.f32 %v4263, %v4633
      %v4782 = vadd.f32 %v4264, %v4635
      %v4783 = vadd.f32 %v4265, %v4638
      %v4784 = vadd.f32 %v4266, %v4640
      %v4785 = vadd.f32 %v4267, %v4643
      %v4786 = vadd.f32 %v4268, %v4645
      %v4787 = vadd.f32 %v4269, %v4648
      %v4788 = vadd.f32 %v4270, %v4650
      %v4789 = vadd.f32 %v4271, %v4653
      %v4790 = vadd.f32 %v4272, %v4655
      %v4791 = vadd.f32 %v4273, %v4658
      %v4792 = vadd.f32 %v4274, %v4660
      %v4793 = vadd.f32 %v4275, %v4663
      %v4794 = vadd.f32 %v4276, %v4665
      %v4796 = vshrl.u32 %v337, 16
      %v4798 = vrot.slane %v4796, 4
      %v4799 = vshll.u32 %v337, 16
      %v4801 = vrot.slane %v4799, 5
      %v4802 = vor.u32 %v4798, %v4801
      %v4803 = vrot.slane %v4802, 4
      %v4805 = vshll.u32 %v338, 16
      %v4807 = vrot.slane %v4805, 5
      %v4808 = vsel %vm2022, %v4803, %v4807
      %v4809 = vshrl.u32 %v338, 16
      %v4811 = vrot.slane %v4809, 4
      %v4812 = vor.u32 %v4811, %v4807
      %v4813 = vrot.slane %v4812, 4
      %v4815 = vshll.u32 %v339, 16
      %v4817 = vrot.slane %v4815, 5
      %v4818 = vsel %vm2022, %v4813, %v4817
      %v4819 = vshrl.u32 %v339, 16
      %v4821 = vrot.slane %v4819, 4
      %v4822 = vor.u32 %v4821, %v4817
      %v4823 = vrot.slane %v4822, 4
      %v4825 = vshll.u32 %v340, 16
      %v4827 = vrot.slane %v4825, 5
      %v4828 = vsel %vm2022, %v4823, %v4827
      %v4829 = vshrl.u32 %v340, 16
      %v4831 = vrot.slane %v4829, 4
      %v4832 = vor.u32 %v4831, %v4827
      %v4833 = vrot.slane %v4832, 4
      %v4835 = vshll.u32 %v341, 16
      %v4837 = vrot.slane %v4835, 5
      %v4838 = vsel %vm2022, %v4833, %v4837
      %s4839 = scalar_lea.vmem %s1, 14
      %v4840 = vld [vmem:[%s4839] sm:$0x3]
      %v4841 = vunpack.c.l.b16 %v4808
      %v4842 = vunpack.c.l.b16 %v4818
      %v4843 = vunpack.c.l.b16 %v4828
      %v4844 = vunpack.c.l.b16 %v4838
      %v4845 = vpack.c.b16 %v4842, %v4841
      %v4846 = vpack.c.b16 %v4844, %v4843
      %v4848 = vsel %vm665, %v4845, 0
      %v4851 = vsel %vm665, %v4846, 0
      %v4854 = vand.u32 %v4840, %v861
      %4856 = vmatpush.bf16.msra.mxu0 0
      %4857 = vmatpush.bf16.msra.mxu0 0
      %4858 = vmatpush.bf16.msra.mxu0 0
      %4859 = vmatpush.bf16.msra.mxu0 0
      %4860 = vmatpush.bf16.msra.mxu0 0
      %4861 = vmatpush.bf16.msra.mxu0 0
      %4862 = vmatpush.bf16.msra.mxu0 0
      %4863 = vmatpush.bf16.msra.mxu0 %v4854
      %4864 = vmatmul.bf16.gmra.mxu0 %v3638
      %v4865 = vpop.f32.mrf.mxu0
      %v4866 = vadd.f32 0.0, %v4865
      %v4867 = vpop.f32.mrf.mxu0
      %v4868 = vadd.f32 0.0, %v4867
      %4869 = vmatmul.bf16.gmra.mxu0 %v3641
      %v4870 = vpop.f32.mrf.mxu0
      %v4871 = vadd.f32 0.0, %v4870
      %v4872 = vpop.f32.mrf.mxu0
      %v4873 = vadd.f32 0.0, %v4872
      %4874 = vmatmul.bf16.gmra.mxu0 %v3644
      %v4875 = vpop.f32.mrf.mxu0
      %v4876 = vadd.f32 0.0, %v4875
      %v4877 = vpop.f32.mrf.mxu0
      %v4878 = vadd.f32 0.0, %v4877
      %4879 = vmatmul.bf16.gmra.mxu0 %v3647
      %v4880 = vpop.f32.mrf.mxu0
      %v4881 = vadd.f32 0.0, %v4880
      %v4882 = vpop.f32.mrf.mxu0
      %v4883 = vadd.f32 0.0, %v4882
      %4884 = vmatmul.bf16.gmra.mxu0 %v3650
      %v4885 = vpop.f32.mrf.mxu0
      %v4886 = vadd.f32 0.0, %v4885
      %v4887 = vpop.f32.mrf.mxu0
      %v4888 = vadd.f32 0.0, %v4887
      %4889 = vmatmul.bf16.gmra.mxu0 %v3653
      %v4890 = vpop.f32.mrf.mxu0
      %v4891 = vadd.f32 0.0, %v4890
      %v4892 = vpop.f32.mrf.mxu0
      %v4893 = vadd.f32 0.0, %v4892
      %4894 = vmatmul.bf16.gmra.mxu0 %v3656
      %v4895 = vpop.f32.mrf.mxu0
      %v4896 = vadd.f32 0.0, %v4895
      %v4897 = vpop.f32.mrf.mxu0
      %v4898 = vadd.f32 0.0, %v4897
      %4899 = vmatmul.bf16.gmra.mxu0 %v3659
      %v4900 = vpop.f32.mrf.mxu0
      %v4901 = vadd.f32 0.0, %v4900
      %v4902 = vpop.f32.mrf.mxu0
      %v4903 = vadd.f32 0.0, %v4902
      %4904 = vmatmul.bf16.gmra.mxu0 %v3662
      %v4905 = vpop.f32.mrf.mxu0
      %v4906 = vadd.f32 0.0, %v4905
      %v4907 = vpop.f32.mrf.mxu0
      %v4908 = vadd.f32 0.0, %v4907
      %4909 = vmatmul.bf16.gmra.mxu0 %v3665
      %v4910 = vpop.f32.mrf.mxu0
      %v4911 = vadd.f32 0.0, %v4910
      %v4912 = vpop.f32.mrf.mxu0
      %v4913 = vadd.f32 0.0, %v4912
      %4914 = vmatmul.bf16.gmra.mxu0 %v3668
      %v4915 = vpop.f32.mrf.mxu0
      %v4916 = vadd.f32 0.0, %v4915
      %v4917 = vpop.f32.mrf.mxu0
      %v4918 = vadd.f32 0.0, %v4917
      %4919 = vmatmul.bf16.gmra.mxu0 %v3671
      %v4920 = vpop.f32.mrf.mxu0
      %v4921 = vadd.f32 0.0, %v4920
      %v4922 = vpop.f32.mrf.mxu0
      %v4923 = vadd.f32 0.0, %v4922
      %4924 = vmatmul.bf16.gmra.mxu0 %v3674
      %v4925 = vpop.f32.mrf.mxu0
      %v4926 = vadd.f32 0.0, %v4925
      %v4927 = vpop.f32.mrf.mxu0
      %v4928 = vadd.f32 0.0, %v4927
      %4929 = vmatmul.bf16.gmra.mxu0 %v3677
      %v4930 = vpop.f32.mrf.mxu0
      %v4931 = vadd.f32 0.0, %v4930
      %v4932 = vpop.f32.mrf.mxu0
      %v4933 = vadd.f32 0.0, %v4932
      %4934 = vmatmul.bf16.gmra.mxu0 %v3680
      %v4935 = vpop.f32.mrf.mxu0
      %v4936 = vadd.f32 0.0, %v4935
      %v4937 = vpop.f32.mrf.mxu0
      %v4938 = vadd.f32 0.0, %v4937
      %4939 = vmatmul.bf16.gmra.mxu0 %v3683
      %v4940 = vpop.f32.mrf.mxu0
      %v4941 = vadd.f32 0.0, %v4940
      %v4942 = vpop.f32.mrf.mxu0
      %v4943 = vadd.f32 0.0, %v4942
      %4944 = vmatmul.bf16.gmra.mxu0 %v3686
      %v4945 = vpop.f32.mrf.mxu0
      %v4946 = vadd.f32 0.0, %v4945
      %v4947 = vpop.f32.mrf.mxu0
      %v4948 = vadd.f32 0.0, %v4947
      %4949 = vmatmul.bf16.gmra.mxu0 %v3689
      %v4950 = vpop.f32.mrf.mxu0
      %v4951 = vadd.f32 0.0, %v4950
      %v4952 = vpop.f32.mrf.mxu0
      %v4953 = vadd.f32 0.0, %v4952
      %4954 = vmatmul.bf16.gmra.mxu0 %v3692
      %v4955 = vpop.f32.mrf.mxu0
      %v4956 = vadd.f32 0.0, %v4955
      %v4957 = vpop.f32.mrf.mxu0
      %v4958 = vadd.f32 0.0, %v4957
      %4959 = vmatmul.bf16.gmra.mxu0 %v3695
      %v4960 = vpop.f32.mrf.mxu0
      %v4961 = vadd.f32 0.0, %v4960
      %v4962 = vpop.f32.mrf.mxu0
      %v4963 = vadd.f32 0.0, %v4962
      %4964 = vmatmul.bf16.gmra.mxu0 %v3698
      %v4965 = vpop.f32.mrf.mxu0
      %v4966 = vadd.f32 0.0, %v4965
      %v4967 = vpop.f32.mrf.mxu0
      %v4968 = vadd.f32 0.0, %v4967
      %4969 = vmatmul.bf16.gmra.mxu0 %v3701
      %v4970 = vpop.f32.mrf.mxu0
      %v4971 = vadd.f32 0.0, %v4970
      %v4972 = vpop.f32.mrf.mxu0
      %v4973 = vadd.f32 0.0, %v4972
      %4974 = vmatmul.bf16.gmra.mxu0 %v3704
      %v4975 = vpop.f32.mrf.mxu0
      %v4976 = vadd.f32 0.0, %v4975
      %v4977 = vpop.f32.mrf.mxu0
      %v4978 = vadd.f32 0.0, %v4977
      %4979 = vmatmul.bf16.gmra.mxu0 %v3707
      %v4980 = vpop.f32.mrf.mxu0
      %v4981 = vadd.f32 0.0, %v4980
      %v4982 = vpop.f32.mrf.mxu0
      %v4983 = vadd.f32 0.0, %v4982
      %4984 = vmatmul.bf16.gmra.mxu0 %v3710
      %v4985 = vpop.f32.mrf.mxu0
      %v4986 = vadd.f32 0.0, %v4985
      %v4987 = vpop.f32.mrf.mxu0
      %v4988 = vadd.f32 0.0, %v4987
      %4989 = vmatmul.bf16.gmra.mxu0 %v3713
      %v4990 = vpop.f32.mrf.mxu0
      %v4991 = vadd.f32 0.0, %v4990
      %v4992 = vpop.f32.mrf.mxu0
      %v4993 = vadd.f32 0.0, %v4992
      %4994 = vmatmul.bf16.gmra.mxu0 %v3716
      %v4995 = vpop.f32.mrf.mxu0
      %v4996 = vadd.f32 0.0, %v4995
      %v4997 = vpop.f32.mrf.mxu0
      %v4998 = vadd.f32 0.0, %v4997
      %4999 = vmatmul.bf16.gmra.mxu0 %v3719
      %v5000 = vpop.f32.mrf.mxu0
      %v5001 = vadd.f32 0.0, %v5000
      %v5002 = vpop.f32.mrf.mxu0
      %v5003 = vadd.f32 0.0, %v5002
      %5004 = vmatmul.bf16.gmra.mxu0 %v3722
      %v5005 = vpop.f32.mrf.mxu0
      %v5006 = vadd.f32 0.0, %v5005
      %v5007 = vpop.f32.mrf.mxu0
      %v5008 = vadd.f32 0.0, %v5007
      %5009 = vmatmul.bf16.gmra.mxu0 %v3725
      %v5010 = vpop.f32.mrf.mxu0
      %v5011 = vadd.f32 0.0, %v5010
      %v5012 = vpop.f32.mrf.mxu0
      %v5013 = vadd.f32 0.0, %v5012
      %5014 = vmatmul.bf16.gmra.mxu0 %v3728
      %v5015 = vpop.f32.mrf.mxu0
      %v5016 = vadd.f32 0.0, %v5015
      %v5017 = vpop.f32.mrf.mxu0
      %v5018 = vadd.f32 0.0, %v5017
      %5019 = vmatmul.bf16.gmra.mxu0 %v3731
      %v5020 = vpop.f32.mrf.mxu0
      %v5021 = vadd.f32 0.0, %v5020
      %v5022 = vpop.f32.mrf.mxu0
      %v5023 = vadd.f32 0.0, %v5022
      %5024 = vmatmul.bf16.gmra.mxu0 %v3734
      %v5025 = vpop.f32.mrf.mxu0
      %v5026 = vadd.f32 0.0, %v5025
      %v5027 = vpop.f32.mrf.mxu0
      %v5028 = vadd.f32 0.0, %v5027
      %5029 = vmatmul.bf16.gmra.mxu0 %v3737
      %v5030 = vpop.f32.mrf.mxu0
      %v5031 = vadd.f32 0.0, %v5030
      %v5032 = vpop.f32.mrf.mxu0
      %v5033 = vadd.f32 0.0, %v5032
      %5034 = vmatmul.bf16.gmra.mxu0 %v3740
      %v5035 = vpop.f32.mrf.mxu0
      %v5036 = vadd.f32 0.0, %v5035
      %v5037 = vpop.f32.mrf.mxu0
      %v5038 = vadd.f32 0.0, %v5037
      %5039 = vmatmul.bf16.gmra.mxu0 %v3743
      %v5040 = vpop.f32.mrf.mxu0
      %v5041 = vadd.f32 0.0, %v5040
      %v5042 = vpop.f32.mrf.mxu0
      %v5043 = vadd.f32 0.0, %v5042
      %5044 = vmatmul.bf16.gmra.mxu0 %v3746
      %v5045 = vpop.f32.mrf.mxu0
      %v5046 = vadd.f32 0.0, %v5045
      %v5047 = vpop.f32.mrf.mxu0
      %v5048 = vadd.f32 0.0, %v5047
      %5049 = vmatmul.bf16.gmra.mxu0 %v3749
      %v5050 = vpop.f32.mrf.mxu0
      %v5051 = vadd.f32 0.0, %v5050
      %v5052 = vpop.f32.mrf.mxu0
      %v5053 = vadd.f32 0.0, %v5052
      %5054 = vmatmul.bf16.gmra.mxu0 %v3752
      %v5055 = vpop.f32.mrf.mxu0
      %v5056 = vadd.f32 0.0, %v5055
      %v5057 = vpop.f32.mrf.mxu0
      %v5058 = vadd.f32 0.0, %v5057
      %5059 = vmatmul.bf16.gmra.mxu0 %v3755
      %v5060 = vpop.f32.mrf.mxu0
      %v5061 = vadd.f32 0.0, %v5060
      %v5062 = vpop.f32.mrf.mxu0
      %v5063 = vadd.f32 0.0, %v5062
      %5064 = vmatmul.bf16.gmra.mxu0 %v3758
      %v5065 = vpop.f32.mrf.mxu0
      %v5066 = vadd.f32 0.0, %v5065
      %v5067 = vpop.f32.mrf.mxu0
      %v5068 = vadd.f32 0.0, %v5067
      %5069 = vmatmul.bf16.gmra.mxu0 %v3761
      %v5070 = vpop.f32.mrf.mxu0
      %v5071 = vadd.f32 0.0, %v5070
      %v5072 = vpop.f32.mrf.mxu0
      %v5073 = vadd.f32 0.0, %v5072
      %5074 = vmatmul.bf16.gmra.mxu0 %v3764
      %v5075 = vpop.f32.mrf.mxu0
      %v5076 = vadd.f32 0.0, %v5075
      %v5077 = vpop.f32.mrf.mxu0
      %v5078 = vadd.f32 0.0, %v5077
      %5079 = vmatmul.bf16.gmra.mxu0 %v3767
      %v5080 = vpop.f32.mrf.mxu0
      %v5081 = vadd.f32 0.0, %v5080
      %v5082 = vpop.f32.mrf.mxu0
      %v5083 = vadd.f32 0.0, %v5082
      %5084 = vmatmul.bf16.gmra.mxu0 %v3770
      %v5085 = vpop.f32.mrf.mxu0
      %v5086 = vadd.f32 0.0, %v5085
      %v5087 = vpop.f32.mrf.mxu0
      %v5088 = vadd.f32 0.0, %v5087
      %5089 = vmatmul.bf16.gmra.mxu0 %v3773
      %v5090 = vpop.f32.mrf.mxu0
      %v5091 = vadd.f32 0.0, %v5090
      %v5092 = vpop.f32.mrf.mxu0
      %v5093 = vadd.f32 0.0, %v5092
      %5094 = vmatmul.bf16.gmra.mxu0 %v3776
      %v5095 = vpop.f32.mrf.mxu0
      %v5096 = vadd.f32 0.0, %v5095
      %v5097 = vpop.f32.mrf.mxu0
      %v5098 = vadd.f32 0.0, %v5097
      %5099 = vmatmul.bf16.gmra.mxu0 %v3779
      %v5100 = vpop.f32.mrf.mxu0
      %v5101 = vadd.f32 0.0, %v5100
      %v5102 = vpop.f32.mrf.mxu0
      %v5103 = vadd.f32 0.0, %v5102
      %5104 = vmatmul.bf16.gmra.mxu0 %v3782
      %v5105 = vpop.f32.mrf.mxu0
      %v5106 = vadd.f32 0.0, %v5105
      %v5107 = vpop.f32.mrf.mxu0
      %v5108 = vadd.f32 0.0, %v5107
      %5109 = vmatmul.bf16.gmra.mxu0 %v3785
      %v5110 = vpop.f32.mrf.mxu0
      %v5111 = vadd.f32 0.0, %v5110
      %v5112 = vpop.f32.mrf.mxu0
      %v5113 = vadd.f32 0.0, %v5112
      %5114 = vmatmul.bf16.gmra.mxu0 %v3788
      %v5115 = vpop.f32.mrf.mxu0
      %v5116 = vadd.f32 0.0, %v5115
      %v5117 = vpop.f32.mrf.mxu0
      %v5118 = vadd.f32 0.0, %v5117
      %5119 = vmatmul.bf16.gmra.mxu0 %v3791
      %v5120 = vpop.f32.mrf.mxu0
      %v5121 = vadd.f32 0.0, %v5120
      %v5122 = vpop.f32.mrf.mxu0
      %v5123 = vadd.f32 0.0, %v5122
      %5124 = vmatmul.bf16.gmra.mxu0 %v3794
      %v5125 = vpop.f32.mrf.mxu0
      %v5126 = vadd.f32 0.0, %v5125
      %v5127 = vpop.f32.mrf.mxu0
      %v5128 = vadd.f32 0.0, %v5127
      %5129 = vmatmul.bf16.gmra.mxu0 %v3797
      %v5130 = vpop.f32.mrf.mxu0
      %v5131 = vadd.f32 0.0, %v5130
      %v5132 = vpop.f32.mrf.mxu0
      %v5133 = vadd.f32 0.0, %v5132
      %5134 = vmatmul.bf16.gmra.mxu0 %v3800
      %v5135 = vpop.f32.mrf.mxu0
      %v5136 = vadd.f32 0.0, %v5135
      %v5137 = vpop.f32.mrf.mxu0
      %v5138 = vadd.f32 0.0, %v5137
      %5139 = vmatmul.bf16.gmra.mxu0 %v3803
      %v5140 = vpop.f32.mrf.mxu0
      %v5141 = vadd.f32 0.0, %v5140
      %v5142 = vpop.f32.mrf.mxu0
      %v5143 = vadd.f32 0.0, %v5142
      %5144 = vmatmul.bf16.gmra.mxu0 %v3806
      %v5145 = vpop.f32.mrf.mxu0
      %v5146 = vadd.f32 0.0, %v5145
      %v5147 = vpop.f32.mrf.mxu0
      %v5148 = vadd.f32 0.0, %v5147
      %5149 = vmatmul.bf16.gmra.mxu0 %v3809
      %v5150 = vpop.f32.mrf.mxu0
      %v5151 = vadd.f32 0.0, %v5150
      %v5152 = vpop.f32.mrf.mxu0
      %v5153 = vadd.f32 0.0, %v5152
      %5154 = vmatmul.bf16.gmra.mxu0 %v3812
      %v5155 = vpop.f32.mrf.mxu0
      %v5156 = vadd.f32 0.0, %v5155
      %v5157 = vpop.f32.mrf.mxu0
      %v5158 = vadd.f32 0.0, %v5157
      %5159 = vmatmul.bf16.gmra.mxu0 %v3815
      %v5160 = vpop.f32.mrf.mxu0
      %v5161 = vadd.f32 0.0, %v5160
      %v5162 = vpop.f32.mrf.mxu0
      %v5163 = vadd.f32 0.0, %v5162
      %5164 = vmatmul.bf16.gmra.mxu0 %v4330
      %v5165 = vpop.f32.mrf.mxu0
      %v5166 = vadd.f32 0.0, %v5165
      %v5167 = vpop.f32.mrf.mxu0
      %v5168 = vadd.f32 0.0, %v5167
      %5169 = vmatmul.bf16.gmra.mxu0 %v4333
      %v5170 = vpop.f32.mrf.mxu0
      %v5171 = vadd.f32 0.0, %v5170
      %v5172 = vpop.f32.mrf.mxu0
      %v5173 = vadd.f32 0.0, %v5172
      %5174 = vmatmul.bf16.gmra.mxu0 %v4848
      %v5175 = vpop.f32.mrf.mxu0
      %v5176 = vadd.f32 0.0, %v5175
      %v5177 = vpop.f32.mrf.mxu0
      %v5178 = vadd.f32 0.0, %v5177
      %5179 = vmatmul.bf16.gmra.mxu0 %v4851
      %v5180 = vpop.f32.mrf.mxu0
      %v5181 = vadd.f32 0.0, %v5180
      %v5182 = vpop.f32.mrf.mxu0
      %v5183 = vadd.f32 0.0, %v5182
      %5184 = vdwg.mxu0
      %v5185 = vadd.f32 %v4667, %v4866
      %v5186 = vadd.f32 %v4668, %v4868
      %v5187 = vadd.f32 %v4669, %v4871
      %v5188 = vadd.f32 %v4670, %v4873
      %v5189 = vadd.f32 %v4671, %v4876
      %v5190 = vadd.f32 %v4672, %v4878
      %v5191 = vadd.f32 %v4673, %v4881
      %v5192 = vadd.f32 %v4674, %v4883
      %v5193 = vadd.f32 %v4675, %v4886
      %v5194 = vadd.f32 %v4676, %v4888
      %v5195 = vadd.f32 %v4677, %v4891
      %v5196 = vadd.f32 %v4678, %v4893
      %v5197 = vadd.f32 %v4679, %v4896
      %v5198 = vadd.f32 %v4680, %v4898
      %v5199 = vadd.f32 %v4681, %v4901
      %v5200 = vadd.f32 %v4682, %v4903
      %v5201 = vadd.f32 %v4683, %v4906
      %v5202 = vadd.f32 %v4684, %v4908
      %v5203 = vadd.f32 %v4685, %v4911
      %v5204 = vadd.f32 %v4686, %v4913
      %v5205 = vadd.f32 %v4687, %v4916
      %v5206 = vadd.f32 %v4688, %v4918
      %v5207 = vadd.f32 %v4689, %v4921
      %v5208 = vadd.f32 %v4690, %v4923
      %v5209 = vadd.f32 %v4691, %v4926
      %v5210 = vadd.f32 %v4692, %v4928
      %v5211 = vadd.f32 %v4693, %v4931
      %v5212 = vadd.f32 %v4694, %v4933
      %v5213 = vadd.f32 %v4695, %v4936
      %v5214 = vadd.f32 %v4696, %v4938
      %v5215 = vadd.f32 %v4697, %v4941
      %v5216 = vadd.f32 %v4698, %v4943
      %v5217 = vadd.f32 %v4699, %v4946
      %v5218 = vadd.f32 %v4700, %v4948
      %v5219 = vadd.f32 %v4701, %v4951
      %v5220 = vadd.f32 %v4702, %v4953
      %v5221 = vadd.f32 %v4703, %v4956
      %v5222 = vadd.f32 %v4704, %v4958
      %v5223 = vadd.f32 %v4705, %v4961
      %v5224 = vadd.f32 %v4706, %v4963
      %v5225 = vadd.f32 %v4707, %v4966
      %v5226 = vadd.f32 %v4708, %v4968
      %v5227 = vadd.f32 %v4709, %v4971
      %v5228 = vadd.f32 %v4710, %v4973
      %v5229 = vadd.f32 %v4711, %v4976
      %v5230 = vadd.f32 %v4712, %v4978
      %v5231 = vadd.f32 %v4713, %v4981
      %v5232 = vadd.f32 %v4714, %v4983
      %v5233 = vadd.f32 %v4715, %v4986
      %v5234 = vadd.f32 %v4716, %v4988
      %v5235 = vadd.f32 %v4717, %v4991
      %v5236 = vadd.f32 %v4718, %v4993
      %v5237 = vadd.f32 %v4719, %v4996
      %v5238 = vadd.f32 %v4720, %v4998
      %v5239 = vadd.f32 %v4721, %v5001
      %v5240 = vadd.f32 %v4722, %v5003
      %v5241 = vadd.f32 %v4723, %v5006
      %v5242 = vadd.f32 %v4724, %v5008
      %v5243 = vadd.f32 %v4725, %v5011
      %v5244 = vadd.f32 %v4726, %v5013
      %v5245 = vadd.f32 %v4727, %v5016
      %v5246 = vadd.f32 %v4728, %v5018
      %v5247 = vadd.f32 %v4729, %v5021
      %v5248 = vadd.f32 %v4730, %v5023
      %v5249 = vadd.f32 %v4731, %v5026
      %v5250 = vadd.f32 %v4732, %v5028
      %v5251 = vadd.f32 %v4733, %v5031
      %v5252 = vadd.f32 %v4734, %v5033
      %v5253 = vadd.f32 %v4735, %v5036
      %v5254 = vadd.f32 %v4736, %v5038
      %v5255 = vadd.f32 %v4737, %v5041
      %v5256 = vadd.f32 %v4738, %v5043
      %v5257 = vadd.f32 %v4739, %v5046
      %v5258 = vadd.f32 %v4740, %v5048
      %v5259 = vadd.f32 %v4741, %v5051
      %v5260 = vadd.f32 %v4742, %v5053
      %v5261 = vadd.f32 %v4743, %v5056
      %v5262 = vadd.f32 %v4744, %v5058
      %v5263 = vadd.f32 %v4745, %v5061
      %v5264 = vadd.f32 %v4746, %v5063
      %v5265 = vadd.f32 %v4747, %v5066
      %v5266 = vadd.f32 %v4748, %v5068
      %v5267 = vadd.f32 %v4749, %v5071
      %v5268 = vadd.f32 %v4750, %v5073
      %v5269 = vadd.f32 %v4751, %v5076
      %v5270 = vadd.f32 %v4752, %v5078
      %v5271 = vadd.f32 %v4753, %v5081
      %v5272 = vadd.f32 %v4754, %v5083
      %v5273 = vadd.f32 %v4755, %v5086
      %v5274 = vadd.f32 %v4756, %v5088
      %v5275 = vadd.f32 %v4757, %v5091
      %v5276 = vadd.f32 %v4758, %v5093
      %v5277 = vadd.f32 %v4759, %v5096
      %v5278 = vadd.f32 %v4760, %v5098
      %v5279 = vadd.f32 %v4761, %v5101
      %v5280 = vadd.f32 %v4762, %v5103
      %v5281 = vadd.f32 %v4763, %v5106
      %v5282 = vadd.f32 %v4764, %v5108
      %v5283 = vadd.f32 %v4765, %v5111
      %v5284 = vadd.f32 %v4766, %v5113
      %v5285 = vadd.f32 %v4767, %v5116
      %v5286 = vadd.f32 %v4768, %v5118
      %v5287 = vadd.f32 %v4769, %v5121
      %v5288 = vadd.f32 %v4770, %v5123
      %v5289 = vadd.f32 %v4771, %v5126
      %v5290 = vadd.f32 %v4772, %v5128
      %v5291 = vadd.f32 %v4773, %v5131
      %v5292 = vadd.f32 %v4774, %v5133
      %v5293 = vadd.f32 %v4775, %v5136
      %v5294 = vadd.f32 %v4776, %v5138
      %v5295 = vadd.f32 %v4777, %v5141
      %v5296 = vadd.f32 %v4778, %v5143
      %v5297 = vadd.f32 %v4779, %v5146
      %v5298 = vadd.f32 %v4780, %v5148
      %v5299 = vadd.f32 %v4781, %v5151
      %v5300 = vadd.f32 %v4782, %v5153
      %v5301 = vadd.f32 %v4783, %v5156
      %v5302 = vadd.f32 %v4784, %v5158
      %v5303 = vadd.f32 %v4785, %v5161
      %v5304 = vadd.f32 %v4786, %v5163
      %v5305 = vadd.f32 %v4787, %v5166
      %v5306 = vadd.f32 %v4788, %v5168
      %v5307 = vadd.f32 %v4789, %v5171
      %v5308 = vadd.f32 %v4790, %v5173
      %v5309 = vadd.f32 %v4791, %v5176
      %v5310 = vadd.f32 %v4792, %v5178
      %v5311 = vadd.f32 %v4793, %v5181
      %v5312 = vadd.f32 %v4794, %v5183
      %vm5345 = vcmask 1042432
      %vm5346 = vcmask 1046532
      %vm5347 = vmor %vm5345, %vm5346
      %v5348 = vrot.slane %v172, 5
      %v5349 = vrot.slane %v5348, 4
      %v5350 = vrot.slane %v173, 5
      %v5351 = vsel %vm5347, %v5349, %v5350
      %v5352 = vrot.slane %v5350, 4
      %v5353 = vrot.slane %v174, 5
      %v5354 = vsel %vm5347, %v5352, %v5353
      %v5355 = vrot.slane %v5353, 4
      %v5356 = vrot.slane %v175, 5
      %v5357 = vsel %vm5347, %v5355, %v5356
      %v5358 = vrot.slane %v5356, 4
      %v5359 = vrot.slane %v176, 5
      %v5360 = vsel %vm5347, %v5358, %v5359
      %v5361 = vrot.slane %v177, 5
      %v5362 = vrot.slane %v5361, 4
      %v5363 = vrot.slane %v178, 5
      %v5364 = vsel %vm5347, %v5362, %v5363
      %v5365 = vrot.slane %v5363, 4
      %v5366 = vrot.slane %v179, 5
      %v5367 = vsel %vm5347, %v5365, %v5366
      %v5368 = vrot.slane %v5366, 4
      %v5369 = vrot.slane %v180, 5
      %v5370 = vsel %vm5347, %v5368, %v5369
      %v5371 = vrot.slane %v5369, 4
      %v5372 = vrot.slane %v181, 5
      %v5373 = vsel %vm5347, %v5371, %v5372
      %v5374 = vrot.slane %v182, 5
      %v5375 = vrot.slane %v5374, 4
      %v5376 = vrot.slane %v183, 5
      %v5377 = vsel %vm5347, %v5375, %v5376
      %v5378 = vrot.slane %v5376, 4
      %v5379 = vrot.slane %v184, 5
      %v5380 = vsel %vm5347, %v5378, %v5379
      %v5381 = vrot.slane %v5379, 4
      %v5382 = vrot.slane %v185, 5
      %v5383 = vsel %vm5347, %v5381, %v5382
      %v5384 = vrot.slane %v5382, 4
      %v5385 = vrot.slane %v186, 5
      %v5386 = vsel %vm5347, %v5384, %v5385
      %v5387 = vrot.slane %v187, 5
      %v5388 = vrot.slane %v5387, 4
      %v5389 = vrot.slane %v188, 5
      %v5390 = vsel %vm5347, %v5388, %v5389
      %v5391 = vrot.slane %v5389, 4
      %v5392 = vrot.slane %v189, 5
      %v5393 = vsel %vm5347, %v5391, %v5392
      %v5394 = vrot.slane %v5392, 4
      %v5395 = vrot.slane %v190, 5
      %v5396 = vsel %vm5347, %v5394, %v5395
      %v5397 = vrot.slane %v5395, 4
      %v5398 = vrot.slane %v191, 5
      %v5399 = vsel %vm5347, %v5397, %v5398
      %v5400 = vrot.slane %v192, 5
      %v5401 = vrot.slane %v5400, 4
      %v5402 = vrot.slane %v193, 5
      %v5403 = vsel %vm5347, %v5401, %v5402
      %v5404 = vrot.slane %v5402, 4
      %v5405 = vrot.slane %v194, 5
      %v5406 = vsel %vm5347, %v5404, %v5405
      %v5407 = vrot.slane %v5405, 4
      %v5408 = vrot.slane %v195, 5
      %v5409 = vsel %vm5347, %v5407, %v5408
      %v5410 = vrot.slane %v5408, 4
      %v5411 = vrot.slane %v196, 5
      %v5412 = vsel %vm5347, %v5410, %v5411
      %v5413 = vrot.slane %v197, 5
      %v5414 = vrot.slane %v5413, 4
      %v5415 = vrot.slane %v198, 5
      %v5416 = vsel %vm5347, %v5414, %v5415
      %v5417 = vrot.slane %v5415, 4
      %v5418 = vrot.slane %v199, 5
      %v5419 = vsel %vm5347, %v5417, %v5418
      %v5420 = vrot.slane %v5418, 4
      %v5421 = vrot.slane %v200, 5
      %v5422 = vsel %vm5347, %v5420, %v5421
      %v5423 = vrot.slane %v5421, 4
      %v5424 = vrot.slane %v201, 5
      %v5425 = vsel %vm5347, %v5423, %v5424
      %v5426 = vrot.slane %v202, 5
      %v5427 = vrot.slane %v5426, 4
      %v5428 = vrot.slane %v203, 5
      %v5429 = vsel %vm5347, %v5427, %v5428
      %v5430 = vrot.slane %v5428, 4
      %v5431 = vrot.slane %v204, 5
      %v5432 = vsel %vm5347, %v5430, %v5431
      %v5433 = vrot.slane %v5431, 4
      %v5434 = vrot.slane %v205, 5
      %v5435 = vsel %vm5347, %v5433, %v5434
      %v5436 = vrot.slane %v5434, 4
      %v5437 = vrot.slane %v206, 5
      %v5438 = vsel %vm5347, %v5436, %v5437
      %v5439 = vrot.slane %v207, 5
      %v5440 = vrot.slane %v5439, 4
      %v5441 = vrot.slane %v208, 5
      %v5442 = vsel %vm5347, %v5440, %v5441
      %v5443 = vrot.slane %v5441, 4
      %v5444 = vrot.slane %v209, 5
      %v5445 = vsel %vm5347, %v5443, %v5444
      %v5446 = vrot.slane %v5444, 4
      %v5447 = vrot.slane %v210, 5
      %v5448 = vsel %vm5347, %v5446, %v5447
      %v5449 = vrot.slane %v5447, 4
      %v5450 = vrot.slane %v211, 5
      %v5451 = vsel %vm5347, %v5449, %v5450
      %v5452 = vrot.slane %v212, 5
      %v5453 = vrot.slane %v5452, 4
      %v5454 = vrot.slane %v213, 5
      %v5455 = vsel %vm5347, %v5453, %v5454
      %v5456 = vrot.slane %v5454, 4
      %v5457 = vrot.slane %v214, 5
      %v5458 = vsel %vm5347, %v5456, %v5457
      %v5459 = vrot.slane %v5457, 4
      %v5460 = vrot.slane %v215, 5
      %v5461 = vsel %vm5347, %v5459, %v5460
      %v5462 = vrot.slane %v5460, 4
      %v5463 = vrot.slane %v216, 5
      %v5464 = vsel %vm5347, %v5462, %v5463
      %v5465 = vrot.slane %v217, 5
      %v5466 = vrot.slane %v5465, 4
      %v5467 = vrot.slane %v218, 5
      %v5468 = vsel %vm5347, %v5466, %v5467
      %v5469 = vrot.slane %v5467, 4
      %v5470 = vrot.slane %v219, 5
      %v5471 = vsel %vm5347, %v5469, %v5470
      %v5472 = vrot.slane %v5470, 4
      %v5473 = vrot.slane %v220, 5
      %v5474 = vsel %vm5347, %v5472, %v5473
      %v5475 = vrot.slane %v5473, 4
      %v5476 = vrot.slane %v221, 5
      %v5477 = vsel %vm5347, %v5475, %v5476
      %v5478 = vrot.slane %v222, 5
      %v5479 = vrot.slane %v5478, 4
      %v5480 = vrot.slane %v223, 5
      %v5481 = vsel %vm5347, %v5479, %v5480
      %v5482 = vrot.slane %v5480, 4
      %v5483 = vrot.slane %v224, 5
      %v5484 = vsel %vm5347, %v5482, %v5483
      %v5485 = vrot.slane %v5483, 4
      %v5486 = vrot.slane %v225, 5
      %v5487 = vsel %vm5347, %v5485, %v5486
      %v5488 = vrot.slane %v5486, 4
      %v5489 = vrot.slane %v226, 5
      %v5490 = vsel %vm5347, %v5488, %v5489
      %v5491 = vrot.slane %v227, 5
      %v5492 = vrot.slane %v5491, 4
      %v5493 = vrot.slane %v228, 5
      %v5494 = vsel %vm5347, %v5492, %v5493
      %v5495 = vrot.slane %v5493, 4
      %v5496 = vrot.slane %v229, 5
      %v5497 = vsel %vm5347, %v5495, %v5496
      %v5498 = vrot.slane %v5496, 4
      %v5499 = vrot.slane %v230, 5
      %v5500 = vsel %vm5347, %v5498, %v5499
      %v5501 = vrot.slane %v5499, 4
      %v5502 = vrot.slane %v231, 5
      %v5503 = vsel %vm5347, %v5501, %v5502
      %v5504 = vrot.slane %v232, 5
      %v5505 = vrot.slane %v5504, 4
      %v5506 = vrot.slane %v233, 5
      %v5507 = vsel %vm5347, %v5505, %v5506
      %v5508 = vrot.slane %v5506, 4
      %v5509 = vrot.slane %v234, 5
      %v5510 = vsel %vm5347, %v5508, %v5509
      %v5511 = vrot.slane %v5509, 4
      %v5512 = vrot.slane %v235, 5
      %v5513 = vsel %vm5347, %v5511, %v5512
      %v5514 = vrot.slane %v5512, 4
      %v5515 = vrot.slane %v236, 5
      %v5516 = vsel %vm5347, %v5514, %v5515
      %v5517 = vrot.slane %v237, 5
      %v5518 = vrot.slane %v5517, 4
      %v5519 = vrot.slane %v238, 5
      %v5520 = vsel %vm5347, %v5518, %v5519
      %v5521 = vrot.slane %v5519, 4
      %v5522 = vrot.slane %v239, 5
      %v5523 = vsel %vm5347, %v5521, %v5522
      %v5524 = vrot.slane %v5522, 4
      %v5525 = vrot.slane %v240, 5
      %v5526 = vsel %vm5347, %v5524, %v5525
      %v5527 = vrot.slane %v5525, 4
      %v5528 = vrot.slane %v241, 5
      %v5529 = vsel %vm5347, %v5527, %v5528
      %v5530 = vrot.slane %v242, 5
      %v5531 = vrot.slane %v5530, 4
      %v5532 = vrot.slane %v243, 5
      %v5533 = vsel %vm5347, %v5531, %v5532
      %v5534 = vrot.slane %v5532, 4
      %v5535 = vrot.slane %v244, 5
      %v5536 = vsel %vm5347, %v5534, %v5535
      %v5537 = vrot.slane %v5535, 4
      %v5538 = vrot.slane %v245, 5
      %v5539 = vsel %vm5347, %v5537, %v5538
      %v5540 = vrot.slane %v5538, 4
      %v5541 = vrot.slane %v246, 5
      %v5542 = vsel %vm5347, %v5540, %v5541
      %v5543 = vrot.slane %v247, 5
      %v5544 = vrot.slane %v5543, 4
      %v5545 = vrot.slane %v248, 5
      %v5546 = vsel %vm5347, %v5544, %v5545
      %v5547 = vrot.slane %v5545, 4
      %v5548 = vrot.slane %v249, 5
      %v5549 = vsel %vm5347, %v5547, %v5548
      %v5550 = vrot.slane %v5548, 4
      %v5551 = vrot.slane %v250, 5
      %v5552 = vsel %vm5347, %v5550, %v5551
      %v5553 = vrot.slane %v5551, 4
      %v5554 = vrot.slane %v251, 5
      %v5555 = vsel %vm5347, %v5553, %v5554
      %v5556 = vrot.slane %v252, 5
      %v5557 = vrot.slane %v5556, 4
      %v5558 = vrot.slane %v253, 5
      %v5559 = vsel %vm5347, %v5557, %v5558
      %v5560 = vrot.slane %v5558, 4
      %v5561 = vrot.slane %v254, 5
      %v5562 = vsel %vm5347, %v5560, %v5561
      %v5563 = vrot.slane %v5561, 4
      %v5564 = vrot.slane %v255, 5
      %v5565 = vsel %vm5347, %v5563, %v5564
      %v5566 = vrot.slane %v5564, 4
      %v5567 = vrot.slane %v256, 5
      %v5568 = vsel %vm5347, %v5566, %v5567
      %v5569 = vrot.slane %v257, 5
      %v5570 = vrot.slane %v5569, 4
      %v5571 = vrot.slane %v258, 5
      %v5572 = vsel %vm5347, %v5570, %v5571
      %v5573 = vrot.slane %v5571, 4
      %v5574 = vrot.slane %v259, 5
      %v5575 = vsel %vm5347, %v5573, %v5574
      %v5576 = vrot.slane %v5574, 4
      %v5577 = vrot.slane %v260, 5
      %v5578 = vsel %vm5347, %v5576, %v5577
      %v5579 = vrot.slane %v5577, 4
      %v5580 = vrot.slane %v261, 5
      %v5581 = vsel %vm5347, %v5579, %v5580
      %v5582 = vrot.slane %v262, 5
      %v5583 = vrot.slane %v5582, 4
      %v5584 = vrot.slane %v263, 5
      %v5585 = vsel %vm5347, %v5583, %v5584
      %v5586 = vrot.slane %v5584, 4
      %v5587 = vrot.slane %v264, 5
      %v5588 = vsel %vm5347, %v5586, %v5587
      %v5589 = vrot.slane %v5587, 4
      %v5590 = vrot.slane %v265, 5
      %v5591 = vsel %vm5347, %v5589, %v5590
      %v5592 = vrot.slane %v5590, 4
      %v5593 = vrot.slane %v266, 5
      %v5594 = vsel %vm5347, %v5592, %v5593
      %v5595 = vrot.slane %v267, 5
      %v5596 = vrot.slane %v5595, 4
      %v5597 = vrot.slane %v268, 5
      %v5598 = vsel %vm5347, %v5596, %v5597
      %v5599 = vrot.slane %v5597, 4
      %v5600 = vrot.slane %v269, 5
      %v5601 = vsel %vm5347, %v5599, %v5600
      %v5602 = vrot.slane %v5600, 4
      %v5603 = vrot.slane %v270, 5
      %v5604 = vsel %vm5347, %v5602, %v5603
      %v5605 = vrot.slane %v5603, 4
      %v5606 = vrot.slane %v271, 5
      %v5607 = vsel %vm5347, %v5605, %v5606
      %v5608 = vrot.slane %v272, 5
      %v5609 = vrot.slane %v5608, 4
      %v5610 = vrot.slane %v273, 5
      %v5611 = vsel %vm5347, %v5609, %v5610
      %v5612 = vrot.slane %v5610, 4
      %v5613 = vrot.slane %v274, 5
      %v5614 = vsel %vm5347, %v5612, %v5613
      %v5615 = vrot.slane %v5613, 4
      %v5616 = vrot.slane %v275, 5
      %v5617 = vsel %vm5347, %v5615, %v5616
      %v5618 = vrot.slane %v5616, 4
      %v5619 = vrot.slane %v276, 5
      %v5620 = vsel %vm5347, %v5618, %v5619
      %v5621 = vrot.slane %v277, 5
      %v5622 = vrot.slane %v5621, 4
      %v5623 = vrot.slane %v278, 5
      %v5624 = vsel %vm5347, %v5622, %v5623
      %v5625 = vrot.slane %v5623, 4
      %v5626 = vrot.slane %v279, 5
      %v5627 = vsel %vm5347, %v5625, %v5626
      %v5628 = vrot.slane %v5626, 4
      %v5629 = vrot.slane %v280, 5
      %v5630 = vsel %vm5347, %v5628, %v5629
      %v5631 = vrot.slane %v5629, 4
      %v5632 = vrot.slane %v281, 5
      %v5633 = vsel %vm5347, %v5631, %v5632
      %v5634 = vrot.slane %v282, 5
      %v5635 = vrot.slane %v5634, 4
      %v5636 = vrot.slane %v283, 5
      %v5637 = vsel %vm5347, %v5635, %v5636
      %v5638 = vrot.slane %v5636, 4
      %v5639 = vrot.slane %v284, 5
      %v5640 = vsel %vm5347, %v5638, %v5639
      %v5641 = vrot.slane %v5639, 4
      %v5642 = vrot.slane %v285, 5
      %v5643 = vsel %vm5347, %v5641, %v5642
      %v5644 = vrot.slane %v5642, 4
      %v5645 = vrot.slane %v286, 5
      %v5646 = vsel %vm5347, %v5644, %v5645
      %v5647 = vrot.slane %v287, 5
      %v5648 = vrot.slane %v5647, 4
      %v5649 = vrot.slane %v288, 5
      %v5650 = vsel %vm5347, %v5648, %v5649
      %v5651 = vrot.slane %v5649, 4
      %v5652 = vrot.slane %v289, 5
      %v5653 = vsel %vm5347, %v5651, %v5652
      %v5654 = vrot.slane %v5652, 4
      %v5655 = vrot.slane %v290, 5
      %v5656 = vsel %vm5347, %v5654, %v5655
      %v5657 = vrot.slane %v5655, 4
      %v5658 = vrot.slane %v291, 5
      %v5659 = vsel %vm5347, %v5657, %v5658
      %v5660 = vrot.slane %v292, 5
      %v5661 = vrot.slane %v5660, 4
      %v5662 = vrot.slane %v293, 5
      %v5663 = vsel %vm5347, %v5661, %v5662
      %v5664 = vrot.slane %v5662, 4
      %v5665 = vrot.slane %v294, 5
      %v5666 = vsel %vm5347, %v5664, %v5665
      %v5667 = vrot.slane %v5665, 4
      %v5668 = vrot.slane %v295, 5
      %v5669 = vsel %vm5347, %v5667, %v5668
      %v5670 = vrot.slane %v5668, 4
      %v5671 = vrot.slane %v296, 5
      %v5672 = vsel %vm5347, %v5670, %v5671
      %v5673 = vrot.slane %v297, 5
      %v5674 = vrot.slane %v5673, 4
      %v5675 = vrot.slane %v298, 5
      %v5676 = vsel %vm5347, %v5674, %v5675
      %v5677 = vrot.slane %v5675, 4
      %v5678 = vrot.slane %v299, 5
      %v5679 = vsel %vm5347, %v5677, %v5678
      %v5680 = vrot.slane %v5678, 4
      %v5681 = vrot.slane %v300, 5
      %v5682 = vsel %vm5347, %v5680, %v5681
      %v5683 = vrot.slane %v5681, 4
      %v5684 = vrot.slane %v301, 5
      %v5685 = vsel %vm5347, %v5683, %v5684
      %v5686 = vrot.slane %v302, 5
      %v5687 = vrot.slane %v5686, 4
      %v5688 = vrot.slane %v303, 5
      %v5689 = vsel %vm5347, %v5687, %v5688
      %v5690 = vrot.slane %v5688, 4
      %v5691 = vrot.slane %v304, 5
      %v5692 = vsel %vm5347, %v5690, %v5691
      %v5693 = vrot.slane %v5691, 4
      %v5694 = vrot.slane %v305, 5
      %v5695 = vsel %vm5347, %v5693, %v5694
      %v5696 = vrot.slane %v5694, 4
      %v5697 = vrot.slane %v306, 5
      %v5698 = vsel %vm5347, %v5696, %v5697
      %v5699 = vrot.slane %v307, 5
      %v5700 = vrot.slane %v5699, 4
      %v5701 = vrot.slane %v308, 5
      %v5702 = vsel %vm5347, %v5700, %v5701
      %v5703 = vrot.slane %v5701, 4
      %v5704 = vrot.slane %v309, 5
      %v5705 = vsel %vm5347, %v5703, %v5704
      %v5706 = vrot.slane %v5704, 4
      %v5707 = vrot.slane %v310, 5
      %v5708 = vsel %vm5347, %v5706, %v5707
      %v5709 = vrot.slane %v5707, 4
      %v5710 = vrot.slane %v311, 5
      %v5711 = vsel %vm5347, %v5709, %v5710
      %v5712 = vrot.slane %v312, 5
      %v5713 = vrot.slane %v5712, 4
      %v5714 = vrot.slane %v313, 5
      %v5715 = vsel %vm5347, %v5713, %v5714
      %v5716 = vrot.slane %v5714, 4
      %v5717 = vrot.slane %v314, 5
      %v5718 = vsel %vm5347, %v5716, %v5717
      %v5719 = vrot.slane %v5717, 4
      %v5720 = vrot.slane %v315, 5
      %v5721 = vsel %vm5347, %v5719, %v5720
      %v5722 = vrot.slane %v5720, 4
      %v5723 = vrot.slane %v316, 5
      %v5724 = vsel %vm5347, %v5722, %v5723
      %v5725 = vrot.slane %v317, 5
      %v5726 = vrot.slane %v5725, 4
      %v5727 = vrot.slane %v318, 5
      %v5728 = vsel %vm5347, %v5726, %v5727
      %v5729 = vrot.slane %v5727, 4
      %v5730 = vrot.slane %v319, 5
      %v5731 = vsel %vm5347, %v5729, %v5730
      %v5732 = vrot.slane %v5730, 4
      %v5733 = vrot.slane %v320, 5
      %v5734 = vsel %vm5347, %v5732, %v5733
      %v5735 = vrot.slane %v5733, 4
      %v5736 = vrot.slane %v321, 5
      %v5737 = vsel %vm5347, %v5735, %v5736
      %v5738 = vrot.slane %v322, 5
      %v5739 = vrot.slane %v5738, 4
      %v5740 = vrot.slane %v323, 5
      %v5741 = vsel %vm5347, %v5739, %v5740
      %v5742 = vrot.slane %v5740, 4
      %v5743 = vrot.slane %v324, 5
      %v5744 = vsel %vm5347, %v5742, %v5743
      %v5745 = vrot.slane %v5743, 4
      %v5746 = vrot.slane %v325, 5
      %v5747 = vsel %vm5347, %v5745, %v5746
      %v5748 = vrot.slane %v5746, 4
      %v5749 = vrot.slane %v326, 5
      %v5750 = vsel %vm5347, %v5748, %v5749
      %v5751 = vrot.slane %v327, 5
      %v5752 = vrot.slane %v5751, 4
      %v5753 = vrot.slane %v328, 5
      %v5754 = vsel %vm5347, %v5752, %v5753
      %v5755 = vrot.slane %v5753, 4
      %v5756 = vrot.slane %v329, 5
      %v5757 = vsel %vm5347, %v5755, %v5756
      %v5758 = vrot.slane %v5756, 4
      %v5759 = vrot.slane %v330, 5
      %v5760 = vsel %vm5347, %v5758, %v5759
      %v5761 = vrot.slane %v5759, 4
      %v5762 = vrot.slane %v331, 5
      %v5763 = vsel %vm5347, %v5761, %v5762
      %s5764 = scalar_lea.vmem %s1, 4
      %v5765 = vld [vmem:[%s5764] sm:$0x3]
      %v5766 = vunpack.c.l.b16 %v5351
      %v5767 = vunpack.c.l.b16 %v5354
      %v5768 = vunpack.c.l.b16 %v5357
      %v5769 = vunpack.c.l.b16 %v5360
      %v5770 = vunpack.c.l.b16 %v5364
      %v5771 = vunpack.c.l.b16 %v5367
      %v5772 = vunpack.c.l.b16 %v5370
      %v5773 = vunpack.c.l.b16 %v5373
      %v5774 = vunpack.c.l.b16 %v5377
      %v5775 = vunpack.c.l.b16 %v5380
      %v5776 = vunpack.c.l.b16 %v5383
      %v5777 = vunpack.c.l.b16 %v5386
      %v5778 = vunpack.c.l.b16 %v5390
      %v5779 = vunpack.c.l.b16 %v5393
      %v5780 = vunpack.c.l.b16 %v5396
      %v5781 = vunpack.c.l.b16 %v5399
      %v5782 = vunpack.c.l.b16 %v5403
      %v5783 = vunpack.c.l.b16 %v5406
      %v5784 = vunpack.c.l.b16 %v5409
      %v5785 = vunpack.c.l.b16 %v5412
      %v5786 = vunpack.c.l.b16 %v5416
      %v5787 = vunpack.c.l.b16 %v5419
      %v5788 = vunpack.c.l.b16 %v5422
      %v5789 = vunpack.c.l.b16 %v5425
      %v5790 = vunpack.c.l.b16 %v5429
      %v5791 = vunpack.c.l.b16 %v5432
      %v5792 = vunpack.c.l.b16 %v5435
      %v5793 = vunpack.c.l.b16 %v5438
      %v5794 = vunpack.c.l.b16 %v5442
      %v5795 = vunpack.c.l.b16 %v5445
      %v5796 = vunpack.c.l.b16 %v5448
      %v5797 = vunpack.c.l.b16 %v5451
      %v5798 = vunpack.c.l.b16 %v5455
      %v5799 = vunpack.c.l.b16 %v5458
      %v5800 = vunpack.c.l.b16 %v5461
      %v5801 = vunpack.c.l.b16 %v5464
      %v5802 = vunpack.c.l.b16 %v5468
      %v5803 = vunpack.c.l.b16 %v5471
      %v5804 = vunpack.c.l.b16 %v5474
      %v5805 = vunpack.c.l.b16 %v5477
      %v5806 = vunpack.c.l.b16 %v5481
      %v5807 = vunpack.c.l.b16 %v5484
      %v5808 = vunpack.c.l.b16 %v5487
      %v5809 = vunpack.c.l.b16 %v5490
      %v5810 = vunpack.c.l.b16 %v5494
      %v5811 = vunpack.c.l.b16 %v5497
      %v5812 = vunpack.c.l.b16 %v5500
      %v5813 = vunpack.c.l.b16 %v5503
      %v5814 = vunpack.c.l.b16 %v5507
      %v5815 = vunpack.c.l.b16 %v5510
      %v5816 = vunpack.c.l.b16 %v5513
      %v5817 = vunpack.c.l.b16 %v5516
      %v5818 = vunpack.c.l.b16 %v5520
      %v5819 = vunpack.c.l.b16 %v5523
      %v5820 = vunpack.c.l.b16 %v5526
      %v5821 = vunpack.c.l.b16 %v5529
      %v5822 = vunpack.c.l.b16 %v5533
      %v5823 = vunpack.c.l.b16 %v5536
      %v5824 = vunpack.c.l.b16 %v5539
      %v5825 = vunpack.c.l.b16 %v5542
      %v5826 = vunpack.c.l.b16 %v5546
      %v5827 = vunpack.c.l.b16 %v5549
      %v5828 = vunpack.c.l.b16 %v5552
      %v5829 = vunpack.c.l.b16 %v5555
      %v5830 = vunpack.c.l.b16 %v5559
      %v5831 = vunpack.c.l.b16 %v5562
      %v5832 = vunpack.c.l.b16 %v5565
      %v5833 = vunpack.c.l.b16 %v5568
      %v5834 = vunpack.c.l.b16 %v5572
      %v5835 = vunpack.c.l.b16 %v5575
      %v5836 = vunpack.c.l.b16 %v5578
      %v5837 = vunpack.c.l.b16 %v5581
      %v5838 = vunpack.c.l.b16 %v5585
      %v5839 = vunpack.c.l.b16 %v5588
      %v5840 = vunpack.c.l.b16 %v5591
      %v5841 = vunpack.c.l.b16 %v5594
      %v5842 = vunpack.c.l.b16 %v5598
      %v5843 = vunpack.c.l.b16 %v5601
      %v5844 = vunpack.c.l.b16 %v5604
      %v5845 = vunpack.c.l.b16 %v5607
      %v5846 = vunpack.c.l.b16 %v5611
      %v5847 = vunpack.c.l.b16 %v5614
      %v5848 = vunpack.c.l.b16 %v5617
      %v5849 = vunpack.c.l.b16 %v5620
      %v5850 = vunpack.c.l.b16 %v5624
      %v5851 = vunpack.c.l.b16 %v5627
      %v5852 = vunpack.c.l.b16 %v5630
      %v5853 = vunpack.c.l.b16 %v5633
      %v5854 = vunpack.c.l.b16 %v5637
      %v5855 = vunpack.c.l.b16 %v5640
      %v5856 = vunpack.c.l.b16 %v5643
      %v5857 = vunpack.c.l.b16 %v5646
      %v5858 = vunpack.c.l.b16 %v5650
      %v5859 = vunpack.c.l.b16 %v5653
      %v5860 = vunpack.c.l.b16 %v5656
      %v5861 = vunpack.c.l.b16 %v5659
      %v5862 = vunpack.c.l.b16 %v5663
      %v5863 = vunpack.c.l.b16 %v5666
      %v5864 = vunpack.c.l.b16 %v5669
      %v5865 = vunpack.c.l.b16 %v5672
      %v5866 = vunpack.c.l.b16 %v5676
      %v5867 = vunpack.c.l.b16 %v5679
      %v5868 = vunpack.c.l.b16 %v5682
      %v5869 = vunpack.c.l.b16 %v5685
      %v5870 = vunpack.c.l.b16 %v5689
      %v5871 = vunpack.c.l.b16 %v5692
      %v5872 = vunpack.c.l.b16 %v5695
      %v5873 = vunpack.c.l.b16 %v5698
      %v5874 = vunpack.c.l.b16 %v5702
      %v5875 = vunpack.c.l.b16 %v5705
      %v5876 = vunpack.c.l.b16 %v5708
      %v5877 = vunpack.c.l.b16 %v5711
      %v5878 = vunpack.c.l.b16 %v5715
      %v5879 = vunpack.c.l.b16 %v5718
      %v5880 = vunpack.c.l.b16 %v5721
      %v5881 = vunpack.c.l.b16 %v5724
      %v5882 = vunpack.c.l.b16 %v5728
      %v5883 = vunpack.c.l.b16 %v5731
      %v5884 = vunpack.c.l.b16 %v5734
      %v5885 = vunpack.c.l.b16 %v5737
      %v5886 = vunpack.c.l.b16 %v5741
      %v5887 = vunpack.c.l.b16 %v5744
      %v5888 = vunpack.c.l.b16 %v5747
      %v5889 = vunpack.c.l.b16 %v5750
      %v5890 = vunpack.c.l.b16 %v5754
      %v5891 = vunpack.c.l.b16 %v5757
      %v5892 = vunpack.c.l.b16 %v5760
      %v5893 = vunpack.c.l.b16 %v5763
      %v5894 = vpack.c.b16 %v5767, %v5766
      %v5895 = vpack.c.b16 %v5769, %v5768
      %v5896 = vpack.c.b16 %v5771, %v5770
      %v5897 = vpack.c.b16 %v5773, %v5772
      %v5898 = vpack.c.b16 %v5775, %v5774
      %v5899 = vpack.c.b16 %v5777, %v5776
      %v5900 = vpack.c.b16 %v5779, %v5778
      %v5901 = vpack.c.b16 %v5781, %v5780
      %v5902 = vpack.c.b16 %v5783, %v5782
      %v5903 = vpack.c.b16 %v5785, %v5784
      %v5904 = vpack.c.b16 %v5787, %v5786
      %v5905 = vpack.c.b16 %v5789, %v5788
      %v5906 = vpack.c.b16 %v5791, %v5790
      %v5907 = vpack.c.b16 %v5793, %v5792
      %v5908 = vpack.c.b16 %v5795, %v5794
      %v5909 = vpack.c.b16 %v5797, %v5796
      %v5910 = vpack.c.b16 %v5799, %v5798
      %v5911 = vpack.c.b16 %v5801, %v5800
      %v5912 = vpack.c.b16 %v5803, %v5802
      %v5913 = vpack.c.b16 %v5805, %v5804
      %v5914 = vpack.c.b16 %v5807, %v5806
      %v5915 = vpack.c.b16 %v5809, %v5808
      %v5916 = vpack.c.b16 %v5811, %v5810
      %v5917 = vpack.c.b16 %v5813, %v5812
      %v5918 = vpack.c.b16 %v5815, %v5814
      %v5919 = vpack.c.b16 %v5817, %v5816
      %v5920 = vpack.c.b16 %v5819, %v5818
      %v5921 = vpack.c.b16 %v5821, %v5820
      %v5922 = vpack.c.b16 %v5823, %v5822
      %v5923 = vpack.c.b16 %v5825, %v5824
      %v5924 = vpack.c.b16 %v5827, %v5826
      %v5925 = vpack.c.b16 %v5829, %v5828
      %v5926 = vpack.c.b16 %v5831, %v5830
      %v5927 = vpack.c.b16 %v5833, %v5832
      %v5928 = vpack.c.b16 %v5835, %v5834
      %v5929 = vpack.c.b16 %v5837, %v5836
      %v5930 = vpack.c.b16 %v5839, %v5838
      %v5931 = vpack.c.b16 %v5841, %v5840
      %v5932 = vpack.c.b16 %v5843, %v5842
      %v5933 = vpack.c.b16 %v5845, %v5844
      %v5934 = vpack.c.b16 %v5847, %v5846
      %v5935 = vpack.c.b16 %v5849, %v5848
      %v5936 = vpack.c.b16 %v5851, %v5850
      %v5937 = vpack.c.b16 %v5853, %v5852
      %v5938 = vpack.c.b16 %v5855, %v5854
      %v5939 = vpack.c.b16 %v5857, %v5856
      %v5940 = vpack.c.b16 %v5859, %v5858
      %v5941 = vpack.c.b16 %v5861, %v5860
      %v5942 = vpack.c.b16 %v5863, %v5862
      %v5943 = vpack.c.b16 %v5865, %v5864
      %v5944 = vpack.c.b16 %v5867, %v5866
      %v5945 = vpack.c.b16 %v5869, %v5868
      %v5946 = vpack.c.b16 %v5871, %v5870
      %v5947 = vpack.c.b16 %v5873, %v5872
      %v5948 = vpack.c.b16 %v5875, %v5874
      %v5949 = vpack.c.b16 %v5877, %v5876
      %v5950 = vpack.c.b16 %v5879, %v5878
      %v5951 = vpack.c.b16 %v5881, %v5880
      %v5952 = vpack.c.b16 %v5883, %v5882
      %v5953 = vpack.c.b16 %v5885, %v5884
      %v5954 = vpack.c.b16 %v5887, %v5886
      %v5955 = vpack.c.b16 %v5889, %v5888
      %v5956 = vpack.c.b16 %v5891, %v5890
      %v5957 = vpack.c.b16 %v5893, %v5892
      %v5959 = vsel %vm665, %v5894, 0
      %v5962 = vsel %vm665, %v5895, 0
      %v5965 = vsel %vm665, %v5896, 0
      %v5968 = vsel %vm665, %v5897, 0
      %v5971 = vsel %vm665, %v5898, 0
      %v5974 = vsel %vm665, %v5899, 0
      %v5977 = vsel %vm665, %v5900, 0
      %v5980 = vsel %vm665, %v5901, 0
      %v5983 = vsel %vm665, %v5902, 0
      %v5986 = vsel %vm665, %v5903, 0
      %v5989 = vsel %vm665, %v5904, 0
      %v5992 = vsel %vm665, %v5905, 0
      %v5995 = vsel %vm665, %v5906, 0
      %v5998 = vsel %vm665, %v5907, 0
      %v6001 = vsel %vm665, %v5908, 0
      %v6004 = vsel %vm665, %v5909, 0
      %v6007 = vsel %vm665, %v5910, 0
      %v6010 = vsel %vm665, %v5911, 0
      %v6013 = vsel %vm665, %v5912, 0
      %v6016 = vsel %vm665, %v5913, 0
      %v6019 = vsel %vm665, %v5914, 0
      %v6022 = vsel %vm665, %v5915, 0
      %v6025 = vsel %vm665, %v5916, 0
      %v6028 = vsel %vm665, %v5917, 0
      %v6031 = vsel %vm665, %v5918, 0
      %v6034 = vsel %vm665, %v5919, 0
      %v6037 = vsel %vm665, %v5920, 0
      %v6040 = vsel %vm665, %v5921, 0
      %v6043 = vsel %vm665, %v5922, 0
      %v6046 = vsel %vm665, %v5923, 0
      %v6049 = vsel %vm665, %v5924, 0
      %v6052 = vsel %vm665, %v5925, 0
      %v6055 = vsel %vm665, %v5926, 0
      %v6058 = vsel %vm665, %v5927, 0
      %v6061 = vsel %vm665, %v5928, 0
      %v6064 = vsel %vm665, %v5929, 0
      %v6067 = vsel %vm665, %v5930, 0
      %v6070 = vsel %vm665, %v5931, 0
      %v6073 = vsel %vm665, %v5932, 0
      %v6076 = vsel %vm665, %v5933, 0
      %v6079 = vsel %vm665, %v5934, 0
      %v6082 = vsel %vm665, %v5935, 0
      %v6085 = vsel %vm665, %v5936, 0
      %v6088 = vsel %vm665, %v5937, 0
      %v6091 = vsel %vm665, %v5938, 0
      %v6094 = vsel %vm665, %v5939, 0
      %v6097 = vsel %vm665, %v5940, 0
      %v6100 = vsel %vm665, %v5941, 0
      %v6103 = vsel %vm665, %v5942, 0
      %v6106 = vsel %vm665, %v5943, 0
      %v6109 = vsel %vm665, %v5944, 0
      %v6112 = vsel %vm665, %v5945, 0
      %v6115 = vsel %vm665, %v5946, 0
      %v6118 = vsel %vm665, %v5947, 0
      %v6121 = vsel %vm665, %v5948, 0
      %v6124 = vsel %vm665, %v5949, 0
      %v6127 = vsel %vm665, %v5950, 0
      %v6130 = vsel %vm665, %v5951, 0
      %v6133 = vsel %vm665, %v5952, 0
      %v6136 = vsel %vm665, %v5953, 0
      %v6139 = vsel %vm665, %v5954, 0
      %v6142 = vsel %vm665, %v5955, 0
      %v6145 = vsel %vm665, %v5956, 0
      %v6148 = vsel %vm665, %v5957, 0
      %v6151 = vand.u32 %v5765, %v861
      %6153 = vmatpush.bf16.msra.mxu0 0
      %6154 = vmatpush.bf16.msra.mxu0 0
      %6155 = vmatpush.bf16.msra.mxu0 0
      %6156 = vmatpush.bf16.msra.mxu0 0
      %6157 = vmatpush.bf16.msra.mxu0 0
      %6158 = vmatpush.bf16.msra.mxu0 0
      %6159 = vmatpush.bf16.msra.mxu0 0
      %6160 = vmatpush.bf16.msra.mxu0 %v6151
      %6161 = vmatmul.bf16.gmra.mxu0 %v5959
      %v6162 = vpop.f32.mrf.mxu0
      %v6163 = vadd.f32 0.0, %v6162
      %v6164 = vpop.f32.mrf.mxu0
      %v6165 = vadd.f32 0.0, %v6164
      %6166 = vmatmul.bf16.gmra.mxu0 %v5962
      %v6167 = vpop.f32.mrf.mxu0
      %v6168 = vadd.f32 0.0, %v6167
      %v6169 = vpop.f32.mrf.mxu0
      %v6170 = vadd.f32 0.0, %v6169
      %6171 = vmatmul.bf16.gmra.mxu0 %v5965
      %v6172 = vpop.f32.mrf.mxu0
      %v6173 = vadd.f32 0.0, %v6172
      %v6174 = vpop.f32.mrf.mxu0
      %v6175 = vadd.f32 0.0, %v6174
      %6176 = vmatmul.bf16.gmra.mxu0 %v5968
      %v6177 = vpop.f32.mrf.mxu0
      %v6178 = vadd.f32 0.0, %v6177
      %v6179 = vpop.f32.mrf.mxu0
      %v6180 = vadd.f32 0.0, %v6179
      %6181 = vmatmul.bf16.gmra.mxu0 %v5971
      %v6182 = vpop.f32.mrf.mxu0
      %v6183 = vadd.f32 0.0, %v6182
      %v6184 = vpop.f32.mrf.mxu0
      %v6185 = vadd.f32 0.0, %v6184
      %6186 = vmatmul.bf16.gmra.mxu0 %v5974
      %v6187 = vpop.f32.mrf.mxu0
      %v6188 = vadd.f32 0.0, %v6187
      %v6189 = vpop.f32.mrf.mxu0
      %v6190 = vadd.f32 0.0, %v6189
      %6191 = vmatmul.bf16.gmra.mxu0 %v5977
      %v6192 = vpop.f32.mrf.mxu0
      %v6193 = vadd.f32 0.0, %v6192
      %v6194 = vpop.f32.mrf.mxu0
      %v6195 = vadd.f32 0.0, %v6194
      %6196 = vmatmul.bf16.gmra.mxu0 %v5980
      %v6197 = vpop.f32.mrf.mxu0
      %v6198 = vadd.f32 0.0, %v6197
      %v6199 = vpop.f32.mrf.mxu0
      %v6200 = vadd.f32 0.0, %v6199
      %6201 = vmatmul.bf16.gmra.mxu0 %v5983
      %v6202 = vpop.f32.mrf.mxu0
      %v6203 = vadd.f32 0.0, %v6202
      %v6204 = vpop.f32.mrf.mxu0
      %v6205 = vadd.f32 0.0, %v6204
      %6206 = vmatmul.bf16.gmra.mxu0 %v5986
      %v6207 = vpop.f32.mrf.mxu0
      %v6208 = vadd.f32 0.0, %v6207
      %v6209 = vpop.f32.mrf.mxu0
      %v6210 = vadd.f32 0.0, %v6209
      %6211 = vmatmul.bf16.gmra.mxu0 %v5989
      %v6212 = vpop.f32.mrf.mxu0
      %v6213 = vadd.f32 0.0, %v6212
      %v6214 = vpop.f32.mrf.mxu0
      %v6215 = vadd.f32 0.0, %v6214
      %6216 = vmatmul.bf16.gmra.mxu0 %v5992
      %v6217 = vpop.f32.mrf.mxu0
      %v6218 = vadd.f32 0.0, %v6217
      %v6219 = vpop.f32.mrf.mxu0
      %v6220 = vadd.f32 0.0, %v6219
      %6221 = vmatmul.bf16.gmra.mxu0 %v5995
      %v6222 = vpop.f32.mrf.mxu0
      %v6223 = vadd.f32 0.0, %v6222
      %v6224 = vpop.f32.mrf.mxu0
      %v6225 = vadd.f32 0.0, %v6224
      %6226 = vmatmul.bf16.gmra.mxu0 %v5998
      %v6227 = vpop.f32.mrf.mxu0
      %v6228 = vadd.f32 0.0, %v6227
      %v6229 = vpop.f32.mrf.mxu0
      %v6230 = vadd.f32 0.0, %v6229
      %6231 = vmatmul.bf16.gmra.mxu0 %v6001
      %v6232 = vpop.f32.mrf.mxu0
      %v6233 = vadd.f32 0.0, %v6232
      %v6234 = vpop.f32.mrf.mxu0
      %v6235 = vadd.f32 0.0, %v6234
      %6236 = vmatmul.bf16.gmra.mxu0 %v6004
      %v6237 = vpop.f32.mrf.mxu0
      %v6238 = vadd.f32 0.0, %v6237
      %v6239 = vpop.f32.mrf.mxu0
      %v6240 = vadd.f32 0.0, %v6239
      %6241 = vmatmul.bf16.gmra.mxu0 %v6007
      %v6242 = vpop.f32.mrf.mxu0
      %v6243 = vadd.f32 0.0, %v6242
      %v6244 = vpop.f32.mrf.mxu0
      %v6245 = vadd.f32 0.0, %v6244
      %6246 = vmatmul.bf16.gmra.mxu0 %v6010
      %v6247 = vpop.f32.mrf.mxu0
      %v6248 = vadd.f32 0.0, %v6247
      %v6249 = vpop.f32.mrf.mxu0
      %v6250 = vadd.f32 0.0, %v6249
      %6251 = vmatmul.bf16.gmra.mxu0 %v6013
      %v6252 = vpop.f32.mrf.mxu0
      %v6253 = vadd.f32 0.0, %v6252
      %v6254 = vpop.f32.mrf.mxu0
      %v6255 = vadd.f32 0.0, %v6254
      %6256 = vmatmul.bf16.gmra.mxu0 %v6016
      %v6257 = vpop.f32.mrf.mxu0
      %v6258 = vadd.f32 0.0, %v6257
      %v6259 = vpop.f32.mrf.mxu0
      %v6260 = vadd.f32 0.0, %v6259
      %6261 = vmatmul.bf16.gmra.mxu0 %v6019
      %v6262 = vpop.f32.mrf.mxu0
      %v6263 = vadd.f32 0.0, %v6262
      %v6264 = vpop.f32.mrf.mxu0
      %v6265 = vadd.f32 0.0, %v6264
      %6266 = vmatmul.bf16.gmra.mxu0 %v6022
      %v6267 = vpop.f32.mrf.mxu0
      %v6268 = vadd.f32 0.0, %v6267
      %v6269 = vpop.f32.mrf.mxu0
      %v6270 = vadd.f32 0.0, %v6269
      %6271 = vmatmul.bf16.gmra.mxu0 %v6025
      %v6272 = vpop.f32.mrf.mxu0
      %v6273 = vadd.f32 0.0, %v6272
      %v6274 = vpop.f32.mrf.mxu0
      %v6275 = vadd.f32 0.0, %v6274
      %6276 = vmatmul.bf16.gmra.mxu0 %v6028
      %v6277 = vpop.f32.mrf.mxu0
      %v6278 = vadd.f32 0.0, %v6277
      %v6279 = vpop.f32.mrf.mxu0
      %v6280 = vadd.f32 0.0, %v6279
      %6281 = vmatmul.bf16.gmra.mxu0 %v6031
      %v6282 = vpop.f32.mrf.mxu0
      %v6283 = vadd.f32 0.0, %v6282
      %v6284 = vpop.f32.mrf.mxu0
      %v6285 = vadd.f32 0.0, %v6284
      %6286 = vmatmul.bf16.gmra.mxu0 %v6034
      %v6287 = vpop.f32.mrf.mxu0
      %v6288 = vadd.f32 0.0, %v6287
      %v6289 = vpop.f32.mrf.mxu0
      %v6290 = vadd.f32 0.0, %v6289
      %6291 = vmatmul.bf16.gmra.mxu0 %v6037
      %v6292 = vpop.f32.mrf.mxu0
      %v6293 = vadd.f32 0.0, %v6292
      %v6294 = vpop.f32.mrf.mxu0
      %v6295 = vadd.f32 0.0, %v6294
      %6296 = vmatmul.bf16.gmra.mxu0 %v6040
      %v6297 = vpop.f32.mrf.mxu0
      %v6298 = vadd.f32 0.0, %v6297
      %v6299 = vpop.f32.mrf.mxu0
      %v6300 = vadd.f32 0.0, %v6299
      %6301 = vmatmul.bf16.gmra.mxu0 %v6043
      %v6302 = vpop.f32.mrf.mxu0
      %v6303 = vadd.f32 0.0, %v6302
      %v6304 = vpop.f32.mrf.mxu0
      %v6305 = vadd.f32 0.0, %v6304
      %6306 = vmatmul.bf16.gmra.mxu0 %v6046
      %v6307 = vpop.f32.mrf.mxu0
      %v6308 = vadd.f32 0.0, %v6307
      %v6309 = vpop.f32.mrf.mxu0
      %v6310 = vadd.f32 0.0, %v6309
      %6311 = vmatmul.bf16.gmra.mxu0 %v6049
      %v6312 = vpop.f32.mrf.mxu0
      %v6313 = vadd.f32 0.0, %v6312
      %v6314 = vpop.f32.mrf.mxu0
      %v6315 = vadd.f32 0.0, %v6314
      %6316 = vmatmul.bf16.gmra.mxu0 %v6052
      %v6317 = vpop.f32.mrf.mxu0
      %v6318 = vadd.f32 0.0, %v6317
      %v6319 = vpop.f32.mrf.mxu0
      %v6320 = vadd.f32 0.0, %v6319
      %6321 = vmatmul.bf16.gmra.mxu0 %v6055
      %v6322 = vpop.f32.mrf.mxu0
      %v6323 = vadd.f32 0.0, %v6322
      %v6324 = vpop.f32.mrf.mxu0
      %v6325 = vadd.f32 0.0, %v6324
      %6326 = vmatmul.bf16.gmra.mxu0 %v6058
      %v6327 = vpop.f32.mrf.mxu0
      %v6328 = vadd.f32 0.0, %v6327
      %v6329 = vpop.f32.mrf.mxu0
      %v6330 = vadd.f32 0.0, %v6329
      %6331 = vmatmul.bf16.gmra.mxu0 %v6061
      %v6332 = vpop.f32.mrf.mxu0
      %v6333 = vadd.f32 0.0, %v6332
      %v6334 = vpop.f32.mrf.mxu0
      %v6335 = vadd.f32 0.0, %v6334
      %6336 = vmatmul.bf16.gmra.mxu0 %v6064
      %v6337 = vpop.f32.mrf.mxu0
      %v6338 = vadd.f32 0.0, %v6337
      %v6339 = vpop.f32.mrf.mxu0
      %v6340 = vadd.f32 0.0, %v6339
      %6341 = vmatmul.bf16.gmra.mxu0 %v6067
      %v6342 = vpop.f32.mrf.mxu0
      %v6343 = vadd.f32 0.0, %v6342
      %v6344 = vpop.f32.mrf.mxu0
      %v6345 = vadd.f32 0.0, %v6344
      %6346 = vmatmul.bf16.gmra.mxu0 %v6070
      %v6347 = vpop.f32.mrf.mxu0
      %v6348 = vadd.f32 0.0, %v6347
      %v6349 = vpop.f32.mrf.mxu0
      %v6350 = vadd.f32 0.0, %v6349
      %6351 = vmatmul.bf16.gmra.mxu0 %v6073
      %v6352 = vpop.f32.mrf.mxu0
      %v6353 = vadd.f32 0.0, %v6352
      %v6354 = vpop.f32.mrf.mxu0
      %v6355 = vadd.f32 0.0, %v6354
      %6356 = vmatmul.bf16.gmra.mxu0 %v6076
      %v6357 = vpop.f32.mrf.mxu0
      %v6358 = vadd.f32 0.0, %v6357
      %v6359 = vpop.f32.mrf.mxu0
      %v6360 = vadd.f32 0.0, %v6359
      %6361 = vmatmul.bf16.gmra.mxu0 %v6079
      %v6362 = vpop.f32.mrf.mxu0
      %v6363 = vadd.f32 0.0, %v6362
      %v6364 = vpop.f32.mrf.mxu0
      %v6365 = vadd.f32 0.0, %v6364
      %6366 = vmatmul.bf16.gmra.mxu0 %v6082
      %v6367 = vpop.f32.mrf.mxu0
      %v6368 = vadd.f32 0.0, %v6367
      %v6369 = vpop.f32.mrf.mxu0
      %v6370 = vadd.f32 0.0, %v6369
      %6371 = vmatmul.bf16.gmra.mxu0 %v6085
      %v6372 = vpop.f32.mrf.mxu0
      %v6373 = vadd.f32 0.0, %v6372
      %v6374 = vpop.f32.mrf.mxu0
      %v6375 = vadd.f32 0.0, %v6374
      %6376 = vmatmul.bf16.gmra.mxu0 %v6088
      %v6377 = vpop.f32.mrf.mxu0
      %v6378 = vadd.f32 0.0, %v6377
      %v6379 = vpop.f32.mrf.mxu0
      %v6380 = vadd.f32 0.0, %v6379
      %6381 = vmatmul.bf16.gmra.mxu0 %v6091
      %v6382 = vpop.f32.mrf.mxu0
      %v6383 = vadd.f32 0.0, %v6382
      %v6384 = vpop.f32.mrf.mxu0
      %v6385 = vadd.f32 0.0, %v6384
      %6386 = vmatmul.bf16.gmra.mxu0 %v6094
      %v6387 = vpop.f32.mrf.mxu0
      %v6388 = vadd.f32 0.0, %v6387
      %v6389 = vpop.f32.mrf.mxu0
      %v6390 = vadd.f32 0.0, %v6389
      %6391 = vmatmul.bf16.gmra.mxu0 %v6097
      %v6392 = vpop.f32.mrf.mxu0
      %v6393 = vadd.f32 0.0, %v6392
      %v6394 = vpop.f32.mrf.mxu0
      %v6395 = vadd.f32 0.0, %v6394
      %6396 = vmatmul.bf16.gmra.mxu0 %v6100
      %v6397 = vpop.f32.mrf.mxu0
      %v6398 = vadd.f32 0.0, %v6397
      %v6399 = vpop.f32.mrf.mxu0
      %v6400 = vadd.f32 0.0, %v6399
      %6401 = vmatmul.bf16.gmra.mxu0 %v6103
      %v6402 = vpop.f32.mrf.mxu0
      %v6403 = vadd.f32 0.0, %v6402
      %v6404 = vpop.f32.mrf.mxu0
      %v6405 = vadd.f32 0.0, %v6404
      %6406 = vmatmul.bf16.gmra.mxu0 %v6106
      %v6407 = vpop.f32.mrf.mxu0
      %v6408 = vadd.f32 0.0, %v6407
      %v6409 = vpop.f32.mrf.mxu0
      %v6410 = vadd.f32 0.0, %v6409
      %6411 = vmatmul.bf16.gmra.mxu0 %v6109
      %v6412 = vpop.f32.mrf.mxu0
      %v6413 = vadd.f32 0.0, %v6412
      %v6414 = vpop.f32.mrf.mxu0
      %v6415 = vadd.f32 0.0, %v6414
      %6416 = vmatmul.bf16.gmra.mxu0 %v6112
      %v6417 = vpop.f32.mrf.mxu0
      %v6418 = vadd.f32 0.0, %v6417
      %v6419 = vpop.f32.mrf.mxu0
      %v6420 = vadd.f32 0.0, %v6419
      %6421 = vmatmul.bf16.gmra.mxu0 %v6115
      %v6422 = vpop.f32.mrf.mxu0
      %v6423 = vadd.f32 0.0, %v6422
      %v6424 = vpop.f32.mrf.mxu0
      %v6425 = vadd.f32 0.0, %v6424
      %6426 = vmatmul.bf16.gmra.mxu0 %v6118
      %v6427 = vpop.f32.mrf.mxu0
      %v6428 = vadd.f32 0.0, %v6427
      %v6429 = vpop.f32.mrf.mxu0
      %v6430 = vadd.f32 0.0, %v6429
      %6431 = vmatmul.bf16.gmra.mxu0 %v6121
      %v6432 = vpop.f32.mrf.mxu0
      %v6433 = vadd.f32 0.0, %v6432
      %v6434 = vpop.f32.mrf.mxu0
      %v6435 = vadd.f32 0.0, %v6434
      %6436 = vmatmul.bf16.gmra.mxu0 %v6124
      %v6437 = vpop.f32.mrf.mxu0
      %v6438 = vadd.f32 0.0, %v6437
      %v6439 = vpop.f32.mrf.mxu0
      %v6440 = vadd.f32 0.0, %v6439
      %6441 = vmatmul.bf16.gmra.mxu0 %v6127
      %v6442 = vpop.f32.mrf.mxu0
      %v6443 = vadd.f32 0.0, %v6442
      %v6444 = vpop.f32.mrf.mxu0
      %v6445 = vadd.f32 0.0, %v6444
      %6446 = vmatmul.bf16.gmra.mxu0 %v6130
      %v6447 = vpop.f32.mrf.mxu0
      %v6448 = vadd.f32 0.0, %v6447
      %v6449 = vpop.f32.mrf.mxu0
      %v6450 = vadd.f32 0.0, %v6449
      %6451 = vmatmul.bf16.gmra.mxu0 %v6133
      %v6452 = vpop.f32.mrf.mxu0
      %v6453 = vadd.f32 0.0, %v6452
      %v6454 = vpop.f32.mrf.mxu0
      %v6455 = vadd.f32 0.0, %v6454
      %6456 = vmatmul.bf16.gmra.mxu0 %v6136
      %v6457 = vpop.f32.mrf.mxu0
      %v6458 = vadd.f32 0.0, %v6457
      %v6459 = vpop.f32.mrf.mxu0
      %v6460 = vadd.f32 0.0, %v6459
      %6461 = vmatmul.bf16.gmra.mxu0 %v6139
      %v6462 = vpop.f32.mrf.mxu0
      %v6463 = vadd.f32 0.0, %v6462
      %v6464 = vpop.f32.mrf.mxu0
      %v6465 = vadd.f32 0.0, %v6464
      %6466 = vmatmul.bf16.gmra.mxu0 %v6142
      %v6467 = vpop.f32.mrf.mxu0
      %v6468 = vadd.f32 0.0, %v6467
      %v6469 = vpop.f32.mrf.mxu0
      %v6470 = vadd.f32 0.0, %v6469
      %6471 = vmatmul.bf16.gmra.mxu0 %v6145
      %v6472 = vpop.f32.mrf.mxu0
      %v6473 = vadd.f32 0.0, %v6472
      %v6474 = vpop.f32.mrf.mxu0
      %v6475 = vadd.f32 0.0, %v6474
      %6476 = vmatmul.bf16.gmra.mxu0 %v6148
      %v6477 = vpop.f32.mrf.mxu0
      %v6478 = vadd.f32 0.0, %v6477
      %v6479 = vpop.f32.mrf.mxu0
      %v6480 = vadd.f32 0.0, %v6479
      %6481 = vdwg.mxu0
      %v6482 = vadd.f32 %v5185, %v6163
      %v6483 = vadd.f32 %v5186, %v6165
      %v6484 = vadd.f32 %v5187, %v6168
      %v6485 = vadd.f32 %v5188, %v6170
      %v6486 = vadd.f32 %v5189, %v6173
      %v6487 = vadd.f32 %v5190, %v6175
      %v6488 = vadd.f32 %v5191, %v6178
      %v6489 = vadd.f32 %v5192, %v6180
      %v6490 = vadd.f32 %v5193, %v6183
      %v6491 = vadd.f32 %v5194, %v6185
      %v6492 = vadd.f32 %v5195, %v6188
      %v6493 = vadd.f32 %v5196, %v6190
      %v6494 = vadd.f32 %v5197, %v6193
      %v6495 = vadd.f32 %v5198, %v6195
      %v6496 = vadd.f32 %v5199, %v6198
      %v6497 = vadd.f32 %v5200, %v6200
      %v6498 = vadd.f32 %v5201, %v6203
      %v6499 = vadd.f32 %v5202, %v6205
      %v6500 = vadd.f32 %v5203, %v6208
      %v6501 = vadd.f32 %v5204, %v6210
      %v6502 = vadd.f32 %v5205, %v6213
      %v6503 = vadd.f32 %v5206, %v6215
      %v6504 = vadd.f32 %v5207, %v6218
      %v6505 = vadd.f32 %v5208, %v6220
      %v6506 = vadd.f32 %v5209, %v6223
      %v6507 = vadd.f32 %v5210, %v6225
      %v6508 = vadd.f32 %v5211, %v6228
      %v6509 = vadd.f32 %v5212, %v6230
      %v6510 = vadd.f32 %v5213, %v6233
      %v6511 = vadd.f32 %v5214, %v6235
      %v6512 = vadd.f32 %v5215, %v6238
      %v6513 = vadd.f32 %v5216, %v6240
      %v6514 = vadd.f32 %v5217, %v6243
      %v6515 = vadd.f32 %v5218, %v6245
      %v6516 = vadd.f32 %v5219, %v6248
      %v6517 = vadd.f32 %v5220, %v6250
      %v6518 = vadd.f32 %v5221, %v6253
      %v6519 = vadd.f32 %v5222, %v6255
      %v6520 = vadd.f32 %v5223, %v6258
      %v6521 = vadd.f32 %v5224, %v6260
      %v6522 = vadd.f32 %v5225, %v6263
      %v6523 = vadd.f32 %v5226, %v6265
      %v6524 = vadd.f32 %v5227, %v6268
      %v6525 = vadd.f32 %v5228, %v6270
      %v6526 = vadd.f32 %v5229, %v6273
      %v6527 = vadd.f32 %v5230, %v6275
      %v6528 = vadd.f32 %v5231, %v6278
      %v6529 = vadd.f32 %v5232, %v6280
      %v6530 = vadd.f32 %v5233, %v6283
      %v6531 = vadd.f32 %v5234, %v6285
      %v6532 = vadd.f32 %v5235, %v6288
      %v6533 = vadd.f32 %v5236, %v6290
      %v6534 = vadd.f32 %v5237, %v6293
      %v6535 = vadd.f32 %v5238, %v6295
      %v6536 = vadd.f32 %v5239, %v6298
      %v6537 = vadd.f32 %v5240, %v6300
      %v6538 = vadd.f32 %v5241, %v6303
      %v6539 = vadd.f32 %v5242, %v6305
      %v6540 = vadd.f32 %v5243, %v6308
      %v6541 = vadd.f32 %v5244, %v6310
      %v6542 = vadd.f32 %v5245, %v6313
      %v6543 = vadd.f32 %v5246, %v6315
      %v6544 = vadd.f32 %v5247, %v6318
      %v6545 = vadd.f32 %v5248, %v6320
      %v6546 = vadd.f32 %v5249, %v6323
      %v6547 = vadd.f32 %v5250, %v6325
      %v6548 = vadd.f32 %v5251, %v6328
      %v6549 = vadd.f32 %v5252, %v6330
      %v6550 = vadd.f32 %v5253, %v6333
      %v6551 = vadd.f32 %v5254, %v6335
      %v6552 = vadd.f32 %v5255, %v6338
      %v6553 = vadd.f32 %v5256, %v6340
      %v6554 = vadd.f32 %v5257, %v6343
      %v6555 = vadd.f32 %v5258, %v6345
      %v6556 = vadd.f32 %v5259, %v6348
      %v6557 = vadd.f32 %v5260, %v6350
      %v6558 = vadd.f32 %v5261, %v6353
      %v6559 = vadd.f32 %v5262, %v6355
      %v6560 = vadd.f32 %v5263, %v6358
      %v6561 = vadd.f32 %v5264, %v6360
      %v6562 = vadd.f32 %v5265, %v6363
      %v6563 = vadd.f32 %v5266, %v6365
      %v6564 = vadd.f32 %v5267, %v6368
      %v6565 = vadd.f32 %v5268, %v6370
      %v6566 = vadd.f32 %v5269, %v6373
      %v6567 = vadd.f32 %v5270, %v6375
      %v6568 = vadd.f32 %v5271, %v6378
      %v6569 = vadd.f32 %v5272, %v6380
      %v6570 = vadd.f32 %v5273, %v6383
      %v6571 = vadd.f32 %v5274, %v6385
      %v6572 = vadd.f32 %v5275, %v6388
      %v6573 = vadd.f32 %v5276, %v6390
      %v6574 = vadd.f32 %v5277, %v6393
      %v6575 = vadd.f32 %v5278, %v6395
      %v6576 = vadd.f32 %v5279, %v6398
      %v6577 = vadd.f32 %v5280, %v6400
      %v6578 = vadd.f32 %v5281, %v6403
      %v6579 = vadd.f32 %v5282, %v6405
      %v6580 = vadd.f32 %v5283, %v6408
      %v6581 = vadd.f32 %v5284, %v6410
      %v6582 = vadd.f32 %v5285, %v6413
      %v6583 = vadd.f32 %v5286, %v6415
      %v6584 = vadd.f32 %v5287, %v6418
      %v6585 = vadd.f32 %v5288, %v6420
      %v6586 = vadd.f32 %v5289, %v6423
      %v6587 = vadd.f32 %v5290, %v6425
      %v6588 = vadd.f32 %v5291, %v6428
      %v6589 = vadd.f32 %v5292, %v6430
      %v6590 = vadd.f32 %v5293, %v6433
      %v6591 = vadd.f32 %v5294, %v6435
      %v6592 = vadd.f32 %v5295, %v6438
      %v6593 = vadd.f32 %v5296, %v6440
      %v6594 = vadd.f32 %v5297, %v6443
      %v6595 = vadd.f32 %v5298, %v6445
      %v6596 = vadd.f32 %v5299, %v6448
      %v6597 = vadd.f32 %v5300, %v6450
      %v6598 = vadd.f32 %v5301, %v6453
      %v6599 = vadd.f32 %v5302, %v6455
      %v6600 = vadd.f32 %v5303, %v6458
      %v6601 = vadd.f32 %v5304, %v6460
      %v6602 = vadd.f32 %v5305, %v6463
      %v6603 = vadd.f32 %v5306, %v6465
      %v6604 = vadd.f32 %v5307, %v6468
      %v6605 = vadd.f32 %v5308, %v6470
      %v6606 = vadd.f32 %v5309, %v6473
      %v6607 = vadd.f32 %v5310, %v6475
      %v6608 = vadd.f32 %v5311, %v6478
      %v6609 = vadd.f32 %v5312, %v6480
      %v6611 = vrot.slane %v332, 5
      %v6612 = vrot.slane %v6611, 4
      %v6613 = vrot.slane %v333, 5
      %v6614 = vsel %vm5347, %v6612, %v6613
      %v6615 = vrot.slane %v6613, 4
      %v6616 = vrot.slane %v334, 5
      %v6617 = vsel %vm5347, %v6615, %v6616
      %v6618 = vrot.slane %v6616, 4
      %v6619 = vrot.slane %v335, 5
      %v6620 = vsel %vm5347, %v6618, %v6619
      %v6621 = vrot.slane %v6619, 4
      %v6622 = vrot.slane %v336, 5
      %v6623 = vsel %vm5347, %v6621, %v6622
      %s6624 = scalar_lea.vmem %s1, 10
      %v6625 = vld [vmem:[%s6624] sm:$0x3]
      %v6626 = vunpack.c.l.b16 %v6614
      %v6627 = vunpack.c.l.b16 %v6617
      %v6628 = vunpack.c.l.b16 %v6620
      %v6629 = vunpack.c.l.b16 %v6623
      %v6630 = vpack.c.b16 %v6627, %v6626
      %v6631 = vpack.c.b16 %v6629, %v6628
      %v6633 = vsel %vm665, %v6630, 0
      %v6636 = vsel %vm665, %v6631, 0
      %v6639 = vand.u32 %v6625, %v861
      %6641 = vmatpush.bf16.msra.mxu0 0
      %6642 = vmatpush.bf16.msra.mxu0 0
      %6643 = vmatpush.bf16.msra.mxu0 0
      %6644 = vmatpush.bf16.msra.mxu0 0
      %6645 = vmatpush.bf16.msra.mxu0 0
      %6646 = vmatpush.bf16.msra.mxu0 0
      %6647 = vmatpush.bf16.msra.mxu0 0
      %6648 = vmatpush.bf16.msra.mxu0 %v6639
      %6649 = vmatmul.bf16.gmra.mxu0 %v5965
      %v6650 = vpop.f32.mrf.mxu0
      %v6651 = vadd.f32 0.0, %v6650
      %v6652 = vpop.f32.mrf.mxu0
      %v6653 = vadd.f32 0.0, %v6652
      %6654 = vmatmul.bf16.gmra.mxu0 %v5968
      %v6655 = vpop.f32.mrf.mxu0
      %v6656 = vadd.f32 0.0, %v6655
      %v6657 = vpop.f32.mrf.mxu0
      %v6658 = vadd.f32 0.0, %v6657
      %6659 = vmatmul.bf16.gmra.mxu0 %v5971
      %v6660 = vpop.f32.mrf.mxu0
      %v6661 = vadd.f32 0.0, %v6660
      %v6662 = vpop.f32.mrf.mxu0
      %v6663 = vadd.f32 0.0, %v6662
      %6664 = vmatmul.bf16.gmra.mxu0 %v5974
      %v6665 = vpop.f32.mrf.mxu0
      %v6666 = vadd.f32 0.0, %v6665
      %v6667 = vpop.f32.mrf.mxu0
      %v6668 = vadd.f32 0.0, %v6667
      %6669 = vmatmul.bf16.gmra.mxu0 %v5977
      %v6670 = vpop.f32.mrf.mxu0
      %v6671 = vadd.f32 0.0, %v6670
      %v6672 = vpop.f32.mrf.mxu0
      %v6673 = vadd.f32 0.0, %v6672
      %6674 = vmatmul.bf16.gmra.mxu0 %v5980
      %v6675 = vpop.f32.mrf.mxu0
      %v6676 = vadd.f32 0.0, %v6675
      %v6677 = vpop.f32.mrf.mxu0
      %v6678 = vadd.f32 0.0, %v6677
      %6679 = vmatmul.bf16.gmra.mxu0 %v5983
      %v6680 = vpop.f32.mrf.mxu0
      %v6681 = vadd.f32 0.0, %v6680
      %v6682 = vpop.f32.mrf.mxu0
      %v6683 = vadd.f32 0.0, %v6682
      %6684 = vmatmul.bf16.gmra.mxu0 %v5986
      %v6685 = vpop.f32.mrf.mxu0
      %v6686 = vadd.f32 0.0, %v6685
      %v6687 = vpop.f32.mrf.mxu0
      %v6688 = vadd.f32 0.0, %v6687
      %6689 = vmatmul.bf16.gmra.mxu0 %v5989
      %v6690 = vpop.f32.mrf.mxu0
      %v6691 = vadd.f32 0.0, %v6690
      %v6692 = vpop.f32.mrf.mxu0
      %v6693 = vadd.f32 0.0, %v6692
      %6694 = vmatmul.bf16.gmra.mxu0 %v5992
      %v6695 = vpop.f32.mrf.mxu0
      %v6696 = vadd.f32 0.0, %v6695
      %v6697 = vpop.f32.mrf.mxu0
      %v6698 = vadd.f32 0.0, %v6697
      %6699 = vmatmul.bf16.gmra.mxu0 %v5995
      %v6700 = vpop.f32.mrf.mxu0
      %v6701 = vadd.f32 0.0, %v6700
      %v6702 = vpop.f32.mrf.mxu0
      %v6703 = vadd.f32 0.0, %v6702
      %6704 = vmatmul.bf16.gmra.mxu0 %v5998
      %v6705 = vpop.f32.mrf.mxu0
      %v6706 = vadd.f32 0.0, %v6705
      %v6707 = vpop.f32.mrf.mxu0
      %v6708 = vadd.f32 0.0, %v6707
      %6709 = vmatmul.bf16.gmra.mxu0 %v6001
      %v6710 = vpop.f32.mrf.mxu0
      %v6711 = vadd.f32 0.0, %v6710
      %v6712 = vpop.f32.mrf.mxu0
      %v6713 = vadd.f32 0.0, %v6712
      %6714 = vmatmul.bf16.gmra.mxu0 %v6004
      %v6715 = vpop.f32.mrf.mxu0
      %v6716 = vadd.f32 0.0, %v6715
      %v6717 = vpop.f32.mrf.mxu0
      %v6718 = vadd.f32 0.0, %v6717
      %6719 = vmatmul.bf16.gmra.mxu0 %v6007
      %v6720 = vpop.f32.mrf.mxu0
      %v6721 = vadd.f32 0.0, %v6720
      %v6722 = vpop.f32.mrf.mxu0
      %v6723 = vadd.f32 0.0, %v6722
      %6724 = vmatmul.bf16.gmra.mxu0 %v6010
      %v6725 = vpop.f32.mrf.mxu0
      %v6726 = vadd.f32 0.0, %v6725
      %v6727 = vpop.f32.mrf.mxu0
      %v6728 = vadd.f32 0.0, %v6727
      %6729 = vmatmul.bf16.gmra.mxu0 %v6013
      %v6730 = vpop.f32.mrf.mxu0
      %v6731 = vadd.f32 0.0, %v6730
      %v6732 = vpop.f32.mrf.mxu0
      %v6733 = vadd.f32 0.0, %v6732
      %6734 = vmatmul.bf16.gmra.mxu0 %v6016
      %v6735 = vpop.f32.mrf.mxu0
      %v6736 = vadd.f32 0.0, %v6735
      %v6737 = vpop.f32.mrf.mxu0
      %v6738 = vadd.f32 0.0, %v6737
      %6739 = vmatmul.bf16.gmra.mxu0 %v6019
      %v6740 = vpop.f32.mrf.mxu0
      %v6741 = vadd.f32 0.0, %v6740
      %v6742 = vpop.f32.mrf.mxu0
      %v6743 = vadd.f32 0.0, %v6742
      %6744 = vmatmul.bf16.gmra.mxu0 %v6022
      %v6745 = vpop.f32.mrf.mxu0
      %v6746 = vadd.f32 0.0, %v6745
      %v6747 = vpop.f32.mrf.mxu0
      %v6748 = vadd.f32 0.0, %v6747
      %6749 = vmatmul.bf16.gmra.mxu0 %v6025
      %v6750 = vpop.f32.mrf.mxu0
      %v6751 = vadd.f32 0.0, %v6750
      %v6752 = vpop.f32.mrf.mxu0
      %v6753 = vadd.f32 0.0, %v6752
      %6754 = vmatmul.bf16.gmra.mxu0 %v6028
      %v6755 = vpop.f32.mrf.mxu0
      %v6756 = vadd.f32 0.0, %v6755
      %v6757 = vpop.f32.mrf.mxu0
      %v6758 = vadd.f32 0.0, %v6757
      %6759 = vmatmul.bf16.gmra.mxu0 %v6031
      %v6760 = vpop.f32.mrf.mxu0
      %v6761 = vadd.f32 0.0, %v6760
      %v6762 = vpop.f32.mrf.mxu0
      %v6763 = vadd.f32 0.0, %v6762
      %6764 = vmatmul.bf16.gmra.mxu0 %v6034
      %v6765 = vpop.f32.mrf.mxu0
      %v6766 = vadd.f32 0.0, %v6765
      %v6767 = vpop.f32.mrf.mxu0
      %v6768 = vadd.f32 0.0, %v6767
      %6769 = vmatmul.bf16.gmra.mxu0 %v6037
      %v6770 = vpop.f32.mrf.mxu0
      %v6771 = vadd.f32 0.0, %v6770
      %v6772 = vpop.f32.mrf.mxu0
      %v6773 = vadd.f32 0.0, %v6772
      %6774 = vmatmul.bf16.gmra.mxu0 %v6040
      %v6775 = vpop.f32.mrf.mxu0
      %v6776 = vadd.f32 0.0, %v6775
      %v6777 = vpop.f32.mrf.mxu0
      %v6778 = vadd.f32 0.0, %v6777
      %6779 = vmatmul.bf16.gmra.mxu0 %v6043
      %v6780 = vpop.f32.mrf.mxu0
      %v6781 = vadd.f32 0.0, %v6780
      %v6782 = vpop.f32.mrf.mxu0
      %v6783 = vadd.f32 0.0, %v6782
      %6784 = vmatmul.bf16.gmra.mxu0 %v6046
      %v6785 = vpop.f32.mrf.mxu0
      %v6786 = vadd.f32 0.0, %v6785
      %v6787 = vpop.f32.mrf.mxu0
      %v6788 = vadd.f32 0.0, %v6787
      %6789 = vmatmul.bf16.gmra.mxu0 %v6049
      %v6790 = vpop.f32.mrf.mxu0
      %v6791 = vadd.f32 0.0, %v6790
      %v6792 = vpop.f32.mrf.mxu0
      %v6793 = vadd.f32 0.0, %v6792
      %6794 = vmatmul.bf16.gmra.mxu0 %v6052
      %v6795 = vpop.f32.mrf.mxu0
      %v6796 = vadd.f32 0.0, %v6795
      %v6797 = vpop.f32.mrf.mxu0
      %v6798 = vadd.f32 0.0, %v6797
      %6799 = vmatmul.bf16.gmra.mxu0 %v6055
      %v6800 = vpop.f32.mrf.mxu0
      %v6801 = vadd.f32 0.0, %v6800
      %v6802 = vpop.f32.mrf.mxu0
      %v6803 = vadd.f32 0.0, %v6802
      %6804 = vmatmul.bf16.gmra.mxu0 %v6058
      %v6805 = vpop.f32.mrf.mxu0
      %v6806 = vadd.f32 0.0, %v6805
      %v6807 = vpop.f32.mrf.mxu0
      %v6808 = vadd.f32 0.0, %v6807
      %6809 = vmatmul.bf16.gmra.mxu0 %v6061
      %v6810 = vpop.f32.mrf.mxu0
      %v6811 = vadd.f32 0.0, %v6810
      %v6812 = vpop.f32.mrf.mxu0
      %v6813 = vadd.f32 0.0, %v6812
      %6814 = vmatmul.bf16.gmra.mxu0 %v6064
      %v6815 = vpop.f32.mrf.mxu0
      %v6816 = vadd.f32 0.0, %v6815
      %v6817 = vpop.f32.mrf.mxu0
      %v6818 = vadd.f32 0.0, %v6817
      %6819 = vmatmul.bf16.gmra.mxu0 %v6067
      %v6820 = vpop.f32.mrf.mxu0
      %v6821 = vadd.f32 0.0, %v6820
      %v6822 = vpop.f32.mrf.mxu0
      %v6823 = vadd.f32 0.0, %v6822
      %6824 = vmatmul.bf16.gmra.mxu0 %v6070
      %v6825 = vpop.f32.mrf.mxu0
      %v6826 = vadd.f32 0.0, %v6825
      %v6827 = vpop.f32.mrf.mxu0
      %v6828 = vadd.f32 0.0, %v6827
      %6829 = vmatmul.bf16.gmra.mxu0 %v6073
      %v6830 = vpop.f32.mrf.mxu0
      %v6831 = vadd.f32 0.0, %v6830
      %v6832 = vpop.f32.mrf.mxu0
      %v6833 = vadd.f32 0.0, %v6832
      %6834 = vmatmul.bf16.gmra.mxu0 %v6076
      %v6835 = vpop.f32.mrf.mxu0
      %v6836 = vadd.f32 0.0, %v6835
      %v6837 = vpop.f32.mrf.mxu0
      %v6838 = vadd.f32 0.0, %v6837
      %6839 = vmatmul.bf16.gmra.mxu0 %v6079
      %v6840 = vpop.f32.mrf.mxu0
      %v6841 = vadd.f32 0.0, %v6840
      %v6842 = vpop.f32.mrf.mxu0
      %v6843 = vadd.f32 0.0, %v6842
      %6844 = vmatmul.bf16.gmra.mxu0 %v6082
      %v6845 = vpop.f32.mrf.mxu0
      %v6846 = vadd.f32 0.0, %v6845
      %v6847 = vpop.f32.mrf.mxu0
      %v6848 = vadd.f32 0.0, %v6847
      %6849 = vmatmul.bf16.gmra.mxu0 %v6085
      %v6850 = vpop.f32.mrf.mxu0
      %v6851 = vadd.f32 0.0, %v6850
      %v6852 = vpop.f32.mrf.mxu0
      %v6853 = vadd.f32 0.0, %v6852
      %6854 = vmatmul.bf16.gmra.mxu0 %v6088
      %v6855 = vpop.f32.mrf.mxu0
      %v6856 = vadd.f32 0.0, %v6855
      %v6857 = vpop.f32.mrf.mxu0
      %v6858 = vadd.f32 0.0, %v6857
      %6859 = vmatmul.bf16.gmra.mxu0 %v6091
      %v6860 = vpop.f32.mrf.mxu0
      %v6861 = vadd.f32 0.0, %v6860
      %v6862 = vpop.f32.mrf.mxu0
      %v6863 = vadd.f32 0.0, %v6862
      %6864 = vmatmul.bf16.gmra.mxu0 %v6094
      %v6865 = vpop.f32.mrf.mxu0
      %v6866 = vadd.f32 0.0, %v6865
      %v6867 = vpop.f32.mrf.mxu0
      %v6868 = vadd.f32 0.0, %v6867
      %6869 = vmatmul.bf16.gmra.mxu0 %v6097
      %v6870 = vpop.f32.mrf.mxu0
      %v6871 = vadd.f32 0.0, %v6870
      %v6872 = vpop.f32.mrf.mxu0
      %v6873 = vadd.f32 0.0, %v6872
      %6874 = vmatmul.bf16.gmra.mxu0 %v6100
      %v6875 = vpop.f32.mrf.mxu0
      %v6876 = vadd.f32 0.0, %v6875
      %v6877 = vpop.f32.mrf.mxu0
      %v6878 = vadd.f32 0.0, %v6877
      %6879 = vmatmul.bf16.gmra.mxu0 %v6103
      %v6880 = vpop.f32.mrf.mxu0
      %v6881 = vadd.f32 0.0, %v6880
      %v6882 = vpop.f32.mrf.mxu0
      %v6883 = vadd.f32 0.0, %v6882
      %6884 = vmatmul.bf16.gmra.mxu0 %v6106
      %v6885 = vpop.f32.mrf.mxu0
      %v6886 = vadd.f32 0.0, %v6885
      %v6887 = vpop.f32.mrf.mxu0
      %v6888 = vadd.f32 0.0, %v6887
      %6889 = vmatmul.bf16.gmra.mxu0 %v6109
      %v6890 = vpop.f32.mrf.mxu0
      %v6891 = vadd.f32 0.0, %v6890
      %v6892 = vpop.f32.mrf.mxu0
      %v6893 = vadd.f32 0.0, %v6892
      %6894 = vmatmul.bf16.gmra.mxu0 %v6112
      %v6895 = vpop.f32.mrf.mxu0
      %v6896 = vadd.f32 0.0, %v6895
      %v6897 = vpop.f32.mrf.mxu0
      %v6898 = vadd.f32 0.0, %v6897
      %6899 = vmatmul.bf16.gmra.mxu0 %v6115
      %v6900 = vpop.f32.mrf.mxu0
      %v6901 = vadd.f32 0.0, %v6900
      %v6902 = vpop.f32.mrf.mxu0
      %v6903 = vadd.f32 0.0, %v6902
      %6904 = vmatmul.bf16.gmra.mxu0 %v6118
      %v6905 = vpop.f32.mrf.mxu0
      %v6906 = vadd.f32 0.0, %v6905
      %v6907 = vpop.f32.mrf.mxu0
      %v6908 = vadd.f32 0.0, %v6907
      %6909 = vmatmul.bf16.gmra.mxu0 %v6121
      %v6910 = vpop.f32.mrf.mxu0
      %v6911 = vadd.f32 0.0, %v6910
      %v6912 = vpop.f32.mrf.mxu0
      %v6913 = vadd.f32 0.0, %v6912
      %6914 = vmatmul.bf16.gmra.mxu0 %v6124
      %v6915 = vpop.f32.mrf.mxu0
      %v6916 = vadd.f32 0.0, %v6915
      %v6917 = vpop.f32.mrf.mxu0
      %v6918 = vadd.f32 0.0, %v6917
      %6919 = vmatmul.bf16.gmra.mxu0 %v6127
      %v6920 = vpop.f32.mrf.mxu0
      %v6921 = vadd.f32 0.0, %v6920
      %v6922 = vpop.f32.mrf.mxu0
      %v6923 = vadd.f32 0.0, %v6922
      %6924 = vmatmul.bf16.gmra.mxu0 %v6130
      %v6925 = vpop.f32.mrf.mxu0
      %v6926 = vadd.f32 0.0, %v6925
      %v6927 = vpop.f32.mrf.mxu0
      %v6928 = vadd.f32 0.0, %v6927
      %6929 = vmatmul.bf16.gmra.mxu0 %v6133
      %v6930 = vpop.f32.mrf.mxu0
      %v6931 = vadd.f32 0.0, %v6930
      %v6932 = vpop.f32.mrf.mxu0
      %v6933 = vadd.f32 0.0, %v6932
      %6934 = vmatmul.bf16.gmra.mxu0 %v6136
      %v6935 = vpop.f32.mrf.mxu0
      %v6936 = vadd.f32 0.0, %v6935
      %v6937 = vpop.f32.mrf.mxu0
      %v6938 = vadd.f32 0.0, %v6937
      %6939 = vmatmul.bf16.gmra.mxu0 %v6139
      %v6940 = vpop.f32.mrf.mxu0
      %v6941 = vadd.f32 0.0, %v6940
      %v6942 = vpop.f32.mrf.mxu0
      %v6943 = vadd.f32 0.0, %v6942
      %6944 = vmatmul.bf16.gmra.mxu0 %v6142
      %v6945 = vpop.f32.mrf.mxu0
      %v6946 = vadd.f32 0.0, %v6945
      %v6947 = vpop.f32.mrf.mxu0
      %v6948 = vadd.f32 0.0, %v6947
      %6949 = vmatmul.bf16.gmra.mxu0 %v6145
      %v6950 = vpop.f32.mrf.mxu0
      %v6951 = vadd.f32 0.0, %v6950
      %v6952 = vpop.f32.mrf.mxu0
      %v6953 = vadd.f32 0.0, %v6952
      %6954 = vmatmul.bf16.gmra.mxu0 %v6148
      %v6955 = vpop.f32.mrf.mxu0
      %v6956 = vadd.f32 0.0, %v6955
      %v6957 = vpop.f32.mrf.mxu0
      %v6958 = vadd.f32 0.0, %v6957
      %6959 = vmatmul.bf16.gmra.mxu0 %v6633
      %v6960 = vpop.f32.mrf.mxu0
      %v6961 = vadd.f32 0.0, %v6960
      %v6962 = vpop.f32.mrf.mxu0
      %v6963 = vadd.f32 0.0, %v6962
      %6964 = vmatmul.bf16.gmra.mxu0 %v6636
      %v6965 = vpop.f32.mrf.mxu0
      %v6966 = vadd.f32 0.0, %v6965
      %v6967 = vpop.f32.mrf.mxu0
      %v6968 = vadd.f32 0.0, %v6967
      %6969 = vdwg.mxu0
      %v6970 = vadd.f32 %v6482, %v6651
      %v6971 = vadd.f32 %v6483, %v6653
      %v6972 = vadd.f32 %v6484, %v6656
      %v6973 = vadd.f32 %v6485, %v6658
      %v6974 = vadd.f32 %v6486, %v6661
      %v6975 = vadd.f32 %v6487, %v6663
      %v6976 = vadd.f32 %v6488, %v6666
      %v6977 = vadd.f32 %v6489, %v6668
      %v6978 = vadd.f32 %v6490, %v6671
      %v6979 = vadd.f32 %v6491, %v6673
      %v6980 = vadd.f32 %v6492, %v6676
      %v6981 = vadd.f32 %v6493, %v6678
      %v6982 = vadd.f32 %v6494, %v6681
      %v6983 = vadd.f32 %v6495, %v6683
      %v6984 = vadd.f32 %v6496, %v6686
      %v6985 = vadd.f32 %v6497, %v6688
      %v6986 = vadd.f32 %v6498, %v6691
      %v6987 = vadd.f32 %v6499, %v6693
      %v6988 = vadd.f32 %v6500, %v6696
      %v6989 = vadd.f32 %v6501, %v6698
      %v6990 = vadd.f32 %v6502, %v6701
      %v6991 = vadd.f32 %v6503, %v6703
      %v6992 = vadd.f32 %v6504, %v6706
      %v6993 = vadd.f32 %v6505, %v6708
      %v6994 = vadd.f32 %v6506, %v6711
      %v6995 = vadd.f32 %v6507, %v6713
      %v6996 = vadd.f32 %v6508, %v6716
      %v6997 = vadd.f32 %v6509, %v6718
      %v6998 = vadd.f32 %v6510, %v6721
      %v6999 = vadd.f32 %v6511, %v6723
      %v7000 = vadd.f32 %v6512, %v6726
      %v7001 = vadd.f32 %v6513, %v6728
      %v7002 = vadd.f32 %v6514, %v6731
      %v7003 = vadd.f32 %v6515, %v6733
      %v7004 = vadd.f32 %v6516, %v6736
      %v7005 = vadd.f32 %v6517, %v6738
      %v7006 = vadd.f32 %v6518, %v6741
      %v7007 = vadd.f32 %v6519, %v6743
      %v7008 = vadd.f32 %v6520, %v6746
      %v7009 = vadd.f32 %v6521, %v6748
      %v7010 = vadd.f32 %v6522, %v6751
      %v7011 = vadd.f32 %v6523, %v6753
      %v7012 = vadd.f32 %v6524, %v6756
      %v7013 = vadd.f32 %v6525, %v6758
      %v7014 = vadd.f32 %v6526, %v6761
      %v7015 = vadd.f32 %v6527, %v6763
      %v7016 = vadd.f32 %v6528, %v6766
      %v7017 = vadd.f32 %v6529, %v6768
      %v7018 = vadd.f32 %v6530, %v6771
      %v7019 = vadd.f32 %v6531, %v6773
      %v7020 = vadd.f32 %v6532, %v6776
      %v7021 = vadd.f32 %v6533, %v6778
      %v7022 = vadd.f32 %v6534, %v6781
      %v7023 = vadd.f32 %v6535, %v6783
      %v7024 = vadd.f32 %v6536, %v6786
      %v7025 = vadd.f32 %v6537, %v6788
      %v7026 = vadd.f32 %v6538, %v6791
      %v7027 = vadd.f32 %v6539, %v6793
      %v7028 = vadd.f32 %v6540, %v6796
      %v7029 = vadd.f32 %v6541, %v6798
      %v7030 = vadd.f32 %v6542, %v6801
      %v7031 = vadd.f32 %v6543, %v6803
      %v7032 = vadd.f32 %v6544, %v6806
      %v7033 = vadd.f32 %v6545, %v6808
      %v7034 = vadd.f32 %v6546, %v6811
      %v7035 = vadd.f32 %v6547, %v6813
      %v7036 = vadd.f32 %v6548, %v6816
      %v7037 = vadd.f32 %v6549, %v6818
      %v7038 = vadd.f32 %v6550, %v6821
      %v7039 = vadd.f32 %v6551, %v6823
      %v7040 = vadd.f32 %v6552, %v6826
      %v7041 = vadd.f32 %v6553, %v6828
      %v7042 = vadd.f32 %v6554, %v6831
      %v7043 = vadd.f32 %v6555, %v6833
      %v7044 = vadd.f32 %v6556, %v6836
      %v7045 = vadd.f32 %v6557, %v6838
      %v7046 = vadd.f32 %v6558, %v6841
      %v7047 = vadd.f32 %v6559, %v6843
      %v7048 = vadd.f32 %v6560, %v6846
      %v7049 = vadd.f32 %v6561, %v6848
      %v7050 = vadd.f32 %v6562, %v6851
      %v7051 = vadd.f32 %v6563, %v6853
      %v7052 = vadd.f32 %v6564, %v6856
      %v7053 = vadd.f32 %v6565, %v6858
      %v7054 = vadd.f32 %v6566, %v6861
      %v7055 = vadd.f32 %v6567, %v6863
      %v7056 = vadd.f32 %v6568, %v6866
      %v7057 = vadd.f32 %v6569, %v6868
      %v7058 = vadd.f32 %v6570, %v6871
      %v7059 = vadd.f32 %v6571, %v6873
      %v7060 = vadd.f32 %v6572, %v6876
      %v7061 = vadd.f32 %v6573, %v6878
      %v7062 = vadd.f32 %v6574, %v6881
      %v7063 = vadd.f32 %v6575, %v6883
      %v7064 = vadd.f32 %v6576, %v6886
      %v7065 = vadd.f32 %v6577, %v6888
      %v7066 = vadd.f32 %v6578, %v6891
      %v7067 = vadd.f32 %v6579, %v6893
      %v7068 = vadd.f32 %v6580, %v6896
      %v7069 = vadd.f32 %v6581, %v6898
      %v7070 = vadd.f32 %v6582, %v6901
      %v7071 = vadd.f32 %v6583, %v6903
      %v7072 = vadd.f32 %v6584, %v6906
      %v7073 = vadd.f32 %v6585, %v6908
      %v7074 = vadd.f32 %v6586, %v6911
      %v7075 = vadd.f32 %v6587, %v6913
      %v7076 = vadd.f32 %v6588, %v6916
      %v7077 = vadd.f32 %v6589, %v6918
      %v7078 = vadd.f32 %v6590, %v6921
      %v7079 = vadd.f32 %v6591, %v6923
      %v7080 = vadd.f32 %v6592, %v6926
      %v7081 = vadd.f32 %v6593, %v6928
      %v7082 = vadd.f32 %v6594, %v6931
      %v7083 = vadd.f32 %v6595, %v6933
      %v7084 = vadd.f32 %v6596, %v6936
      %v7085 = vadd.f32 %v6597, %v6938
      %v7086 = vadd.f32 %v6598, %v6941
      %v7087 = vadd.f32 %v6599, %v6943
      %v7088 = vadd.f32 %v6600, %v6946
      %v7089 = vadd.f32 %v6601, %v6948
      %v7090 = vadd.f32 %v6602, %v6951
      %v7091 = vadd.f32 %v6603, %v6953
      %v7092 = vadd.f32 %v6604, %v6956
      %v7093 = vadd.f32 %v6605, %v6958
      %v7094 = vadd.f32 %v6606, %v6961
      %v7095 = vadd.f32 %v6607, %v6963
      %v7096 = vadd.f32 %v6608, %v6966
      %v7097 = vadd.f32 %v6609, %v6968
      %v7099 = vrot.slane %v337, 5
      %v7100 = vrot.slane %v7099, 4
      %v7101 = vrot.slane %v338, 5
      %v7102 = vsel %vm5347, %v7100, %v7101
      %v7103 = vrot.slane %v7101, 4
      %v7104 = vrot.slane %v339, 5
      %v7105 = vsel %vm5347, %v7103, %v7104
      %v7106 = vrot.slane %v7104, 4
      %v7107 = vrot.slane %v340, 5
      %v7108 = vsel %vm5347, %v7106, %v7107
      %v7109 = vrot.slane %v7107, 4
      %v7110 = vrot.slane %v341, 5
      %v7111 = vsel %vm5347, %v7109, %v7110
      %s7112 = scalar_lea.vmem %s1, 16
      %v7113 = vld [vmem:[%s7112] sm:$0x3]
      %v7114 = vunpack.c.l.b16 %v7102
      %v7115 = vunpack.c.l.b16 %v7105
      %v7116 = vunpack.c.l.b16 %v7108
      %v7117 = vunpack.c.l.b16 %v7111
      %v7118 = vpack.c.b16 %v7115, %v7114
      %v7119 = vpack.c.b16 %v7117, %v7116
      %v7121 = vsel %vm665, %v7118, 0
      %v7124 = vsel %vm665, %v7119, 0
      %v7127 = vand.u32 %v7113, %v861
      %7129 = vmatpush.bf16.msra.mxu0 0
      %7130 = vmatpush.bf16.msra.mxu0 0
      %7131 = vmatpush.bf16.msra.mxu0 0
      %7132 = vmatpush.bf16.msra.mxu0 0
      %7133 = vmatpush.bf16.msra.mxu0 0
      %7134 = vmatpush.bf16.msra.mxu0 0
      %7135 = vmatpush.bf16.msra.mxu0 0
      %7136 = vmatpush.bf16.msra.mxu0 %v7127
      %7137 = vmatmul.bf16.gmra.mxu0 %v5971
      %v7138 = vpop.f32.mrf.mxu0
      %v7139 = vadd.f32 0.0, %v7138
      %v7140 = vpop.f32.mrf.mxu0
      %v7141 = vadd.f32 0.0, %v7140
      %7142 = vmatmul.bf16.gmra.mxu0 %v5974
      %v7143 = vpop.f32.mrf.mxu0
      %v7144 = vadd.f32 0.0, %v7143
      %v7145 = vpop.f32.mrf.mxu0
      %v7146 = vadd.f32 0.0, %v7145
      %7147 = vmatmul.bf16.gmra.mxu0 %v5977
      %v7148 = vpop.f32.mrf.mxu0
      %v7149 = vadd.f32 0.0, %v7148
      %v7150 = vpop.f32.mrf.mxu0
      %v7151 = vadd.f32 0.0, %v7150
      %7152 = vmatmul.bf16.gmra.mxu0 %v5980
      %v7153 = vpop.f32.mrf.mxu0
      %v7154 = vadd.f32 0.0, %v7153
      %v7155 = vpop.f32.mrf.mxu0
      %v7156 = vadd.f32 0.0, %v7155
      %7157 = vmatmul.bf16.gmra.mxu0 %v5983
      %v7158 = vpop.f32.mrf.mxu0
      %v7159 = vadd.f32 0.0, %v7158
      %v7160 = vpop.f32.mrf.mxu0
      %v7161 = vadd.f32 0.0, %v7160
      %7162 = vmatmul.bf16.gmra.mxu0 %v5986
      %v7163 = vpop.f32.mrf.mxu0
      %v7164 = vadd.f32 0.0, %v7163
      %v7165 = vpop.f32.mrf.mxu0
      %v7166 = vadd.f32 0.0, %v7165
      %7167 = vmatmul.bf16.gmra.mxu0 %v5989
      %v7168 = vpop.f32.mrf.mxu0
      %v7169 = vadd.f32 0.0, %v7168
      %v7170 = vpop.f32.mrf.mxu0
      %v7171 = vadd.f32 0.0, %v7170
      %7172 = vmatmul.bf16.gmra.mxu0 %v5992
      %v7173 = vpop.f32.mrf.mxu0
      %v7174 = vadd.f32 0.0, %v7173
      %v7175 = vpop.f32.mrf.mxu0
      %v7176 = vadd.f32 0.0, %v7175
      %7177 = vmatmul.bf16.gmra.mxu0 %v5995
      %v7178 = vpop.f32.mrf.mxu0
      %v7179 = vadd.f32 0.0, %v7178
      %v7180 = vpop.f32.mrf.mxu0
      %v7181 = vadd.f32 0.0, %v7180
      %7182 = vmatmul.bf16.gmra.mxu0 %v5998
      %v7183 = vpop.f32.mrf.mxu0
      %v7184 = vadd.f32 0.0, %v7183
      %v7185 = vpop.f32.mrf.mxu0
      %v7186 = vadd.f32 0.0, %v7185
      %7187 = vmatmul.bf16.gmra.mxu0 %v6001
      %v7188 = vpop.f32.mrf.mxu0
      %v7189 = vadd.f32 0.0, %v7188
      %v7190 = vpop.f32.mrf.mxu0
      %v7191 = vadd.f32 0.0, %v7190
      %7192 = vmatmul.bf16.gmra.mxu0 %v6004
      %v7193 = vpop.f32.mrf.mxu0
      %v7194 = vadd.f32 0.0, %v7193
      %v7195 = vpop.f32.mrf.mxu0
      %v7196 = vadd.f32 0.0, %v7195
      %7197 = vmatmul.bf16.gmra.mxu0 %v6007
      %v7198 = vpop.f32.mrf.mxu0
      %v7199 = vadd.f32 0.0, %v7198
      %v7200 = vpop.f32.mrf.mxu0
      %v7201 = vadd.f32 0.0, %v7200
      %7202 = vmatmul.bf16.gmra.mxu0 %v6010
      %v7203 = vpop.f32.mrf.mxu0
      %v7204 = vadd.f32 0.0, %v7203
      %v7205 = vpop.f32.mrf.mxu0
      %v7206 = vadd.f32 0.0, %v7205
      %7207 = vmatmul.bf16.gmra.mxu0 %v6013
      %v7208 = vpop.f32.mrf.mxu0
      %v7209 = vadd.f32 0.0, %v7208
      %v7210 = vpop.f32.mrf.mxu0
      %v7211 = vadd.f32 0.0, %v7210
      %7212 = vmatmul.bf16.gmra.mxu0 %v6016
      %v7213 = vpop.f32.mrf.mxu0
      %v7214 = vadd.f32 0.0, %v7213
      %v7215 = vpop.f32.mrf.mxu0
      %v7216 = vadd.f32 0.0, %v7215
      %7217 = vmatmul.bf16.gmra.mxu0 %v6019
      %v7218 = vpop.f32.mrf.mxu0
      %v7219 = vadd.f32 0.0, %v7218
      %v7220 = vpop.f32.mrf.mxu0
      %v7221 = vadd.f32 0.0, %v7220
      %7222 = vmatmul.bf16.gmra.mxu0 %v6022
      %v7223 = vpop.f32.mrf.mxu0
      %v7224 = vadd.f32 0.0, %v7223
      %v7225 = vpop.f32.mrf.mxu0
      %v7226 = vadd.f32 0.0, %v7225
      %7227 = vmatmul.bf16.gmra.mxu0 %v6025
      %v7228 = vpop.f32.mrf.mxu0
      %v7229 = vadd.f32 0.0, %v7228
      %v7230 = vpop.f32.mrf.mxu0
      %v7231 = vadd.f32 0.0, %v7230
      %7232 = vmatmul.bf16.gmra.mxu0 %v6028
      %v7233 = vpop.f32.mrf.mxu0
      %v7234 = vadd.f32 0.0, %v7233
      %v7235 = vpop.f32.mrf.mxu0
      %v7236 = vadd.f32 0.0, %v7235
      %7237 = vmatmul.bf16.gmra.mxu0 %v6031
      %v7238 = vpop.f32.mrf.mxu0
      %v7239 = vadd.f32 0.0, %v7238
      %v7240 = vpop.f32.mrf.mxu0
      %v7241 = vadd.f32 0.0, %v7240
      %7242 = vmatmul.bf16.gmra.mxu0 %v6034
      %v7243 = vpop.f32.mrf.mxu0
      %v7244 = vadd.f32 0.0, %v7243
      %v7245 = vpop.f32.mrf.mxu0
      %v7246 = vadd.f32 0.0, %v7245
      %7247 = vmatmul.bf16.gmra.mxu0 %v6037
      %v7248 = vpop.f32.mrf.mxu0
      %v7249 = vadd.f32 0.0, %v7248
      %v7250 = vpop.f32.mrf.mxu0
      %v7251 = vadd.f32 0.0, %v7250
      %7252 = vmatmul.bf16.gmra.mxu0 %v6040
      %v7253 = vpop.f32.mrf.mxu0
      %v7254 = vadd.f32 0.0, %v7253
      %v7255 = vpop.f32.mrf.mxu0
      %v7256 = vadd.f32 0.0, %v7255
      %7257 = vmatmul.bf16.gmra.mxu0 %v6043
      %v7258 = vpop.f32.mrf.mxu0
      %v7259 = vadd.f32 0.0, %v7258
      %v7260 = vpop.f32.mrf.mxu0
      %v7261 = vadd.f32 0.0, %v7260
      %7262 = vmatmul.bf16.gmra.mxu0 %v6046
      %v7263 = vpop.f32.mrf.mxu0
      %v7264 = vadd.f32 0.0, %v7263
      %v7265 = vpop.f32.mrf.mxu0
      %v7266 = vadd.f32 0.0, %v7265
      %7267 = vmatmul.bf16.gmra.mxu0 %v6049
      %v7268 = vpop.f32.mrf.mxu0
      %v7269 = vadd.f32 0.0, %v7268
      %v7270 = vpop.f32.mrf.mxu0
      %v7271 = vadd.f32 0.0, %v7270
      %7272 = vmatmul.bf16.gmra.mxu0 %v6052
      %v7273 = vpop.f32.mrf.mxu0
      %v7274 = vadd.f32 0.0, %v7273
      %v7275 = vpop.f32.mrf.mxu0
      %v7276 = vadd.f32 0.0, %v7275
      %7277 = vmatmul.bf16.gmra.mxu0 %v6055
      %v7278 = vpop.f32.mrf.mxu0
      %v7279 = vadd.f32 0.0, %v7278
      %v7280 = vpop.f32.mrf.mxu0
      %v7281 = vadd.f32 0.0, %v7280
      %7282 = vmatmul.bf16.gmra.mxu0 %v6058
      %v7283 = vpop.f32.mrf.mxu0
      %v7284 = vadd.f32 0.0, %v7283
      %v7285 = vpop.f32.mrf.mxu0
      %v7286 = vadd.f32 0.0, %v7285
      %7287 = vmatmul.bf16.gmra.mxu0 %v6061
      %v7288 = vpop.f32.mrf.mxu0
      %v7289 = vadd.f32 0.0, %v7288
      %v7290 = vpop.f32.mrf.mxu0
      %v7291 = vadd.f32 0.0, %v7290
      %7292 = vmatmul.bf16.gmra.mxu0 %v6064
      %v7293 = vpop.f32.mrf.mxu0
      %v7294 = vadd.f32 0.0, %v7293
      %v7295 = vpop.f32.mrf.mxu0
      %v7296 = vadd.f32 0.0, %v7295
      %7297 = vmatmul.bf16.gmra.mxu0 %v6067
      %v7298 = vpop.f32.mrf.mxu0
      %v7299 = vadd.f32 0.0, %v7298
      %v7300 = vpop.f32.mrf.mxu0
      %v7301 = vadd.f32 0.0, %v7300
      %7302 = vmatmul.bf16.gmra.mxu0 %v6070
      %v7303 = vpop.f32.mrf.mxu0
      %v7304 = vadd.f32 0.0, %v7303
      %v7305 = vpop.f32.mrf.mxu0
      %v7306 = vadd.f32 0.0, %v7305
      %7307 = vmatmul.bf16.gmra.mxu0 %v6073
      %v7308 = vpop.f32.mrf.mxu0
      %v7309 = vadd.f32 0.0, %v7308
      %v7310 = vpop.f32.mrf.mxu0
      %v7311 = vadd.f32 0.0, %v7310
      %7312 = vmatmul.bf16.gmra.mxu0 %v6076
      %v7313 = vpop.f32.mrf.mxu0
      %v7314 = vadd.f32 0.0, %v7313
      %v7315 = vpop.f32.mrf.mxu0
      %v7316 = vadd.f32 0.0, %v7315
      %7317 = vmatmul.bf16.gmra.mxu0 %v6079
      %v7318 = vpop.f32.mrf.mxu0
      %v7319 = vadd.f32 0.0, %v7318
      %v7320 = vpop.f32.mrf.mxu0
      %v7321 = vadd.f32 0.0, %v7320
      %7322 = vmatmul.bf16.gmra.mxu0 %v6082
      %v7323 = vpop.f32.mrf.mxu0
      %v7324 = vadd.f32 0.0, %v7323
      %v7325 = vpop.f32.mrf.mxu0
      %v7326 = vadd.f32 0.0, %v7325
      %7327 = vmatmul.bf16.gmra.mxu0 %v6085
      %v7328 = vpop.f32.mrf.mxu0
      %v7329 = vadd.f32 0.0, %v7328
      %v7330 = vpop.f32.mrf.mxu0
      %v7331 = vadd.f32 0.0, %v7330
      %7332 = vmatmul.bf16.gmra.mxu0 %v6088
      %v7333 = vpop.f32.mrf.mxu0
      %v7334 = vadd.f32 0.0, %v7333
      %v7335 = vpop.f32.mrf.mxu0
      %v7336 = vadd.f32 0.0, %v7335
      %7337 = vmatmul.bf16.gmra.mxu0 %v6091
      %v7338 = vpop.f32.mrf.mxu0
      %v7339 = vadd.f32 0.0, %v7338
      %v7340 = vpop.f32.mrf.mxu0
      %v7341 = vadd.f32 0.0, %v7340
      %7342 = vmatmul.bf16.gmra.mxu0 %v6094
      %v7343 = vpop.f32.mrf.mxu0
      %v7344 = vadd.f32 0.0, %v7343
      %v7345 = vpop.f32.mrf.mxu0
      %v7346 = vadd.f32 0.0, %v7345
      %7347 = vmatmul.bf16.gmra.mxu0 %v6097
      %v7348 = vpop.f32.mrf.mxu0
      %v7349 = vadd.f32 0.0, %v7348
      %v7350 = vpop.f32.mrf.mxu0
      %v7351 = vadd.f32 0.0, %v7350
      %7352 = vmatmul.bf16.gmra.mxu0 %v6100
      %v7353 = vpop.f32.mrf.mxu0
      %v7354 = vadd.f32 0.0, %v7353
      %v7355 = vpop.f32.mrf.mxu0
      %v7356 = vadd.f32 0.0, %v7355
      %7357 = vmatmul.bf16.gmra.mxu0 %v6103
      %v7358 = vpop.f32.mrf.mxu0
      %v7359 = vadd.f32 0.0, %v7358
      %v7360 = vpop.f32.mrf.mxu0
      %v7361 = vadd.f32 0.0, %v7360
      %7362 = vmatmul.bf16.gmra.mxu0 %v6106
      %v7363 = vpop.f32.mrf.mxu0
      %v7364 = vadd.f32 0.0, %v7363
      %v7365 = vpop.f32.mrf.mxu0
      %v7366 = vadd.f32 0.0, %v7365
      %7367 = vmatmul.bf16.gmra.mxu0 %v6109
      %v7368 = vpop.f32.mrf.mxu0
      %v7369 = vadd.f32 0.0, %v7368
      %v7370 = vpop.f32.mrf.mxu0
      %v7371 = vadd.f32 0.0, %v7370
      %7372 = vmatmul.bf16.gmra.mxu0 %v6112
      %v7373 = vpop.f32.mrf.mxu0
      %v7374 = vadd.f32 0.0, %v7373
      %v7375 = vpop.f32.mrf.mxu0
      %v7376 = vadd.f32 0.0, %v7375
      %7377 = vmatmul.bf16.gmra.mxu0 %v6115
      %v7378 = vpop.f32.mrf.mxu0
      %v7379 = vadd.f32 0.0, %v7378
      %v7380 = vpop.f32.mrf.mxu0
      %v7381 = vadd.f32 0.0, %v7380
      %7382 = vmatmul.bf16.gmra.mxu0 %v6118
      %v7383 = vpop.f32.mrf.mxu0
      %v7384 = vadd.f32 0.0, %v7383
      %v7385 = vpop.f32.mrf.mxu0
      %v7386 = vadd.f32 0.0, %v7385
      %7387 = vmatmul.bf16.gmra.mxu0 %v6121
      %v7388 = vpop.f32.mrf.mxu0
      %v7389 = vadd.f32 0.0, %v7388
      %v7390 = vpop.f32.mrf.mxu0
      %v7391 = vadd.f32 0.0, %v7390
      %7392 = vmatmul.bf16.gmra.mxu0 %v6124
      %v7393 = vpop.f32.mrf.mxu0
      %v7394 = vadd.f32 0.0, %v7393
      %v7395 = vpop.f32.mrf.mxu0
      %v7396 = vadd.f32 0.0, %v7395
      %7397 = vmatmul.bf16.gmra.mxu0 %v6127
      %v7398 = vpop.f32.mrf.mxu0
      %v7399 = vadd.f32 0.0, %v7398
      %v7400 = vpop.f32.mrf.mxu0
      %v7401 = vadd.f32 0.0, %v7400
      %7402 = vmatmul.bf16.gmra.mxu0 %v6130
      %v7403 = vpop.f32.mrf.mxu0
      %v7404 = vadd.f32 0.0, %v7403
      %v7405 = vpop.f32.mrf.mxu0
      %v7406 = vadd.f32 0.0, %v7405
      %7407 = vmatmul.bf16.gmra.mxu0 %v6133
      %v7408 = vpop.f32.mrf.mxu0
      %v7409 = vadd.f32 0.0, %v7408
      %v7410 = vpop.f32.mrf.mxu0
      %v7411 = vadd.f32 0.0, %v7410
      %7412 = vmatmul.bf16.gmra.mxu0 %v6136
      %v7413 = vpop.f32.mrf.mxu0
      %v7414 = vadd.f32 0.0, %v7413
      %v7415 = vpop.f32.mrf.mxu0
      %v7416 = vadd.f32 0.0, %v7415
      %7417 = vmatmul.bf16.gmra.mxu0 %v6139
      %v7418 = vpop.f32.mrf.mxu0
      %v7419 = vadd.f32 0.0, %v7418
      %v7420 = vpop.f32.mrf.mxu0
      %v7421 = vadd.f32 0.0, %v7420
      %7422 = vmatmul.bf16.gmra.mxu0 %v6142
      %v7423 = vpop.f32.mrf.mxu0
      %v7424 = vadd.f32 0.0, %v7423
      %v7425 = vpop.f32.mrf.mxu0
      %v7426 = vadd.f32 0.0, %v7425
      %7427 = vmatmul.bf16.gmra.mxu0 %v6145
      %v7428 = vpop.f32.mrf.mxu0
      %v7429 = vadd.f32 0.0, %v7428
      %v7430 = vpop.f32.mrf.mxu0
      %v7431 = vadd.f32 0.0, %v7430
      %7432 = vmatmul.bf16.gmra.mxu0 %v6148
      %v7433 = vpop.f32.mrf.mxu0
      %v7434 = vadd.f32 0.0, %v7433
      %v7435 = vpop.f32.mrf.mxu0
      %v7436 = vadd.f32 0.0, %v7435
      %7437 = vmatmul.bf16.gmra.mxu0 %v6633
      %v7438 = vpop.f32.mrf.mxu0
      %v7439 = vadd.f32 0.0, %v7438
      %v7440 = vpop.f32.mrf.mxu0
      %v7441 = vadd.f32 0.0, %v7440
      %7442 = vmatmul.bf16.gmra.mxu0 %v6636
      %v7443 = vpop.f32.mrf.mxu0
      %v7444 = vadd.f32 0.0, %v7443
      %v7445 = vpop.f32.mrf.mxu0
      %v7446 = vadd.f32 0.0, %v7445
      %7447 = vmatmul.bf16.gmra.mxu0 %v7121
      %v7448 = vpop.f32.mrf.mxu0
      %v7449 = vadd.f32 0.0, %v7448
      %v7450 = vpop.f32.mrf.mxu0
      %v7451 = vadd.f32 0.0, %v7450
      %7452 = vmatmul.bf16.gmra.mxu0 %v7124
      %v7453 = vpop.f32.mrf.mxu0
      %v7454 = vadd.f32 0.0, %v7453
      %v7455 = vpop.f32.mrf.mxu0
      %v7456 = vadd.f32 0.0, %v7455
      %7457 = vdwg.mxu0
      %v7458 = vadd.f32 %v6970, %v7139
      %v7459 = vadd.f32 %v6971, %v7141
      %v7460 = vadd.f32 %v6972, %v7144
      %v7461 = vadd.f32 %v6973, %v7146
      %v7462 = vadd.f32 %v6974, %v7149
      %v7463 = vadd.f32 %v6975, %v7151
      %v7464 = vadd.f32 %v6976, %v7154
      %v7465 = vadd.f32 %v6977, %v7156
      %v7466 = vadd.f32 %v6978, %v7159
      %v7467 = vadd.f32 %v6979, %v7161
      %v7468 = vadd.f32 %v6980, %v7164
      %v7469 = vadd.f32 %v6981, %v7166
      %v7470 = vadd.f32 %v6982, %v7169
      %v7471 = vadd.f32 %v6983, %v7171
      %v7472 = vadd.f32 %v6984, %v7174
      %v7473 = vadd.f32 %v6985, %v7176
      %v7474 = vadd.f32 %v6986, %v7179
      %v7475 = vadd.f32 %v6987, %v7181
      %v7476 = vadd.f32 %v6988, %v7184
      %v7477 = vadd.f32 %v6989, %v7186
      %v7478 = vadd.f32 %v6990, %v7189
      %v7479 = vadd.f32 %v6991, %v7191
      %v7480 = vadd.f32 %v6992, %v7194
      %v7481 = vadd.f32 %v6993, %v7196
      %v7482 = vadd.f32 %v6994, %v7199
      %v7483 = vadd.f32 %v6995, %v7201
      %v7484 = vadd.f32 %v6996, %v7204
      %v7485 = vadd.f32 %v6997, %v7206
      %v7486 = vadd.f32 %v6998, %v7209
      %v7487 = vadd.f32 %v6999, %v7211
      %v7488 = vadd.f32 %v7000, %v7214
      %v7489 = vadd.f32 %v7001, %v7216
      %v7490 = vadd.f32 %v7002, %v7219
      %v7491 = vadd.f32 %v7003, %v7221
      %v7492 = vadd.f32 %v7004, %v7224
      %v7493 = vadd.f32 %v7005, %v7226
      %v7494 = vadd.f32 %v7006, %v7229
      %v7495 = vadd.f32 %v7007, %v7231
      %v7496 = vadd.f32 %v7008, %v7234
      %v7497 = vadd.f32 %v7009, %v7236
      %v7498 = vadd.f32 %v7010, %v7239
      %v7499 = vadd.f32 %v7011, %v7241
      %v7500 = vadd.f32 %v7012, %v7244
      %v7501 = vadd.f32 %v7013, %v7246
      %v7502 = vadd.f32 %v7014, %v7249
      %v7503 = vadd.f32 %v7015, %v7251
      %v7504 = vadd.f32 %v7016, %v7254
      %v7505 = vadd.f32 %v7017, %v7256
      %v7506 = vadd.f32 %v7018, %v7259
      %v7507 = vadd.f32 %v7019, %v7261
      %v7508 = vadd.f32 %v7020, %v7264
      %v7509 = vadd.f32 %v7021, %v7266
      %v7510 = vadd.f32 %v7022, %v7269
      %v7511 = vadd.f32 %v7023, %v7271
      %v7512 = vadd.f32 %v7024, %v7274
      %v7513 = vadd.f32 %v7025, %v7276
      %v7514 = vadd.f32 %v7026, %v7279
      %v7515 = vadd.f32 %v7027, %v7281
      %v7516 = vadd.f32 %v7028, %v7284
      %v7517 = vadd.f32 %v7029, %v7286
      %v7518 = vadd.f32 %v7030, %v7289
      %v7519 = vadd.f32 %v7031, %v7291
      %v7520 = vadd.f32 %v7032, %v7294
      %v7521 = vadd.f32 %v7033, %v7296
      %v7522 = vadd.f32 %v7034, %v7299
      %v7523 = vadd.f32 %v7035, %v7301
      %v7524 = vadd.f32 %v7036, %v7304
      %v7525 = vadd.f32 %v7037, %v7306
      %v7526 = vadd.f32 %v7038, %v7309
      %v7527 = vadd.f32 %v7039, %v7311
      %v7528 = vadd.f32 %v7040, %v7314
      %v7529 = vadd.f32 %v7041, %v7316
      %v7530 = vadd.f32 %v7042, %v7319
      %v7531 = vadd.f32 %v7043, %v7321
      %v7532 = vadd.f32 %v7044, %v7324
      %v7533 = vadd.f32 %v7045, %v7326
      %v7534 = vadd.f32 %v7046, %v7329
      %v7535 = vadd.f32 %v7047, %v7331
      %v7536 = vadd.f32 %v7048, %v7334
      %v7537 = vadd.f32 %v7049, %v7336
      %v7538 = vadd.f32 %v7050, %v7339
      %v7539 = vadd.f32 %v7051, %v7341
      %v7540 = vadd.f32 %v7052, %v7344
      %v7541 = vadd.f32 %v7053, %v7346
      %v7542 = vadd.f32 %v7054, %v7349
      %v7543 = vadd.f32 %v7055, %v7351
      %v7544 = vadd.f32 %v7056, %v7354
      %v7545 = vadd.f32 %v7057, %v7356
      %v7546 = vadd.f32 %v7058, %v7359
      %v7547 = vadd.f32 %v7059, %v7361
      %v7548 = vadd.f32 %v7060, %v7364
      %v7549 = vadd.f32 %v7061, %v7366
      %v7550 = vadd.f32 %v7062, %v7369
      %v7551 = vadd.f32 %v7063, %v7371
      %v7552 = vadd.f32 %v7064, %v7374
      %v7553 = vadd.f32 %v7065, %v7376
      %v7554 = vadd.f32 %v7066, %v7379
      %v7555 = vadd.f32 %v7067, %v7381
      %v7556 = vadd.f32 %v7068, %v7384
      %v7557 = vadd.f32 %v7069, %v7386
      %v7558 = vadd.f32 %v7070, %v7389
      %v7559 = vadd.f32 %v7071, %v7391
      %v7560 = vadd.f32 %v7072, %v7394
      %v7561 = vadd.f32 %v7073, %v7396
      %v7562 = vadd.f32 %v7074, %v7399
      %v7563 = vadd.f32 %v7075, %v7401
      %v7564 = vadd.f32 %v7076, %v7404
      %v7565 = vadd.f32 %v7077, %v7406
      %v7566 = vadd.f32 %v7078, %v7409
      %v7567 = vadd.f32 %v7079, %v7411
      %v7568 = vadd.f32 %v7080, %v7414
      %v7569 = vadd.f32 %v7081, %v7416
      %v7570 = vadd.f32 %v7082, %v7419
      %v7571 = vadd.f32 %v7083, %v7421
      %v7572 = vadd.f32 %v7084, %v7424
      %v7573 = vadd.f32 %v7085, %v7426
      %v7574 = vadd.f32 %v7086, %v7429
      %v7575 = vadd.f32 %v7087, %v7431
      %v7576 = vadd.f32 %v7088, %v7434
      %v7577 = vadd.f32 %v7089, %v7436
      %v7578 = vadd.f32 %v7090, %v7439
      %v7579 = vadd.f32 %v7091, %v7441
      %v7580 = vadd.f32 %v7092, %v7444
      %v7581 = vadd.f32 %v7093, %v7446
      %v7582 = vadd.f32 %v7094, %v7449
      %v7583 = vadd.f32 %v7095, %v7451
      %v7584 = vadd.f32 %v7096, %v7454
      %v7585 = vadd.f32 %v7097, %v7456
      %v7586 = vld [vmem:[%s2] sm:$0x1]
      %v7588 = vperm.slane %v7586, 0
      %v7590 = vadd.f32 %v7458, %v7588
      %v7591 = vadd.f32 %v7459, %v7588
      %v7592 = vadd.f32 %v7460, %v7588
      %v7593 = vadd.f32 %v7461, %v7588
      %v7594 = vadd.f32 %v7462, %v7588
      %v7595 = vadd.f32 %v7463, %v7588
      %v7596 = vadd.f32 %v7464, %v7588
      %v7597 = vadd.f32 %v7465, %v7588
      %v7598 = vadd.f32 %v7466, %v7588
      %v7599 = vadd.f32 %v7467, %v7588
      %v7600 = vadd.f32 %v7468, %v7588
      %v7601 = vadd.f32 %v7469, %v7588
      %v7602 = vadd.f32 %v7470, %v7588
      %v7603 = vadd.f32 %v7471, %v7588
      %v7604 = vadd.f32 %v7472, %v7588
      %v7605 = vadd.f32 %v7473, %v7588
      %v7606 = vadd.f32 %v7474, %v7588
      %v7607 = vadd.f32 %v7475, %v7588
      %v7608 = vadd.f32 %v7476, %v7588
      %v7609 = vadd.f32 %v7477, %v7588
      %v7610 = vadd.f32 %v7478, %v7588
      %v7611 = vadd.f32 %v7479, %v7588
      %v7612 = vadd.f32 %v7480, %v7588
      %v7613 = vadd.f32 %v7481, %v7588
      %v7614 = vadd.f32 %v7482, %v7588
      %v7615 = vadd.f32 %v7483, %v7588
      %v7616 = vadd.f32 %v7484, %v7588
      %v7617 = vadd.f32 %v7485, %v7588
      %v7618 = vadd.f32 %v7486, %v7588
      %v7619 = vadd.f32 %v7487, %v7588
      %v7620 = vadd.f32 %v7488, %v7588
      %v7621 = vadd.f32 %v7489, %v7588
      %v7622 = vadd.f32 %v7490, %v7588
      %v7623 = vadd.f32 %v7491, %v7588
      %v7624 = vadd.f32 %v7492, %v7588
      %v7625 = vadd.f32 %v7493, %v7588
      %v7626 = vadd.f32 %v7494, %v7588
      %v7627 = vadd.f32 %v7495, %v7588
      %v7628 = vadd.f32 %v7496, %v7588
      %v7629 = vadd.f32 %v7497, %v7588
      %v7630 = vadd.f32 %v7498, %v7588
      %v7631 = vadd.f32 %v7499, %v7588
      %v7632 = vadd.f32 %v7500, %v7588
      %v7633 = vadd.f32 %v7501, %v7588
      %v7634 = vadd.f32 %v7502, %v7588
      %v7635 = vadd.f32 %v7503, %v7588
      %v7636 = vadd.f32 %v7504, %v7588
      %v7637 = vadd.f32 %v7505, %v7588
      %v7638 = vadd.f32 %v7506, %v7588
      %v7639 = vadd.f32 %v7507, %v7588
      %v7640 = vadd.f32 %v7508, %v7588
      %v7641 = vadd.f32 %v7509, %v7588
      %v7642 = vadd.f32 %v7510, %v7588
      %v7643 = vadd.f32 %v7511, %v7588
      %v7644 = vadd.f32 %v7512, %v7588
      %v7645 = vadd.f32 %v7513, %v7588
      %v7646 = vadd.f32 %v7514, %v7588
      %v7647 = vadd.f32 %v7515, %v7588
      %v7648 = vadd.f32 %v7516, %v7588
      %v7649 = vadd.f32 %v7517, %v7588
      %v7650 = vadd.f32 %v7518, %v7588
      %v7651 = vadd.f32 %v7519, %v7588
      %v7652 = vadd.f32 %v7520, %v7588
      %v7653 = vadd.f32 %v7521, %v7588
      %v7654 = vadd.f32 %v7522, %v7588
      %v7655 = vadd.f32 %v7523, %v7588
      %v7656 = vadd.f32 %v7524, %v7588
      %v7657 = vadd.f32 %v7525, %v7588
      %v7658 = vadd.f32 %v7526, %v7588
      %v7659 = vadd.f32 %v7527, %v7588
      %v7660 = vadd.f32 %v7528, %v7588
      %v7661 = vadd.f32 %v7529, %v7588
      %v7662 = vadd.f32 %v7530, %v7588
      %v7663 = vadd.f32 %v7531, %v7588
      %v7664 = vadd.f32 %v7532, %v7588
      %v7665 = vadd.f32 %v7533, %v7588
      %v7666 = vadd.f32 %v7534, %v7588
      %v7667 = vadd.f32 %v7535, %v7588
      %v7668 = vadd.f32 %v7536, %v7588
      %v7669 = vadd.f32 %v7537, %v7588
      %v7670 = vadd.f32 %v7538, %v7588
      %v7671 = vadd.f32 %v7539, %v7588
      %v7672 = vadd.f32 %v7540, %v7588
      %v7673 = vadd.f32 %v7541, %v7588
      %v7674 = vadd.f32 %v7542, %v7588
      %v7675 = vadd.f32 %v7543, %v7588
      %v7676 = vadd.f32 %v7544, %v7588
      %v7677 = vadd.f32 %v7545, %v7588
      %v7678 = vadd.f32 %v7546, %v7588
      %v7679 = vadd.f32 %v7547, %v7588
      %v7680 = vadd.f32 %v7548, %v7588
      %v7681 = vadd.f32 %v7549, %v7588
      %v7682 = vadd.f32 %v7550, %v7588
      %v7683 = vadd.f32 %v7551, %v7588
      %v7684 = vadd.f32 %v7552, %v7588
      %v7685 = vadd.f32 %v7553, %v7588
      %v7686 = vadd.f32 %v7554, %v7588
      %v7687 = vadd.f32 %v7555, %v7588
      %v7688 = vadd.f32 %v7556, %v7588
      %v7689 = vadd.f32 %v7557, %v7588
      %v7690 = vadd.f32 %v7558, %v7588
      %v7691 = vadd.f32 %v7559, %v7588
      %v7692 = vadd.f32 %v7560, %v7588
      %v7693 = vadd.f32 %v7561, %v7588
      %v7694 = vadd.f32 %v7562, %v7588
      %v7695 = vadd.f32 %v7563, %v7588
      %v7696 = vadd.f32 %v7564, %v7588
      %v7697 = vadd.f32 %v7565, %v7588
      %v7698 = vadd.f32 %v7566, %v7588
      %v7699 = vadd.f32 %v7567, %v7588
      %v7700 = vadd.f32 %v7568, %v7588
      %v7701 = vadd.f32 %v7569, %v7588
      %v7702 = vadd.f32 %v7570, %v7588
      %v7703 = vadd.f32 %v7571, %v7588
      %v7704 = vadd.f32 %v7572, %v7588
      %v7705 = vadd.f32 %v7573, %v7588
      %v7706 = vadd.f32 %v7574, %v7588
      %v7707 = vadd.f32 %v7575, %v7588
      %v7708 = vadd.f32 %v7576, %v7588
      %v7709 = vadd.f32 %v7577, %v7588
      %v7710 = vadd.f32 %v7578, %v7588
      %v7711 = vadd.f32 %v7579, %v7588
      %v7712 = vadd.f32 %v7580, %v7588
      %v7713 = vadd.f32 %v7581, %v7588
      %v7714 = vadd.f32 %v7582, %v7588
      %v7715 = vadd.f32 %v7583, %v7588
      %v7716 = vadd.f32 %v7584, %v7588
      %v7717 = vadd.f32 %v7585, %v7588
      %v7718 = vmax.f32 %v7590, 0.0
      %v7719 = vmax.f32 %v7591, 0.0
      %v7720 = vmax.f32 %v7592, 0.0
      %v7721 = vmax.f32 %v7593, 0.0
      %v7722 = vmax.f32 %v7594, 0.0
      %v7723 = vmax.f32 %v7595, 0.0
      %v7724 = vmax.f32 %v7596, 0.0
      %v7725 = vmax.f32 %v7597, 0.0
      %v7726 = vmax.f32 %v7598, 0.0
      %v7727 = vmax.f32 %v7599, 0.0
      %v7728 = vmax.f32 %v7600, 0.0
      %v7729 = vmax.f32 %v7601, 0.0
      %v7730 = vmax.f32 %v7602, 0.0
      %v7731 = vmax.f32 %v7603, 0.0
      %v7732 = vmax.f32 %v7604, 0.0
      %v7733 = vmax.f32 %v7605, 0.0
      %v7734 = vmax.f32 %v7606, 0.0
      %v7735 = vmax.f32 %v7607, 0.0
      %v7736 = vmax.f32 %v7608, 0.0
      %v7737 = vmax.f32 %v7609, 0.0
      %v7738 = vmax.f32 %v7610, 0.0
      %v7739 = vmax.f32 %v7611, 0.0
      %v7740 = vmax.f32 %v7612, 0.0
      %v7741 = vmax.f32 %v7613, 0.0
      %v7742 = vmax.f32 %v7614, 0.0
      %v7743 = vmax.f32 %v7615, 0.0
      %v7744 = vmax.f32 %v7616, 0.0
      %v7745 = vmax.f32 %v7617, 0.0
      %v7746 = vmax.f32 %v7618, 0.0
      %v7747 = vmax.f32 %v7619, 0.0
      %v7748 = vmax.f32 %v7620, 0.0
      %v7749 = vmax.f32 %v7621, 0.0
      %v7750 = vmax.f32 %v7622, 0.0
      %v7751 = vmax.f32 %v7623, 0.0
      %v7752 = vmax.f32 %v7624, 0.0
      %v7753 = vmax.f32 %v7625, 0.0
      %v7754 = vmax.f32 %v7626, 0.0
      %v7755 = vmax.f32 %v7627, 0.0
      %v7756 = vmax.f32 %v7628, 0.0
      %v7757 = vmax.f32 %v7629, 0.0
      %v7758 = vmax.f32 %v7630, 0.0
      %v7759 = vmax.f32 %v7631, 0.0
      %v7760 = vmax.f32 %v7632, 0.0
      %v7761 = vmax.f32 %v7633, 0.0
      %v7762 = vmax.f32 %v7634, 0.0
      %v7763 = vmax.f32 %v7635, 0.0
      %v7764 = vmax.f32 %v7636, 0.0
      %v7765 = vmax.f32 %v7637, 0.0
      %v7766 = vmax.f32 %v7638, 0.0
      %v7767 = vmax.f32 %v7639, 0.0
      %v7768 = vmax.f32 %v7640, 0.0
      %v7769 = vmax.f32 %v7641, 0.0
      %v7770 = vmax.f32 %v7642, 0.0
      %v7771 = vmax.f32 %v7643, 0.0
      %v7772 = vmax.f32 %v7644, 0.0
      %v7773 = vmax.f32 %v7645, 0.0
      %v7774 = vmax.f32 %v7646, 0.0
      %v7775 = vmax.f32 %v7647, 0.0
      %v7776 = vmax.f32 %v7648, 0.0
      %v7777 = vmax.f32 %v7649, 0.0
      %v7778 = vmax.f32 %v7650, 0.0
      %v7779 = vmax.f32 %v7651, 0.0
      %v7780 = vmax.f32 %v7652, 0.0
      %v7781 = vmax.f32 %v7653, 0.0
      %v7782 = vmax.f32 %v7654, 0.0
      %v7783 = vmax.f32 %v7655, 0.0
      %v7784 = vmax.f32 %v7656, 0.0
      %v7785 = vmax.f32 %v7657, 0.0
      %v7786 = vmax.f32 %v7658, 0.0
      %v7787 = vmax.f32 %v7659, 0.0
      %v7788 = vmax.f32 %v7660, 0.0
      %v7789 = vmax.f32 %v7661, 0.0
      %v7790 = vmax.f32 %v7662, 0.0
      %v7791 = vmax.f32 %v7663, 0.0
      %v7792 = vmax.f32 %v7664, 0.0
      %v7793 = vmax.f32 %v7665, 0.0
      %v7794 = vmax.f32 %v7666, 0.0
      %v7795 = vmax.f32 %v7667, 0.0
      %v7796 = vmax.f32 %v7668, 0.0
      %v7797 = vmax.f32 %v7669, 0.0
      %v7798 = vmax.f32 %v7670, 0.0
      %v7799 = vmax.f32 %v7671, 0.0
      %v7800 = vmax.f32 %v7672, 0.0
      %v7801 = vmax.f32 %v7673, 0.0
      %v7802 = vmax.f32 %v7674, 0.0
      %v7803 = vmax.f32 %v7675, 0.0
      %v7804 = vmax.f32 %v7676, 0.0
      %v7805 = vmax.f32 %v7677, 0.0
      %v7806 = vmax.f32 %v7678, 0.0
      %v7807 = vmax.f32 %v7679, 0.0
      %v7808 = vmax.f32 %v7680, 0.0
      %v7809 = vmax.f32 %v7681, 0.0
      %v7810 = vmax.f32 %v7682, 0.0
      %v7811 = vmax.f32 %v7683, 0.0
      %v7812 = vmax.f32 %v7684, 0.0
      %v7813 = vmax.f32 %v7685, 0.0
      %v7814 = vmax.f32 %v7686, 0.0
      %v7815 = vmax.f32 %v7687, 0.0
      %v7816 = vmax.f32 %v7688, 0.0
      %v7817 = vmax.f32 %v7689, 0.0
      %v7818 = vmax.f32 %v7690, 0.0
      %v7819 = vmax.f32 %v7691, 0.0
      %v7820 = vmax.f32 %v7692, 0.0
      %v7821 = vmax.f32 %v7693, 0.0
      %v7822 = vmax.f32 %v7694, 0.0
      %v7823 = vmax.f32 %v7695, 0.0
      %v7824 = vmax.f32 %v7696, 0.0
      %v7825 = vmax.f32 %v7697, 0.0
      %v7826 = vmax.f32 %v7698, 0.0
      %v7827 = vmax.f32 %v7699, 0.0
      %v7828 = vmax.f32 %v7700, 0.0
      %v7829 = vmax.f32 %v7701, 0.0
      %v7830 = vmax.f32 %v7702, 0.0
      %v7831 = vmax.f32 %v7703, 0.0
      %v7832 = vmax.f32 %v7704, 0.0
      %v7833 = vmax.f32 %v7705, 0.0
      %v7834 = vmax.f32 %v7706, 0.0
      %v7835 = vmax.f32 %v7707, 0.0
      %v7836 = vmax.f32 %v7708, 0.0
      %v7837 = vmax.f32 %v7709, 0.0
      %v7838 = vmax.f32 %v7710, 0.0
      %v7839 = vmax.f32 %v7711, 0.0
      %v7840 = vmax.f32 %v7712, 0.0
      %v7841 = vmax.f32 %v7713, 0.0
      %v7842 = vmax.f32 %v7714, 0.0
      %v7843 = vmax.f32 %v7715, 0.0
      %v7844 = vmax.f32 %v7716, 0.0
      %v7845 = vmax.f32 %v7717, 0.0
      %v7846 = vmax.f32 %v7718, %v7722
      %v7847 = vmax.f32 %v7719, %v7723
      %v7848 = vmax.f32 %v7720, %v7724
      %v7849 = vmax.f32 %v7721, %v7725
      %v7850 = vmax.f32 %v7726, %v7730
      %v7851 = vmax.f32 %v7727, %v7731
      %v7852 = vmax.f32 %v7728, %v7732
      %v7853 = vmax.f32 %v7729, %v7733
      %v7854 = vmax.f32 %v7734, %v7738
      %v7855 = vmax.f32 %v7735, %v7739
      %v7856 = vmax.f32 %v7736, %v7740
      %v7857 = vmax.f32 %v7737, %v7741
      %v7858 = vmax.f32 %v7742, %v7746
      %v7859 = vmax.f32 %v7743, %v7747
      %v7860 = vmax.f32 %v7744, %v7748
      %v7861 = vmax.f32 %v7745, %v7749
      %v7862 = vmax.f32 %v7750, %v7754
      %v7863 = vmax.f32 %v7751, %v7755
      %v7864 = vmax.f32 %v7752, %v7756
      %v7865 = vmax.f32 %v7753, %v7757
      %v7866 = vmax.f32 %v7758, %v7762
      %v7867 = vmax.f32 %v7759, %v7763
      %v7868 = vmax.f32 %v7760, %v7764
      %v7869 = vmax.f32 %v7761, %v7765
      %v7870 = vmax.f32 %v7766, %v7770
      %v7871 = vmax.f32 %v7767, %v7771
      %v7872 = vmax.f32 %v7768, %v7772
      %v7873 = vmax.f32 %v7769, %v7773
      %v7874 = vmax.f32 %v7774, %v7778
      %v7875 = vmax.f32 %v7775, %v7779
      %v7876 = vmax.f32 %v7776, %v7780
      %v7877 = vmax.f32 %v7777, %v7781
      %v7878 = vmax.f32 %v7782, %v7786
      %v7879 = vmax.f32 %v7783, %v7787
      %v7880 = vmax.f32 %v7784, %v7788
      %v7881 = vmax.f32 %v7785, %v7789
      %v7882 = vmax.f32 %v7790, %v7794
      %v7883 = vmax.f32 %v7791, %v7795
      %v7884 = vmax.f32 %v7792, %v7796
      %v7885 = vmax.f32 %v7793, %v7797
      %v7886 = vmax.f32 %v7798, %v7802
      %v7887 = vmax.f32 %v7799, %v7803
      %v7888 = vmax.f32 %v7800, %v7804
      %v7889 = vmax.f32 %v7801, %v7805
      %v7890 = vmax.f32 %v7806, %v7810
      %v7891 = vmax.f32 %v7807, %v7811
      %v7892 = vmax.f32 %v7808, %v7812
      %v7893 = vmax.f32 %v7809, %v7813
      %v7894 = vmax.f32 %v7814, %v7818
      %v7895 = vmax.f32 %v7815, %v7819
      %v7896 = vmax.f32 %v7816, %v7820
      %v7897 = vmax.f32 %v7817, %v7821
      %v7898 = vmax.f32 %v7822, %v7826
      %v7899 = vmax.f32 %v7823, %v7827
      %v7900 = vmax.f32 %v7824, %v7828
      %v7901 = vmax.f32 %v7825, %v7829
      %v7902 = vmax.f32 %v7830, %v7834
      %v7903 = vmax.f32 %v7831, %v7835
      %v7904 = vmax.f32 %v7832, %v7836
      %v7905 = vmax.f32 %v7833, %v7837
      %v7906 = vmax.f32 %v7838, %v7842
      %v7907 = vmax.f32 %v7839, %v7843
      %v7908 = vmax.f32 %v7840, %v7844
      %v7909 = vmax.f32 %v7841, %v7845
      %vm7910 = vcmask 130048
      %7911 = vst.msk [vmem:[#allocation2] sm:$0xff] %vm7910, %v7846
      %7912 = vst.msk [vmem:[#allocation2 + $0x8] sm:$0xff] %vm7910, %v7847
      %7913 = vst.msk [vmem:[#allocation2 + $0x10] sm:$0xff] %vm7910, %v7848
      %7914 = vst.msk [vmem:[#allocation2 + $0x18] sm:$0xff] %vm7910, %v7849
      %7915 = vst.msk [vmem:[#allocation2 + $0x20] sm:$0xff] %vm7910, %v7850
      %7916 = vst.msk [vmem:[#allocation2 + $0x28] sm:$0xff] %vm7910, %v7851
      %7917 = vst.msk [vmem:[#allocation2 + $0x30] sm:$0xff] %vm7910, %v7852
      %7918 = vst.msk [vmem:[#allocation2 + $0x38] sm:$0xff] %vm7910, %v7853
      %7919 = vst.msk [vmem:[#allocation2 + $0x40] sm:$0xff] %vm7910, %v7854
      %7920 = vst.msk [vmem:[#allocation2 + $0x48] sm:$0xff] %vm7910, %v7855
      %7921 = vst.msk [vmem:[#allocation2 + $0x50] sm:$0xff] %vm7910, %v7856
      %7922 = vst.msk [vmem:[#allocation2 + $0x58] sm:$0xff] %vm7910, %v7857
      %7923 = vst.msk [vmem:[#allocation2 + $0x60] sm:$0xff] %vm7910, %v7858
      %7924 = vst.msk [vmem:[#allocation2 + $0x68] sm:$0xff] %vm7910, %v7859
      %7925 = vst.msk [vmem:[#allocation2 + $0x70] sm:$0xff] %vm7910, %v7860
      %7926 = vst.msk [vmem:[#allocation2 + $0x78] sm:$0xff] %vm7910, %v7861
      %7927 = vst.msk [vmem:[#allocation2 + $0x80] sm:$0xff] %vm7910, %v7862
      %7928 = vst.msk [vmem:[#allocation2 + $0x88] sm:$0xff] %vm7910, %v7863
      %7929 = vst.msk [vmem:[#allocation2 + $0x90] sm:$0xff] %vm7910, %v7864
      %7930 = vst.msk [vmem:[#allocation2 + $0x98] sm:$0xff] %vm7910, %v7865
      %7931 = vst.msk [vmem:[#allocation2 + $0xa0] sm:$0xff] %vm7910, %v7866
      %7932 = vst.msk [vmem:[#allocation2 + $0xa8] sm:$0xff] %vm7910, %v7867
      %7933 = vst.msk [vmem:[#allocation2 + $0xb0] sm:$0xff] %vm7910, %v7868
      %7934 = vst.msk [vmem:[#allocation2 + $0xb8] sm:$0xff] %vm7910, %v7869
      %7935 = vst.msk [vmem:[#allocation2 + $0xc0] sm:$0xff] %vm7910, %v7870
      %7936 = vst.msk [vmem:[#allocation2 + $0xc8] sm:$0xff] %vm7910, %v7871
      %7937 = vst.msk [vmem:[#allocation2 + $0xd0] sm:$0xff] %vm7910, %v7872
      %7938 = vst.msk [vmem:[#allocation2 + $0xd8] sm:$0xff] %vm7910, %v7873
      %7939 = vst.msk [vmem:[#allocation2 + $0xe0] sm:$0xff] %vm7910, %v7874
      %7940 = vst.msk [vmem:[#allocation2 + $0xe8] sm:$0xff] %vm7910, %v7875
      %7941 = vst.msk [vmem:[#allocation2 + $0xf0] sm:$0xff] %vm7910, %v7876
      %7942 = vst.msk [vmem:[#allocation2 + $0xf8] sm:$0xff] %vm7910, %v7877
      %7943 = vst.msk [vmem:[#allocation2 + $0x100] sm:$0xff] %vm7910, %v7878
      %7944 = vst.msk [vmem:[#allocation2 + $0x108] sm:$0xff] %vm7910, %v7879
      %7945 = vst.msk [vmem:[#allocation2 + $0x110] sm:$0xff] %vm7910, %v7880
      %7946 = vst.msk [vmem:[#allocation2 + $0x118] sm:$0xff] %vm7910, %v7881
      %7947 = vst.msk [vmem:[#allocation2 + $0x120] sm:$0xff] %vm7910, %v7882
      %7948 = vst.msk [vmem:[#allocation2 + $0x128] sm:$0xff] %vm7910, %v7883
      %7949 = vst.msk [vmem:[#allocation2 + $0x130] sm:$0xff] %vm7910, %v7884
      %7950 = vst.msk [vmem:[#allocation2 + $0x138] sm:$0xff] %vm7910, %v7885
      %7951 = vst.msk [vmem:[#allocation2 + $0x140] sm:$0xff] %vm7910, %v7886
      %7952 = vst.msk [vmem:[#allocation2 + $0x148] sm:$0xff] %vm7910, %v7887
      %7953 = vst.msk [vmem:[#allocation2 + $0x150] sm:$0xff] %vm7910, %v7888
      %7954 = vst.msk [vmem:[#allocation2 + $0x158] sm:$0xff] %vm7910, %v7889
      %7955 = vst.msk [vmem:[#allocation2 + $0x160] sm:$0xff] %vm7910, %v7890
      %7956 = vst.msk [vmem:[#allocation2 + $0x168] sm:$0xff] %vm7910, %v7891
      %7957 = vst.msk [vmem:[#allocation2 + $0x170] sm:$0xff] %vm7910, %v7892
      %7958 = vst.msk [vmem:[#allocation2 + $0x178] sm:$0xff] %vm7910, %v7893
      %7959 = vst.msk [vmem:[#allocation2 + $0x180] sm:$0xff] %vm7910, %v7894
      %7960 = vst.msk [vmem:[#allocation2 + $0x188] sm:$0xff] %vm7910, %v7895
      %7961 = vst.msk [vmem:[#allocation2 + $0x190] sm:$0xff] %vm7910, %v7896
      %7962 = vst.msk [vmem:[#allocation2 + $0x198] sm:$0xff] %vm7910, %v7897
      %7963 = vst.msk [vmem:[#allocation2 + $0x1a0] sm:$0xff] %vm7910, %v7898
      %7964 = vst.msk [vmem:[#allocation2 + $0x1a8] sm:$0xff] %vm7910, %v7899
      %7965 = vst.msk [vmem:[#allocation2 + $0x1b0] sm:$0xff] %vm7910, %v7900
      %7966 = vst.msk [vmem:[#allocation2 + $0x1b8] sm:$0xff] %vm7910, %v7901
      %7967 = vst.msk [vmem:[#allocation2 + $0x1c0] sm:$0xff] %vm7910, %v7902
      %7968 = vst.msk [vmem:[#allocation2 + $0x1c8] sm:$0xff] %vm7910, %v7903
      %7969 = vst.msk [vmem:[#allocation2 + $0x1d0] sm:$0xff] %vm7910, %v7904
      %7970 = vst.msk [vmem:[#allocation2 + $0x1d8] sm:$0xff] %vm7910, %v7905
      %7971 = vst.msk [vmem:[#allocation2 + $0x1e0] sm:$0xff] %vm7910, %v7906
      %7972 = vst.msk [vmem:[#allocation2 + $0x1e8] sm:$0xff] %vm7910, %v7907
      %7973 = vst.msk [vmem:[#allocation2 + $0x1f0] sm:$0xff] %vm7910, %v7908
      %7974 = vst.msk [vmem:[#allocation2 + $0x1f8] sm:$0xff] %vm7910, %v7909
      %v7975 = vld [vmem:[#allocation2] ss:$2 sm:$0xff]
      %s7976 = scalar_lea.vmem [#allocation2], 16
      %v7977 = vld [vmem:[%s7976] ss:$2 sm:$0xff]
      %s7978 = scalar_lea.vmem [#allocation2], 32
      %v7979 = vld [vmem:[%s7978] ss:$2 sm:$0xff]
      %s7980 = scalar_lea.vmem [#allocation2], 48
      %v7981 = vld [vmem:[%s7980] ss:$2 sm:$0xff]
      %s7982 = scalar_lea.vmem [#allocation2], 64
      %v7983 = vld [vmem:[%s7982] ss:$2 sm:$0xff]
      %s7984 = scalar_lea.vmem [#allocation2], 80
      %v7985 = vld [vmem:[%s7984] ss:$2 sm:$0xff]
      %s7986 = scalar_lea.vmem [#allocation2], 96
      %v7987 = vld [vmem:[%s7986] ss:$2 sm:$0xff]
      %s7988 = scalar_lea.vmem [#allocation2], 112
      %v7989 = vld [vmem:[%s7988] ss:$2 sm:$0xff]
      %s7990 = scalar_lea.vmem [#allocation2], 128
      %v7991 = vld [vmem:[%s7990] ss:$2 sm:$0xff]
      %s7992 = scalar_lea.vmem [#allocation2], 144
      %v7993 = vld [vmem:[%s7992] ss:$2 sm:$0xff]
      %s7994 = scalar_lea.vmem [#allocation2], 160
      %v7995 = vld [vmem:[%s7994] ss:$2 sm:$0xff]
      %s7996 = scalar_lea.vmem [#allocation2], 176
      %v7997 = vld [vmem:[%s7996] ss:$2 sm:$0xff]
      %s7998 = scalar_lea.vmem [#allocation2], 192
      %v7999 = vld [vmem:[%s7998] ss:$2 sm:$0xff]
      %s8000 = scalar_lea.vmem [#allocation2], 208
      %v8001 = vld [vmem:[%s8000] ss:$2 sm:$0xff]
      %s8002 = scalar_lea.vmem [#allocation2], 224
      %v8003 = vld [vmem:[%s8002] ss:$2 sm:$0xff]
      %s8004 = scalar_lea.vmem [#allocation2], 240
      %v8005 = vld [vmem:[%s8004] ss:$2 sm:$0xff]
      %s8006 = scalar_lea.vmem [#allocation2], 256
      %v8007 = vld [vmem:[%s8006] ss:$2 sm:$0xff]
      %s8008 = scalar_lea.vmem [#allocation2], 272
      %v8009 = vld [vmem:[%s8008] ss:$2 sm:$0xff]
      %s8010 = scalar_lea.vmem [#allocation2], 288
      %v8011 = vld [vmem:[%s8010] ss:$2 sm:$0xff]
      %s8012 = scalar_lea.vmem [#allocation2], 304
      %v8013 = vld [vmem:[%s8012] ss:$2 sm:$0xff]
      %s8014 = scalar_lea.vmem [#allocation2], 320
      %v8015 = vld [vmem:[%s8014] ss:$2 sm:$0xff]
      %s8016 = scalar_lea.vmem [#allocation2], 336
      %v8017 = vld [vmem:[%s8016] ss:$2 sm:$0xff]
      %s8018 = scalar_lea.vmem [#allocation2], 352
      %v8019 = vld [vmem:[%s8018] ss:$2 sm:$0xff]
      %s8020 = scalar_lea.vmem [#allocation2], 368
      %v8021 = vld [vmem:[%s8020] ss:$2 sm:$0xff]
      %s8022 = scalar_lea.vmem [#allocation2], 384
      %v8023 = vld [vmem:[%s8022] ss:$2 sm:$0xff]
      %s8024 = scalar_lea.vmem [#allocation2], 400
      %v8025 = vld [vmem:[%s8024] ss:$2 sm:$0xff]
      %s8026 = scalar_lea.vmem [#allocation2], 416
      %v8027 = vld [vmem:[%s8026] ss:$2 sm:$0xff]
      %s8028 = scalar_lea.vmem [#allocation2], 432
      %v8029 = vld [vmem:[%s8028] ss:$2 sm:$0xff]
      %s8030 = scalar_lea.vmem [#allocation2], 448
      %v8031 = vld [vmem:[%s8030] ss:$2 sm:$0xff]
      %s8032 = scalar_lea.vmem [#allocation2], 464
      %v8033 = vld [vmem:[%s8032] ss:$2 sm:$0xff]
      %s8034 = scalar_lea.vmem [#allocation2], 480
      %v8035 = vld [vmem:[%s8034] ss:$2 sm:$0xff]
      %s8036 = scalar_lea.vmem [#allocation2], 496
      %v8037 = vld [vmem:[%s8036] ss:$2 sm:$0xff]
      %s8038 = scalar_lea.vmem [#allocation2], 1
      %v8039 = vld [vmem:[%s8038] ss:$2 sm:$0xff]
      %s8040 = scalar_lea.vmem [#allocation2], 17
      %v8041 = vld [vmem:[%s8040] ss:$2 sm:$0xff]
      %s8042 = scalar_lea.vmem [#allocation2], 33
      %v8043 = vld [vmem:[%s8042] ss:$2 sm:$0xff]
      %s8044 = scalar_lea.vmem [#allocation2], 49
      %v8045 = vld [vmem:[%s8044] ss:$2 sm:$0xff]
      %s8046 = scalar_lea.vmem [#allocation2], 65
      %v8047 = vld [vmem:[%s8046] ss:$2 sm:$0xff]
      %s8048 = scalar_lea.vmem [#allocation2], 81
      %v8049 = vld [vmem:[%s8048] ss:$2 sm:$0xff]
      %s8050 = scalar_lea.vmem [#allocation2], 97
      %v8051 = vld [vmem:[%s8050] ss:$2 sm:$0xff]
      %s8052 = scalar_lea.vmem [#allocation2], 113
      %v8053 = vld [vmem:[%s8052] ss:$2 sm:$0xff]
      %s8054 = scalar_lea.vmem [#allocation2], 129
      %v8055 = vld [vmem:[%s8054] ss:$2 sm:$0xff]
      %s8056 = scalar_lea.vmem [#allocation2], 145
      %v8057 = vld [vmem:[%s8056] ss:$2 sm:$0xff]
      %s8058 = scalar_lea.vmem [#allocation2], 161
      %v8059 = vld [vmem:[%s8058] ss:$2 sm:$0xff]
      %s8060 = scalar_lea.vmem [#allocation2], 177
      %v8061 = vld [vmem:[%s8060] ss:$2 sm:$0xff]
      %s8062 = scalar_lea.vmem [#allocation2], 193
      %v8063 = vld [vmem:[%s8062] ss:$2 sm:$0xff]
      %s8064 = scalar_lea.vmem [#allocation2], 209
      %v8065 = vld [vmem:[%s8064] ss:$2 sm:$0xff]
      %s8066 = scalar_lea.vmem [#allocation2], 225
      %v8067 = vld [vmem:[%s8066] ss:$2 sm:$0xff]
      %s8068 = scalar_lea.vmem [#allocation2], 241
      %v8069 = vld [vmem:[%s8068] ss:$2 sm:$0xff]
      %s8070 = scalar_lea.vmem [#allocation2], 257
      %v8071 = vld [vmem:[%s8070] ss:$2 sm:$0xff]
      %s8072 = scalar_lea.vmem [#allocation2], 273
      %v8073 = vld [vmem:[%s8072] ss:$2 sm:$0xff]
      %s8074 = scalar_lea.vmem [#allocation2], 289
      %v8075 = vld [vmem:[%s8074] ss:$2 sm:$0xff]
      %s8076 = scalar_lea.vmem [#allocation2], 305
      %v8077 = vld [vmem:[%s8076] ss:$2 sm:$0xff]
      %s8078 = scalar_lea.vmem [#allocation2], 321
      %v8079 = vld [vmem:[%s8078] ss:$2 sm:$0xff]
      %s8080 = scalar_lea.vmem [#allocation2], 337
      %v8081 = vld [vmem:[%s8080] ss:$2 sm:$0xff]
      %s8082 = scalar_lea.vmem [#allocation2], 353
      %v8083 = vld [vmem:[%s8082] ss:$2 sm:$0xff]
      %s8084 = scalar_lea.vmem [#allocation2], 369
      %v8085 = vld [vmem:[%s8084] ss:$2 sm:$0xff]
      %s8086 = scalar_lea.vmem [#allocation2], 385
      %v8087 = vld [vmem:[%s8086] ss:$2 sm:$0xff]
      %s8088 = scalar_lea.vmem [#allocation2], 401
      %v8089 = vld [vmem:[%s8088] ss:$2 sm:$0xff]
      %s8090 = scalar_lea.vmem [#allocation2], 417
      %v8091 = vld [vmem:[%s8090] ss:$2 sm:$0xff]
      %s8092 = scalar_lea.vmem [#allocation2], 433
      %v8093 = vld [vmem:[%s8092] ss:$2 sm:$0xff]
      %s8094 = scalar_lea.vmem [#allocation2], 449
      %v8095 = vld [vmem:[%s8094] ss:$2 sm:$0xff]
      %s8096 = scalar_lea.vmem [#allocation2], 465
      %v8097 = vld [vmem:[%s8096] ss:$2 sm:$0xff]
      %s8098 = scalar_lea.vmem [#allocation2], 481
      %v8099 = vld [vmem:[%s8098] ss:$2 sm:$0xff]
      %s8100 = scalar_lea.vmem [#allocation2], 497
      %v8101 = vld [vmem:[%s8100] ss:$2 sm:$0xff]
      %v8102 = vmax.f32 %v7975, %v8039
      %v8103 = vmax.f32 %v7977, %v8041
      %v8104 = vmax.f32 %v7979, %v8043
      %v8105 = vmax.f32 %v7981, %v8045
      %v8106 = vmax.f32 %v7983, %v8047
      %v8107 = vmax.f32 %v7985, %v8049
      %v8108 = vmax.f32 %v7987, %v8051
      %v8109 = vmax.f32 %v7989, %v8053
      %v8110 = vmax.f32 %v7991, %v8055
      %v8111 = vmax.f32 %v7993, %v8057
      %v8112 = vmax.f32 %v7995, %v8059
      %v8113 = vmax.f32 %v7997, %v8061
      %v8114 = vmax.f32 %v7999, %v8063
      %v8115 = vmax.f32 %v8001, %v8065
      %v8116 = vmax.f32 %v8003, %v8067
      %v8117 = vmax.f32 %v8005, %v8069
      %v8118 = vmax.f32 %v8007, %v8071
      %v8119 = vmax.f32 %v8009, %v8073
      %v8120 = vmax.f32 %v8011, %v8075
      %v8121 = vmax.f32 %v8013, %v8077
      %v8122 = vmax.f32 %v8015, %v8079
      %v8123 = vmax.f32 %v8017, %v8081
      %v8124 = vmax.f32 %v8019, %v8083
      %v8125 = vmax.f32 %v8021, %v8085
      %v8126 = vmax.f32 %v8023, %v8087
      %v8127 = vmax.f32 %v8025, %v8089
      %v8128 = vmax.f32 %v8027, %v8091
      %v8129 = vmax.f32 %v8029, %v8093
      %v8130 = vmax.f32 %v8031, %v8095
      %v8131 = vmax.f32 %v8033, %v8097
      %v8132 = vmax.f32 %v8035, %v8099
      %v8133 = vmax.f32 %v8037, %v8101
      %v8134 = vpack.c.bf16 %v8102, %v8102
      %v8135 = vpack.c.bf16 %v8103, %v8103
      %v8136 = vpack.c.bf16 %v8104, %v8104
      %v8137 = vpack.c.bf16 %v8105, %v8105
      %v8138 = vpack.c.bf16 %v8106, %v8106
      %v8139 = vpack.c.bf16 %v8107, %v8107
      %v8140 = vpack.c.bf16 %v8108, %v8108
      %v8141 = vpack.c.bf16 %v8109, %v8109
      %v8142 = vpack.c.bf16 %v8110, %v8110
      %v8143 = vpack.c.bf16 %v8111, %v8111
      %v8144 = vpack.c.bf16 %v8112, %v8112
      %v8145 = vpack.c.bf16 %v8113, %v8113
      %v8146 = vpack.c.bf16 %v8114, %v8114
      %v8147 = vpack.c.bf16 %v8115, %v8115
      %v8148 = vpack.c.bf16 %v8116, %v8116
      %v8149 = vpack.c.bf16 %v8117, %v8117
      %v8150 = vpack.c.bf16 %v8118, %v8118
      %v8151 = vpack.c.bf16 %v8119, %v8119
      %v8152 = vpack.c.bf16 %v8120, %v8120
      %v8153 = vpack.c.bf16 %v8121, %v8121
      %v8154 = vpack.c.bf16 %v8122, %v8122
      %v8155 = vpack.c.bf16 %v8123, %v8123
      %v8156 = vpack.c.bf16 %v8124, %v8124
      %v8157 = vpack.c.bf16 %v8125, %v8125
      %v8158 = vpack.c.bf16 %v8126, %v8126
      %v8159 = vpack.c.bf16 %v8127, %v8127
      %v8160 = vpack.c.bf16 %v8128, %v8128
      %v8161 = vpack.c.bf16 %v8129, %v8129
      %v8162 = vpack.c.bf16 %v8130, %v8130
      %v8163 = vpack.c.bf16 %v8131, %v8131
      %v8164 = vpack.c.bf16 %v8132, %v8132
      %v8165 = vpack.c.bf16 %v8133, %v8133
      %vm8166 = vcmask 125952
      %8167 = vst.msk [vmem:[%s170] sm:$0xf] %vm8166, %v8134
      %8168 = vst.msk [vmem:[%s170 + $0x4] sm:$0xf] %vm8166, %v8135
      %8169 = vst.msk [vmem:[%s170 + $0x8] sm:$0xf] %vm8166, %v8136
      %8170 = vst.msk [vmem:[%s170 + $0xc] sm:$0xf] %vm8166, %v8137
      %8171 = vst.msk [vmem:[%s170 + $0x10] sm:$0xf] %vm8166, %v8138
      %8172 = vst.msk [vmem:[%s170 + $0x14] sm:$0xf] %vm8166, %v8139
      %8173 = vst.msk [vmem:[%s170 + $0x18] sm:$0xf] %vm8166, %v8140
      %8174 = vst.msk [vmem:[%s170 + $0x1c] sm:$0xf] %vm8166, %v8141
      %8175 = vst.msk [vmem:[%s170 + $0x20] sm:$0xf] %vm8166, %v8142
      %8176 = vst.msk [vmem:[%s170 + $0x24] sm:$0xf] %vm8166, %v8143
      %8177 = vst.msk [vmem:[%s170 + $0x28] sm:$0xf] %vm8166, %v8144
      %8178 = vst.msk [vmem:[%s170 + $0x2c] sm:$0xf] %vm8166, %v8145
      %8179 = vst.msk [vmem:[%s170 + $0x30] sm:$0xf] %vm8166, %v8146
      %8180 = vst.msk [vmem:[%s170 + $0x34] sm:$0xf] %vm8166, %v8147
      %8181 = vst.msk [vmem:[%s170 + $0x38] sm:$0xf] %vm8166, %v8148
      %8182 = vst.msk [vmem:[%s170 + $0x3c] sm:$0xf] %vm8166, %v8149
      %8183 = vst.msk [vmem:[%s170 + $0x40] sm:$0xf] %vm8166, %v8150
      %8184 = vst.msk [vmem:[%s170 + $0x44] sm:$0xf] %vm8166, %v8151
      %8185 = vst.msk [vmem:[%s170 + $0x48] sm:$0xf] %vm8166, %v8152
      %8186 = vst.msk [vmem:[%s170 + $0x4c] sm:$0xf] %vm8166, %v8153
      %8187 = vst.msk [vmem:[%s170 + $0x50] sm:$0xf] %vm8166, %v8154
      %8188 = vst.msk [vmem:[%s170 + $0x54] sm:$0xf] %vm8166, %v8155
      %8189 = vst.msk [vmem:[%s170 + $0x58] sm:$0xf] %vm8166, %v8156
      %8190 = vst.msk [vmem:[%s170 + $0x5c] sm:$0xf] %vm8166, %v8157
      %8191 = vst.msk [vmem:[%s170 + $0x60] sm:$0xf] %vm8166, %v8158
      %8192 = vst.msk [vmem:[%s170 + $0x64] sm:$0xf] %vm8166, %v8159
      %8193 = vst.msk [vmem:[%s170 + $0x68] sm:$0xf] %vm8166, %v8160
      %8194 = vst.msk [vmem:[%s170 + $0x6c] sm:$0xf] %vm8166, %v8161
      %8195 = vst.msk [vmem:[%s170 + $0x70] sm:$0xf] %vm8166, %v8162
      %8196 = vst.msk [vmem:[%s170 + $0x74] sm:$0xf] %vm8166, %v8163
      %8197 = vst.msk [vmem:[%s170 + $0x78] sm:$0xf] %vm8166, %v8164
      %8198 = vst.msk [vmem:[%s170 + $0x7c] sm:$0xf] %vm8166, %v8165
      %p8199 = scmp.lt.s32.totalorder %s14, 1
      %s8200 = scalar_select %p8199, %s14, 1
      %s8201 = smul.addr %s8200, 32
      %s8202 = smul.addr %s8201, 4
      %s8203 = scalar_lea.vmem %s3, %s8202
      // Predicated region
      $region33: #{cnn_forward.5} parent=31 // pred_check
        %p8204 = pneg %p100
      $region34: #{cnn_forward.5} parent=31 // pred_check_branch
        %8206 = sbr.rel (%p8204) target = $region36
      $region35: #{cnn_forward.5} parent=31 // pred_region
        _
      $region36: #{cnn_forward.5} parent=31 // pred_fallthru
        _
    $region32: #{cnn_forward.5} parent=5 // pred_fallthru
      _
    %p8207 = scmp.le.s32.totalorder 2, %s9
    // Predicated region
    $region37: #{cnn_forward.5} parent=5 // pred_check
      %p8208 = pneg %p8207
    $region38: #{cnn_forward.5} parent=5 // pred_check_branch
      %8210 = sbr.rel (%p8208) target = $region40
    $region39: #{cnn_forward.5} parent=5 // pred_region
      %s8211 = ssub.s32 %s9, 2
      // Predicated region
      $region41: #{cnn_forward.5} parent=39 // pred_check
        %p8212 = pneg %p106
      $region42: #{cnn_forward.5} parent=39 // pred_check_branch
        %8214 = sbr.rel (%p8212) target = $region44
      $region43: #{cnn_forward.5} parent=39 // pred_region
        %p8215 = scmp.lt.s32.totalorder %s15, 1
        %s8216 = scalar_select %p8215, %s15, 1
        %s8217 = smul.addr %s8216, 32
        %s8218 = smul.addr %s8217, 4
        %s8219 = scalar_lea.vmem %s3, %s8218
      $region44: #{cnn_forward.5} parent=39 // pred_fallthru
        _
    $region40: #{cnn_forward.5} parent=5 // pred_fallthru
      _
  $region6: #{cnn_forward.5} parent=0 // loop_footer
    %s13 = sadd.s32 1, %s9
  $region7: #{cnn_forward.5} parent=0 // loop_footer_branch
    %8 = sbr.rel target = $region3
  $region8: #{cnn_forward.5} parent=0 // loop_exit
    _

</llo_original>
